<compile_context>
chip_gen: v5e
topology: v5e:2x2
jax: 0.10.0
libtpu: 0.0.40
codegen_flags: <defaults>
</compile_context>

<pallas_src>
import numpy as np
import jax
import jax.numpy as jnp
from jax import lax
from jax.experimental import pallas as pl
from jax.experimental.pallas import tpu as pltpu

EPS = 1e-5            # torch BatchNorm2d default
LRELU_SLOPE = 0.01    # nn.LeakyReLU() default (linear stages only)
C16 = 16
SLOT = 32             # lanes per channel slot in the packed layout
PACKW = C16 * SLOT    # 512
DN_LAST = (((1,), (1,)), ((), ()))   # dot_general: contract last dim of both


# ----------------------------------------------------------------------------
# In-kernel helpers.
# ----------------------------------------------------------------------------
def _sum11(t):
    """Full sum of a 2-D tile as a (1, 1) array (keepdims reductions only)."""
    return jnp.sum(jnp.sum(t, axis=1, keepdims=True), axis=0, keepdims=True)


def _leaky(t, slope):
    return jnp.where(t >= 0.0, t, slope * t)


# ----------------------------------------------------------------------------
# The fused kernel.
# ----------------------------------------------------------------------------
def _autoencoder_kernel(
    # inputs ----------------------------------------------------------------
    x_ref,                                     # (B,1,28,28)              VMEM
    t1_ref, b1l_ref, g1_ref, be1_ref,          # (3,28,512),(1,512),(1,16),(1,16)
    u2_ref, b2_ref, g2_ref, be2_ref,           # (3,24,512) VMEM, (1,)x3 SMEM
    we_ref, bE_ref,                            # (8,24,24) VMEM, (8,) SMEM
    wd_ref, bD_ref,                            # (8,24,24) VMEM, (24,24) VMEM
    t3_ref, b3l_ref, g3_ref, be3_ref,          # deconv1 Toeplitz / BN(16)
    u4_ref, b4_ref, g4_ref, be4_ref,           # (3,28,512) VMEM, (1,)x3 SMEM
    sel_ref, bc_ref,                           # (512,16),(16,512)        VMEM
    # output ----------------------------------------------------------------
    o_ref,                                     # (B,1,28,28)              VMEM
    # scratch ---------------------------------------------------------------
    a1_sc,                                     # (B,26,512) packed post-BN1
    pad1_sc,                                   # (B,28,28)  zero-padded deconv1 input
    pad2_sc,                                   # (B,30,512) zero-padded packed deconv2 input
):
    B = x_ref.shape[0]
    f32 = jnp.float32

    # Bulk zero-fill of the padded scratch buffers (single whole-ref stores).
    pad1_sc[...] = jnp.zeros(pad1_sc.shape, f32)
    pad2_sc[...] = jnp.zeros(pad2_sc.shape, f32)

    sel = sel_ref[...]          # (512, 16) valid-lane -> channel selector
    bcast = bc_ref[...]         # (16, 512) channel -> lane-slot broadcaster

    # ---------------- conv1: Conv2d(1,16,3) -> packed (26, 16*32) -----------
    y1 = []
    s16 = jnp.zeros((1, C16), f32)
    ss16 = jnp.zeros((1, C16), f32)
    for b in range(B):
        acc = jnp.dot(x_ref[b, 0, 0:26, :], t1_ref[0], preferred_element_type=f32)
        acc = acc + jnp.dot(x_ref[b, 0, 1:27, :], t1_ref[1], preferred_element_type=f32)
        acc = acc + jnp.dot(x_ref[b, 0, 2:28, :], t1_ref[2], preferred_element_type=f32)
        acc = acc + b1l_ref[...]
        y1.append(acc)
        # Per-channel partial sums via one matmul against the slot selector.
        s16 = s16 + jnp.sum(jnp.dot(acc, sel, preferred_element_type=f32),
                            axis=0, keepdims=True)
        ss16 = ss16 + jnp.sum(jnp.dot(acc * acc, sel, preferred_element_type=f32),
                              axis=0, keepdims=True)

    # ---------------- BN(16)   [LeakyReLU(True) == slope 1.0 -> identity] ---
    inv_n1 = 1.0 / float(B * 26 * 26)
    mean1 = s16 * inv_n1
    var1 = ss16 * inv_n1 - mean1 * mean1
    scale1 = g1_ref[...] * lax.rsqrt(var1 + EPS)
    shift1 = be1_ref[...] - mean1 * scale1
    scale1_sl = jnp.dot(jnp.broadcast_to(scale1, (26, C16)), bcast,
                        preferred_element_type=f32)
    shift1_sl = jnp.dot(jnp.broadcast_to(shift1, (26, C16)), bcast,
                        preferred_element_type=f32)
    for b in range(B):
        a1_sc[b, :, :] = y1[b] * scale1_sl + shift1_sl

    # ---------------- conv2: Conv2d(16,1,3) + BN(1) --------------------------
    y2 = []
    s2 = jnp.zeros((1, 1), f32)
    ss2 = jnp.zeros((1, 1), f32)
    for b in range(B):
        acc = lax.dot_general(a1_sc[b, 0:24, :], u2_ref[0], DN_LAST,
                              preferred_element_type=f32)
        acc = acc + lax.dot_general(a1_sc[b, 1:25, :], u2_ref[1], DN_LAST,
                                    preferred_element_type=f32)
        acc = acc + lax.dot_general(a1_sc[b, 2:26, :], u2_ref[2], DN_LAST,
                                    preferred_element_type=f32)
        acc = acc + b2_ref[0]
        y2.append(acc)
        s2 = s2 + _sum11(acc)
        ss2 = ss2 + _sum11(acc * acc)
    inv_n2 = 1.0 / float(B * 24 * 24)
    mean2 = s2 * inv_n2
    var2 = ss2 * inv_n2 - mean2 * mean2
    scale2 = g2_ref[0] * lax.rsqrt(var2 + EPS)
    shift2 = be2_ref[0] - mean2 * scale2
    a2 = [y2[b] * scale2 + shift2 for b in range(B)]     # identity activation

    # ---------------- encoder_linear (576->8) + decoder_linear (8->576) ------
    for b in range(B):
        lat = []
        for o in range(8):
            v = _sum11(we_ref[o] * a2[b]) + bE_ref[o]
            lat.append(_leaky(v, LRELU_SLOPE))
        dec = bD_ref[...]
        for o in range(8):
            dec = dec + wd_ref[o] * lat[o]
        # Decoder-linear output goes straight into the zero-padded deconv1 input.
        pad1_sc[b, 2:26, 2:26] = _leaky(dec, LRELU_SLOPE)

    # ---------------- deconv1: ConvTranspose2d(1,16,3) + BN(16) -------------
    y3 = []
    s16 = jnp.zeros((1, C16), f32)
    ss16 = jnp.zeros((1, C16), f32)
    for b in range(B):
        acc = jnp.dot(pad1_sc[b, 0:26, :], t3_ref[0], preferred_element_type=f32)
        acc = acc + jnp.dot(pad1_sc[b, 1:27, :], t3_ref[1], preferred_element_type=f32)
        acc = acc + jnp.dot(pad1_sc[b, 2:28, :], t3_ref[2], preferred_element_type=f32)
        acc = acc + b3l_ref[...]
        y3.append(acc)
        s16 = s16 + jnp.sum(jnp.dot(acc, sel, preferred_element_type=f32),
                            axis=0, keepdims=True)
        ss16 = ss16 + jnp.sum(jnp.dot(acc * acc, sel, preferred_element_type=f32),
                              axis=0, keepdims=True)
    inv_n3 = 1.0 / float(B * 26 * 26)
    mean3 = s16 * inv_n3
    var3 = ss16 * inv_n3 - mean3 * mean3
    scale3 = g3_ref[...] * lax.rsqrt(var3 + EPS)
    shift3 = be3_ref[...] - mean3 * scale3
    scale3_sl = jnp.dot(jnp.broadcast_to(scale3, (26, C16)), bcast,
                        preferred_element_type=f32)
    shift3_sl = jnp.dot(jnp.broadcast_to(shift3, (26, C16)), bcast,
                        preferred_element_type=f32)
    for b in range(B):
        # Rows 0,1,28,29 (and the width padding, baked into U4) stay zero.
        pad2_sc[b, 2:28, :] = y3[b] * scale3_sl + shift3_sl

    # ---------------- deconv2: ConvTranspose2d(16,1,3) + BN(1) + Sigmoid ----
    y4 = []
    s4 = jnp.zeros((1, 1), f32)
    ss4 = jnp.zeros((1, 1), f32)
    for b in range(B):
        acc = lax.dot_general(pad2_sc[b, 0:28, :], u4_ref[0], DN_LAST,
                              preferred_element_type=f32)
        acc = acc + lax.dot_general(pad2_sc[b, 1:29, :], u4_ref[1], DN_LAST,
                                    preferred_element_type=f32)
        acc = acc + lax.dot_general(pad2_sc[b, 2:30, :], u4_ref[2], DN_LAST,
                                    preferred_element_type=f32)
        acc = acc + b4_ref[0]
        y4.append(acc)
        s4 = s4 + _sum11(acc)
        ss4 = ss4 + _sum11(acc * acc)
    inv_n4 = 1.0 / float(B * 28 * 28)
    mean4 = s4 * inv_n4
    var4 = ss4 * inv_n4 - mean4 * mean4
    scale4 = g4_ref[0] * lax.rsqrt(var4 + EPS)
    shift4 = be4_ref[0] - mean4 * scale4
    for b in range(B):
        v = y4[b] * scale4 + shift4               # LeakyReLU(True) -> identity
        # Numerically-stable sigmoid (single exp on the EUP), output in [0, 1].
        e = jnp.exp(-jnp.abs(v))
        r = 1.0 / (1.0 + e)
        o_ref[b, 0, :, :] = jnp.where(v >= 0.0, r, e * r)


# ----------------------------------------------------------------------------
# One-time parameter preparation (hoisted out of the per-forward path):
# builds the width-Toeplitz matmul slabs, packed biases and BN helper matrices.
# ----------------------------------------------------------------------------
def prepare_params(p):
    f32 = np.float32
    K1 = np.asarray(p['conv1_w'], f32)[:, 0]                  # (16,3,3)
    K2 = np.asarray(p['conv2_w'], f32)[0]                     # (16,3,3)
    K3 = np.asarray(p['deconv1_w'], f32)[0, :, ::-1, ::-1]    # flipped, (16,3,3)
    K4 = np.asarray(p['deconv2_w'], f32)[:, 0, ::-1, ::-1]    # flipped, (16,3,3)

    # 1->16 conv as 3 matmuls:  y[i, c*32+wo] = sum_di (x[di:di+26,:] @ T[di])
    def toeplitz_expand(K, w_in, w_out_n):
        T = np.zeros((3, w_in, PACKW), f32)
        for c in range(C16):
            for di in range(3):
                for dj in range(3):
                    for wo in range(w_out_n):
                        T[di, wo + dj, c * SLOT + wo] = K[c, di, dj]
        return jnp.asarray(T)

    # 16->1 conv as 3 dot_generals (contract packed lanes); `in_off` absorbs
    # the ConvTranspose width zero-padding into the band offset.
    def toeplitz_contract(K, w_out_n, w_valid, in_off):
        U = np.zeros((3, w_out_n, PACKW), f32)
        for c in range(C16):
            for di in range(3):
                for dj in range(3):
                    for wo in range(w_out_n):
                        wi = wo + dj - in_off
                        if 0 <= wi < w_valid:
                            U[di, wo, c * SLOT + wi] = K[c, di, dj]
        return jnp.asarray(U)

    def lane_bias(bias):
        v = np.zeros((1, PACKW), f32)
        for c in range(C16):
            v[0, c * SLOT:c * SLOT + 26] = bias[c]
        return jnp.asarray(v)

    sel = np.zeros((PACKW, C16), f32)          # valid lanes -> channel sums
    for c in range(C16):
        sel[c * SLOT:c * SLOT + 26, c] = 1.0
    bc = np.zeros((C16, PACKW), f32)           # channel value -> whole slot
    for c in range(C16):
        bc[c, c * SLOT:(c + 1) * SLOT] = 1.0

    return {
        't1': toeplitz_expand(K1, 28, 26),
        'b1l': lane_bias(np.asarray(p['conv1_b'], f32)),
        'g1': jnp.asarray(np.asarray(p['bn1_g'], f32).reshape(1, C16)),
        'be1': jnp.asarray(np.asarray(p['bn1_b'], f32).reshape(1, C16)),
        'u2t': toeplitz_contract(K2, 24, 26, 0),
        'b2': jnp.asarray(np.asarray(p['conv2_b'], f32).reshape(1)),
        'g2': jnp.asarray(np.asarray(p['bn2_g'], f32).reshape(1)),
        'be2': jnp.asarray(np.asarray(p['bn2_b'], f32).reshape(1)),
        'we': jnp.asarray(np.asarray(p['enc_lin_w'], f32).reshape(8, 24, 24)),
        'bE': jnp.asarray(np.asarray(p['enc_lin_b'], f32)),
        'wd': jnp.asarray(np.asarray(p['dec_lin_w'], f32).T.reshape(8, 24, 24)),
        'bD': jnp.asarray(np.asarray(p['dec_lin_b'], f32).reshape(24, 24)),
        't3': toeplitz_expand(K3, 28, 26),
        'b3l': lane_bias(np.asarray(p['deconv1_b'], f32)),
        'g3': jnp.asarray(np.asarray(p['bn3_g'], f32).reshape(1, C16)),
        'be3': jnp.asarray(np.asarray(p['bn3_b'], f32).reshape(1, C16)),
        'u4t': toeplitz_contract(K4, 28, 26, 2),
        'b4': jnp.asarray(np.asarray(p['deconv2_b'], f32).reshape(1)),
        'g4': jnp.asarray(np.asarray(p['bn4_g'], f32).reshape(1)),
        'be4': jnp.asarray(np.asarray(p['bn4_b'], f32).reshape(1)),
        'sel': jnp.asarray(sel),
        'bc': jnp.asarray(bc),
    }


# ----------------------------------------------------------------------------
# Forward: one pallas_call for the whole network.
# ----------------------------------------------------------------------------
def autoencoder_forward(x_nchw, pp):
    B = x_nchw.shape[0]
    vmem = pl.BlockSpec(memory_space=pltpu.MemorySpace.VMEM)
    smem = pl.BlockSpec(memory_space=pltpu.MemorySpace.SMEM)

    args = [
        x_nchw.astype(jnp.float32),
        pp['t1'], pp['b1l'], pp['g1'], pp['be1'],
        pp['u2t'], pp['b2'], pp['g2'], pp['be2'],
        pp['we'], pp['bE'],
        pp['wd'], pp['bD'],
        pp['t3'], pp['b3l'], pp['g3'], pp['be3'],
        pp['u4t'], pp['b4'], pp['g4'], pp['be4'],
        pp['sel'], pp['bc'],
    ]
    specs = [
        vmem,
        vmem, vmem, vmem, vmem,
        vmem, smem, smem, smem,
        vmem, smem,
        vmem, vmem,
        vmem, vmem, vmem, vmem,
        vmem, smem, smem, smem,
        vmem, vmem,
    ]
    return pl.pallas_call(
        _autoencoder_kernel,
        out_shape=jax.ShapeDtypeStruct((B, 1, 28, 28), jnp.float32),
        in_specs=specs,
        out_specs=vmem,
        scratch_shapes=[
            pltpu.VMEM((B, 26, PACKW), jnp.float32),   # packed post-BN1 activation
            pltpu.VMEM((B, 28, 28), jnp.float32),      # zero-padded deconv1 input
            pltpu.VMEM((B, 30, PACKW), jnp.float32),   # zero-padded packed deconv2 input
        ],
    )(*args)


# ----------------------------------------------------------------------------
# Deterministic parameter init (shapes from Autoencoder.__init__).
# ----------------------------------------------------------------------------
def init_params(key):
    ks = jax.random.split(key, 12)

    def u(k, shape, fan_in):
        bound = 1.0 / jnp.sqrt(jnp.float32(fan_in))
        return jax.random.uniform(k, shape, jnp.float32, -bound, bound)

    return {
        'conv1_w': u(ks[0], (16, 1, 3, 3), 9),    'conv1_b': u(ks[1], (16,), 9),
        'bn1_g': jnp.ones((16,), jnp.float32),    'bn1_b': jnp.zeros((16,), jnp.float32),
        'conv2_w': u(ks[2], (1, 16, 3, 3), 144),  'conv2_b': u(ks[3], (1,), 144),
        'bn2_g': jnp.ones((1,), jnp.float32),     'bn2_b': jnp.zeros((1,), jnp.float32),
        'enc_lin_w': u(ks[4], (8, 576), 576),     'enc_lin_b': u(ks[5], (8,), 576),
        'dec_lin_w': u(ks[6], (576, 8), 8),       'dec_lin_b': u(ks[7], (576,), 8),
        'deconv1_w': u(ks[8], (1, 16, 3, 3), 9),  'deconv1_b': u(ks[9], (16,), 9),
        'bn3_g': jnp.ones((16,), jnp.float32),    'bn3_b': jnp.zeros((16,), jnp.float32),
        'deconv2_w': u(ks[10], (16, 1, 3, 3), 144), 'deconv2_b': u(ks[11], (1,), 144),
        'bn4_g': jnp.ones((1,), jnp.float32),     'bn4_b': jnp.zeros((1,), jnp.float32),
    }


if __name__ == "__main__":
    key = jax.random.PRNGKey(0)
    k_param, k_x = jax.random.split(key)
    params = init_params(k_param)
    prepped = prepare_params(params)          # one-time weight prep, outside the hot path

    # Input implied by the module: 28x28 single-channel images, NCHW.
    x = jax.random.uniform(k_x, (2, 1, 28, 28), jnp.float32)

    fwd = jax.jit(autoencoder_forward)
    out = jax.block_until_ready(fwd(x, prepped))

    assert out.shape == (2, 1, 28, 28), out.shape
    assert out.dtype == jnp.float32
    assert bool(jnp.all(jnp.isfinite(out)))
    assert bool(jnp.all((out >= 0.0) & (out <= 1.0)))  # sigmoid output range

    print("KERNEL_OK")
</pallas_src>

<mosaic_0001>
module attributes {stable_mosaic.version = 11 : i64} {
  func.func @_autoencoder_kernel(%arg0: memref<2x1x28x28xf32, #tpu.memory_space<vmem>>, %arg1: memref<3x28x512xf32, #tpu.memory_space<vmem>>, %arg2: memref<1x512xf32, #tpu.memory_space<vmem>>, %arg3: memref<1x16xf32, #tpu.memory_space<vmem>>, %arg4: memref<1x16xf32, #tpu.memory_space<vmem>>, %arg5: memref<3x24x512xf32, #tpu.memory_space<vmem>>, %arg6: memref<1xf32, #tpu.memory_space<smem>>, %arg7: memref<1xf32, #tpu.memory_space<smem>>, %arg8: memref<1xf32, #tpu.memory_space<smem>>, %arg9: memref<8x24x24xf32, #tpu.memory_space<vmem>>, %arg10: memref<8xf32, #tpu.memory_space<smem>>, %arg11: memref<8x24x24xf32, #tpu.memory_space<vmem>>, %arg12: memref<24x24xf32, #tpu.memory_space<vmem>>, %arg13: memref<3x28x512xf32, #tpu.memory_space<vmem>>, %arg14: memref<1x512xf32, #tpu.memory_space<vmem>>, %arg15: memref<1x16xf32, #tpu.memory_space<vmem>>, %arg16: memref<1x16xf32, #tpu.memory_space<vmem>>, %arg17: memref<3x28x512xf32, #tpu.memory_space<vmem>>, %arg18: memref<1xf32, #tpu.memory_space<smem>>, %arg19: memref<1xf32, #tpu.memory_space<smem>>, %arg20: memref<1xf32, #tpu.memory_space<smem>>, %arg21: memref<512x16xf32, #tpu.memory_space<vmem>>, %arg22: memref<16x512xf32, #tpu.memory_space<vmem>>, %arg23: memref<2x1x28x28xf32, #tpu.memory_space<vmem>>, %arg24: memref<2x26x512xf32, #tpu.memory_space<vmem>>, %arg25: memref<2x28x28xf32, #tpu.memory_space<vmem>>, %arg26: memref<2x30x512xf32, #tpu.memory_space<vmem>>) attributes {dimension_semantics = [], scalar_prefetch = 0 : i64, scratch_operands = 3 : i64, tpu.core_type = #tpu.core_type<tc>} {
    %cst = arith.constant 0.000000e+00 : f32
    %0 = vector.broadcast %cst : f32 to vector<2x28x28xf32>
    %c0 = arith.constant 0 : index
    %c0_0 = arith.constant 0 : index
    %c0_1 = arith.constant 0 : index
    %1 = vector.load %arg25[%c0, %c0_0, %c0_1] : memref<2x28x28xf32, #tpu.memory_space<vmem>>, vector<2x28x28xf32>
    tpu.vector_store %arg25[%c0, %c0_0, %c0_1], %0 {strides = array<i32>} : memref<2x28x28xf32, #tpu.memory_space<vmem>>, vector<2x28x28xf32>,
    %cst_2 = arith.constant 0.000000e+00 : f32
    %2 = vector.broadcast %cst_2 : f32 to vector<2x30x512xf32>
    %c0_3 = arith.constant 0 : index
    %c0_4 = arith.constant 0 : index
    %c0_5 = arith.constant 0 : index
    %3 = vector.load %arg26[%c0_3, %c0_4, %c0_5] : memref<2x30x512xf32, #tpu.memory_space<vmem>>, vector<2x30x512xf32>
    tpu.vector_store %arg26[%c0_3, %c0_4, %c0_5], %2 {strides = array<i32>} : memref<2x30x512xf32, #tpu.memory_space<vmem>>, vector<2x30x512xf32>,
    %c0_6 = arith.constant 0 : index
    %c0_7 = arith.constant 0 : index
    %4 = vector.load %arg21[%c0_6, %c0_7] : memref<512x16xf32, #tpu.memory_space<vmem>>, vector<512x16xf32>
    %c0_8 = arith.constant 0 : index
    %c0_9 = arith.constant 0 : index
    %5 = vector.load %arg22[%c0_8, %c0_9] : memref<16x512xf32, #tpu.memory_space<vmem>>, vector<16x512xf32>
    %cst_10 = arith.constant 0.000000e+00 : f32
    %6 = vector.broadcast %cst_10 : f32 to vector<1x16xf32>
    %cst_11 = arith.constant 0.000000e+00 : f32
    %7 = vector.broadcast %cst_11 : f32 to vector<1x16xf32>
    %c0_12 = arith.constant 0 : index
    %c0_13 = arith.constant 0 : index
    %c0_14 = arith.constant 0 : index
    %c0_15 = arith.constant 0 : index
    %8 = vector.load %arg0[%c0_12, %c0_13, %c0_14, %c0_15] : memref<2x1x28x28xf32, #tpu.memory_space<vmem>>, vector<1x1x26x28xf32>
    %9 = vector.shape_cast %8 : vector<1x1x26x28xf32> to vector<26x28xf32>
    %c0_16 = arith.constant 0 : index
    %c0_17 = arith.constant 0 : index
    %c0_18 = arith.constant 0 : index
    %10 = vector.load %arg1[%c0_16, %c0_17, %c0_18] : memref<3x28x512xf32, #tpu.memory_space<vmem>>, vector<1x28x512xf32>
    %11 = vector.shape_cast %10 : vector<1x28x512xf32> to vector<28x512xf32>
    %cst_19 = arith.constant dense<0.000000e+00> : vector<26x512xf32>
    %12 = tpu.matmul %9, %11, %cst_19 {dimension_numbers = #tpu.dot_dimension_numbers<[1], [0], [0], [1], [0, 0, 1, 1], [], []>} : vector<26x28xf32>, vector<28x512xf32>, vector<26x512xf32> -> vector<26x512xf32>
    %c0_20 = arith.constant 0 : index
    %c0_21 = arith.constant 0 : index
    %c1 = arith.constant 1 : index
    %c0_22 = arith.constant 0 : index
    %13 = vector.load %arg0[%c0_20, %c0_21, %c1, %c0_22] : memref<2x1x28x28xf32, #tpu.memory_space<vmem>>, vector<1x1x26x28xf32>
    %14 = vector.shape_cast %13 : vector<1x1x26x28xf32> to vector<26x28xf32>
    %c1_23 = arith.constant 1 : index
    %c0_24 = arith.constant 0 : index
    %c0_25 = arith.constant 0 : index
    %15 = vector.load %arg1[%c1_23, %c0_24, %c0_25] : memref<3x28x512xf32, #tpu.memory_space<vmem>>, vector<1x28x512xf32>
    %16 = vector.shape_cast %15 : vector<1x28x512xf32> to vector<28x512xf32>
    %cst_26 = arith.constant dense<0.000000e+00> : vector<26x512xf32>
    %17 = tpu.matmul %14, %16, %cst_26 {dimension_numbers = #tpu.dot_dimension_numbers<[1], [0], [0], [1], [0, 0, 1, 1], [], []>} : vector<26x28xf32>, vector<28x512xf32>, vector<26x512xf32> -> vector<26x512xf32>
    %18 = arith.addf %12, %17 : vector<26x512xf32>
    %c0_27 = arith.constant 0 : index
    %c0_28 = arith.constant 0 : index
    %c2 = arith.constant 2 : index
    %c0_29 = arith.constant 0 : index
    %19 = vector.load %arg0[%c0_27, %c0_28, %c2, %c0_29] : memref<2x1x28x28xf32, #tpu.memory_space<vmem>>, vector<1x1x26x28xf32>
    %20 = vector.shape_cast %19 : vector<1x1x26x28xf32> to vector<26x28xf32>
    %c2_30 = arith.constant 2 : index
    %c0_31 = arith.constant 0 : index
    %c0_32 = arith.constant 0 : index
    %21 = vector.load %arg1[%c2_30, %c0_31, %c0_32] : memref<3x28x512xf32, #tpu.memory_space<vmem>>, vector<1x28x512xf32>
    %22 = vector.shape_cast %21 : vector<1x28x512xf32> to vector<28x512xf32>
    %cst_33 = arith.constant dense<0.000000e+00> : vector<26x512xf32>
    %23 = tpu.matmul %20, %22, %cst_33 {dimension_numbers = #tpu.dot_dimension_numbers<[1], [0], [0], [1], [0, 0, 1, 1], [], []>} : vector<26x28xf32>, vector<28x512xf32>, vector<26x512xf32> -> vector<26x512xf32>
    %24 = arith.addf %18, %23 : vector<26x512xf32>
    %c0_34 = arith.constant 0 : index
    %c0_35 = arith.constant 0 : index
    %25 = vector.load %arg2[%c0_34, %c0_35] : memref<1x512xf32, #tpu.memory_space<vmem>>, vector<1x512xf32>
    %26 = vector.broadcast %25 : vector<1x512xf32> to vector<26x512xf32>
    %27 = arith.addf %24, %26 : vector<26x512xf32>
    %cst_36 = arith.constant dense<0.000000e+00> : vector<26x16xf32>
    %28 = tpu.matmul %27, %4, %cst_36 {dimension_numbers = #tpu.dot_dimension_numbers<[1], [0], [0], [1], [0, 0, 1, 1], [], []>} : vector<26x512xf32>, vector<512x16xf32>, vector<26x16xf32> -> vector<26x16xf32>
    %cst_37 = arith.constant dense<0.000000e+00> : vector<16xf32>
    %29 = vector.multi_reduction <add>, %28, %cst_37 [0] : vector<26x16xf32> to vector<16xf32>
    %30 = vector.shape_cast %29 : vector<16xf32> to vector<1x16xf32>
    %31 = arith.addf %6, %30 : vector<1x16xf32>
    %32 = arith.mulf %27, %27 : vector<26x512xf32>
    %cst_38 = arith.constant dense<0.000000e+00> : vector<26x16xf32>
    %33 = tpu.matmul %32, %4, %cst_38 {dimension_numbers = #tpu.dot_dimension_numbers<[1], [0], [0], [1], [0, 0, 1, 1], [], []>} : vector<26x512xf32>, vector<512x16xf32>, vector<26x16xf32> -> vector<26x16xf32>
    %cst_39 = arith.constant dense<0.000000e+00> : vector<16xf32>
    %34 = vector.multi_reduction <add>, %33, %cst_39 [0] : vector<26x16xf32> to vector<16xf32>
    %35 = vector.shape_cast %34 : vector<16xf32> to vector<1x16xf32>
    %36 = arith.addf %7, %35 : vector<1x16xf32>
    %c1_40 = arith.constant 1 : index
    %c0_41 = arith.constant 0 : index
    %c0_42 = arith.constant 0 : index
    %c0_43 = arith.constant 0 : index
    %37 = vector.load %arg0[%c1_40, %c0_41, %c0_42, %c0_43] : memref<2x1x28x28xf32, #tpu.memory_space<vmem>>, vector<1x1x26x28xf32>
    %38 = vector.shape_cast %37 : vector<1x1x26x28xf32> to vector<26x28xf32>
    %c0_44 = arith.constant 0 : index
    %c0_45 = arith.constant 0 : index
    %c0_46 = arith.constant 0 : index
    %39 = vector.load %arg1[%c0_44, %c0_45, %c0_46] : memref<3x28x512xf32, #tpu.memory_space<vmem>>, vector<1x28x512xf32>
    %40 = vector.shape_cast %39 : vector<1x28x512xf32> to vector<28x512xf32>
    %cst_47 = arith.constant dense<0.000000e+00> : vector<26x512xf32>
    %41 = tpu.matmul %38, %40, %cst_47 {dimension_numbers = #tpu.dot_dimension_numbers<[1], [0], [0], [1], [0, 0, 1, 1], [], []>} : vector<26x28xf32>, vector<28x512xf32>, vector<26x512xf32> -> vector<26x512xf32>
    %c1_48 = arith.constant 1 : index
    %c0_49 = arith.constant 0 : index
    %c1_50 = arith.constant 1 : index
    %c0_51 = arith.constant 0 : index
    %42 = vector.load %arg0[%c1_48, %c0_49, %c1_50, %c0_51] : memref<2x1x28x28xf32, #tpu.memory_space<vmem>>, vector<1x1x26x28xf32>
    %43 = vector.shape_cast %42 : vector<1x1x26x28xf32> to vector<26x28xf32>
    %c1_52 = arith.constant 1 : index
    %c0_53 = arith.constant 0 : index
    %c0_54 = arith.constant 0 : index
    %44 = vector.load %arg1[%c1_52, %c0_53, %c0_54] : memref<3x28x512xf32, #tpu.memory_space<vmem>>, vector<1x28x512xf32>
    %45 = vector.shape_cast %44 : vector<1x28x512xf32> to vector<28x512xf32>
    %cst_55 = arith.constant dense<0.000000e+00> : vector<26x512xf32>
    %46 = tpu.matmul %43, %45, %cst_55 {dimension_numbers = #tpu.dot_dimension_numbers<[1], [0], [0], [1], [0, 0, 1, 1], [], []>} : vector<26x28xf32>, vector<28x512xf32>, vector<26x512xf32> -> vector<26x512xf32>
    %47 = arith.addf %41, %46 : vector<26x512xf32>
    %c1_56 = arith.constant 1 : index
    %c0_57 = arith.constant 0 : index
    %c2_58 = arith.constant 2 : index
    %c0_59 = arith.constant 0 : index
    %48 = vector.load %arg0[%c1_56, %c0_57, %c2_58, %c0_59] : memref<2x1x28x28xf32, #tpu.memory_space<vmem>>, vector<1x1x26x28xf32>
    %49 = vector.shape_cast %48 : vector<1x1x26x28xf32> to vector<26x28xf32>
    %c2_60 = arith.constant 2 : index
    %c0_61 = arith.constant 0 : index
    %c0_62 = arith.constant 0 : index
    %50 = vector.load %arg1[%c2_60, %c0_61, %c0_62] : memref<3x28x512xf32, #tpu.memory_space<vmem>>, vector<1x28x512xf32>
    %51 = vector.shape_cast %50 : vector<1x28x512xf32> to vector<28x512xf32>
    %cst_63 = arith.constant dense<0.000000e+00> : vector<26x512xf32>
    %52 = tpu.matmul %49, %51, %cst_63 {dimension_numbers = #tpu.dot_dimension_numbers<[1], [0], [0], [1], [0, 0, 1, 1], [], []>} : vector<26x28xf32>, vector<28x512xf32>, vector<26x512xf32> -> vector<26x512xf32>
    %53 = arith.addf %47, %52 : vector<26x512xf32>
    %c0_64 = arith.constant 0 : index
    %c0_65 = arith.constant 0 : index
    %54 = vector.load %arg2[%c0_64, %c0_65] : memref<1x512xf32, #tpu.memory_space<vmem>>, vector<1x512xf32>
    %55 = vector.broadcast %54 : vector<1x512xf32> to vector<26x512xf32>
    %56 = arith.addf %53, %55 : vector<26x512xf32>
    %cst_66 = arith.constant dense<0.000000e+00> : vector<26x16xf32>
    %57 = tpu.matmul %56, %4, %cst_66 {dimension_numbers = #tpu.dot_dimension_numbers<[1], [0], [0], [1], [0, 0, 1, 1], [], []>} : vector<26x512xf32>, vector<512x16xf32>, vector<26x16xf32> -> vector<26x16xf32>
    %cst_67 = arith.constant dense<0.000000e+00> : vector<16xf32>
    %58 = vector.multi_reduction <add>, %57, %cst_67 [0] : vector<26x16xf32> to vector<16xf32>
    %59 = vector.shape_cast %58 : vector<16xf32> to vector<1x16xf32>
    %60 = arith.addf %31, %59 : vector<1x16xf32>
    %61 = arith.mulf %56, %56 : vector<26x512xf32>
    %cst_68 = arith.constant dense<0.000000e+00> : vector<26x16xf32>
    %62 = tpu.matmul %61, %4, %cst_68 {dimension_numbers = #tpu.dot_dimension_numbers<[1], [0], [0], [1], [0, 0, 1, 1], [], []>} : vector<26x512xf32>, vector<512x16xf32>, vector<26x16xf32> -> vector<26x16xf32>
    %cst_69 = arith.constant dense<0.000000e+00> : vector<16xf32>
    %63 = vector.multi_reduction <add>, %62, %cst_69 [0] : vector<26x16xf32> to vector<16xf32>
    %64 = vector.shape_cast %63 : vector<16xf32> to vector<1x16xf32>
    %65 = arith.addf %36, %64 : vector<1x16xf32>
    %cst_70 = arith.constant 7.396450e-04 : f32
    %66 = vector.broadcast %cst_70 : f32 to vector<1x16xf32>
    %67 = arith.mulf %60, %66 : vector<1x16xf32>
    %cst_71 = arith.constant 7.396450e-04 : f32
    %68 = vector.broadcast %cst_71 : f32 to vector<1x16xf32>
    %69 = arith.mulf %65, %68 : vector<1x16xf32>
    %70 = arith.mulf %67, %67 : vector<1x16xf32>
    %71 = arith.subf %69, %70 : vector<1x16xf32>
    %c0_72 = arith.constant 0 : index
    %c0_73 = arith.constant 0 : index
    %72 = vector.load %arg3[%c0_72, %c0_73] : memref<1x16xf32, #tpu.memory_space<vmem>>, vector<1x16xf32>
    %cst_74 = arith.constant 9.99999974E-6 : f32
    %73 = vector.broadcast %cst_74 : f32 to vector<1x16xf32>
    %74 = arith.addf %71, %73 : vector<1x16xf32>
    %75 = math.rsqrt %74 : vector<1x16xf32>
    %76 = arith.mulf %72, %75 : vector<1x16xf32>
    %c0_75 = arith.constant 0 : index
    %c0_76 = arith.constant 0 : index
    %77 = vector.load %arg4[%c0_75, %c0_76] : memref<1x16xf32, #tpu.memory_space<vmem>>, vector<1x16xf32>
    %78 = arith.mulf %67, %76 : vector<1x16xf32>
    %79 = arith.subf %77, %78 : vector<1x16xf32>
    %80 = vector.shape_cast %76 : vector<1x16xf32> to vector<1x16xf32>
    %81 = vector.broadcast %80 : vector<1x16xf32> to vector<26x16xf32>
    %cst_77 = arith.constant dense<0.000000e+00> : vector<26x512xf32>
    %82 = tpu.matmul %81, %5, %cst_77 {dimension_numbers = #tpu.dot_dimension_numbers<[1], [0], [0], [1], [0, 0, 1, 1], [], []>} : vector<26x16xf32>, vector<16x512xf32>, vector<26x512xf32> -> vector<26x512xf32>
    %83 = vector.shape_cast %79 : vector<1x16xf32> to vector<1x16xf32>
    %84 = vector.broadcast %83 : vector<1x16xf32> to vector<26x16xf32>
    %cst_78 = arith.constant dense<0.000000e+00> : vector<26x512xf32>
    %85 = tpu.matmul %84, %5, %cst_78 {dimension_numbers = #tpu.dot_dimension_numbers<[1], [0], [0], [1], [0, 0, 1, 1], [], []>} : vector<26x16xf32>, vector<16x512xf32>, vector<26x512xf32> -> vector<26x512xf32>
    %86 = arith.mulf %27, %82 : vector<26x512xf32>
    %87 = arith.addf %86, %85 : vector<26x512xf32>
    %c0_79 = arith.constant 0 : index
    %c0_80 = arith.constant 0 : index
    %c0_81 = arith.constant 0 : index
    %88 = vector.load %arg24[%c0_79, %c0_80, %c0_81] : memref<2x26x512xf32, #tpu.memory_space<vmem>>, vector<1x26x512xf32>
    %89 = vector.shape_cast %88 : vector<1x26x512xf32> to vector<26x512xf32>
    %90 = vector.shape_cast %87 : vector<26x512xf32> to vector<1x26x512xf32>
    tpu.vector_store %arg24[%c0_79, %c0_80, %c0_81], %90 {strides = array<i32>} : memref<2x26x512xf32, #tpu.memory_space<vmem>>, vector<1x26x512xf32>,
    %91 = arith.mulf %56, %82 : vector<26x512xf32>
    %92 = arith.addf %91, %85 : vector<26x512xf32>
    %c1_82 = arith.constant 1 : index
    %c0_83 = arith.constant 0 : index
    %c0_84 = arith.constant 0 : index
    %93 = vector.load %arg24[%c1_82, %c0_83, %c0_84] : memref<2x26x512xf32, #tpu.memory_space<vmem>>, vector<1x26x512xf32>
    %94 = vector.shape_cast %93 : vector<1x26x512xf32> to vector<26x512xf32>
    %95 = vector.shape_cast %92 : vector<26x512xf32> to vector<1x26x512xf32>
    tpu.vector_store %arg24[%c1_82, %c0_83, %c0_84], %95 {strides = array<i32>} : memref<2x26x512xf32, #tpu.memory_space<vmem>>, vector<1x26x512xf32>,
    %cst_85 = arith.constant 0.000000e+00 : f32
    %96 = vector.broadcast %cst_85 : f32 to vector<1x1xf32>
    %cst_86 = arith.constant 0.000000e+00 : f32
    %97 = vector.broadcast %cst_86 : f32 to vector<1x1xf32>
    %c0_87 = arith.constant 0 : index
    %c0_88 = arith.constant 0 : index
    %c0_89 = arith.constant 0 : index
    %98 = vector.load %arg24[%c0_87, %c0_88, %c0_89] : memref<2x26x512xf32, #tpu.memory_space<vmem>>, vector<1x24x512xf32>
    %99 = vector.shape_cast %98 : vector<1x24x512xf32> to vector<24x512xf32>
    %c0_90 = arith.constant 0 : index
    %c0_91 = arith.constant 0 : index
    %c0_92 = arith.constant 0 : index
    %100 = vector.load %arg5[%c0_90, %c0_91, %c0_92] : memref<3x24x512xf32, #tpu.memory_space<vmem>>, vector<1x24x512xf32>
    %101 = vector.shape_cast %100 : vector<1x24x512xf32> to vector<24x512xf32>
    %cst_93 = arith.constant dense<0.000000e+00> : vector<24x24xf32>
    %102 = tpu.matmul %99, %101, %cst_93 {dimension_numbers = #tpu.dot_dimension_numbers<[1], [1], [0], [0], [0, 0, 1, 0], [], []>} : vector<24x512xf32>, vector<24x512xf32>, vector<24x24xf32> -> vector<24x24xf32>
    %c0_94 = arith.constant 0 : index
    %c1_95 = arith.constant 1 : index
    %c0_96 = arith.constant 0 : index
    %103 = vector.load %arg24[%c0_94, %c1_95, %c0_96] : memref<2x26x512xf32, #tpu.memory_space<vmem>>, vector<1x24x512xf32>
    %104 = vector.shape_cast %103 : vector<1x24x512xf32> to vector<24x512xf32>
    %c1_97 = arith.constant 1 : index
    %c0_98 = arith.constant 0 : index
    %c0_99 = arith.constant 0 : index
    %105 = vector.load %arg5[%c1_97, %c0_98, %c0_99] : memref<3x24x512xf32, #tpu.memory_space<vmem>>, vector<1x24x512xf32>
    %106 = vector.shape_cast %105 : vector<1x24x512xf32> to vector<24x512xf32>
    %cst_100 = arith.constant dense<0.000000e+00> : vector<24x24xf32>
    %107 = tpu.matmul %104, %106, %cst_100 {dimension_numbers = #tpu.dot_dimension_numbers<[1], [1], [0], [0], [0, 0, 1, 0], [], []>} : vector<24x512xf32>, vector<24x512xf32>, vector<24x24xf32> -> vector<24x24xf32>
    %108 = arith.addf %102, %107 : vector<24x24xf32>
    %c0_101 = arith.constant 0 : index
    %c2_102 = arith.constant 2 : index
    %c0_103 = arith.constant 0 : index
    %109 = vector.load %arg24[%c0_101, %c2_102, %c0_103] : memref<2x26x512xf32, #tpu.memory_space<vmem>>, vector<1x24x512xf32>
    %110 = vector.shape_cast %109 : vector<1x24x512xf32> to vector<24x512xf32>
    %c2_104 = arith.constant 2 : index
    %c0_105 = arith.constant 0 : index
    %c0_106 = arith.constant 0 : index
    %111 = vector.load %arg5[%c2_104, %c0_105, %c0_106] : memref<3x24x512xf32, #tpu.memory_space<vmem>>, vector<1x24x512xf32>
    %112 = vector.shape_cast %111 : vector<1x24x512xf32> to vector<24x512xf32>
    %cst_107 = arith.constant dense<0.000000e+00> : vector<24x24xf32>
    %113 = tpu.matmul %110, %112, %cst_107 {dimension_numbers = #tpu.dot_dimension_numbers<[1], [1], [0], [0], [0, 0, 1, 0], [], []>} : vector<24x512xf32>, vector<24x512xf32>, vector<24x24xf32> -> vector<24x24xf32>
    %114 = arith.addf %108, %113 : vector<24x24xf32>
    %c0_108 = arith.constant 0 : index
    %115 = memref.load %arg6[%c0_108] : memref<1xf32, #tpu.memory_space<smem>>
    %116 = vector.broadcast %115 : f32 to vector<24x24xf32>
    %117 = arith.addf %114, %116 : vector<24x24xf32>
    %cst_109 = arith.constant dense<0.000000e+00> : vector<24xf32>
    %118 = vector.multi_reduction <add>, %117, %cst_109 [1] : vector<24x24xf32> to vector<24xf32>
    %119 = vector.shape_cast %118 : vector<24xf32> to vector<24x1xf32>
    %cst_110 = arith.constant dense<0.000000e+00> : vector<1xf32>
    %120 = vector.multi_reduction <add>, %119, %cst_110 [0] : vector<24x1xf32> to vector<1xf32>
    %121 = vector.shape_cast %120 : vector<1xf32> to vector<1x1xf32>
    %122 = arith.addf %96, %121 : vector<1x1xf32>
    %123 = arith.mulf %117, %117 : vector<24x24xf32>
    %cst_111 = arith.constant dense<0.000000e+00> : vector<24xf32>
    %124 = vector.multi_reduction <add>, %123, %cst_111 [1] : vector<24x24xf32> to vector<24xf32>
    %125 = vector.shape_cast %124 : vector<24xf32> to vector<24x1xf32>
    %cst_112 = arith.constant dense<0.000000e+00> : vector<1xf32>
    %126 = vector.multi_reduction <add>, %125, %cst_112 [0] : vector<24x1xf32> to vector<1xf32>
    %127 = vector.shape_cast %126 : vector<1xf32> to vector<1x1xf32>
    %128 = arith.addf %97, %127 : vector<1x1xf32>
    %c1_113 = arith.constant 1 : index
    %c0_114 = arith.constant 0 : index
    %c0_115 = arith.constant 0 : index
    %129 = vector.load %arg24[%c1_113, %c0_114, %c0_115] : memref<2x26x512xf32, #tpu.memory_space<vmem>>, vector<1x24x512xf32>
    %130 = vector.shape_cast %129 : vector<1x24x512xf32> to vector<24x512xf32>
    %c0_116 = arith.constant 0 : index
    %c0_117 = arith.constant 0 : index
    %c0_118 = arith.constant 0 : index
    %131 = vector.load %arg5[%c0_116, %c0_117, %c0_118] : memref<3x24x512xf32, #tpu.memory_space<vmem>>, vector<1x24x512xf32>
    %132 = vector.shape_cast %131 : vector<1x24x512xf32> to vector<24x512xf32>
    %cst_119 = arith.constant dense<0.000000e+00> : vector<24x24xf32>
    %133 = tpu.matmul %130, %132, %cst_119 {dimension_numbers = #tpu.dot_dimension_numbers<[1], [1], [0], [0], [0, 0, 1, 0], [], []>} : vector<24x512xf32>, vector<24x512xf32>, vector<24x24xf32> -> vector<24x24xf32>
    %c1_120 = arith.constant 1 : index
    %c1_121 = arith.constant 1 : index
    %c0_122 = arith.constant 0 : index
    %134 = vector.load %arg24[%c1_120, %c1_121, %c0_122] : memref<2x26x512xf32, #tpu.memory_space<vmem>>, vector<1x24x512xf32>
    %135 = vector.shape_cast %134 : vector<1x24x512xf32> to vector<24x512xf32>
    %c1_123 = arith.constant 1 : index
    %c0_124 = arith.constant 0 : index
    %c0_125 = arith.constant 0 : index
    %136 = vector.load %arg5[%c1_123, %c0_124, %c0_125] : memref<3x24x512xf32, #tpu.memory_space<vmem>>, vector<1x24x512xf32>
    %137 = vector.shape_cast %136 : vector<1x24x512xf32> to vector<24x512xf32>
    %cst_126 = arith.constant dense<0.000000e+00> : vector<24x24xf32>
    %138 = tpu.matmul %135, %137, %cst_126 {dimension_numbers = #tpu.dot_dimension_numbers<[1], [1], [0], [0], [0, 0, 1, 0], [], []>} : vector<24x512xf32>, vector<24x512xf32>, vector<24x24xf32> -> vector<24x24xf32>
    %139 = arith.addf %133, %138 : vector<24x24xf32>
    %c1_127 = arith.constant 1 : index
    %c2_128 = arith.constant 2 : index
    %c0_129 = arith.constant 0 : index
    %140 = vector.load %arg24[%c1_127, %c2_128, %c0_129] : memref<2x26x512xf32, #tpu.memory_space<vmem>>, vector<1x24x512xf32>
    %141 = vector.shape_cast %140 : vector<1x24x512xf32> to vector<24x512xf32>
    %c2_130 = arith.constant 2 : index
    %c0_131 = arith.constant 0 : index
    %c0_132 = arith.constant 0 : index
    %142 = vector.load %arg5[%c2_130, %c0_131, %c0_132] : memref<3x24x512xf32, #tpu.memory_space<vmem>>, vector<1x24x512xf32>
    %143 = vector.shape_cast %142 : vector<1x24x512xf32> to vector<24x512xf32>
    %cst_133 = arith.constant dense<0.000000e+00> : vector<24x24xf32>
    %144 = tpu.matmul %141, %143, %cst_133 {dimension_numbers = #tpu.dot_dimension_numbers<[1], [1], [0], [0], [0, 0, 1, 0], [], []>} : vector<24x512xf32>, vector<24x512xf32>, vector<24x24xf32> -> vector<24x24xf32>
    %145 = arith.addf %139, %144 : vector<24x24xf32>
    %c0_134 = arith.constant 0 : index
    %146 = memref.load %arg6[%c0_134] : memref<1xf32, #tpu.memory_space<smem>>
    %147 = vector.broadcast %146 : f32 to vector<24x24xf32>
    %148 = arith.addf %145, %147 : vector<24x24xf32>
    %cst_135 = arith.constant dense<0.000000e+00> : vector<24xf32>
    %149 = vector.multi_reduction <add>, %148, %cst_135 [1] : vector<24x24xf32> to vector<24xf32>
    %150 = vector.shape_cast %149 : vector<24xf32> to vector<24x1xf32>
    %cst_136 = arith.constant dense<0.000000e+00> : vector<1xf32>
    %151 = vector.multi_reduction <add>, %150, %cst_136 [0] : vector<24x1xf32> to vector<1xf32>
    %152 = vector.shape_cast %151 : vector<1xf32> to vector<1x1xf32>
    %153 = arith.addf %122, %152 : vector<1x1xf32>
    %154 = arith.mulf %148, %148 : vector<24x24xf32>
    %cst_137 = arith.constant dense<0.000000e+00> : vector<24xf32>
    %155 = vector.multi_reduction <add>, %154, %cst_137 [1] : vector<24x24xf32> to vector<24xf32>
    %156 = vector.shape_cast %155 : vector<24xf32> to vector<24x1xf32>
    %cst_138 = arith.constant dense<0.000000e+00> : vector<1xf32>
    %157 = vector.multi_reduction <add>, %156, %cst_138 [0] : vector<24x1xf32> to vector<1xf32>
    %158 = vector.shape_cast %157 : vector<1xf32> to vector<1x1xf32>
    %159 = arith.addf %128, %158 : vector<1x1xf32>
    %cst_139 = arith.constant 8.68055562E-4 : f32
    %160 = vector.broadcast %cst_139 : f32 to vector<1x1xf32>
    %161 = arith.mulf %153, %160 : vector<1x1xf32>
    %cst_140 = arith.constant 8.68055562E-4 : f32
    %162 = vector.broadcast %cst_140 : f32 to vector<1x1xf32>
    %163 = arith.mulf %159, %162 : vector<1x1xf32>
    %164 = arith.mulf %161, %161 : vector<1x1xf32>
    %165 = arith.subf %163, %164 : vector<1x1xf32>
    %c0_141 = arith.constant 0 : index
    %166 = memref.load %arg7[%c0_141] : memref<1xf32, #tpu.memory_space<smem>>
    %cst_142 = arith.constant 9.99999974E-6 : f32
    %167 = vector.broadcast %cst_142 : f32 to vector<1x1xf32>
    %168 = arith.addf %165, %167 : vector<1x1xf32>
    %169 = math.rsqrt %168 : vector<1x1xf32>
    %170 = vector.broadcast %166 : f32 to vector<1x1xf32>
    %171 = arith.mulf %170, %169 : vector<1x1xf32>
    %c0_143 = arith.constant 0 : index
    %172 = memref.load %arg8[%c0_143] : memref<1xf32, #tpu.memory_space<smem>>
    %173 = arith.mulf %161, %171 : vector<1x1xf32>
    %174 = vector.broadcast %172 : f32 to vector<1x1xf32>
    %175 = arith.subf %174, %173 : vector<1x1xf32>
    %176 = vector.broadcast %171 : vector<1x1xf32> to vector<24x24xf32>
    %177 = arith.mulf %117, %176 : vector<24x24xf32>
    %178 = vector.broadcast %175 : vector<1x1xf32> to vector<24x24xf32>
    %179 = arith.addf %177, %178 : vector<24x24xf32>
    %180 = vector.broadcast %171 : vector<1x1xf32> to vector<24x24xf32>
    %181 = arith.mulf %148, %180 : vector<24x24xf32>
    %182 = vector.broadcast %175 : vector<1x1xf32> to vector<24x24xf32>
    %183 = arith.addf %181, %182 : vector<24x24xf32>
    %c0_144 = arith.constant 0 : index
    %c0_145 = arith.constant 0 : index
    %c0_146 = arith.constant 0 : index
    %184 = vector.load %arg9[%c0_144, %c0_145, %c0_146] : memref<8x24x24xf32, #tpu.memory_space<vmem>>, vector<1x24x24xf32>
    %185 = vector.shape_cast %184 : vector<1x24x24xf32> to vector<24x24xf32>
    %186 = arith.mulf %185, %179 : vector<24x24xf32>
    %cst_147 = arith.constant dense<0.000000e+00> : vector<24xf32>
    %187 = vector.multi_reduction <add>, %186, %cst_147 [1] : vector<24x24xf32> to vector<24xf32>
    %188 = vector.shape_cast %187 : vector<24xf32> to vector<24x1xf32>
    %cst_148 = arith.constant dense<0.000000e+00> : vector<1xf32>
    %189 = vector.multi_reduction <add>, %188, %cst_148 [0] : vector<24x1xf32> to vector<1xf32>
    %190 = vector.shape_cast %189 : vector<1xf32> to vector<1x1xf32>
    %c0_149 = arith.constant 0 : index
    %191 = memref.load %arg10[%c0_149] : memref<8xf32, #tpu.memory_space<smem>>
    %192 = vector.broadcast %191 : f32 to vector<1x1xf32>
    %193 = arith.addf %190, %192 : vector<1x1xf32>
    %cst_150 = arith.constant 0.000000e+00 : f32
    %194 = vector.broadcast %cst_150 : f32 to vector<1x1xf32>
    %195 = arith.cmpf oge, %193, %194 : vector<1x1xf32>
    %cst_151 = arith.constant 0.00999999977 : f32
    %196 = vector.broadcast %cst_151 : f32 to vector<1x1xf32>
    %197 = arith.mulf %196, %193 : vector<1x1xf32>
    %198 = arith.select %195, %193, %197 : vector<1x1xi1>, vector<1x1xf32>
    %c1_152 = arith.constant 1 : index
    %c0_153 = arith.constant 0 : index
    %c0_154 = arith.constant 0 : index
    %199 = vector.load %arg9[%c1_152, %c0_153, %c0_154] : memref<8x24x24xf32, #tpu.memory_space<vmem>>, vector<1x24x24xf32>
    %200 = vector.shape_cast %199 : vector<1x24x24xf32> to vector<24x24xf32>
    %201 = arith.mulf %200, %179 : vector<24x24xf32>
    %cst_155 = arith.constant dense<0.000000e+00> : vector<24xf32>
    %202 = vector.multi_reduction <add>, %201, %cst_155 [1] : vector<24x24xf32> to vector<24xf32>
    %203 = vector.shape_cast %202 : vector<24xf32> to vector<24x1xf32>
    %cst_156 = arith.constant dense<0.000000e+00> : vector<1xf32>
    %204 = vector.multi_reduction <add>, %203, %cst_156 [0] : vector<24x1xf32> to vector<1xf32>
    %205 = vector.shape_cast %204 : vector<1xf32> to vector<1x1xf32>
    %c1_157 = arith.constant 1 : index
    %206 = memref.load %arg10[%c1_157] : memref<8xf32, #tpu.memory_space<smem>>
    %207 = vector.broadcast %206 : f32 to vector<1x1xf32>
    %208 = arith.addf %205, %207 : vector<1x1xf32>
    %cst_158 = arith.constant 0.000000e+00 : f32
    %209 = vector.broadcast %cst_158 : f32 to vector<1x1xf32>
    %210 = arith.cmpf oge, %208, %209 : vector<1x1xf32>
    %cst_159 = arith.constant 0.00999999977 : f32
    %211 = vector.broadcast %cst_159 : f32 to vector<1x1xf32>
    %212 = arith.mulf %211, %208 : vector<1x1xf32>
    %213 = arith.select %210, %208, %212 : vector<1x1xi1>, vector<1x1xf32>
    %c2_160 = arith.constant 2 : index
    %c0_161 = arith.constant 0 : index
    %c0_162 = arith.constant 0 : index
    %214 = vector.load %arg9[%c2_160, %c0_161, %c0_162] : memref<8x24x24xf32, #tpu.memory_space<vmem>>, vector<1x24x24xf32>
    %215 = vector.shape_cast %214 : vector<1x24x24xf32> to vector<24x24xf32>
    %216 = arith.mulf %215, %179 : vector<24x24xf32>
    %cst_163 = arith.constant dense<0.000000e+00> : vector<24xf32>
    %217 = vector.multi_reduction <add>, %216, %cst_163 [1] : vector<24x24xf32> to vector<24xf32>
    %218 = vector.shape_cast %217 : vector<24xf32> to vector<24x1xf32>
    %cst_164 = arith.constant dense<0.000000e+00> : vector<1xf32>
    %219 = vector.multi_reduction <add>, %218, %cst_164 [0] : vector<24x1xf32> to vector<1xf32>
    %220 = vector.shape_cast %219 : vector<1xf32> to vector<1x1xf32>
    %c2_165 = arith.constant 2 : index
    %221 = memref.load %arg10[%c2_165] : memref<8xf32, #tpu.memory_space<smem>>
    %222 = vector.broadcast %221 : f32 to vector<1x1xf32>
    %223 = arith.addf %220, %222 : vector<1x1xf32>
    %cst_166 = arith.constant 0.000000e+00 : f32
    %224 = vector.broadcast %cst_166 : f32 to vector<1x1xf32>
    %225 = arith.cmpf oge, %223, %224 : vector<1x1xf32>
    %cst_167 = arith.constant 0.00999999977 : f32
    %226 = vector.broadcast %cst_167 : f32 to vector<1x1xf32>
    %227 = arith.mulf %226, %223 : vector<1x1xf32>
    %228 = arith.select %225, %223, %227 : vector<1x1xi1>, vector<1x1xf32>
    %c3 = arith.constant 3 : index
    %c0_168 = arith.constant 0 : index
    %c0_169 = arith.constant 0 : index
    %229 = vector.load %arg9[%c3, %c0_168, %c0_169] : memref<8x24x24xf32, #tpu.memory_space<vmem>>, vector<1x24x24xf32>
    %230 = vector.shape_cast %229 : vector<1x24x24xf32> to vector<24x24xf32>
    %231 = arith.mulf %230, %179 : vector<24x24xf32>
    %cst_170 = arith.constant dense<0.000000e+00> : vector<24xf32>
    %232 = vector.multi_reduction <add>, %231, %cst_170 [1] : vector<24x24xf32> to vector<24xf32>
    %233 = vector.shape_cast %232 : vector<24xf32> to vector<24x1xf32>
    %cst_171 = arith.constant dense<0.000000e+00> : vector<1xf32>
    %234 = vector.multi_reduction <add>, %233, %cst_171 [0] : vector<24x1xf32> to vector<1xf32>
    %235 = vector.shape_cast %234 : vector<1xf32> to vector<1x1xf32>
    %c3_172 = arith.constant 3 : index
    %236 = memref.load %arg10[%c3_172] : memref<8xf32, #tpu.memory_space<smem>>
    %237 = vector.broadcast %236 : f32 to vector<1x1xf32>
    %238 = arith.addf %235, %237 : vector<1x1xf32>
    %cst_173 = arith.constant 0.000000e+00 : f32
    %239 = vector.broadcast %cst_173 : f32 to vector<1x1xf32>
    %240 = arith.cmpf oge, %238, %239 : vector<1x1xf32>
    %cst_174 = arith.constant 0.00999999977 : f32
    %241 = vector.broadcast %cst_174 : f32 to vector<1x1xf32>
    %242 = arith.mulf %241, %238 : vector<1x1xf32>
    %243 = arith.select %240, %238, %242 : vector<1x1xi1>, vector<1x1xf32>
    %c4 = arith.constant 4 : index
    %c0_175 = arith.constant 0 : index
    %c0_176 = arith.constant 0 : index
    %244 = vector.load %arg9[%c4, %c0_175, %c0_176] : memref<8x24x24xf32, #tpu.memory_space<vmem>>, vector<1x24x24xf32>
    %245 = vector.shape_cast %244 : vector<1x24x24xf32> to vector<24x24xf32>
    %246 = arith.mulf %245, %179 : vector<24x24xf32>
    %cst_177 = arith.constant dense<0.000000e+00> : vector<24xf32>
    %247 = vector.multi_reduction <add>, %246, %cst_177 [1] : vector<24x24xf32> to vector<24xf32>
    %248 = vector.shape_cast %247 : vector<24xf32> to vector<24x1xf32>
    %cst_178 = arith.constant dense<0.000000e+00> : vector<1xf32>
    %249 = vector.multi_reduction <add>, %248, %cst_178 [0] : vector<24x1xf32> to vector<1xf32>
    %250 = vector.shape_cast %249 : vector<1xf32> to vector<1x1xf32>
    %c4_179 = arith.constant 4 : index
    %251 = memref.load %arg10[%c4_179] : memref<8xf32, #tpu.memory_space<smem>>
    %252 = vector.broadcast %251 : f32 to vector<1x1xf32>
    %253 = arith.addf %250, %252 : vector<1x1xf32>
    %cst_180 = arith.constant 0.000000e+00 : f32
    %254 = vector.broadcast %cst_180 : f32 to vector<1x1xf32>
    %255 = arith.cmpf oge, %253, %254 : vector<1x1xf32>
    %cst_181 = arith.constant 0.00999999977 : f32
    %256 = vector.broadcast %cst_181 : f32 to vector<1x1xf32>
    %257 = arith.mulf %256, %253 : vector<1x1xf32>
    %258 = arith.select %255, %253, %257 : vector<1x1xi1>, vector<1x1xf32>
    %c5 = arith.constant 5 : index
    %c0_182 = arith.constant 0 : index
    %c0_183 = arith.constant 0 : index
    %259 = vector.load %arg9[%c5, %c0_182, %c0_183] : memref<8x24x24xf32, #tpu.memory_space<vmem>>, vector<1x24x24xf32>
    %260 = vector.shape_cast %259 : vector<1x24x24xf32> to vector<24x24xf32>
    %261 = arith.mulf %260, %179 : vector<24x24xf32>
    %cst_184 = arith.constant dense<0.000000e+00> : vector<24xf32>
    %262 = vector.multi_reduction <add>, %261, %cst_184 [1] : vector<24x24xf32> to vector<24xf32>
    %263 = vector.shape_cast %262 : vector<24xf32> to vector<24x1xf32>
    %cst_185 = arith.constant dense<0.000000e+00> : vector<1xf32>
    %264 = vector.multi_reduction <add>, %263, %cst_185 [0] : vector<24x1xf32> to vector<1xf32>
    %265 = vector.shape_cast %264 : vector<1xf32> to vector<1x1xf32>
    %c5_186 = arith.constant 5 : index
    %266 = memref.load %arg10[%c5_186] : memref<8xf32, #tpu.memory_space<smem>>
    %267 = vector.broadcast %266 : f32 to vector<1x1xf32>
    %268 = arith.addf %265, %267 : vector<1x1xf32>
    %cst_187 = arith.constant 0.000000e+00 : f32
    %269 = vector.broadcast %cst_187 : f32 to vector<1x1xf32>
    %270 = arith.cmpf oge, %268, %269 : vector<1x1xf32>
    %cst_188 = arith.constant 0.00999999977 : f32
    %271 = vector.broadcast %cst_188 : f32 to vector<1x1xf32>
    %272 = arith.mulf %271, %268 : vector<1x1xf32>
    %273 = arith.select %270, %268, %272 : vector<1x1xi1>, vector<1x1xf32>
    %c6 = arith.constant 6 : index
    %c0_189 = arith.constant 0 : index
    %c0_190 = arith.constant 0 : index
    %274 = vector.load %arg9[%c6, %c0_189, %c0_190] : memref<8x24x24xf32, #tpu.memory_space<vmem>>, vector<1x24x24xf32>
    %275 = vector.shape_cast %274 : vector<1x24x24xf32> to vector<24x24xf32>
    %276 = arith.mulf %275, %179 : vector<24x24xf32>
    %cst_191 = arith.constant dense<0.000000e+00> : vector<24xf32>
    %277 = vector.multi_reduction <add>, %276, %cst_191 [1] : vector<24x24xf32> to vector<24xf32>
    %278 = vector.shape_cast %277 : vector<24xf32> to vector<24x1xf32>
    %cst_192 = arith.constant dense<0.000000e+00> : vector<1xf32>
    %279 = vector.multi_reduction <add>, %278, %cst_192 [0] : vector<24x1xf32> to vector<1xf32>
    %280 = vector.shape_cast %279 : vector<1xf32> to vector<1x1xf32>
    %c6_193 = arith.constant 6 : index
    %281 = memref.load %arg10[%c6_193] : memref<8xf32, #tpu.memory_space<smem>>
    %282 = vector.broadcast %281 : f32 to vector<1x1xf32>
    %283 = arith.addf %280, %282 : vector<1x1xf32>
    %cst_194 = arith.constant 0.000000e+00 : f32
    %284 = vector.broadcast %cst_194 : f32 to vector<1x1xf32>
    %285 = arith.cmpf oge, %283, %284 : vector<1x1xf32>
    %cst_195 = arith.constant 0.00999999977 : f32
    %286 = vector.broadcast %cst_195 : f32 to vector<1x1xf32>
    %287 = arith.mulf %286, %283 : vector<1x1xf32>
    %288 = arith.select %285, %283, %287 : vector<1x1xi1>, vector<1x1xf32>
    %c7 = arith.constant 7 : index
    %c0_196 = arith.constant 0 : index
    %c0_197 = arith.constant 0 : index
    %289 = vector.load %arg9[%c7, %c0_196, %c0_197] : memref<8x24x24xf32, #tpu.memory_space<vmem>>, vector<1x24x24xf32>
    %290 = vector.shape_cast %289 : vector<1x24x24xf32> to vector<24x24xf32>
    %291 = arith.mulf %290, %179 : vector<24x24xf32>
    %cst_198 = arith.constant dense<0.000000e+00> : vector<24xf32>
    %292 = vector.multi_reduction <add>, %291, %cst_198 [1] : vector<24x24xf32> to vector<24xf32>
    %293 = vector.shape_cast %292 : vector<24xf32> to vector<24x1xf32>
    %cst_199 = arith.constant dense<0.000000e+00> : vector<1xf32>
    %294 = vector.multi_reduction <add>, %293, %cst_199 [0] : vector<24x1xf32> to vector<1xf32>
    %295 = vector.shape_cast %294 : vector<1xf32> to vector<1x1xf32>
    %c7_200 = arith.constant 7 : index
    %296 = memref.load %arg10[%c7_200] : memref<8xf32, #tpu.memory_space<smem>>
    %297 = vector.broadcast %296 : f32 to vector<1x1xf32>
    %298 = arith.addf %295, %297 : vector<1x1xf32>
    %cst_201 = arith.constant 0.000000e+00 : f32
    %299 = vector.broadcast %cst_201 : f32 to vector<1x1xf32>
    %300 = arith.cmpf oge, %298, %299 : vector<1x1xf32>
    %cst_202 = arith.constant 0.00999999977 : f32
    %301 = vector.broadcast %cst_202 : f32 to vector<1x1xf32>
    %302 = arith.mulf %301, %298 : vector<1x1xf32>
    %303 = arith.select %300, %298, %302 : vector<1x1xi1>, vector<1x1xf32>
    %c0_203 = arith.constant 0 : index
    %c0_204 = arith.constant 0 : index
    %304 = vector.load %arg12[%c0_203, %c0_204] : memref<24x24xf32, #tpu.memory_space<vmem>>, vector<24x24xf32>
    %c0_205 = arith.constant 0 : index
    %c0_206 = arith.constant 0 : index
    %c0_207 = arith.constant 0 : index
    %305 = vector.load %arg11[%c0_205, %c0_206, %c0_207] : memref<8x24x24xf32, #tpu.memory_space<vmem>>, vector<1x24x24xf32>
    %306 = vector.shape_cast %305 : vector<1x24x24xf32> to vector<24x24xf32>
    %307 = vector.broadcast %198 : vector<1x1xf32> to vector<24x24xf32>
    %308 = arith.mulf %306, %307 : vector<24x24xf32>
    %309 = arith.addf %304, %308 : vector<24x24xf32>
    %c1_208 = arith.constant 1 : index
    %c0_209 = arith.constant 0 : index
    %c0_210 = arith.constant 0 : index
    %310 = vector.load %arg11[%c1_208, %c0_209, %c0_210] : memref<8x24x24xf32, #tpu.memory_space<vmem>>, vector<1x24x24xf32>
    %311 = vector.shape_cast %310 : vector<1x24x24xf32> to vector<24x24xf32>
    %312 = vector.broadcast %213 : vector<1x1xf32> to vector<24x24xf32>
    %313 = arith.mulf %311, %312 : vector<24x24xf32>
    %314 = arith.addf %309, %313 : vector<24x24xf32>
    %c2_211 = arith.constant 2 : index
    %c0_212 = arith.constant 0 : index
    %c0_213 = arith.constant 0 : index
    %315 = vector.load %arg11[%c2_211, %c0_212, %c0_213] : memref<8x24x24xf32, #tpu.memory_space<vmem>>, vector<1x24x24xf32>
    %316 = vector.shape_cast %315 : vector<1x24x24xf32> to vector<24x24xf32>
    %317 = vector.broadcast %228 : vector<1x1xf32> to vector<24x24xf32>
    %318 = arith.mulf %316, %317 : vector<24x24xf32>
    %319 = arith.addf %314, %318 : vector<24x24xf32>
    %c3_214 = arith.constant 3 : index
    %c0_215 = arith.constant 0 : index
    %c0_216 = arith.constant 0 : index
    %320 = vector.load %arg11[%c3_214, %c0_215, %c0_216] : memref<8x24x24xf32, #tpu.memory_space<vmem>>, vector<1x24x24xf32>
    %321 = vector.shape_cast %320 : vector<1x24x24xf32> to vector<24x24xf32>
    %322 = vector.broadcast %243 : vector<1x1xf32> to vector<24x24xf32>
    %323 = arith.mulf %321, %322 : vector<24x24xf32>
    %324 = arith.addf %319, %323 : vector<24x24xf32>
    %c4_217 = arith.constant 4 : index
    %c0_218 = arith.constant 0 : index
    %c0_219 = arith.constant 0 : index
    %325 = vector.load %arg11[%c4_217, %c0_218, %c0_219] : memref<8x24x24xf32, #tpu.memory_space<vmem>>, vector<1x24x24xf32>
    %326 = vector.shape_cast %325 : vector<1x24x24xf32> to vector<24x24xf32>
    %327 = vector.broadcast %258 : vector<1x1xf32> to vector<24x24xf32>
    %328 = arith.mulf %326, %327 : vector<24x24xf32>
    %329 = arith.addf %324, %328 : vector<24x24xf32>
    %c5_220 = arith.constant 5 : index
    %c0_221 = arith.constant 0 : index
    %c0_222 = arith.constant 0 : index
    %330 = vector.load %arg11[%c5_220, %c0_221, %c0_222] : memref<8x24x24xf32, #tpu.memory_space<vmem>>, vector<1x24x24xf32>
    %331 = vector.shape_cast %330 : vector<1x24x24xf32> to vector<24x24xf32>
    %332 = vector.broadcast %273 : vector<1x1xf32> to vector<24x24xf32>
    %333 = arith.mulf %331, %332 : vector<24x24xf32>
    %334 = arith.addf %329, %333 : vector<24x24xf32>
    %c6_223 = arith.constant 6 : index
    %c0_224 = arith.constant 0 : index
    %c0_225 = arith.constant 0 : index
    %335 = vector.load %arg11[%c6_223, %c0_224, %c0_225] : memref<8x24x24xf32, #tpu.memory_space<vmem>>, vector<1x24x24xf32>
    %336 = vector.shape_cast %335 : vector<1x24x24xf32> to vector<24x24xf32>
    %337 = vector.broadcast %288 : vector<1x1xf32> to vector<24x24xf32>
    %338 = arith.mulf %336, %337 : vector<24x24xf32>
    %339 = arith.addf %334, %338 : vector<24x24xf32>
    %c7_226 = arith.constant 7 : index
    %c0_227 = arith.constant 0 : index
    %c0_228 = arith.constant 0 : index
    %340 = vector.load %arg11[%c7_226, %c0_227, %c0_228] : memref<8x24x24xf32, #tpu.memory_space<vmem>>, vector<1x24x24xf32>
    %341 = vector.shape_cast %340 : vector<1x24x24xf32> to vector<24x24xf32>
    %342 = vector.broadcast %303 : vector<1x1xf32> to vector<24x24xf32>
    %343 = arith.mulf %341, %342 : vector<24x24xf32>
    %344 = arith.addf %339, %343 : vector<24x24xf32>
    %cst_229 = arith.constant 0.000000e+00 : f32
    %345 = vector.broadcast %cst_229 : f32 to vector<24x24xf32>
    %346 = arith.cmpf oge, %344, %345 : vector<24x24xf32>
    %cst_230 = arith.constant 0.00999999977 : f32
    %347 = vector.broadcast %cst_230 : f32 to vector<24x24xf32>
    %348 = arith.mulf %347, %344 : vector<24x24xf32>
    %349 = arith.select %346, %344, %348 : vector<24x24xi1>, vector<24x24xf32>
    %c0_231 = arith.constant 0 : index
    %c2_232 = arith.constant 2 : index
    %c2_233 = arith.constant 2 : index
    %350 = vector.load %arg25[%c0_231, %c2_232, %c2_233] : memref<2x28x28xf32, #tpu.memory_space<vmem>>, vector<1x24x24xf32>
    %351 = vector.shape_cast %350 : vector<1x24x24xf32> to vector<24x24xf32>
    %352 = vector.shape_cast %349 : vector<24x24xf32> to vector<1x24x24xf32>
    tpu.vector_store %arg25[%c0_231, %c2_232, %c2_233], %352 {strides = array<i32>} : memref<2x28x28xf32, #tpu.memory_space<vmem>>, vector<1x24x24xf32>,
    %c0_234 = arith.constant 0 : index
    %c0_235 = arith.constant 0 : index
    %c0_236 = arith.constant 0 : index
    %353 = vector.load %arg9[%c0_234, %c0_235, %c0_236] : memref<8x24x24xf32, #tpu.memory_space<vmem>>, vector<1x24x24xf32>
    %354 = vector.shape_cast %353 : vector<1x24x24xf32> to vector<24x24xf32>
    %355 = arith.mulf %354, %183 : vector<24x24xf32>
    %cst_237 = arith.constant dense<0.000000e+00> : vector<24xf32>
    %356 = vector.multi_reduction <add>, %355, %cst_237 [1] : vector<24x24xf32> to vector<24xf32>
    %357 = vector.shape_cast %356 : vector<24xf32> to vector<24x1xf32>
    %cst_238 = arith.constant dense<0.000000e+00> : vector<1xf32>
    %358 = vector.multi_reduction <add>, %357, %cst_238 [0] : vector<24x1xf32> to vector<1xf32>
    %359 = vector.shape_cast %358 : vector<1xf32> to vector<1x1xf32>
    %c0_239 = arith.constant 0 : index
    %360 = memref.load %arg10[%c0_239] : memref<8xf32, #tpu.memory_space<smem>>
    %361 = vector.broadcast %360 : f32 to vector<1x1xf32>
    %362 = arith.addf %359, %361 : vector<1x1xf32>
    %cst_240 = arith.constant 0.000000e+00 : f32
    %363 = vector.broadcast %cst_240 : f32 to vector<1x1xf32>
    %364 = arith.cmpf oge, %362, %363 : vector<1x1xf32>
    %cst_241 = arith.constant 0.00999999977 : f32
    %365 = vector.broadcast %cst_241 : f32 to vector<1x1xf32>
    %366 = arith.mulf %365, %362 : vector<1x1xf32>
    %367 = arith.select %364, %362, %366 : vector<1x1xi1>, vector<1x1xf32>
    %c1_242 = arith.constant 1 : index
    %c0_243 = arith.constant 0 : index
    %c0_244 = arith.constant 0 : index
    %368 = vector.load %arg9[%c1_242, %c0_243, %c0_244] : memref<8x24x24xf32, #tpu.memory_space<vmem>>, vector<1x24x24xf32>
    %369 = vector.shape_cast %368 : vector<1x24x24xf32> to vector<24x24xf32>
    %370 = arith.mulf %369, %183 : vector<24x24xf32>
    %cst_245 = arith.constant dense<0.000000e+00> : vector<24xf32>
    %371 = vector.multi_reduction <add>, %370, %cst_245 [1] : vector<24x24xf32> to vector<24xf32>
    %372 = vector.shape_cast %371 : vector<24xf32> to vector<24x1xf32>
    %cst_246 = arith.constant dense<0.000000e+00> : vector<1xf32>
    %373 = vector.multi_reduction <add>, %372, %cst_246 [0] : vector<24x1xf32> to vector<1xf32>
    %374 = vector.shape_cast %373 : vector<1xf32> to vector<1x1xf32>
    %c1_247 = arith.constant 1 : index
    %375 = memref.load %arg10[%c1_247] : memref<8xf32, #tpu.memory_space<smem>>
    %376 = vector.broadcast %375 : f32 to vector<1x1xf32>
    %377 = arith.addf %374, %376 : vector<1x1xf32>
    %cst_248 = arith.constant 0.000000e+00 : f32
    %378 = vector.broadcast %cst_248 : f32 to vector<1x1xf32>
    %379 = arith.cmpf oge, %377, %378 : vector<1x1xf32>
    %cst_249 = arith.constant 0.00999999977 : f32
    %380 = vector.broadcast %cst_249 : f32 to vector<1x1xf32>
    %381 = arith.mulf %380, %377 : vector<1x1xf32>
    %382 = arith.select %379, %377, %381 : vector<1x1xi1>, vector<1x1xf32>
    %c2_250 = arith.constant 2 : index
    %c0_251 = arith.constant 0 : index
    %c0_252 = arith.constant 0 : index
    %383 = vector.load %arg9[%c2_250, %c0_251, %c0_252] : memref<8x24x24xf32, #tpu.memory_space<vmem>>, vector<1x24x24xf32>
    %384 = vector.shape_cast %383 : vector<1x24x24xf32> to vector<24x24xf32>
    %385 = arith.mulf %384, %183 : vector<24x24xf32>
    %cst_253 = arith.constant dense<0.000000e+00> : vector<24xf32>
    %386 = vector.multi_reduction <add>, %385, %cst_253 [1] : vector<24x24xf32> to vector<24xf32>
    %387 = vector.shape_cast %386 : vector<24xf32> to vector<24x1xf32>
    %cst_254 = arith.constant dense<0.000000e+00> : vector<1xf32>
    %388 = vector.multi_reduction <add>, %387, %cst_254 [0] : vector<24x1xf32> to vector<1xf32>
    %389 = vector.shape_cast %388 : vector<1xf32> to vector<1x1xf32>
    %c2_255 = arith.constant 2 : index
    %390 = memref.load %arg10[%c2_255] : memref<8xf32, #tpu.memory_space<smem>>
    %391 = vector.broadcast %390 : f32 to vector<1x1xf32>
    %392 = arith.addf %389, %391 : vector<1x1xf32>
    %cst_256 = arith.constant 0.000000e+00 : f32
    %393 = vector.broadcast %cst_256 : f32 to vector<1x1xf32>
    %394 = arith.cmpf oge, %392, %393 : vector<1x1xf32>
    %cst_257 = arith.constant 0.00999999977 : f32
    %395 = vector.broadcast %cst_257 : f32 to vector<1x1xf32>
    %396 = arith.mulf %395, %392 : vector<1x1xf32>
    %397 = arith.select %394, %392, %396 : vector<1x1xi1>, vector<1x1xf32>
    %c3_258 = arith.constant 3 : index
    %c0_259 = arith.constant 0 : index
    %c0_260 = arith.constant 0 : index
    %398 = vector.load %arg9[%c3_258, %c0_259, %c0_260] : memref<8x24x24xf32, #tpu.memory_space<vmem>>, vector<1x24x24xf32>
    %399 = vector.shape_cast %398 : vector<1x24x24xf32> to vector<24x24xf32>
    %400 = arith.mulf %399, %183 : vector<24x24xf32>
    %cst_261 = arith.constant dense<0.000000e+00> : vector<24xf32>
    %401 = vector.multi_reduction <add>, %400, %cst_261 [1] : vector<24x24xf32> to vector<24xf32>
    %402 = vector.shape_cast %401 : vector<24xf32> to vector<24x1xf32>
    %cst_262 = arith.constant dense<0.000000e+00> : vector<1xf32>
    %403 = vector.multi_reduction <add>, %402, %cst_262 [0] : vector<24x1xf32> to vector<1xf32>
    %404 = vector.shape_cast %403 : vector<1xf32> to vector<1x1xf32>
    %c3_263 = arith.constant 3 : index
    %405 = memref.load %arg10[%c3_263] : memref<8xf32, #tpu.memory_space<smem>>
    %406 = vector.broadcast %405 : f32 to vector<1x1xf32>
    %407 = arith.addf %404, %406 : vector<1x1xf32>
    %cst_264 = arith.constant 0.000000e+00 : f32
    %408 = vector.broadcast %cst_264 : f32 to vector<1x1xf32>
    %409 = arith.cmpf oge, %407, %408 : vector<1x1xf32>
    %cst_265 = arith.constant 0.00999999977 : f32
    %410 = vector.broadcast %cst_265 : f32 to vector<1x1xf32>
    %411 = arith.mulf %410, %407 : vector<1x1xf32>
    %412 = arith.select %409, %407, %411 : vector<1x1xi1>, vector<1x1xf32>
    %c4_266 = arith.constant 4 : index
    %c0_267 = arith.constant 0 : index
    %c0_268 = arith.constant 0 : index
    %413 = vector.load %arg9[%c4_266, %c0_267, %c0_268] : memref<8x24x24xf32, #tpu.memory_space<vmem>>, vector<1x24x24xf32>
    %414 = vector.shape_cast %413 : vector<1x24x24xf32> to vector<24x24xf32>
    %415 = arith.mulf %414, %183 : vector<24x24xf32>
    %cst_269 = arith.constant dense<0.000000e+00> : vector<24xf32>
    %416 = vector.multi_reduction <add>, %415, %cst_269 [1] : vector<24x24xf32> to vector<24xf32>
    %417 = vector.shape_cast %416 : vector<24xf32> to vector<24x1xf32>
    %cst_270 = arith.constant dense<0.000000e+00> : vector<1xf32>
    %418 = vector.multi_reduction <add>, %417, %cst_270 [0] : vector<24x1xf32> to vector<1xf32>
    %419 = vector.shape_cast %418 : vector<1xf32> to vector<1x1xf32>
    %c4_271 = arith.constant 4 : index
    %420 = memref.load %arg10[%c4_271] : memref<8xf32, #tpu.memory_space<smem>>
    %421 = vector.broadcast %420 : f32 to vector<1x1xf32>
    %422 = arith.addf %419, %421 : vector<1x1xf32>
    %cst_272 = arith.constant 0.000000e+00 : f32
    %423 = vector.broadcast %cst_272 : f32 to vector<1x1xf32>
    %424 = arith.cmpf oge, %422, %423 : vector<1x1xf32>
    %cst_273 = arith.constant 0.00999999977 : f32
    %425 = vector.broadcast %cst_273 : f32 to vector<1x1xf32>
    %426 = arith.mulf %425, %422 : vector<1x1xf32>
    %427 = arith.select %424, %422, %426 : vector<1x1xi1>, vector<1x1xf32>
    %c5_274 = arith.constant 5 : index
    %c0_275 = arith.constant 0 : index
    %c0_276 = arith.constant 0 : index
    %428 = vector.load %arg9[%c5_274, %c0_275, %c0_276] : memref<8x24x24xf32, #tpu.memory_space<vmem>>, vector<1x24x24xf32>
    %429 = vector.shape_cast %428 : vector<1x24x24xf32> to vector<24x24xf32>
    %430 = arith.mulf %429, %183 : vector<24x24xf32>
    %cst_277 = arith.constant dense<0.000000e+00> : vector<24xf32>
    %431 = vector.multi_reduction <add>, %430, %cst_277 [1] : vector<24x24xf32> to vector<24xf32>
    %432 = vector.shape_cast %431 : vector<24xf32> to vector<24x1xf32>
    %cst_278 = arith.constant dense<0.000000e+00> : vector<1xf32>
    %433 = vector.multi_reduction <add>, %432, %cst_278 [0] : vector<24x1xf32> to vector<1xf32>
    %434 = vector.shape_cast %433 : vector<1xf32> to vector<1x1xf32>
    %c5_279 = arith.constant 5 : index
    %435 = memref.load %arg10[%c5_279] : memref<8xf32, #tpu.memory_space<smem>>
    %436 = vector.broadcast %435 : f32 to vector<1x1xf32>
    %437 = arith.addf %434, %436 : vector<1x1xf32>
    %cst_280 = arith.constant 0.000000e+00 : f32
    %438 = vector.broadcast %cst_280 : f32 to vector<1x1xf32>
    %439 = arith.cmpf oge, %437, %438 : vector<1x1xf32>
    %cst_281 = arith.constant 0.00999999977 : f32
    %440 = vector.broadcast %cst_281 : f32 to vector<1x1xf32>
    %441 = arith.mulf %440, %437 : vector<1x1xf32>
    %442 = arith.select %439, %437, %441 : vector<1x1xi1>, vector<1x1xf32>
    %c6_282 = arith.constant 6 : index
    %c0_283 = arith.constant 0 : index
    %c0_284 = arith.constant 0 : index
    %443 = vector.load %arg9[%c6_282, %c0_283, %c0_284] : memref<8x24x24xf32, #tpu.memory_space<vmem>>, vector<1x24x24xf32>
    %444 = vector.shape_cast %443 : vector<1x24x24xf32> to vector<24x24xf32>
    %445 = arith.mulf %444, %183 : vector<24x24xf32>
    %cst_285 = arith.constant dense<0.000000e+00> : vector<24xf32>
    %446 = vector.multi_reduction <add>, %445, %cst_285 [1] : vector<24x24xf32> to vector<24xf32>
    %447 = vector.shape_cast %446 : vector<24xf32> to vector<24x1xf32>
    %cst_286 = arith.constant dense<0.000000e+00> : vector<1xf32>
    %448 = vector.multi_reduction <add>, %447, %cst_286 [0] : vector<24x1xf32> to vector<1xf32>
    %449 = vector.shape_cast %448 : vector<1xf32> to vector<1x1xf32>
    %c6_287 = arith.constant 6 : index
    %450 = memref.load %arg10[%c6_287] : memref<8xf32, #tpu.memory_space<smem>>
    %451 = vector.broadcast %450 : f32 to vector<1x1xf32>
    %452 = arith.addf %449, %451 : vector<1x1xf32>
    %cst_288 = arith.constant 0.000000e+00 : f32
    %453 = vector.broadcast %cst_288 : f32 to vector<1x1xf32>
    %454 = arith.cmpf oge, %452, %453 : vector<1x1xf32>
    %cst_289 = arith.constant 0.00999999977 : f32
    %455 = vector.broadcast %cst_289 : f32 to vector<1x1xf32>
    %456 = arith.mulf %455, %452 : vector<1x1xf32>
    %457 = arith.select %454, %452, %456 : vector<1x1xi1>, vector<1x1xf32>
    %c7_290 = arith.constant 7 : index
    %c0_291 = arith.constant 0 : index
    %c0_292 = arith.constant 0 : index
    %458 = vector.load %arg9[%c7_290, %c0_291, %c0_292] : memref<8x24x24xf32, #tpu.memory_space<vmem>>, vector<1x24x24xf32>
    %459 = vector.shape_cast %458 : vector<1x24x24xf32> to vector<24x24xf32>
    %460 = arith.mulf %459, %183 : vector<24x24xf32>
    %cst_293 = arith.constant dense<0.000000e+00> : vector<24xf32>
    %461 = vector.multi_reduction <add>, %460, %cst_293 [1] : vector<24x24xf32> to vector<24xf32>
    %462 = vector.shape_cast %461 : vector<24xf32> to vector<24x1xf32>
    %cst_294 = arith.constant dense<0.000000e+00> : vector<1xf32>
    %463 = vector.multi_reduction <add>, %462, %cst_294 [0] : vector<24x1xf32> to vector<1xf32>
    %464 = vector.shape_cast %463 : vector<1xf32> to vector<1x1xf32>
    %c7_295 = arith.constant 7 : index
    %465 = memref.load %arg10[%c7_295] : memref<8xf32, #tpu.memory_space<smem>>
    %466 = vector.broadcast %465 : f32 to vector<1x1xf32>
    %467 = arith.addf %464, %466 : vector<1x1xf32>
    %cst_296 = arith.constant 0.000000e+00 : f32
    %468 = vector.broadcast %cst_296 : f32 to vector<1x1xf32>
    %469 = arith.cmpf oge, %467, %468 : vector<1x1xf32>
    %cst_297 = arith.constant 0.00999999977 : f32
    %470 = vector.broadcast %cst_297 : f32 to vector<1x1xf32>
    %471 = arith.mulf %470, %467 : vector<1x1xf32>
    %472 = arith.select %469, %467, %471 : vector<1x1xi1>, vector<1x1xf32>
    %c0_298 = arith.constant 0 : index
    %c0_299 = arith.constant 0 : index
    %473 = vector.load %arg12[%c0_298, %c0_299] : memref<24x24xf32, #tpu.memory_space<vmem>>, vector<24x24xf32>
    %c0_300 = arith.constant 0 : index
    %c0_301 = arith.constant 0 : index
    %c0_302 = arith.constant 0 : index
    %474 = vector.load %arg11[%c0_300, %c0_301, %c0_302] : memref<8x24x24xf32, #tpu.memory_space<vmem>>, vector<1x24x24xf32>
    %475 = vector.shape_cast %474 : vector<1x24x24xf32> to vector<24x24xf32>
    %476 = vector.broadcast %367 : vector<1x1xf32> to vector<24x24xf32>
    %477 = arith.mulf %475, %476 : vector<24x24xf32>
    %478 = arith.addf %473, %477 : vector<24x24xf32>
    %c1_303 = arith.constant 1 : index
    %c0_304 = arith.constant 0 : index
    %c0_305 = arith.constant 0 : index
    %479 = vector.load %arg11[%c1_303, %c0_304, %c0_305] : memref<8x24x24xf32, #tpu.memory_space<vmem>>, vector<1x24x24xf32>
    %480 = vector.shape_cast %479 : vector<1x24x24xf32> to vector<24x24xf32>
    %481 = vector.broadcast %382 : vector<1x1xf32> to vector<24x24xf32>
    %482 = arith.mulf %480, %481 : vector<24x24xf32>
    %483 = arith.addf %478, %482 : vector<24x24xf32>
    %c2_306 = arith.constant 2 : index
    %c0_307 = arith.constant 0 : index
    %c0_308 = arith.constant 0 : index
    %484 = vector.load %arg11[%c2_306, %c0_307, %c0_308] : memref<8x24x24xf32, #tpu.memory_space<vmem>>, vector<1x24x24xf32>
    %485 = vector.shape_cast %484 : vector<1x24x24xf32> to vector<24x24xf32>
    %486 = vector.broadcast %397 : vector<1x1xf32> to vector<24x24xf32>
    %487 = arith.mulf %485, %486 : vector<24x24xf32>
    %488 = arith.addf %483, %487 : vector<24x24xf32>
    %c3_309 = arith.constant 3 : index
    %c0_310 = arith.constant 0 : index
    %c0_311 = arith.constant 0 : index
    %489 = vector.load %arg11[%c3_309, %c0_310, %c0_311] : memref<8x24x24xf32, #tpu.memory_space<vmem>>, vector<1x24x24xf32>
    %490 = vector.shape_cast %489 : vector<1x24x24xf32> to vector<24x24xf32>
    %491 = vector.broadcast %412 : vector<1x1xf32> to vector<24x24xf32>
    %492 = arith.mulf %490, %491 : vector<24x24xf32>
    %493 = arith.addf %488, %492 : vector<24x24xf32>
    %c4_312 = arith.constant 4 : index
    %c0_313 = arith.constant 0 : index
    %c0_314 = arith.constant 0 : index
    %494 = vector.load %arg11[%c4_312, %c0_313, %c0_314] : memref<8x24x24xf32, #tpu.memory_space<vmem>>, vector<1x24x24xf32>
    %495 = vector.shape_cast %494 : vector<1x24x24xf32> to vector<24x24xf32>
    %496 = vector.broadcast %427 : vector<1x1xf32> to vector<24x24xf32>
    %497 = arith.mulf %495, %496 : vector<24x24xf32>
    %498 = arith.addf %493, %497 : vector<24x24xf32>
    %c5_315 = arith.constant 5 : index
    %c0_316 = arith.constant 0 : index
    %c0_317 = arith.constant 0 : index
    %499 = vector.load %arg11[%c5_315, %c0_316, %c0_317] : memref<8x24x24xf32, #tpu.memory_space<vmem>>, vector<1x24x24xf32>
    %500 = vector.shape_cast %499 : vector<1x24x24xf32> to vector<24x24xf32>
    %501 = vector.broadcast %442 : vector<1x1xf32> to vector<24x24xf32>
    %502 = arith.mulf %500, %501 : vector<24x24xf32>
    %503 = arith.addf %498, %502 : vector<24x24xf32>
    %c6_318 = arith.constant 6 : index
    %c0_319 = arith.constant 0 : index
    %c0_320 = arith.constant 0 : index
    %504 = vector.load %arg11[%c6_318, %c0_319, %c0_320] : memref<8x24x24xf32, #tpu.memory_space<vmem>>, vector<1x24x24xf32>
    %505 = vector.shape_cast %504 : vector<1x24x24xf32> to vector<24x24xf32>
    %506 = vector.broadcast %457 : vector<1x1xf32> to vector<24x24xf32>
    %507 = arith.mulf %505, %506 : vector<24x24xf32>
    %508 = arith.addf %503, %507 : vector<24x24xf32>
    %c7_321 = arith.constant 7 : index
    %c0_322 = arith.constant 0 : index
    %c0_323 = arith.constant 0 : index
    %509 = vector.load %arg11[%c7_321, %c0_322, %c0_323] : memref<8x24x24xf32, #tpu.memory_space<vmem>>, vector<1x24x24xf32>
    %510 = vector.shape_cast %509 : vector<1x24x24xf32> to vector<24x24xf32>
    %511 = vector.broadcast %472 : vector<1x1xf32> to vector<24x24xf32>
    %512 = arith.mulf %510, %511 : vector<24x24xf32>
    %513 = arith.addf %508, %512 : vector<24x24xf32>
    %cst_324 = arith.constant 0.000000e+00 : f32
    %514 = vector.broadcast %cst_324 : f32 to vector<24x24xf32>
    %515 = arith.cmpf oge, %513, %514 : vector<24x24xf32>
    %cst_325 = arith.constant 0.00999999977 : f32
    %516 = vector.broadcast %cst_325 : f32 to vector<24x24xf32>
    %517 = arith.mulf %516, %513 : vector<24x24xf32>
    %518 = arith.select %515, %513, %517 : vector<24x24xi1>, vector<24x24xf32>
    %c1_326 = arith.constant 1 : index
    %c2_327 = arith.constant 2 : index
    %c2_328 = arith.constant 2 : index
    %519 = vector.load %arg25[%c1_326, %c2_327, %c2_328] : memref<2x28x28xf32, #tpu.memory_space<vmem>>, vector<1x24x24xf32>
    %520 = vector.shape_cast %519 : vector<1x24x24xf32> to vector<24x24xf32>
    %521 = vector.shape_cast %518 : vector<24x24xf32> to vector<1x24x24xf32>
    tpu.vector_store %arg25[%c1_326, %c2_327, %c2_328], %521 {strides = array<i32>} : memref<2x28x28xf32, #tpu.memory_space<vmem>>, vector<1x24x24xf32>,
    %cst_329 = arith.constant 0.000000e+00 : f32
    %522 = vector.broadcast %cst_329 : f32 to vector<1x16xf32>
    %cst_330 = arith.constant 0.000000e+00 : f32
    %523 = vector.broadcast %cst_330 : f32 to vector<1x16xf32>
    %c0_331 = arith.constant 0 : index
    %c0_332 = arith.constant 0 : index
    %c0_333 = arith.constant 0 : index
    %524 = vector.load %arg25[%c0_331, %c0_332, %c0_333] : memref<2x28x28xf32, #tpu.memory_space<vmem>>, vector<1x26x28xf32>
    %525 = vector.shape_cast %524 : vector<1x26x28xf32> to vector<26x28xf32>
    %c0_334 = arith.constant 0 : index
    %c0_335 = arith.constant 0 : index
    %c0_336 = arith.constant 0 : index
    %526 = vector.load %arg13[%c0_334, %c0_335, %c0_336] : memref<3x28x512xf32, #tpu.memory_space<vmem>>, vector<1x28x512xf32>
    %527 = vector.shape_cast %526 : vector<1x28x512xf32> to vector<28x512xf32>
    %cst_337 = arith.constant dense<0.000000e+00> : vector<26x512xf32>
    %528 = tpu.matmul %525, %527, %cst_337 {dimension_numbers = #tpu.dot_dimension_numbers<[1], [0], [0], [1], [0, 0, 1, 1], [], []>} : vector<26x28xf32>, vector<28x512xf32>, vector<26x512xf32> -> vector<26x512xf32>
    %c0_338 = arith.constant 0 : index
    %c1_339 = arith.constant 1 : index
    %c0_340 = arith.constant 0 : index
    %529 = vector.load %arg25[%c0_338, %c1_339, %c0_340] : memref<2x28x28xf32, #tpu.memory_space<vmem>>, vector<1x26x28xf32>
    %530 = vector.shape_cast %529 : vector<1x26x28xf32> to vector<26x28xf32>
    %c1_341 = arith.constant 1 : index
    %c0_342 = arith.constant 0 : index
    %c0_343 = arith.constant 0 : index
    %531 = vector.load %arg13[%c1_341, %c0_342, %c0_343] : memref<3x28x512xf32, #tpu.memory_space<vmem>>, vector<1x28x512xf32>
    %532 = vector.shape_cast %531 : vector<1x28x512xf32> to vector<28x512xf32>
    %cst_344 = arith.constant dense<0.000000e+00> : vector<26x512xf32>
    %533 = tpu.matmul %530, %532, %cst_344 {dimension_numbers = #tpu.dot_dimension_numbers<[1], [0], [0], [1], [0, 0, 1, 1], [], []>} : vector<26x28xf32>, vector<28x512xf32>, vector<26x512xf32> -> vector<26x512xf32>
    %534 = arith.addf %528, %533 : vector<26x512xf32>
    %c0_345 = arith.constant 0 : index
    %c2_346 = arith.constant 2 : index
    %c0_347 = arith.constant 0 : index
    %535 = vector.load %arg25[%c0_345, %c2_346, %c0_347] : memref<2x28x28xf32, #tpu.memory_space<vmem>>, vector<1x26x28xf32>
    %536 = vector.shape_cast %535 : vector<1x26x28xf32> to vector<26x28xf32>
    %c2_348 = arith.constant 2 : index
    %c0_349 = arith.constant 0 : index
    %c0_350 = arith.constant 0 : index
    %537 = vector.load %arg13[%c2_348, %c0_349, %c0_350] : memref<3x28x512xf32, #tpu.memory_space<vmem>>, vector<1x28x512xf32>
    %538 = vector.shape_cast %537 : vector<1x28x512xf32> to vector<28x512xf32>
    %cst_351 = arith.constant dense<0.000000e+00> : vector<26x512xf32>
    %539 = tpu.matmul %536, %538, %cst_351 {dimension_numbers = #tpu.dot_dimension_numbers<[1], [0], [0], [1], [0, 0, 1, 1], [], []>} : vector<26x28xf32>, vector<28x512xf32>, vector<26x512xf32> -> vector<26x512xf32>
    %540 = arith.addf %534, %539 : vector<26x512xf32>
    %c0_352 = arith.constant 0 : index
    %c0_353 = arith.constant 0 : index
    %541 = vector.load %arg14[%c0_352, %c0_353] : memref<1x512xf32, #tpu.memory_space<vmem>>, vector<1x512xf32>
    %542 = vector.broadcast %541 : vector<1x512xf32> to vector<26x512xf32>
    %543 = arith.addf %540, %542 : vector<26x512xf32>
    %cst_354 = arith.constant dense<0.000000e+00> : vector<26x16xf32>
    %544 = tpu.matmul %543, %4, %cst_354 {dimension_numbers = #tpu.dot_dimension_numbers<[1], [0], [0], [1], [0, 0, 1, 1], [], []>} : vector<26x512xf32>, vector<512x16xf32>, vector<26x16xf32> -> vector<26x16xf32>
    %cst_355 = arith.constant dense<0.000000e+00> : vector<16xf32>
    %545 = vector.multi_reduction <add>, %544, %cst_355 [0] : vector<26x16xf32> to vector<16xf32>
    %546 = vector.shape_cast %545 : vector<16xf32> to vector<1x16xf32>
    %547 = arith.addf %522, %546 : vector<1x16xf32>
    %548 = arith.mulf %543, %543 : vector<26x512xf32>
    %cst_356 = arith.constant dense<0.000000e+00> : vector<26x16xf32>
    %549 = tpu.matmul %548, %4, %cst_356 {dimension_numbers = #tpu.dot_dimension_numbers<[1], [0], [0], [1], [0, 0, 1, 1], [], []>} : vector<26x512xf32>, vector<512x16xf32>, vector<26x16xf32> -> vector<26x16xf32>
    %cst_357 = arith.constant dense<0.000000e+00> : vector<16xf32>
    %550 = vector.multi_reduction <add>, %549, %cst_357 [0] : vector<26x16xf32> to vector<16xf32>
    %551 = vector.shape_cast %550 : vector<16xf32> to vector<1x16xf32>
    %552 = arith.addf %523, %551 : vector<1x16xf32>
    %c1_358 = arith.constant 1 : index
    %c0_359 = arith.constant 0 : index
    %c0_360 = arith.constant 0 : index
    %553 = vector.load %arg25[%c1_358, %c0_359, %c0_360] : memref<2x28x28xf32, #tpu.memory_space<vmem>>, vector<1x26x28xf32>
    %554 = vector.shape_cast %553 : vector<1x26x28xf32> to vector<26x28xf32>
    %c0_361 = arith.constant 0 : index
    %c0_362 = arith.constant 0 : index
    %c0_363 = arith.constant 0 : index
    %555 = vector.load %arg13[%c0_361, %c0_362, %c0_363] : memref<3x28x512xf32, #tpu.memory_space<vmem>>, vector<1x28x512xf32>
    %556 = vector.shape_cast %555 : vector<1x28x512xf32> to vector<28x512xf32>
    %cst_364 = arith.constant dense<0.000000e+00> : vector<26x512xf32>
    %557 = tpu.matmul %554, %556, %cst_364 {dimension_numbers = #tpu.dot_dimension_numbers<[1], [0], [0], [1], [0, 0, 1, 1], [], []>} : vector<26x28xf32>, vector<28x512xf32>, vector<26x512xf32> -> vector<26x512xf32>
    %c1_365 = arith.constant 1 : index
    %c1_366 = arith.constant 1 : index
    %c0_367 = arith.constant 0 : index
    %558 = vector.load %arg25[%c1_365, %c1_366, %c0_367] : memref<2x28x28xf32, #tpu.memory_space<vmem>>, vector<1x26x28xf32>
    %559 = vector.shape_cast %558 : vector<1x26x28xf32> to vector<26x28xf32>
    %c1_368 = arith.constant 1 : index
    %c0_369 = arith.constant 0 : index
    %c0_370 = arith.constant 0 : index
    %560 = vector.load %arg13[%c1_368, %c0_369, %c0_370] : memref<3x28x512xf32, #tpu.memory_space<vmem>>, vector<1x28x512xf32>
    %561 = vector.shape_cast %560 : vector<1x28x512xf32> to vector<28x512xf32>
    %cst_371 = arith.constant dense<0.000000e+00> : vector<26x512xf32>
    %562 = tpu.matmul %559, %561, %cst_371 {dimension_numbers = #tpu.dot_dimension_numbers<[1], [0], [0], [1], [0, 0, 1, 1], [], []>} : vector<26x28xf32>, vector<28x512xf32>, vector<26x512xf32> -> vector<26x512xf32>
    %563 = arith.addf %557, %562 : vector<26x512xf32>
    %c1_372 = arith.constant 1 : index
    %c2_373 = arith.constant 2 : index
    %c0_374 = arith.constant 0 : index
    %564 = vector.load %arg25[%c1_372, %c2_373, %c0_374] : memref<2x28x28xf32, #tpu.memory_space<vmem>>, vector<1x26x28xf32>
    %565 = vector.shape_cast %564 : vector<1x26x28xf32> to vector<26x28xf32>
    %c2_375 = arith.constant 2 : index
    %c0_376 = arith.constant 0 : index
    %c0_377 = arith.constant 0 : index
    %566 = vector.load %arg13[%c2_375, %c0_376, %c0_377] : memref<3x28x512xf32, #tpu.memory_space<vmem>>, vector<1x28x512xf32>
    %567 = vector.shape_cast %566 : vector<1x28x512xf32> to vector<28x512xf32>
    %cst_378 = arith.constant dense<0.000000e+00> : vector<26x512xf32>
    %568 = tpu.matmul %565, %567, %cst_378 {dimension_numbers = #tpu.dot_dimension_numbers<[1], [0], [0], [1], [0, 0, 1, 1], [], []>} : vector<26x28xf32>, vector<28x512xf32>, vector<26x512xf32> -> vector<26x512xf32>
    %569 = arith.addf %563, %568 : vector<26x512xf32>
    %c0_379 = arith.constant 0 : index
    %c0_380 = arith.constant 0 : index
    %570 = vector.load %arg14[%c0_379, %c0_380] : memref<1x512xf32, #tpu.memory_space<vmem>>, vector<1x512xf32>
    %571 = vector.broadcast %570 : vector<1x512xf32> to vector<26x512xf32>
    %572 = arith.addf %569, %571 : vector<26x512xf32>
    %cst_381 = arith.constant dense<0.000000e+00> : vector<26x16xf32>
    %573 = tpu.matmul %572, %4, %cst_381 {dimension_numbers = #tpu.dot_dimension_numbers<[1], [0], [0], [1], [0, 0, 1, 1], [], []>} : vector<26x512xf32>, vector<512x16xf32>, vector<26x16xf32> -> vector<26x16xf32>
    %cst_382 = arith.constant dense<0.000000e+00> : vector<16xf32>
    %574 = vector.multi_reduction <add>, %573, %cst_382 [0] : vector<26x16xf32> to vector<16xf32>
    %575 = vector.shape_cast %574 : vector<16xf32> to vector<1x16xf32>
    %576 = arith.addf %547, %575 : vector<1x16xf32>
    %577 = arith.mulf %572, %572 : vector<26x512xf32>
    %cst_383 = arith.constant dense<0.000000e+00> : vector<26x16xf32>
    %578 = tpu.matmul %577, %4, %cst_383 {dimension_numbers = #tpu.dot_dimension_numbers<[1], [0], [0], [1], [0, 0, 1, 1], [], []>} : vector<26x512xf32>, vector<512x16xf32>, vector<26x16xf32> -> vector<26x16xf32>
    %cst_384 = arith.constant dense<0.000000e+00> : vector<16xf32>
    %579 = vector.multi_reduction <add>, %578, %cst_384 [0] : vector<26x16xf32> to vector<16xf32>
    %580 = vector.shape_cast %579 : vector<16xf32> to vector<1x16xf32>
    %581 = arith.addf %552, %580 : vector<1x16xf32>
    %cst_385 = arith.constant 7.396450e-04 : f32
    %582 = vector.broadcast %cst_385 : f32 to vector<1x16xf32>
    %583 = arith.mulf %576, %582 : vector<1x16xf32>
    %cst_386 = arith.constant 7.396450e-04 : f32
    %584 = vector.broadcast %cst_386 : f32 to vector<1x16xf32>
    %585 = arith.mulf %581, %584 : vector<1x16xf32>
    %586 = arith.mulf %583, %583 : vector<1x16xf32>
    %587 = arith.subf %585, %586 : vector<1x16xf32>
    %c0_387 = arith.constant 0 : index
    %c0_388 = arith.constant 0 : index
    %588 = vector.load %arg15[%c0_387, %c0_388] : memref<1x16xf32, #tpu.memory_space<vmem>>, vector<1x16xf32>
    %cst_389 = arith.constant 9.99999974E-6 : f32
    %589 = vector.broadcast %cst_389 : f32 to vector<1x16xf32>
    %590 = arith.addf %587, %589 : vector<1x16xf32>
    %591 = math.rsqrt %590 : vector<1x16xf32>
    %592 = arith.mulf %588, %591 : vector<1x16xf32>
    %c0_390 = arith.constant 0 : index
    %c0_391 = arith.constant 0 : index
    %593 = vector.load %arg16[%c0_390, %c0_391] : memref<1x16xf32, #tpu.memory_space<vmem>>, vector<1x16xf32>
    %594 = arith.mulf %583, %592 : vector<1x16xf32>
    %595 = arith.subf %593, %594 : vector<1x16xf32>
    %596 = vector.shape_cast %592 : vector<1x16xf32> to vector<1x16xf32>
    %597 = vector.broadcast %596 : vector<1x16xf32> to vector<26x16xf32>
    %cst_392 = arith.constant dense<0.000000e+00> : vector<26x512xf32>
    %598 = tpu.matmul %597, %5, %cst_392 {dimension_numbers = #tpu.dot_dimension_numbers<[1], [0], [0], [1], [0, 0, 1, 1], [], []>} : vector<26x16xf32>, vector<16x512xf32>, vector<26x512xf32> -> vector<26x512xf32>
    %599 = vector.shape_cast %595 : vector<1x16xf32> to vector<1x16xf32>
    %600 = vector.broadcast %599 : vector<1x16xf32> to vector<26x16xf32>
    %cst_393 = arith.constant dense<0.000000e+00> : vector<26x512xf32>
    %601 = tpu.matmul %600, %5, %cst_393 {dimension_numbers = #tpu.dot_dimension_numbers<[1], [0], [0], [1], [0, 0, 1, 1], [], []>} : vector<26x16xf32>, vector<16x512xf32>, vector<26x512xf32> -> vector<26x512xf32>
    %602 = arith.mulf %543, %598 : vector<26x512xf32>
    %603 = arith.addf %602, %601 : vector<26x512xf32>
    %c0_394 = arith.constant 0 : index
    %c2_395 = arith.constant 2 : index
    %c0_396 = arith.constant 0 : index
    %604 = vector.load %arg26[%c0_394, %c2_395, %c0_396] : memref<2x30x512xf32, #tpu.memory_space<vmem>>, vector<1x26x512xf32>
    %605 = vector.shape_cast %604 : vector<1x26x512xf32> to vector<26x512xf32>
    %606 = vector.shape_cast %603 : vector<26x512xf32> to vector<1x26x512xf32>
    tpu.vector_store %arg26[%c0_394, %c2_395, %c0_396], %606 {strides = array<i32>} : memref<2x30x512xf32, #tpu.memory_space<vmem>>, vector<1x26x512xf32>,
    %607 = arith.mulf %572, %598 : vector<26x512xf32>
    %608 = arith.addf %607, %601 : vector<26x512xf32>
    %c1_397 = arith.constant 1 : index
    %c2_398 = arith.constant 2 : index
    %c0_399 = arith.constant 0 : index
    %609 = vector.load %arg26[%c1_397, %c2_398, %c0_399] : memref<2x30x512xf32, #tpu.memory_space<vmem>>, vector<1x26x512xf32>
    %610 = vector.shape_cast %609 : vector<1x26x512xf32> to vector<26x512xf32>
    %611 = vector.shape_cast %608 : vector<26x512xf32> to vector<1x26x512xf32>
    tpu.vector_store %arg26[%c1_397, %c2_398, %c0_399], %611 {strides = array<i32>} : memref<2x30x512xf32, #tpu.memory_space<vmem>>, vector<1x26x512xf32>,
    %cst_400 = arith.constant 0.000000e+00 : f32
    %612 = vector.broadcast %cst_400 : f32 to vector<1x1xf32>
    %cst_401 = arith.constant 0.000000e+00 : f32
    %613 = vector.broadcast %cst_401 : f32 to vector<1x1xf32>
    %c0_402 = arith.constant 0 : index
    %c0_403 = arith.constant 0 : index
    %c0_404 = arith.constant 0 : index
    %614 = vector.load %arg26[%c0_402, %c0_403, %c0_404] : memref<2x30x512xf32, #tpu.memory_space<vmem>>, vector<1x28x512xf32>
    %615 = vector.shape_cast %614 : vector<1x28x512xf32> to vector<28x512xf32>
    %c0_405 = arith.constant 0 : index
    %c0_406 = arith.constant 0 : index
    %c0_407 = arith.constant 0 : index
    %616 = vector.load %arg17[%c0_405, %c0_406, %c0_407] : memref<3x28x512xf32, #tpu.memory_space<vmem>>, vector<1x28x512xf32>
    %617 = vector.shape_cast %616 : vector<1x28x512xf32> to vector<28x512xf32>
    %cst_408 = arith.constant dense<0.000000e+00> : vector<28x28xf32>
    %618 = tpu.matmul %615, %617, %cst_408 {dimension_numbers = #tpu.dot_dimension_numbers<[1], [1], [0], [0], [0, 0, 1, 0], [], []>} : vector<28x512xf32>, vector<28x512xf32>, vector<28x28xf32> -> vector<28x28xf32>
    %c0_409 = arith.constant 0 : index
    %c1_410 = arith.constant 1 : index
    %c0_411 = arith.constant 0 : index
    %619 = vector.load %arg26[%c0_409, %c1_410, %c0_411] : memref<2x30x512xf32, #tpu.memory_space<vmem>>, vector<1x28x512xf32>
    %620 = vector.shape_cast %619 : vector<1x28x512xf32> to vector<28x512xf32>
    %c1_412 = arith.constant 1 : index
    %c0_413 = arith.constant 0 : index
    %c0_414 = arith.constant 0 : index
    %621 = vector.load %arg17[%c1_412, %c0_413, %c0_414] : memref<3x28x512xf32, #tpu.memory_space<vmem>>, vector<1x28x512xf32>
    %622 = vector.shape_cast %621 : vector<1x28x512xf32> to vector<28x512xf32>
    %cst_415 = arith.constant dense<0.000000e+00> : vector<28x28xf32>
    %623 = tpu.matmul %620, %622, %cst_415 {dimension_numbers = #tpu.dot_dimension_numbers<[1], [1], [0], [0], [0, 0, 1, 0], [], []>} : vector<28x512xf32>, vector<28x512xf32>, vector<28x28xf32> -> vector<28x28xf32>
    %624 = arith.addf %618, %623 : vector<28x28xf32>
    %c0_416 = arith.constant 0 : index
    %c2_417 = arith.constant 2 : index
    %c0_418 = arith.constant 0 : index
    %625 = vector.load %arg26[%c0_416, %c2_417, %c0_418] : memref<2x30x512xf32, #tpu.memory_space<vmem>>, vector<1x28x512xf32>
    %626 = vector.shape_cast %625 : vector<1x28x512xf32> to vector<28x512xf32>
    %c2_419 = arith.constant 2 : index
    %c0_420 = arith.constant 0 : index
    %c0_421 = arith.constant 0 : index
    %627 = vector.load %arg17[%c2_419, %c0_420, %c0_421] : memref<3x28x512xf32, #tpu.memory_space<vmem>>, vector<1x28x512xf32>
    %628 = vector.shape_cast %627 : vector<1x28x512xf32> to vector<28x512xf32>
    %cst_422 = arith.constant dense<0.000000e+00> : vector<28x28xf32>
    %629 = tpu.matmul %626, %628, %cst_422 {dimension_numbers = #tpu.dot_dimension_numbers<[1], [1], [0], [0], [0, 0, 1, 0], [], []>} : vector<28x512xf32>, vector<28x512xf32>, vector<28x28xf32> -> vector<28x28xf32>
    %630 = arith.addf %624, %629 : vector<28x28xf32>
    %c0_423 = arith.constant 0 : index
    %631 = memref.load %arg18[%c0_423] : memref<1xf32, #tpu.memory_space<smem>>
    %632 = vector.broadcast %631 : f32 to vector<28x28xf32>
    %633 = arith.addf %630, %632 : vector<28x28xf32>
    %cst_424 = arith.constant dense<0.000000e+00> : vector<28xf32>
    %634 = vector.multi_reduction <add>, %633, %cst_424 [1] : vector<28x28xf32> to vector<28xf32>
    %635 = vector.shape_cast %634 : vector<28xf32> to vector<28x1xf32>
    %cst_425 = arith.constant dense<0.000000e+00> : vector<1xf32>
    %636 = vector.multi_reduction <add>, %635, %cst_425 [0] : vector<28x1xf32> to vector<1xf32>
    %637 = vector.shape_cast %636 : vector<1xf32> to vector<1x1xf32>
    %638 = arith.addf %612, %637 : vector<1x1xf32>
    %639 = arith.mulf %633, %633 : vector<28x28xf32>
    %cst_426 = arith.constant dense<0.000000e+00> : vector<28xf32>
    %640 = vector.multi_reduction <add>, %639, %cst_426 [1] : vector<28x28xf32> to vector<28xf32>
    %641 = vector.shape_cast %640 : vector<28xf32> to vector<28x1xf32>
    %cst_427 = arith.constant dense<0.000000e+00> : vector<1xf32>
    %642 = vector.multi_reduction <add>, %641, %cst_427 [0] : vector<28x1xf32> to vector<1xf32>
    %643 = vector.shape_cast %642 : vector<1xf32> to vector<1x1xf32>
    %644 = arith.addf %613, %643 : vector<1x1xf32>
    %c1_428 = arith.constant 1 : index
    %c0_429 = arith.constant 0 : index
    %c0_430 = arith.constant 0 : index
    %645 = vector.load %arg26[%c1_428, %c0_429, %c0_430] : memref<2x30x512xf32, #tpu.memory_space<vmem>>, vector<1x28x512xf32>
    %646 = vector.shape_cast %645 : vector<1x28x512xf32> to vector<28x512xf32>
    %c0_431 = arith.constant 0 : index
    %c0_432 = arith.constant 0 : index
    %c0_433 = arith.constant 0 : index
    %647 = vector.load %arg17[%c0_431, %c0_432, %c0_433] : memref<3x28x512xf32, #tpu.memory_space<vmem>>, vector<1x28x512xf32>
    %648 = vector.shape_cast %647 : vector<1x28x512xf32> to vector<28x512xf32>
    %cst_434 = arith.constant dense<0.000000e+00> : vector<28x28xf32>
    %649 = tpu.matmul %646, %648, %cst_434 {dimension_numbers = #tpu.dot_dimension_numbers<[1], [1], [0], [0], [0, 0, 1, 0], [], []>} : vector<28x512xf32>, vector<28x512xf32>, vector<28x28xf32> -> vector<28x28xf32>
    %c1_435 = arith.constant 1 : index
    %c1_436 = arith.constant 1 : index
    %c0_437 = arith.constant 0 : index
    %650 = vector.load %arg26[%c1_435, %c1_436, %c0_437] : memref<2x30x512xf32, #tpu.memory_space<vmem>>, vector<1x28x512xf32>
    %651 = vector.shape_cast %650 : vector<1x28x512xf32> to vector<28x512xf32>
    %c1_438 = arith.constant 1 : index
    %c0_439 = arith.constant 0 : index
    %c0_440 = arith.constant 0 : index
    %652 = vector.load %arg17[%c1_438, %c0_439, %c0_440] : memref<3x28x512xf32, #tpu.memory_space<vmem>>, vector<1x28x512xf32>
    %653 = vector.shape_cast %652 : vector<1x28x512xf32> to vector<28x512xf32>
    %cst_441 = arith.constant dense<0.000000e+00> : vector<28x28xf32>
    %654 = tpu.matmul %651, %653, %cst_441 {dimension_numbers = #tpu.dot_dimension_numbers<[1], [1], [0], [0], [0, 0, 1, 0], [], []>} : vector<28x512xf32>, vector<28x512xf32>, vector<28x28xf32> -> vector<28x28xf32>
    %655 = arith.addf %649, %654 : vector<28x28xf32>
    %c1_442 = arith.constant 1 : index
    %c2_443 = arith.constant 2 : index
    %c0_444 = arith.constant 0 : index
    %656 = vector.load %arg26[%c1_442, %c2_443, %c0_444] : memref<2x30x512xf32, #tpu.memory_space<vmem>>, vector<1x28x512xf32>
    %657 = vector.shape_cast %656 : vector<1x28x512xf32> to vector<28x512xf32>
    %c2_445 = arith.constant 2 : index
    %c0_446 = arith.constant 0 : index
    %c0_447 = arith.constant 0 : index
    %658 = vector.load %arg17[%c2_445, %c0_446, %c0_447] : memref<3x28x512xf32, #tpu.memory_space<vmem>>, vector<1x28x512xf32>
    %659 = vector.shape_cast %658 : vector<1x28x512xf32> to vector<28x512xf32>
    %cst_448 = arith.constant dense<0.000000e+00> : vector<28x28xf32>
    %660 = tpu.matmul %657, %659, %cst_448 {dimension_numbers = #tpu.dot_dimension_numbers<[1], [1], [0], [0], [0, 0, 1, 0], [], []>} : vector<28x512xf32>, vector<28x512xf32>, vector<28x28xf32> -> vector<28x28xf32>
    %661 = arith.addf %655, %660 : vector<28x28xf32>
    %c0_449 = arith.constant 0 : index
    %662 = memref.load %arg18[%c0_449] : memref<1xf32, #tpu.memory_space<smem>>
    %663 = vector.broadcast %662 : f32 to vector<28x28xf32>
    %664 = arith.addf %661, %663 : vector<28x28xf32>
    %cst_450 = arith.constant dense<0.000000e+00> : vector<28xf32>
    %665 = vector.multi_reduction <add>, %664, %cst_450 [1] : vector<28x28xf32> to vector<28xf32>
    %666 = vector.shape_cast %665 : vector<28xf32> to vector<28x1xf32>
    %cst_451 = arith.constant dense<0.000000e+00> : vector<1xf32>
    %667 = vector.multi_reduction <add>, %666, %cst_451 [0] : vector<28x1xf32> to vector<1xf32>
    %668 = vector.shape_cast %667 : vector<1xf32> to vector<1x1xf32>
    %669 = arith.addf %638, %668 : vector<1x1xf32>
    %670 = arith.mulf %664, %664 : vector<28x28xf32>
    %cst_452 = arith.constant dense<0.000000e+00> : vector<28xf32>
    %671 = vector.multi_reduction <add>, %670, %cst_452 [1] : vector<28x28xf32> to vector<28xf32>
    %672 = vector.shape_cast %671 : vector<28xf32> to vector<28x1xf32>
    %cst_453 = arith.constant dense<0.000000e+00> : vector<1xf32>
    %673 = vector.multi_reduction <add>, %672, %cst_453 [0] : vector<28x1xf32> to vector<1xf32>
    %674 = vector.shape_cast %673 : vector<1xf32> to vector<1x1xf32>
    %675 = arith.addf %644, %674 : vector<1x1xf32>
    %cst_454 = arith.constant 6.37755089E-4 : f32
    %676 = vector.broadcast %cst_454 : f32 to vector<1x1xf32>
    %677 = arith.mulf %669, %676 : vector<1x1xf32>
    %cst_455 = arith.constant 6.37755089E-4 : f32
    %678 = vector.broadcast %cst_455 : f32 to vector<1x1xf32>
    %679 = arith.mulf %675, %678 : vector<1x1xf32>
    %680 = arith.mulf %677, %677 : vector<1x1xf32>
    %681 = arith.subf %679, %680 : vector<1x1xf32>
    %c0_456 = arith.constant 0 : index
    %682 = memref.load %arg19[%c0_456] : memref<1xf32, #tpu.memory_space<smem>>
    %cst_457 = arith.constant 9.99999974E-6 : f32
    %683 = vector.broadcast %cst_457 : f32 to vector<1x1xf32>
    %684 = arith.addf %681, %683 : vector<1x1xf32>
    %685 = math.rsqrt %684 : vector<1x1xf32>
    %686 = vector.broadcast %682 : f32 to vector<1x1xf32>
    %687 = arith.mulf %686, %685 : vector<1x1xf32>
    %c0_458 = arith.constant 0 : index
    %688 = memref.load %arg20[%c0_458] : memref<1xf32, #tpu.memory_space<smem>>
    %689 = arith.mulf %677, %687 : vector<1x1xf32>
    %690 = vector.broadcast %688 : f32 to vector<1x1xf32>
    %691 = arith.subf %690, %689 : vector<1x1xf32>
    %692 = vector.broadcast %687 : vector<1x1xf32> to vector<28x28xf32>
    %693 = arith.mulf %633, %692 : vector<28x28xf32>
    %694 = vector.broadcast %691 : vector<1x1xf32> to vector<28x28xf32>
    %695 = arith.addf %693, %694 : vector<28x28xf32>
    %696 = math.absf %695 : vector<28x28xf32>
    %cst_459 = arith.constant 0.000000e+00 : f32
    %697 = vector.broadcast %cst_459 : f32 to vector<28x28xf32>
    %698 = arith.subf %697, %696 : vector<28x28xf32>
    %699 = math.exp %698 : vector<28x28xf32>
    %cst_460 = arith.constant 1.000000e+00 : f32
    %700 = vector.broadcast %cst_460 : f32 to vector<28x28xf32>
    %701 = arith.addf %700, %699 : vector<28x28xf32>
    %cst_461 = arith.constant 1.000000e+00 : f32
    %702 = vector.broadcast %cst_461 : f32 to vector<28x28xf32>
    %703 = arith.divf %702, %701 : vector<28x28xf32>
    %cst_462 = arith.constant 0.000000e+00 : f32
    %704 = vector.broadcast %cst_462 : f32 to vector<28x28xf32>
    %705 = arith.cmpf oge, %695, %704 : vector<28x28xf32>
    %706 = arith.mulf %699, %703 : vector<28x28xf32>
    %707 = arith.select %705, %703, %706 : vector<28x28xi1>, vector<28x28xf32>
    %c0_463 = arith.constant 0 : index
    %c0_464 = arith.constant 0 : index
    %c0_465 = arith.constant 0 : index
    %c0_466 = arith.constant 0 : index
    %708 = vector.load %arg23[%c0_463, %c0_464, %c0_465, %c0_466] : memref<2x1x28x28xf32, #tpu.memory_space<vmem>>, vector<1x1x28x28xf32>
    %709 = vector.shape_cast %708 : vector<1x1x28x28xf32> to vector<28x28xf32>
    %710 = vector.shape_cast %707 : vector<28x28xf32> to vector<1x1x28x28xf32>
    tpu.vector_store %arg23[%c0_463, %c0_464, %c0_465, %c0_466], %710 {strides = array<i32>} : memref<2x1x28x28xf32, #tpu.memory_space<vmem>>, vector<1x1x28x28xf32>,
    %711 = vector.broadcast %687 : vector<1x1xf32> to vector<28x28xf32>
    %712 = arith.mulf %664, %711 : vector<28x28xf32>
    %713 = vector.broadcast %691 : vector<1x1xf32> to vector<28x28xf32>
    %714 = arith.addf %712, %713 : vector<28x28xf32>
    %715 = math.absf %714 : vector<28x28xf32>
    %cst_467 = arith.constant 0.000000e+00 : f32
    %716 = vector.broadcast %cst_467 : f32 to vector<28x28xf32>
    %717 = arith.subf %716, %715 : vector<28x28xf32>
    %718 = math.exp %717 : vector<28x28xf32>
    %cst_468 = arith.constant 1.000000e+00 : f32
    %719 = vector.broadcast %cst_468 : f32 to vector<28x28xf32>
    %720 = arith.addf %719, %718 : vector<28x28xf32>
    %cst_469 = arith.constant 1.000000e+00 : f32
    %721 = vector.broadcast %cst_469 : f32 to vector<28x28xf32>
    %722 = arith.divf %721, %720 : vector<28x28xf32>
    %cst_470 = arith.constant 0.000000e+00 : f32
    %723 = vector.broadcast %cst_470 : f32 to vector<28x28xf32>
    %724 = arith.cmpf oge, %714, %723 : vector<28x28xf32>
    %725 = arith.mulf %718, %722 : vector<28x28xf32>
    %726 = arith.select %724, %722, %725 : vector<28x28xi1>, vector<28x28xf32>
    %c1_471 = arith.constant 1 : index
    %c0_472 = arith.constant 0 : index
    %c0_473 = arith.constant 0 : index
    %c0_474 = arith.constant 0 : index
    %727 = vector.load %arg23[%c1_471, %c0_472, %c0_473, %c0_474] : memref<2x1x28x28xf32, #tpu.memory_space<vmem>>, vector<1x1x28x28xf32>
    %728 = vector.shape_cast %727 : vector<1x1x28x28xf32> to vector<28x28xf32>
    %729 = vector.shape_cast %726 : vector<28x28xf32> to vector<1x1x28x28xf32>
    tpu.vector_store %arg23[%c1_471, %c0_472, %c0_473, %c0_474], %729 {strides = array<i32>} : memref<2x1x28x28xf32, #tpu.memory_space<vmem>>, vector<1x1x28x28xf32>,
    return
  }
}

</mosaic_0001>

<llo_original>
// kernel: autoencoder_forward.1
$region0: #{autoencoder_forward.1}
  #allocation0 [shape = 'u32[]', space=smem, size = 0x4, offset = 0x4, fixed_abs, tag = 'smem constant byte address 0x4 - core index']
  #allocation1 [shape = 'u32[72,128]{1,0:T(1,128)}', space=vmem, size = 0x9000, scoped, tag = 'internal scratch']
  #allocation2 [shape = 'f32[2,26,512]{2,1,0:T(8,128)}', space=vmem, size = 0x20000, scoped, tag = 'scratch operand']
  #allocation3 [shape = 'f32[2,28,28]{2,1,0:T(8,128)}', space=vmem, size = 0x8000, scoped, tag = 'scratch operand']
  #allocation4 [shape = 'f32[2,30,512]{2,1,0:T(8,128)}', space=vmem, size = 0x20000, scoped, tag = 'scratch operand']
  #allocation5 [shape = 'f32[1]{0:T(128)S(6)}', space=smem, size = 0x200, scoped, tag = 'scoped memory for autoencoder_forward.1']
  #allocation6 [shape = 'f32[1]{0:T(128)S(6)}', space=smem, size = 0x200, scoped, tag = 'scoped memory for autoencoder_forward.1']
  #allocation7 [shape = 'f32[1]{0:T(128)S(6)}', space=smem, size = 0x200, scoped, tag = 'scoped memory for autoencoder_forward.1']
  #allocation8 [shape = 'f32[1]{0:T(128)S(6)}', space=smem, size = 0x200, scoped, tag = 'scoped memory for autoencoder_forward.1']
  #allocation9 [shape = 'f32[1]{0:T(128)S(6)}', space=smem, size = 0x200, scoped, tag = 'scoped memory for autoencoder_forward.1']
  #allocation10 [shape = 'f32[1]{0:T(128)S(6)}', space=smem, size = 0x200, scoped, tag = 'scoped memory for autoencoder_forward.1']
  %s0 = inlined_call_operand.vmem [shape: f32[2,1,28,28], index: 0, kind: input, shape index: {}]
  %s1 = inlined_call_operand.vmem [shape: f32[3,28,512], index: 1, kind: input, shape index: {}]
  %s2 = inlined_call_operand.hbm [shape: f32[1,512], index: 2, kind: input, shape index: {}]
  %s3 = inlined_call_operand.vmem [shape: f32[1,16], index: 3, kind: input, shape index: {}]
  %s4 = inlined_call_operand.vmem [shape: f32[1,16], index: 4, kind: input, shape index: {}]
  %s5 = inlined_call_operand.hbm [shape: f32[3,24,512], index: 5, kind: input, shape index: {}]
  %s6 = inlined_call_operand.<no memory space> [shape: f32[1], index: 6, kind: input, shape index: {}]
  %s7 = inlined_call_operand.<no memory space> [shape: f32[1], index: 7, kind: input, shape index: {}]
  %s8 = inlined_call_operand.<no memory space> [shape: f32[1], index: 8, kind: input, shape index: {}]
  %s9 = inlined_call_operand.vmem [shape: f32[8,24,24], index: 9, kind: input, shape index: {}]
  %s10 = inlined_call_operand.vmem [shape: f32[8], index: 10, kind: input, shape index: {}]
  %s11 = inlined_call_operand.hbm [shape: f32[8,24,24], index: 11, kind: input, shape index: {}]
  %s12 = inlined_call_operand.hbm [shape: f32[24,24], index: 12, kind: input, shape index: {}]
  %s13 = inlined_call_operand.hbm [shape: f32[3,28,512], index: 13, kind: input, shape index: {}]
  %s14 = inlined_call_operand.hbm [shape: f32[1,512], index: 14, kind: input, shape index: {}]
  %s15 = inlined_call_operand.vmem [shape: f32[1,16], index: 15, kind: input, shape index: {}]
  %s16 = inlined_call_operand.vmem [shape: f32[1,16], index: 16, kind: input, shape index: {}]
  %s17 = inlined_call_operand.hbm [shape: f32[3,28,512], index: 17, kind: input, shape index: {}]
  %s18 = inlined_call_operand.<no memory space> [shape: f32[1], index: 18, kind: input, shape index: {}]
  %s19 = inlined_call_operand.<no memory space> [shape: f32[1], index: 19, kind: input, shape index: {}]
  %s20 = inlined_call_operand.<no memory space> [shape: f32[1], index: 20, kind: input, shape index: {}]
  %s21 = inlined_call_operand.vmem [shape: f32[512,16], index: 21, kind: input, shape index: {}]
  %s22 = inlined_call_operand.vmem [shape: f32[16,512], index: 22, kind: input, shape index: {}]
  %s23 = inlined_call_operand.vmem [shape: f32[2,1,28,28], index: 23, kind: output, shape index: {}]
  %s24 = sld [smem:[#allocation0]]
  $region134: #{autoencoder_forward.1} parent=0
    _
  %s26 = ssub.s32 1, %s24
  %s27 = scalar_select 0, %s26, %s24
  %28 = sst [smem:[#allocation5]] %s6
  %29 = sst [smem:[#allocation6]] %s7
  %30 = sst [smem:[#allocation7]] %s8
  %31 = sst [smem:[#allocation8]] %s18
  %32 = sst [smem:[#allocation9]] %s19
  %33 = sst [smem:[#allocation10]] %s20
  $region1: #{autoencoder_forward.1} parent=0
    #allocation11 [shape = 'u8[2048]{0}', space=vmem, size = 0x800, scoped, tag = 'input window, operand 2, single buffered']
    #allocation12 [shape = 's32[1]{0}', space=sflag, size = 0x4, scoped, tag = 'scoped memory for autoencoder_forward.1']
    #allocation13 [shape = 's32[1]{0}', space=sflag, size = 0x4, scoped, tag = 'scoped memory for autoencoder_forward.1']
    #allocation14 [shape = 'u8[147456]{0}', space=vmem, size = 0x24000, scoped, tag = 'input window, operand 5, single buffered']
    #allocation15 [shape = 's32[1]{0}', space=sflag, size = 0x4, scoped, tag = 'scoped memory for autoencoder_forward.1']
    #allocation16 [shape = 'u8[512]{0}', space=smem, size = 0x200, scoped, tag = 'input window, operand 10, single buffered']
    #allocation17 [shape = 'u8[98304]{0}', space=vmem, size = 0x18000, scoped, tag = 'input window, operand 11, single buffered']
    #allocation18 [shape = 'u8[12288]{0}', space=vmem, size = 0x3000, scoped, tag = 'input window, operand 12, single buffered']
    #allocation19 [shape = 's32[1]{0}', space=sflag, size = 0x4, scoped, tag = 'scoped memory for autoencoder_forward.1']
    #allocation20 [shape = 'u8[196608]{0}', space=vmem, size = 0x30000, scoped, tag = 'input window, operand 13, single buffered']
    #allocation21 [shape = 'u8[2048]{0}', space=vmem, size = 0x800, scoped, tag = 'input window, operand 14, single buffered']
    #allocation22 [shape = 's32[1]{0}', space=sflag, size = 0x4, scoped, tag = 'scoped memory for autoencoder_forward.1']
    #allocation23 [shape = 'u8[196608]{0}', space=vmem, size = 0x30000, scoped, tag = 'input window, operand 17, single buffered']
    %34 = vsyncpa [#allocation12], 0
    %35 = vsyncpa [#allocation15], 0
    %36 = vsyncpa [#allocation13], 0
    %37 = vsyncpa [#allocation19], 0
    %38 = vsyncpa [#allocation22], 0
    // Predicated region
    $region2: #{autoencoder_forward.1} parent=1 // pred_check
      _
    $region3: #{autoencoder_forward.1} parent=1 // pred_check_branch
      %40 = sbr.rel (0) target = $region5
    $region4: #{autoencoder_forward.1} parent=1 // pred_region
      _
    $region5: #{autoencoder_forward.1} parent=1 // pred_fallthru
      _
    // Predicated region
    $region6: #{autoencoder_forward.1} parent=1 // pred_check
      _
    $region7: #{autoencoder_forward.1} parent=1 // pred_check_branch
      %42 = sbr.rel (0) target = $region9
    $region8: #{autoencoder_forward.1} parent=1 // pred_region
      _
    $region9: #{autoencoder_forward.1} parent=1 // pred_fallthru
      _
    // Predicated region
    $region10: #{autoencoder_forward.1} parent=1 // pred_check
      _
    $region11: #{autoencoder_forward.1} parent=1 // pred_check_branch
      %44 = sbr.rel (0) target = $region13
    $region12: #{autoencoder_forward.1} parent=1 // pred_region
      %46 = vsyncadd [#allocation12], 0
      %s48 = sshll.u32 %s2, 4
      %s49 = int_to_ptr.hbm [resolvable:$true] %s48
      %s50 = sshll.u32 [#allocation11], 4
      %s51 = int_to_ptr.vmem [resolvable:$true] %s50
      %53 = dma.hbm_to_vmem [thread:$0]  %s49, 64, %s51, [#allocation12]
    $region13: #{autoencoder_forward.1} parent=1 // pred_fallthru
      _
    // Predicated region
    $region14: #{autoencoder_forward.1} parent=1 // pred_check
      _
    $region15: #{autoencoder_forward.1} parent=1 // pred_check_branch
      %55 = sbr.rel (0) target = $region17
    $region16: #{autoencoder_forward.1} parent=1 // pred_region
      _
    $region17: #{autoencoder_forward.1} parent=1 // pred_fallthru
      _
    // Predicated region
    $region18: #{autoencoder_forward.1} parent=1 // pred_check
      _
    $region19: #{autoencoder_forward.1} parent=1 // pred_check_branch
      %57 = sbr.rel (0) target = $region21
    $region20: #{autoencoder_forward.1} parent=1 // pred_region
      _
    $region21: #{autoencoder_forward.1} parent=1 // pred_fallthru
      _
    // Predicated region
    $region22: #{autoencoder_forward.1} parent=1 // pred_check
      _
    $region23: #{autoencoder_forward.1} parent=1 // pred_check_branch
      %59 = sbr.rel (0) target = $region25
    $region24: #{autoencoder_forward.1} parent=1 // pred_region
      %61 = vsyncadd [#allocation15], 0
      %s62 = sshll.u32 %s5, 4
      %s63 = int_to_ptr.hbm [resolvable:$true] %s62
      %s64 = sshll.u32 [#allocation14], 4
      %s65 = int_to_ptr.vmem [resolvable:$true] %s64
      %70 = dma.hbm_to_vmem [thread:$0]  %s63, 4608, %s65, [#allocation15], 512, 512, 32
    $region25: #{autoencoder_forward.1} parent=1 // pred_fallthru
      _
    // Predicated region
    $region26: #{autoencoder_forward.1} parent=1 // pred_check
      _
    $region27: #{autoencoder_forward.1} parent=1 // pred_check_branch
      %72 = sbr.rel (0) target = $region29
    $region28: #{autoencoder_forward.1} parent=1 // pred_region
      _
    $region29: #{autoencoder_forward.1} parent=1 // pred_fallthru
      _
    // Predicated region
    $region30: #{autoencoder_forward.1} parent=1 // pred_check
      _
    $region31: #{autoencoder_forward.1} parent=1 // pred_check_branch
      %74 = sbr.rel (0) target = $region33
    $region32: #{autoencoder_forward.1} parent=1 // pred_region
      _
    $region33: #{autoencoder_forward.1} parent=1 // pred_fallthru
      _
    // Predicated region
    $region34: #{autoencoder_forward.1} parent=1 // pred_check
      _
    $region35: #{autoencoder_forward.1} parent=1 // pred_check_branch
      %76 = sbr.rel (0) target = $region37
    $region36: #{autoencoder_forward.1} parent=1 // pred_region
      _
    $region37: #{autoencoder_forward.1} parent=1 // pred_fallthru
      _
    // Predicated region
    $region38: #{autoencoder_forward.1} parent=1 // pred_check
      _
    $region39: #{autoencoder_forward.1} parent=1 // pred_check_branch
      %78 = sbr.rel (0) target = $region41
    $region40: #{autoencoder_forward.1} parent=1 // pred_region
      _
    $region41: #{autoencoder_forward.1} parent=1 // pred_fallthru
      _
    // Predicated region
    $region42: #{autoencoder_forward.1} parent=1 // pred_check
      _
    $region43: #{autoencoder_forward.1} parent=1 // pred_check_branch
      %80 = sbr.rel (0) target = $region45
    $region44: #{autoencoder_forward.1} parent=1 // pred_region
      %82 = vsyncadd [#allocation13], 0
      %s84 = sshll.u32 %s10, 4
      %s85 = int_to_ptr.vmem [resolvable:$true] %s84
      %87 = dma.vmem_to_smem %s85, 16, [#allocation16], [#allocation13]
    $region45: #{autoencoder_forward.1} parent=1 // pred_fallthru
      _
    // Predicated region
    $region46: #{autoencoder_forward.1} parent=1 // pred_check
      _
    $region47: #{autoencoder_forward.1} parent=1 // pred_check_branch
      %89 = sbr.rel (0) target = $region49
    $region48: #{autoencoder_forward.1} parent=1 // pred_region
      %91 = vsyncadd [#allocation15], 0
      %s92 = sshll.u32 %s11, 4
      %s93 = int_to_ptr.hbm [resolvable:$true] %s92
      %s94 = sshll.u32 [#allocation17], 4
      %s95 = int_to_ptr.vmem [resolvable:$true] %s94
      %100 = dma.hbm_to_vmem [thread:$0]  %s93, 3072, %s95, [#allocation15], 128, 128, 8
    $region49: #{autoencoder_forward.1} parent=1 // pred_fallthru
      _
    // Predicated region
    $region50: #{autoencoder_forward.1} parent=1 // pred_check
      _
    $region51: #{autoencoder_forward.1} parent=1 // pred_check_branch
      %102 = sbr.rel (0) target = $region53
    $region52: #{autoencoder_forward.1} parent=1 // pred_region
      %104 = vsyncadd [#allocation19], 0
      %s105 = sshll.u32 %s12, 4
      %s106 = int_to_ptr.hbm [resolvable:$true] %s105
      %s107 = sshll.u32 [#allocation18], 4
      %s108 = int_to_ptr.vmem [resolvable:$true] %s107
      %113 = dma.hbm_to_vmem [thread:$0]  %s106, 384, %s108, [#allocation19], 128, 128, 8
    $region53: #{autoencoder_forward.1} parent=1 // pred_fallthru
      _
    // Predicated region
    $region54: #{autoencoder_forward.1} parent=1 // pred_check
      _
    $region55: #{autoencoder_forward.1} parent=1 // pred_check_branch
      %115 = sbr.rel (0) target = $region57
    $region56: #{autoencoder_forward.1} parent=1 // pred_region
      %117 = vsyncadd [#allocation19], 0
      %s118 = sshll.u32 %s13, 4
      %s119 = int_to_ptr.hbm [resolvable:$true] %s118
      %s120 = sshll.u32 [#allocation20], 4
      %s121 = int_to_ptr.vmem [resolvable:$true] %s120
      %126 = dma.hbm_to_vmem [thread:$0]  %s119, 6144, %s121, [#allocation19], 512, 512, 32
    $region57: #{autoencoder_forward.1} parent=1 // pred_fallthru
      _
    // Predicated region
    $region58: #{autoencoder_forward.1} parent=1 // pred_check
      _
    $region59: #{autoencoder_forward.1} parent=1 // pred_check_branch
      %128 = sbr.rel (0) target = $region61
    $region60: #{autoencoder_forward.1} parent=1 // pred_region
      %130 = vsyncadd [#allocation22], 0
      %s132 = sshll.u32 %s14, 4
      %s133 = int_to_ptr.hbm [resolvable:$true] %s132
      %s134 = sshll.u32 [#allocation21], 4
      %s135 = int_to_ptr.vmem [resolvable:$true] %s134
      %137 = dma.hbm_to_vmem [thread:$0]  %s133, 64, %s135, [#allocation22]
    $region61: #{autoencoder_forward.1} parent=1 // pred_fallthru
      _
    // Predicated region
    $region62: #{autoencoder_forward.1} parent=1 // pred_check
      _
    $region63: #{autoencoder_forward.1} parent=1 // pred_check_branch
      %139 = sbr.rel (0) target = $region65
    $region64: #{autoencoder_forward.1} parent=1 // pred_region
      _
    $region65: #{autoencoder_forward.1} parent=1 // pred_fallthru
      _
    // Predicated region
    $region66: #{autoencoder_forward.1} parent=1 // pred_check
      _
    $region67: #{autoencoder_forward.1} parent=1 // pred_check_branch
      %141 = sbr.rel (0) target = $region69
    $region68: #{autoencoder_forward.1} parent=1 // pred_region
      _
    $region69: #{autoencoder_forward.1} parent=1 // pred_fallthru
      _
    // Predicated region
    $region70: #{autoencoder_forward.1} parent=1 // pred_check
      _
    $region71: #{autoencoder_forward.1} parent=1 // pred_check_branch
      %143 = sbr.rel (0) target = $region73
    $region72: #{autoencoder_forward.1} parent=1 // pred_region
      %145 = vsyncadd [#allocation22], 0
      %s146 = sshll.u32 %s17, 4
      %s147 = int_to_ptr.hbm [resolvable:$true] %s146
      %s148 = sshll.u32 [#allocation23], 4
      %s149 = int_to_ptr.vmem [resolvable:$true] %s148
      %154 = dma.hbm_to_vmem [thread:$0]  %s147, 6144, %s149, [#allocation22], 512, 512, 32
    $region73: #{autoencoder_forward.1} parent=1 // pred_fallthru
      _
    // Predicated region
    $region74: #{autoencoder_forward.1} parent=1 // pred_check
      _
    $region75: #{autoencoder_forward.1} parent=1 // pred_check_branch
      %156 = sbr.rel (0) target = $region77
    $region76: #{autoencoder_forward.1} parent=1 // pred_region
      _
    $region77: #{autoencoder_forward.1} parent=1 // pred_fallthru
      _
    // Predicated region
    $region78: #{autoencoder_forward.1} parent=1 // pred_check
      _
    $region79: #{autoencoder_forward.1} parent=1 // pred_check_branch
      %158 = sbr.rel (0) target = $region81
    $region80: #{autoencoder_forward.1} parent=1 // pred_region
      _
    $region81: #{autoencoder_forward.1} parent=1 // pred_fallthru
      _
    // Predicated region
    $region82: #{autoencoder_forward.1} parent=1 // pred_check
      _
    $region83: #{autoencoder_forward.1} parent=1 // pred_check_branch
      %160 = sbr.rel (0) target = $region85
    $region84: #{autoencoder_forward.1} parent=1 // pred_region
      _
    $region85: #{autoencoder_forward.1} parent=1 // pred_fallthru
      _
    // Predicated region
    $region86: #{autoencoder_forward.1} parent=1 // pred_check
      _
    $region87: #{autoencoder_forward.1} parent=1 // pred_check_branch
      %162 = sbr.rel (0) target = $region89
    $region88: #{autoencoder_forward.1} parent=1 // pred_region
      _
    $region89: #{autoencoder_forward.1} parent=1 // pred_fallthru
      _
    // Predicated region
    $region90: #{autoencoder_forward.1} parent=1 // pred_check
      _
    $region91: #{autoencoder_forward.1} parent=1 // pred_check_branch
      %164 = sbr.rel (0) target = $region93
    $region92: #{autoencoder_forward.1} parent=1 // pred_region
      _
    $region93: #{autoencoder_forward.1} parent=1 // pred_fallthru
      _
    // Predicated region
    $region94: #{autoencoder_forward.1} parent=1 // pred_check
      _
    $region95: #{autoencoder_forward.1} parent=1 // pred_check_branch
      %166 = sbr.rel (0) target = $region97
    $region96: #{autoencoder_forward.1} parent=1 // pred_region
      %168 = dma.done [#allocation12], 64
    $region97: #{autoencoder_forward.1} parent=1 // pred_fallthru
      _
    // Predicated region
    $region98: #{autoencoder_forward.1} parent=1 // pred_check
      _
    $region99: #{autoencoder_forward.1} parent=1 // pred_check_branch
      %170 = sbr.rel (0) target = $region101
    $region100: #{autoencoder_forward.1} parent=1 // pred_region
      %172 = dma.done [#allocation15], 4608
    $region101: #{autoencoder_forward.1} parent=1 // pred_fallthru
      _
    // Predicated region
    $region102: #{autoencoder_forward.1} parent=1 // pred_check
      _
    $region103: #{autoencoder_forward.1} parent=1 // pred_check_branch
      %174 = sbr.rel (0) target = $region105
    $region104: #{autoencoder_forward.1} parent=1 // pred_region
      %176 = dma.done [#allocation13], 16
    $region105: #{autoencoder_forward.1} parent=1 // pred_fallthru
      _
    // Predicated region
    $region106: #{autoencoder_forward.1} parent=1 // pred_check
      _
    $region107: #{autoencoder_forward.1} parent=1 // pred_check_branch
      %178 = sbr.rel (0) target = $region109
    $region108: #{autoencoder_forward.1} parent=1 // pred_region
      %180 = dma.done [#allocation15], 3072
    $region109: #{autoencoder_forward.1} parent=1 // pred_fallthru
      _
    // Predicated region
    $region110: #{autoencoder_forward.1} parent=1 // pred_check
      _
    $region111: #{autoencoder_forward.1} parent=1 // pred_check_branch
      %182 = sbr.rel (0) target = $region113
    $region112: #{autoencoder_forward.1} parent=1 // pred_region
      %184 = dma.done [#allocation19], 384
    $region113: #{autoencoder_forward.1} parent=1 // pred_fallthru
      _
    // Predicated region
    $region114: #{autoencoder_forward.1} parent=1 // pred_check
      _
    $region115: #{autoencoder_forward.1} parent=1 // pred_check_branch
      %186 = sbr.rel (0) target = $region117
    $region116: #{autoencoder_forward.1} parent=1 // pred_region
      %188 = dma.done [#allocation19], 6144
    $region117: #{autoencoder_forward.1} parent=1 // pred_fallthru
      _
    // Predicated region
    $region118: #{autoencoder_forward.1} parent=1 // pred_check
      _
    $region119: #{autoencoder_forward.1} parent=1 // pred_check_branch
      %190 = sbr.rel (0) target = $region121
    $region120: #{autoencoder_forward.1} parent=1 // pred_region
      %192 = dma.done [#allocation22], 64
    $region121: #{autoencoder_forward.1} parent=1 // pred_fallthru
      _
    // Predicated region
    $region122: #{autoencoder_forward.1} parent=1 // pred_check
      _
    $region123: #{autoencoder_forward.1} parent=1 // pred_check_branch
      %194 = sbr.rel (0) target = $region125
    $region124: #{autoencoder_forward.1} parent=1 // pred_region
      %196 = dma.done [#allocation22], 6144
    $region125: #{autoencoder_forward.1} parent=1 // pred_fallthru
      _
    %197 = sfence
    %vm198 = vcmask 228352
    %199 = vst.msk [vmem:[#allocation3] sm:$0xff] %vm198, 0.0
    %200 = vst.msk [vmem:[#allocation3 + $0x8] sm:$0xff] %vm198, 0.0
    %201 = vst.msk [vmem:[#allocation3 + $0x10] sm:$0xff] %vm198, 0.0
    %vm202 = vcmask 224256
    %203 = vst.msk [vmem:[#allocation3 + $0x18] sm:$0xf] %vm202, 0.0
    %204 = vst.msk [vmem:[#allocation3 + $0x20] sm:$0xff] %vm198, 0.0
    %205 = vst.msk [vmem:[#allocation3 + $0x28] sm:$0xff] %vm198, 0.0
    %206 = vst.msk [vmem:[#allocation3 + $0x30] sm:$0xff] %vm198, 0.0
    %207 = vst.msk [vmem:[#allocation3 + $0x38] sm:$0xf] %vm202, 0.0
    %208 = vst [vmem:[#allocation4] sm:$0xff] 0.0
    %209 = vst [vmem:[#allocation4 + $0x8] sm:$0xff] 0.0
    %210 = vst [vmem:[#allocation4 + $0x10] sm:$0xff] 0.0
    %211 = vst [vmem:[#allocation4 + $0x18] sm:$0xff] 0.0
    %212 = vst [vmem:[#allocation4 + $0x20] sm:$0xff] 0.0
    %213 = vst [vmem:[#allocation4 + $0x28] sm:$0xff] 0.0
    %214 = vst [vmem:[#allocation4 + $0x30] sm:$0xff] 0.0
    %215 = vst [vmem:[#allocation4 + $0x38] sm:$0xff] 0.0
    %216 = vst [vmem:[#allocation4 + $0x40] sm:$0xff] 0.0
    %217 = vst [vmem:[#allocation4 + $0x48] sm:$0xff] 0.0
    %218 = vst [vmem:[#allocation4 + $0x50] sm:$0xff] 0.0
    %219 = vst [vmem:[#allocation4 + $0x58] sm:$0xff] 0.0
    %220 = vst [vmem:[#allocation4 + $0x60] sm:$0x3f] 0.0
    %221 = vst [vmem:[#allocation4 + $0x68] sm:$0x3f] 0.0
    %222 = vst [vmem:[#allocation4 + $0x70] sm:$0x3f] 0.0
    %223 = vst [vmem:[#allocation4 + $0x78] sm:$0x3f] 0.0
    %224 = vst [vmem:[#allocation4 + $0x80] sm:$0xff] 0.0
    %225 = vst [vmem:[#allocation4 + $0x88] sm:$0xff] 0.0
    %226 = vst [vmem:[#allocation4 + $0x90] sm:$0xff] 0.0
    %227 = vst [vmem:[#allocation4 + $0x98] sm:$0xff] 0.0
    %228 = vst [vmem:[#allocation4 + $0xa0] sm:$0xff] 0.0
    %229 = vst [vmem:[#allocation4 + $0xa8] sm:$0xff] 0.0
    %230 = vst [vmem:[#allocation4 + $0xb0] sm:$0xff] 0.0
    %231 = vst [vmem:[#allocation4 + $0xb8] sm:$0xff] 0.0
    %232 = vst [vmem:[#allocation4 + $0xc0] sm:$0xff] 0.0
    %233 = vst [vmem:[#allocation4 + $0xc8] sm:$0xff] 0.0
    %234 = vst [vmem:[#allocation4 + $0xd0] sm:$0xff] 0.0
    %235 = vst [vmem:[#allocation4 + $0xd8] sm:$0xff] 0.0
    %236 = vst [vmem:[#allocation4 + $0xe0] sm:$0x3f] 0.0
    %237 = vst [vmem:[#allocation4 + $0xe8] sm:$0x3f] 0.0
    %238 = vst [vmem:[#allocation4 + $0xf0] sm:$0x3f] 0.0
    %239 = vst [vmem:[#allocation4 + $0xf8] sm:$0x3f] 0.0
    %v240 = vld [vmem:[%s21] sm:$0xff]
    %v241 = vld [vmem:[%s21 + $0x8] sm:$0xff]
    %v242 = vld [vmem:[%s21 + $0x10] sm:$0xff]
    %v243 = vld [vmem:[%s21 + $0x18] sm:$0xff]
    %v244 = vld [vmem:[%s21 + $0x20] sm:$0xff]
    %v245 = vld [vmem:[%s21 + $0x28] sm:$0xff]
    %v246 = vld [vmem:[%s21 + $0x30] sm:$0xff]
    %v247 = vld [vmem:[%s21 + $0x38] sm:$0xff]
    %v248 = vld [vmem:[%s21 + $0x40] sm:$0xff]
    %v249 = vld [vmem:[%s21 + $0x48] sm:$0xff]
    %v250 = vld [vmem:[%s21 + $0x50] sm:$0xff]
    %v251 = vld [vmem:[%s21 + $0x58] sm:$0xff]
    %v252 = vld [vmem:[%s21 + $0x60] sm:$0xff]
    %v253 = vld [vmem:[%s21 + $0x68] sm:$0xff]
    %v254 = vld [vmem:[%s21 + $0x70] sm:$0xff]
    %v255 = vld [vmem:[%s21 + $0x78] sm:$0xff]
    %v256 = vld [vmem:[%s21 + $0x80] sm:$0xff]
    %v257 = vld [vmem:[%s21 + $0x88] sm:$0xff]
    %v258 = vld [vmem:[%s21 + $0x90] sm:$0xff]
    %v259 = vld [vmem:[%s21 + $0x98] sm:$0xff]
    %v260 = vld [vmem:[%s21 + $0xa0] sm:$0xff]
    %v261 = vld [vmem:[%s21 + $0xa8] sm:$0xff]
    %v262 = vld [vmem:[%s21 + $0xb0] sm:$0xff]
    %v263 = vld [vmem:[%s21 + $0xb8] sm:$0xff]
    %v264 = vld [vmem:[%s21 + $0xc0] sm:$0xff]
    %v265 = vld [vmem:[%s21 + $0xc8] sm:$0xff]
    %v266 = vld [vmem:[%s21 + $0xd0] sm:$0xff]
    %v267 = vld [vmem:[%s21 + $0xd8] sm:$0xff]
    %v268 = vld [vmem:[%s21 + $0xe0] sm:$0xff]
    %v269 = vld [vmem:[%s21 + $0xe8] sm:$0xff]
    %v270 = vld [vmem:[%s21 + $0xf0] sm:$0xff]
    %v271 = vld [vmem:[%s21 + $0xf8] sm:$0xff]
    %v272 = vld [vmem:[%s21 + $0x100] sm:$0xff]
    %v273 = vld [vmem:[%s21 + $0x108] sm:$0xff]
    %v274 = vld [vmem:[%s21 + $0x110] sm:$0xff]
    %v275 = vld [vmem:[%s21 + $0x118] sm:$0xff]
    %v276 = vld [vmem:[%s21 + $0x120] sm:$0xff]
    %v277 = vld [vmem:[%s21 + $0x128] sm:$0xff]
    %v278 = vld [vmem:[%s21 + $0x130] sm:$0xff]
    %v279 = vld [vmem:[%s21 + $0x138] sm:$0xff]
    %v280 = vld [vmem:[%s21 + $0x140] sm:$0xff]
    %v281 = vld [vmem:[%s21 + $0x148] sm:$0xff]
    %v282 = vld [vmem:[%s21 + $0x150] sm:$0xff]
    %v283 = vld [vmem:[%s21 + $0x158] sm:$0xff]
    %v284 = vld [vmem:[%s21 + $0x160] sm:$0xff]
    %v285 = vld [vmem:[%s21 + $0x168] sm:$0xff]
    %v286 = vld [vmem:[%s21 + $0x170] sm:$0xff]
    %v287 = vld [vmem:[%s21 + $0x178] sm:$0xff]
    %v288 = vld [vmem:[%s21 + $0x180] sm:$0xff]
    %v289 = vld [vmem:[%s21 + $0x188] sm:$0xff]
    %v290 = vld [vmem:[%s21 + $0x190] sm:$0xff]
    %v291 = vld [vmem:[%s21 + $0x198] sm:$0xff]
    %v292 = vld [vmem:[%s21 + $0x1a0] sm:$0xff]
    %v293 = vld [vmem:[%s21 + $0x1a8] sm:$0xff]
    %v294 = vld [vmem:[%s21 + $0x1b0] sm:$0xff]
    %v295 = vld [vmem:[%s21 + $0x1b8] sm:$0xff]
    %v296 = vld [vmem:[%s21 + $0x1c0] sm:$0xff]
    %v297 = vld [vmem:[%s21 + $0x1c8] sm:$0xff]
    %v298 = vld [vmem:[%s21 + $0x1d0] sm:$0xff]
    %v299 = vld [vmem:[%s21 + $0x1d8] sm:$0xff]
    %v300 = vld [vmem:[%s21 + $0x1e0] sm:$0xff]
    %v301 = vld [vmem:[%s21 + $0x1e8] sm:$0xff]
    %v302 = vld [vmem:[%s21 + $0x1f0] sm:$0xff]
    %v303 = vld [vmem:[%s21 + $0x1f8] sm:$0xff]
    %v304 = vld [vmem:[%s22] sm:$0xff]
    %v305 = vld [vmem:[%s22 + $0x8] sm:$0xff]
    %v306 = vld [vmem:[%s22 + $0x10] sm:$0xff]
    %v307 = vld [vmem:[%s22 + $0x18] sm:$0xff]
    %v308 = vld [vmem:[%s22 + $0x20] sm:$0xff]
    %v309 = vld [vmem:[%s22 + $0x28] sm:$0xff]
    %v310 = vld [vmem:[%s22 + $0x30] sm:$0xff]
    %v311 = vld [vmem:[%s22 + $0x38] sm:$0xff]
    %v312 = vld [vmem:[%s0] sm:$0xff]
    %v313 = vld [vmem:[%s0 + $0x8] sm:$0xff]
    %v314 = vld [vmem:[%s0 + $0x10] sm:$0xff]
    %v315 = vld [vmem:[%s0 + $0x18] sm:$0x3]
    %v316 = vld [vmem:[%s1] sm:$0xff]
    %v317 = vld [vmem:[%s1 + $0x8] sm:$0xff]
    %v318 = vld [vmem:[%s1 + $0x10] sm:$0xff]
    %v319 = vld [vmem:[%s1 + $0x18] sm:$0xff]
    %v320 = vld [vmem:[%s1 + $0x20] sm:$0xff]
    %v321 = vld [vmem:[%s1 + $0x28] sm:$0xff]
    %v322 = vld [vmem:[%s1 + $0x30] sm:$0xff]
    %v323 = vld [vmem:[%s1 + $0x38] sm:$0xff]
    %v324 = vld [vmem:[%s1 + $0x40] sm:$0xff]
    %v325 = vld [vmem:[%s1 + $0x48] sm:$0xff]
    %v326 = vld [vmem:[%s1 + $0x50] sm:$0xff]
    %v327 = vld [vmem:[%s1 + $0x58] sm:$0xff]
    %v328 = vld [vmem:[%s1 + $0x60] sm:$0xf]
    %v329 = vld [vmem:[%s1 + $0x68] sm:$0xf]
    %v330 = vld [vmem:[%s1 + $0x70] sm:$0xf]
    %v331 = vld [vmem:[%s1 + $0x78] sm:$0xf]
    %v332 = vld [vmem:[%s0 + $0x1] sm:$0xff]
    %v333 = vld [vmem:[%s0 + $0x9] sm:$0xff]
    %v334 = vld [vmem:[%s0 + $0x11] sm:$0xff]
    %v335 = vld [vmem:[%s0 + $0x19] sm:$0x3]
    %s336 = scalar_lea.vmem %s1, 128
    %v337 = vld [vmem:[%s336] sm:$0xff]
    %v338 = vld [vmem:[%s336 + $0x8] sm:$0xff]
    %v339 = vld [vmem:[%s336 + $0x10] sm:$0xff]
    %v340 = vld [vmem:[%s336 + $0x18] sm:$0xff]
    %v341 = vld [vmem:[%s336 + $0x20] sm:$0xff]
    %v342 = vld [vmem:[%s336 + $0x28] sm:$0xff]
    %v343 = vld [vmem:[%s336 + $0x30] sm:$0xff]
    %v344 = vld [vmem:[%s336 + $0x38] sm:$0xff]
    %v345 = vld [vmem:[%s336 + $0x40] sm:$0xff]
    %v346 = vld [vmem:[%s336 + $0x48] sm:$0xff]
    %v347 = vld [vmem:[%s336 + $0x50] sm:$0xff]
    %v348 = vld [vmem:[%s336 + $0x58] sm:$0xff]
    %v349 = vld [vmem:[%s336 + $0x60] sm:$0xf]
    %v350 = vld [vmem:[%s336 + $0x68] sm:$0xf]
    %v351 = vld [vmem:[%s336 + $0x70] sm:$0xf]
    %v352 = vld [vmem:[%s336 + $0x78] sm:$0xf]
    %v354 = vsel %vm198, %v332, 0
    %v357 = vsel %vm198, %v333, 0
    %v360 = vsel %vm198, %v334, 0
    %v363 = vsel %vm198, %v335, 0
    %vm365 = vcmask 1043456
    %v367 = vsel %vm365, %v349, 0
    %v370 = vsel %vm365, %v350, 0
    %v373 = vsel %vm365, %v351, 0
    %v376 = vsel %vm365, %v352, 0
    %378 = vmatpush.msra.mxu0 0.0
    %379 = vmatpush.msra.mxu0 0.0
    %380 = vmatpush.msra.mxu0 0.0
    %381 = vmatpush.msra.mxu0 0.0
    %382 = vmatpush.msra.mxu0 0.0
    %383 = vmatpush.msra.mxu0 0.0
    %384 = vmatpush.msra.mxu0 0.0
    %385 = vmatpush.msra.mxu0 0.0
    %386 = vmatpush.msra.mxu0 0.0
    %387 = vmatpush.msra.mxu0 0.0
    %388 = vmatpush.msra.mxu0 0.0
    %389 = vmatpush.msra.mxu0 0.0
    %390 = vmatpush.msra.mxu0 %v367
    %391 = vmatpush.msra.mxu0 %v345
    %392 = vmatpush.msra.mxu0 %v341
    %393 = vmatpush.msra.mxu0 %v337
    %394 = vmatmul.f32.gmra.mxu0 %v354
    %v395 = vpop.f32.mrf.mxu0
    %v396 = vadd.f32 0.0, %v395
    %397 = vmatmul.f32.gmra.mxu0 %v357
    %v398 = vpop.f32.mrf.mxu0
    %v399 = vadd.f32 0.0, %v398
    %400 = vmatmul.f32.gmra.mxu0 %v360
    %v401 = vpop.f32.mrf.mxu0
    %v402 = vadd.f32 0.0, %v401
    %403 = vmatmul.f32.gmra.mxu0 %v363
    %v404 = vpop.f32.mrf.mxu0
    %v405 = vadd.f32 0.0, %v404
    %406 = vdwg.mxu0
    %407 = vmatpush.msra.mxu0 0.0
    %408 = vmatpush.msra.mxu0 0.0
    %409 = vmatpush.msra.mxu0 0.0
    %410 = vmatpush.msra.mxu0 0.0
    %411 = vmatpush.msra.mxu0 0.0
    %412 = vmatpush.msra.mxu0 0.0
    %413 = vmatpush.msra.mxu0 0.0
    %414 = vmatpush.msra.mxu0 0.0
    %415 = vmatpush.msra.mxu0 0.0
    %416 = vmatpush.msra.mxu0 0.0
    %417 = vmatpush.msra.mxu0 0.0
    %418 = vmatpush.msra.mxu0 0.0
    %419 = vmatpush.msra.mxu0 %v370
    %420 = vmatpush.msra.mxu0 %v346
    %421 = vmatpush.msra.mxu0 %v342
    %422 = vmatpush.msra.mxu0 %v338
    %423 = vmatmul.f32.gmra.mxu0 %v354
    %v424 = vpop.f32.mrf.mxu0
    %v425 = vadd.f32 0.0, %v424
    %426 = vmatmul.f32.gmra.mxu0 %v357
    %v427 = vpop.f32.mrf.mxu0
    %v428 = vadd.f32 0.0, %v427
    %429 = vmatmul.f32.gmra.mxu0 %v360
    %v430 = vpop.f32.mrf.mxu0
    %v431 = vadd.f32 0.0, %v430
    %432 = vmatmul.f32.gmra.mxu0 %v363
    %v433 = vpop.f32.mrf.mxu0
    %v434 = vadd.f32 0.0, %v433
    %435 = vdwg.mxu0
    %436 = vmatpush.msra.mxu0 0.0
    %437 = vmatpush.msra.mxu0 0.0
    %438 = vmatpush.msra.mxu0 0.0
    %439 = vmatpush.msra.mxu0 0.0
    %440 = vmatpush.msra.mxu0 0.0
    %441 = vmatpush.msra.mxu0 0.0
    %442 = vmatpush.msra.mxu0 0.0
    %443 = vmatpush.msra.mxu0 0.0
    %444 = vmatpush.msra.mxu0 0.0
    %445 = vmatpush.msra.mxu0 0.0
    %446 = vmatpush.msra.mxu0 0.0
    %447 = vmatpush.msra.mxu0 0.0
    %448 = vmatpush.msra.mxu0 %v373
    %449 = vmatpush.msra.mxu0 %v347
    %450 = vmatpush.msra.mxu0 %v343
    %451 = vmatpush.msra.mxu0 %v339
    %452 = vmatmul.f32.gmra.mxu0 %v354
    %v453 = vpop.f32.mrf.mxu0
    %v454 = vadd.f32 0.0, %v453
    %455 = vmatmul.f32.gmra.mxu0 %v357
    %v456 = vpop.f32.mrf.mxu0
    %v457 = vadd.f32 0.0, %v456
    %458 = vmatmul.f32.gmra.mxu0 %v360
    %v459 = vpop.f32.mrf.mxu0
    %v460 = vadd.f32 0.0, %v459
    %461 = vmatmul.f32.gmra.mxu0 %v363
    %v462 = vpop.f32.mrf.mxu0
    %v463 = vadd.f32 0.0, %v462
    %464 = vdwg.mxu0
    %465 = vmatpush.msra.mxu0 0.0
    %466 = vmatpush.msra.mxu0 0.0
    %467 = vmatpush.msra.mxu0 0.0
    %468 = vmatpush.msra.mxu0 0.0
    %469 = vmatpush.msra.mxu0 0.0
    %470 = vmatpush.msra.mxu0 0.0
    %471 = vmatpush.msra.mxu0 0.0
    %472 = vmatpush.msra.mxu0 0.0
    %473 = vmatpush.msra.mxu0 0.0
    %474 = vmatpush.msra.mxu0 0.0
    %475 = vmatpush.msra.mxu0 0.0
    %476 = vmatpush.msra.mxu0 0.0
    %477 = vmatpush.msra.mxu0 %v376
    %478 = vmatpush.msra.mxu0 %v348
    %479 = vmatpush.msra.mxu0 %v344
    %480 = vmatpush.msra.mxu0 %v340
    %481 = vmatmul.f32.gmra.mxu0 %v354
    %v482 = vpop.f32.mrf.mxu0
    %v483 = vadd.f32 0.0, %v482
    %484 = vmatmul.f32.gmra.mxu0 %v357
    %v485 = vpop.f32.mrf.mxu0
    %v486 = vadd.f32 0.0, %v485
    %487 = vmatmul.f32.gmra.mxu0 %v360
    %v488 = vpop.f32.mrf.mxu0
    %v489 = vadd.f32 0.0, %v488
    %490 = vmatmul.f32.gmra.mxu0 %v363
    %v491 = vpop.f32.mrf.mxu0
    %v492 = vadd.f32 0.0, %v491
    %493 = vdwg.mxu0
    %v495 = vsel %vm198, %v312, 0
    %v498 = vsel %vm198, %v313, 0
    %v501 = vsel %vm198, %v314, 0
    %v504 = vsel %vm198, %v315, 0
    %v507 = vsel %vm365, %v328, 0
    %v510 = vsel %vm365, %v329, 0
    %v513 = vsel %vm365, %v330, 0
    %v516 = vsel %vm365, %v331, 0
    %518 = vmatpush.msra.mxu0 0.0
    %519 = vmatpush.msra.mxu0 0.0
    %520 = vmatpush.msra.mxu0 0.0
    %521 = vmatpush.msra.mxu0 0.0
    %522 = vmatpush.msra.mxu0 0.0
    %523 = vmatpush.msra.mxu0 0.0
    %524 = vmatpush.msra.mxu0 0.0
    %525 = vmatpush.msra.mxu0 0.0
    %526 = vmatpush.msra.mxu0 0.0
    %527 = vmatpush.msra.mxu0 0.0
    %528 = vmatpush.msra.mxu0 0.0
    %529 = vmatpush.msra.mxu0 0.0
    %530 = vmatpush.msra.mxu0 %v507
    %531 = vmatpush.msra.mxu0 %v324
    %532 = vmatpush.msra.mxu0 %v320
    %533 = vmatpush.msra.mxu0 %v316
    %534 = vmatmul.f32.gmra.mxu0 %v495
    %v535 = vpop.f32.mrf.mxu0
    %v536 = vadd.f32 %v396, %v535
    %537 = vmatmul.f32.gmra.mxu0 %v498
    %v538 = vpop.f32.mrf.mxu0
    %v539 = vadd.f32 %v399, %v538
    %540 = vmatmul.f32.gmra.mxu0 %v501
    %v541 = vpop.f32.mrf.mxu0
    %v542 = vadd.f32 %v402, %v541
    %543 = vmatmul.f32.gmra.mxu0 %v504
    %v544 = vpop.f32.mrf.mxu0
    %v545 = vadd.f32 %v405, %v544
    %546 = vdwg.mxu0
    %547 = vmatpush.msra.mxu0 0.0
    %548 = vmatpush.msra.mxu0 0.0
    %549 = vmatpush.msra.mxu0 0.0
    %550 = vmatpush.msra.mxu0 0.0
    %551 = vmatpush.msra.mxu0 0.0
    %552 = vmatpush.msra.mxu0 0.0
    %553 = vmatpush.msra.mxu0 0.0
    %554 = vmatpush.msra.mxu0 0.0
    %555 = vmatpush.msra.mxu0 0.0
    %556 = vmatpush.msra.mxu0 0.0
    %557 = vmatpush.msra.mxu0 0.0
    %558 = vmatpush.msra.mxu0 0.0
    %559 = vmatpush.msra.mxu0 %v510
    %560 = vmatpush.msra.mxu0 %v325
    %561 = vmatpush.msra.mxu0 %v321
    %562 = vmatpush.msra.mxu0 %v317
    %563 = vmatmul.f32.gmra.mxu0 %v495
    %v564 = vpop.f32.mrf.mxu0
    %v565 = vadd.f32 %v425, %v564
    %566 = vmatmul.f32.gmra.mxu0 %v498
    %v567 = vpop.f32.mrf.mxu0
    %v568 = vadd.f32 %v428, %v567
    %569 = vmatmul.f32.gmra.mxu0 %v501
    %v570 = vpop.f32.mrf.mxu0
    %v571 = vadd.f32 %v431, %v570
    %572 = vmatmul.f32.gmra.mxu0 %v504
    %v573 = vpop.f32.mrf.mxu0
    %v574 = vadd.f32 %v434, %v573
    %575 = vdwg.mxu0
    %576 = vmatpush.msra.mxu0 0.0
    %577 = vmatpush.msra.mxu0 0.0
    %578 = vmatpush.msra.mxu0 0.0
    %579 = vmatpush.msra.mxu0 0.0
    %580 = vmatpush.msra.mxu0 0.0
    %581 = vmatpush.msra.mxu0 0.0
    %582 = vmatpush.msra.mxu0 0.0
    %583 = vmatpush.msra.mxu0 0.0
    %584 = vmatpush.msra.mxu0 0.0
    %585 = vmatpush.msra.mxu0 0.0
    %586 = vmatpush.msra.mxu0 0.0
    %587 = vmatpush.msra.mxu0 0.0
    %588 = vmatpush.msra.mxu0 %v513
    %589 = vmatpush.msra.mxu0 %v326
    %590 = vmatpush.msra.mxu0 %v322
    %591 = vmatpush.msra.mxu0 %v318
    %592 = vmatmul.f32.gmra.mxu0 %v495
    %v593 = vpop.f32.mrf.mxu0
    %v594 = vadd.f32 %v454, %v593
    %595 = vmatmul.f32.gmra.mxu0 %v498
    %v596 = vpop.f32.mrf.mxu0
    %v597 = vadd.f32 %v457, %v596
    %598 = vmatmul.f32.gmra.mxu0 %v501
    %v599 = vpop.f32.mrf.mxu0
    %v600 = vadd.f32 %v460, %v599
    %601 = vmatmul.f32.gmra.mxu0 %v504
    %v602 = vpop.f32.mrf.mxu0
    %v603 = vadd.f32 %v463, %v602
    %604 = vdwg.mxu0
    %605 = vmatpush.msra.mxu0 0.0
    %606 = vmatpush.msra.mxu0 0.0
    %607 = vmatpush.msra.mxu0 0.0
    %608 = vmatpush.msra.mxu0 0.0
    %609 = vmatpush.msra.mxu0 0.0
    %610 = vmatpush.msra.mxu0 0.0
    %611 = vmatpush.msra.mxu0 0.0
    %612 = vmatpush.msra.mxu0 0.0
    %613 = vmatpush.msra.mxu0 0.0
    %614 = vmatpush.msra.mxu0 0.0
    %615 = vmatpush.msra.mxu0 0.0
    %616 = vmatpush.msra.mxu0 0.0
    %617 = vmatpush.msra.mxu0 %v516
    %618 = vmatpush.msra.mxu0 %v327
    %619 = vmatpush.msra.mxu0 %v323
    %620 = vmatpush.msra.mxu0 %v319
    %621 = vmatmul.f32.gmra.mxu0 %v495
    %v622 = vpop.f32.mrf.mxu0
    %v623 = vadd.f32 %v483, %v622
    %624 = vmatmul.f32.gmra.mxu0 %v498
    %v625 = vpop.f32.mrf.mxu0
    %v626 = vadd.f32 %v486, %v625
    %627 = vmatmul.f32.gmra.mxu0 %v501
    %v628 = vpop.f32.mrf.mxu0
    %v629 = vadd.f32 %v489, %v628
    %630 = vmatmul.f32.gmra.mxu0 %v504
    %v631 = vpop.f32.mrf.mxu0
    %v632 = vadd.f32 %v492, %v631
    %633 = vdwg.mxu0
    %v634 = vld [vmem:[%s0 + $0x2] sm:$0xff]
    %v635 = vld [vmem:[%s0 + $0xa] sm:$0xff]
    %v636 = vld [vmem:[%s0 + $0x12] sm:$0xff]
    %v637 = vld [vmem:[%s0 + $0x1a] sm:$0x3]
    %s638 = scalar_lea.vmem %s1, 256
    %v639 = vld [vmem:[%s638] sm:$0xff]
    %v640 = vld [vmem:[%s638 + $0x8] sm:$0xff]
    %v641 = vld [vmem:[%s638 + $0x10] sm:$0xff]
    %v642 = vld [vmem:[%s638 + $0x18] sm:$0xff]
    %v643 = vld [vmem:[%s638 + $0x20] sm:$0xff]
    %v644 = vld [vmem:[%s638 + $0x28] sm:$0xff]
    %v645 = vld [vmem:[%s638 + $0x30] sm:$0xff]
    %v646 = vld [vmem:[%s638 + $0x38] sm:$0xff]
    %v647 = vld [vmem:[%s638 + $0x40] sm:$0xff]
    %v648 = vld [vmem:[%s638 + $0x48] sm:$0xff]
    %v649 = vld [vmem:[%s638 + $0x50] sm:$0xff]
    %v650 = vld [vmem:[%s638 + $0x58] sm:$0xff]
    %v651 = vld [vmem:[%s638 + $0x60] sm:$0xf]
    %v652 = vld [vmem:[%s638 + $0x68] sm:$0xf]
    %v653 = vld [vmem:[%s638 + $0x70] sm:$0xf]
    %v654 = vld [vmem:[%s638 + $0x78] sm:$0xf]
    %v656 = vsel %vm198, %v634, 0
    %v659 = vsel %vm198, %v635, 0
    %v662 = vsel %vm198, %v636, 0
    %v665 = vsel %vm198, %v637, 0
    %v668 = vsel %vm365, %v651, 0
    %v671 = vsel %vm365, %v652, 0
    %v674 = vsel %vm365, %v653, 0
    %v677 = vsel %vm365, %v654, 0
    %679 = vmatpush.msra.mxu0 0.0
    %680 = vmatpush.msra.mxu0 0.0
    %681 = vmatpush.msra.mxu0 0.0
    %682 = vmatpush.msra.mxu0 0.0
    %683 = vmatpush.msra.mxu0 0.0
    %684 = vmatpush.msra.mxu0 0.0
    %685 = vmatpush.msra.mxu0 0.0
    %686 = vmatpush.msra.mxu0 0.0
    %687 = vmatpush.msra.mxu0 0.0
    %688 = vmatpush.msra.mxu0 0.0
    %689 = vmatpush.msra.mxu0 0.0
    %690 = vmatpush.msra.mxu0 0.0
    %691 = vmatpush.msra.mxu0 %v668
    %692 = vmatpush.msra.mxu0 %v647
    %693 = vmatpush.msra.mxu0 %v643
    %694 = vmatpush.msra.mxu0 %v639
    %695 = vmatmul.f32.gmra.mxu0 %v656
    %v696 = vpop.f32.mrf.mxu0
    %v697 = vadd.f32 0.0, %v696
    %698 = vmatmul.f32.gmra.mxu0 %v659
    %v699 = vpop.f32.mrf.mxu0
    %v700 = vadd.f32 0.0, %v699
    %701 = vmatmul.f32.gmra.mxu0 %v662
    %v702 = vpop.f32.mrf.mxu0
    %v703 = vadd.f32 0.0, %v702
    %704 = vmatmul.f32.gmra.mxu0 %v665
    %v705 = vpop.f32.mrf.mxu0
    %v706 = vadd.f32 0.0, %v705
    %707 = vdwg.mxu0
    %708 = vmatpush.msra.mxu0 0.0
    %709 = vmatpush.msra.mxu0 0.0
    %710 = vmatpush.msra.mxu0 0.0
    %711 = vmatpush.msra.mxu0 0.0
    %712 = vmatpush.msra.mxu0 0.0
    %713 = vmatpush.msra.mxu0 0.0
    %714 = vmatpush.msra.mxu0 0.0
    %715 = vmatpush.msra.mxu0 0.0
    %716 = vmatpush.msra.mxu0 0.0
    %717 = vmatpush.msra.mxu0 0.0
    %718 = vmatpush.msra.mxu0 0.0
    %719 = vmatpush.msra.mxu0 0.0
    %720 = vmatpush.msra.mxu0 %v671
    %721 = vmatpush.msra.mxu0 %v648
    %722 = vmatpush.msra.mxu0 %v644
    %723 = vmatpush.msra.mxu0 %v640
    %724 = vmatmul.f32.gmra.mxu0 %v656
    %v725 = vpop.f32.mrf.mxu0
    %v726 = vadd.f32 0.0, %v725
    %727 = vmatmul.f32.gmra.mxu0 %v659
    %v728 = vpop.f32.mrf.mxu0
    %v729 = vadd.f32 0.0, %v728
    %730 = vmatmul.f32.gmra.mxu0 %v662
    %v731 = vpop.f32.mrf.mxu0
    %v732 = vadd.f32 0.0, %v731
    %733 = vmatmul.f32.gmra.mxu0 %v665
    %v734 = vpop.f32.mrf.mxu0
    %v735 = vadd.f32 0.0, %v734
    %736 = vdwg.mxu0
    %737 = vmatpush.msra.mxu0 0.0
    %738 = vmatpush.msra.mxu0 0.0
    %739 = vmatpush.msra.mxu0 0.0
    %740 = vmatpush.msra.mxu0 0.0
    %741 = vmatpush.msra.mxu0 0.0
    %742 = vmatpush.msra.mxu0 0.0
    %743 = vmatpush.msra.mxu0 0.0
    %744 = vmatpush.msra.mxu0 0.0
    %745 = vmatpush.msra.mxu0 0.0
    %746 = vmatpush.msra.mxu0 0.0
    %747 = vmatpush.msra.mxu0 0.0
    %748 = vmatpush.msra.mxu0 0.0
    %749 = vmatpush.msra.mxu0 %v674
    %750 = vmatpush.msra.mxu0 %v649
    %751 = vmatpush.msra.mxu0 %v645
    %752 = vmatpush.msra.mxu0 %v641
    %753 = vmatmul.f32.gmra.mxu0 %v656
    %v754 = vpop.f32.mrf.mxu0
    %v755 = vadd.f32 0.0, %v754
    %756 = vmatmul.f32.gmra.mxu0 %v659
    %v757 = vpop.f32.mrf.mxu0
    %v758 = vadd.f32 0.0, %v757
    %759 = vmatmul.f32.gmra.mxu0 %v662
    %v760 = vpop.f32.mrf.mxu0
    %v761 = vadd.f32 0.0, %v760
    %762 = vmatmul.f32.gmra.mxu0 %v665
    %v763 = vpop.f32.mrf.mxu0
    %v764 = vadd.f32 0.0, %v763
    %765 = vdwg.mxu0
    %766 = vmatpush.msra.mxu0 0.0
    %767 = vmatpush.msra.mxu0 0.0
    %768 = vmatpush.msra.mxu0 0.0
    %769 = vmatpush.msra.mxu0 0.0
    %770 = vmatpush.msra.mxu0 0.0
    %771 = vmatpush.msra.mxu0 0.0
    %772 = vmatpush.msra.mxu0 0.0
    %773 = vmatpush.msra.mxu0 0.0
    %774 = vmatpush.msra.mxu0 0.0
    %775 = vmatpush.msra.mxu0 0.0
    %776 = vmatpush.msra.mxu0 0.0
    %777 = vmatpush.msra.mxu0 0.0
    %778 = vmatpush.msra.mxu0 %v677
    %779 = vmatpush.msra.mxu0 %v650
    %780 = vmatpush.msra.mxu0 %v646
    %781 = vmatpush.msra.mxu0 %v642
    %782 = vmatmul.f32.gmra.mxu0 %v656
    %v783 = vpop.f32.mrf.mxu0
    %v784 = vadd.f32 0.0, %v783
    %785 = vmatmul.f32.gmra.mxu0 %v659
    %v786 = vpop.f32.mrf.mxu0
    %v787 = vadd.f32 0.0, %v786
    %788 = vmatmul.f32.gmra.mxu0 %v662
    %v789 = vpop.f32.mrf.mxu0
    %v790 = vadd.f32 0.0, %v789
    %791 = vmatmul.f32.gmra.mxu0 %v665
    %v792 = vpop.f32.mrf.mxu0
    %v793 = vadd.f32 0.0, %v792
    %794 = vdwg.mxu0
    %v795 = vadd.f32 %v536, %v697
    %v796 = vadd.f32 %v565, %v726
    %v797 = vadd.f32 %v594, %v755
    %v798 = vadd.f32 %v623, %v784
    %v799 = vadd.f32 %v539, %v700
    %v800 = vadd.f32 %v568, %v729
    %v801 = vadd.f32 %v597, %v758
    %v802 = vadd.f32 %v626, %v787
    %v803 = vadd.f32 %v542, %v703
    %v804 = vadd.f32 %v571, %v732
    %v805 = vadd.f32 %v600, %v761
    %v806 = vadd.f32 %v629, %v790
    %v807 = vadd.f32 %v545, %v706
    %v808 = vadd.f32 %v574, %v735
    %v809 = vadd.f32 %v603, %v764
    %v810 = vadd.f32 %v632, %v793
    %v811 = vld [vmem:[#allocation11] sm:$0xf]
    %v813 = vperm.slane %v811, 0
    %v814 = vperm.slane %v811, 1
    %v815 = vperm.slane %v811, 2
    %v816 = vperm.slane %v811, 3
    %v821 = vadd.f32 %v795, %v813
    %v822 = vadd.f32 %v796, %v814
    %v823 = vadd.f32 %v797, %v815
    %v824 = vadd.f32 %v798, %v816
    %v825 = vadd.f32 %v799, %v813
    %v826 = vadd.f32 %v800, %v814
    %v827 = vadd.f32 %v801, %v815
    %v828 = vadd.f32 %v802, %v816
    %v829 = vadd.f32 %v803, %v813
    %v830 = vadd.f32 %v804, %v814
    %v831 = vadd.f32 %v805, %v815
    %v832 = vadd.f32 %v806, %v816
    %v833 = vadd.f32 %v807, %v813
    %v834 = vadd.f32 %v808, %v814
    %v835 = vadd.f32 %v809, %v815
    %v836 = vadd.f32 %v810, %v816
    %837 = vmatpush.msra.mxu0 %v255
    %838 = vmatpush.msra.mxu0 %v254
    %839 = vmatpush.msra.mxu0 %v253
    %840 = vmatpush.msra.mxu0 %v252
    %841 = vmatpush.msra.mxu0 %v251
    %842 = vmatpush.msra.mxu0 %v250
    %843 = vmatpush.msra.mxu0 %v249
    %844 = vmatpush.msra.mxu0 %v248
    %845 = vmatpush.msra.mxu0 %v247
    %846 = vmatpush.msra.mxu0 %v246
    %847 = vmatpush.msra.mxu0 %v245
    %848 = vmatpush.msra.mxu0 %v244
    %849 = vmatpush.msra.mxu0 %v243
    %850 = vmatpush.msra.mxu0 %v242
    %851 = vmatpush.msra.mxu0 %v241
    %852 = vmatpush.msra.mxu0 %v240
    %853 = vmatmul.f32.gmra.mxu0 %v821
    %v854 = vpop.f32.mrf.mxu0
    %v855 = vadd.f32 0.0, %v854
    %856 = vmatmul.f32.gmra.mxu0 %v825
    %v857 = vpop.f32.mrf.mxu0
    %v858 = vadd.f32 0.0, %v857
    %859 = vmatmul.f32.gmra.mxu0 %v829
    %v860 = vpop.f32.mrf.mxu0
    %v861 = vadd.f32 0.0, %v860
    %862 = vmatmul.f32.gmra.mxu0 %v833
    %v863 = vpop.f32.mrf.mxu0
    %v864 = vadd.f32 0.0, %v863
    %865 = vdwg.mxu0
    %866 = vmatpush.msra.mxu0 %v271
    %867 = vmatpush.msra.mxu0 %v270
    %868 = vmatpush.msra.mxu0 %v269
    %869 = vmatpush.msra.mxu0 %v268
    %870 = vmatpush.msra.mxu0 %v267
    %871 = vmatpush.msra.mxu0 %v266
    %872 = vmatpush.msra.mxu0 %v265
    %873 = vmatpush.msra.mxu0 %v264
    %874 = vmatpush.msra.mxu0 %v263
    %875 = vmatpush.msra.mxu0 %v262
    %876 = vmatpush.msra.mxu0 %v261
    %877 = vmatpush.msra.mxu0 %v260
    %878 = vmatpush.msra.mxu0 %v259
    %879 = vmatpush.msra.mxu0 %v258
    %880 = vmatpush.msra.mxu0 %v257
    %881 = vmatpush.msra.mxu0 %v256
    %882 = vmatmul.f32.gmra.mxu0 %v822
    %v883 = vpop.f32.mrf.mxu0
    %v884 = vadd.f32 %v855, %v883
    %885 = vmatmul.f32.gmra.mxu0 %v826
    %v886 = vpop.f32.mrf.mxu0
    %v887 = vadd.f32 %v858, %v886
    %888 = vmatmul.f32.gmra.mxu0 %v830
    %v889 = vpop.f32.mrf.mxu0
    %v890 = vadd.f32 %v861, %v889
    %891 = vmatmul.f32.gmra.mxu0 %v834
    %v892 = vpop.f32.mrf.mxu0
    %v893 = vadd.f32 %v864, %v892
    %894 = vdwg.mxu0
    %895 = vmatpush.msra.mxu0 %v287
    %896 = vmatpush.msra.mxu0 %v286
    %897 = vmatpush.msra.mxu0 %v285
    %898 = vmatpush.msra.mxu0 %v284
    %899 = vmatpush.msra.mxu0 %v283
    %900 = vmatpush.msra.mxu0 %v282
    %901 = vmatpush.msra.mxu0 %v281
    %902 = vmatpush.msra.mxu0 %v280
    %903 = vmatpush.msra.mxu0 %v279
    %904 = vmatpush.msra.mxu0 %v278
    %905 = vmatpush.msra.mxu0 %v277
    %906 = vmatpush.msra.mxu0 %v276
    %907 = vmatpush.msra.mxu0 %v275
    %908 = vmatpush.msra.mxu0 %v274
    %909 = vmatpush.msra.mxu0 %v273
    %910 = vmatpush.msra.mxu0 %v272
    %911 = vmatmul.f32.gmra.mxu0 %v823
    %v912 = vpop.f32.mrf.mxu0
    %v913 = vadd.f32 %v884, %v912
    %914 = vmatmul.f32.gmra.mxu0 %v827
    %v915 = vpop.f32.mrf.mxu0
    %v916 = vadd.f32 %v887, %v915
    %917 = vmatmul.f32.gmra.mxu0 %v831
    %v918 = vpop.f32.mrf.mxu0
    %v919 = vadd.f32 %v890, %v918
    %920 = vmatmul.f32.gmra.mxu0 %v835
    %v921 = vpop.f32.mrf.mxu0
    %v922 = vadd.f32 %v893, %v921
    %923 = vdwg.mxu0
    %924 = vmatpush.msra.mxu0 %v303
    %925 = vmatpush.msra.mxu0 %v302
    %926 = vmatpush.msra.mxu0 %v301
    %927 = vmatpush.msra.mxu0 %v300
    %928 = vmatpush.msra.mxu0 %v299
    %929 = vmatpush.msra.mxu0 %v298
    %930 = vmatpush.msra.mxu0 %v297
    %931 = vmatpush.msra.mxu0 %v296
    %932 = vmatpush.msra.mxu0 %v295
    %933 = vmatpush.msra.mxu0 %v294
    %934 = vmatpush.msra.mxu0 %v293
    %935 = vmatpush.msra.mxu0 %v292
    %936 = vmatpush.msra.mxu0 %v291
    %937 = vmatpush.msra.mxu0 %v290
    %938 = vmatpush.msra.mxu0 %v289
    %939 = vmatpush.msra.mxu0 %v288
    %940 = vmatmul.f32.gmra.mxu0 %v824
    %v941 = vpop.f32.mrf.mxu0
    %v942 = vadd.f32 %v913, %v941
    %943 = vmatmul.f32.gmra.mxu0 %v828
    %v944 = vpop.f32.mrf.mxu0
    %v945 = vadd.f32 %v916, %v944
    %946 = vmatmul.f32.gmra.mxu0 %v832
    %v947 = vpop.f32.mrf.mxu0
    %v948 = vadd.f32 %v919, %v947
    %949 = vmatmul.f32.gmra.mxu0 %v836
    %v950 = vpop.f32.mrf.mxu0
    %v951 = vadd.f32 %v922, %v950
    %952 = vdwg.mxu0
    %vm953 = vcmask 130048
    %v954 = vsel %vm953, %v942, 0.0
    %v955 = vsel %vm953, %v945, 0.0
    %v956 = vadd.f32 %v954, %v955
    %v957 = vsel %vm953, %v948, 0.0
    %v958 = vadd.f32 %v956, %v957
    %vm959 = vcmask 123904
    %v960 = vsel %vm959, %v951, 0.0
    %v961 = vadd.f32 %v958, %v960
    %v962 = vrot.slane %v961, 4
    %v963 = vadd.f32 %v961, %v962
    %v964 = vrot.slane %v963, 2
    %v965 = vadd.f32 %v963, %v964
    %v966 = vrot.slane %v965, 1
    %v967 = vadd.f32 %v965, %v966
    %v968 = vadd.f32 %v967, 0.0
    %v969 = vmul.f32 %v821, %v821
    %v970 = vmul.f32 %v822, %v822
    %v971 = vmul.f32 %v823, %v823
    %v972 = vmul.f32 %v824, %v824
    %v973 = vmul.f32 %v825, %v825
    %v974 = vmul.f32 %v826, %v826
    %v975 = vmul.f32 %v827, %v827
    %v976 = vmul.f32 %v828, %v828
    %v977 = vmul.f32 %v829, %v829
    %v978 = vmul.f32 %v830, %v830
    %v979 = vmul.f32 %v831, %v831
    %v980 = vmul.f32 %v832, %v832
    %v981 = vmul.f32 %v833, %v833
    %v982 = vmul.f32 %v834, %v834
    %v983 = vmul.f32 %v835, %v835
    %v984 = vmul.f32 %v836, %v836
    %985 = vmatpush.msra.mxu0 %v255
    %986 = vmatpush.msra.mxu0 %v254
    %987 = vmatpush.msra.mxu0 %v253
    %988 = vmatpush.msra.mxu0 %v252
    %989 = vmatpush.msra.mxu0 %v251
    %990 = vmatpush.msra.mxu0 %v250
    %991 = vmatpush.msra.mxu0 %v249
    %992 = vmatpush.msra.mxu0 %v248
    %993 = vmatpush.msra.mxu0 %v247
    %994 = vmatpush.msra.mxu0 %v246
    %995 = vmatpush.msra.mxu0 %v245
    %996 = vmatpush.msra.mxu0 %v244
    %997 = vmatpush.msra.mxu0 %v243
    %998 = vmatpush.msra.mxu0 %v242
    %999 = vmatpush.msra.mxu0 %v241
    %1000 = vmatpush.msra.mxu0 %v240
    %1001 = vmatmul.f32.gmra.mxu0 %v969
    %v1002 = vpop.f32.mrf.mxu0
    %v1003 = vadd.f32 0.0, %v1002
    %1004 = vmatmul.f32.gmra.mxu0 %v973
    %v1005 = vpop.f32.mrf.mxu0
    %v1006 = vadd.f32 0.0, %v1005
    %1007 = vmatmul.f32.gmra.mxu0 %v977
    %v1008 = vpop.f32.mrf.mxu0
    %v1009 = vadd.f32 0.0, %v1008
    %1010 = vmatmul.f32.gmra.mxu0 %v981
    %v1011 = vpop.f32.mrf.mxu0
    %v1012 = vadd.f32 0.0, %v1011
    %1013 = vdwg.mxu0
    %1014 = vmatpush.msra.mxu0 %v271
    %1015 = vmatpush.msra.mxu0 %v270
    %1016 = vmatpush.msra.mxu0 %v269
    %1017 = vmatpush.msra.mxu0 %v268
    %1018 = vmatpush.msra.mxu0 %v267
    %1019 = vmatpush.msra.mxu0 %v266
    %1020 = vmatpush.msra.mxu0 %v265
    %1021 = vmatpush.msra.mxu0 %v264
    %1022 = vmatpush.msra.mxu0 %v263
    %1023 = vmatpush.msra.mxu0 %v262
    %1024 = vmatpush.msra.mxu0 %v261
    %1025 = vmatpush.msra.mxu0 %v260
    %1026 = vmatpush.msra.mxu0 %v259
    %1027 = vmatpush.msra.mxu0 %v258
    %1028 = vmatpush.msra.mxu0 %v257
    %1029 = vmatpush.msra.mxu0 %v256
    %1030 = vmatmul.f32.gmra.mxu0 %v970
    %v1031 = vpop.f32.mrf.mxu0
    %v1032 = vadd.f32 %v1003, %v1031
    %1033 = vmatmul.f32.gmra.mxu0 %v974
    %v1034 = vpop.f32.mrf.mxu0
    %v1035 = vadd.f32 %v1006, %v1034
    %1036 = vmatmul.f32.gmra.mxu0 %v978
    %v1037 = vpop.f32.mrf.mxu0
    %v1038 = vadd.f32 %v1009, %v1037
    %1039 = vmatmul.f32.gmra.mxu0 %v982
    %v1040 = vpop.f32.mrf.mxu0
    %v1041 = vadd.f32 %v1012, %v1040
    %1042 = vdwg.mxu0
    %1043 = vmatpush.msra.mxu0 %v287
    %1044 = vmatpush.msra.mxu0 %v286
    %1045 = vmatpush.msra.mxu0 %v285
    %1046 = vmatpush.msra.mxu0 %v284
    %1047 = vmatpush.msra.mxu0 %v283
    %1048 = vmatpush.msra.mxu0 %v282
    %1049 = vmatpush.msra.mxu0 %v281
    %1050 = vmatpush.msra.mxu0 %v280
    %1051 = vmatpush.msra.mxu0 %v279
    %1052 = vmatpush.msra.mxu0 %v278
    %1053 = vmatpush.msra.mxu0 %v277
    %1054 = vmatpush.msra.mxu0 %v276
    %1055 = vmatpush.msra.mxu0 %v275
    %1056 = vmatpush.msra.mxu0 %v274
    %1057 = vmatpush.msra.mxu0 %v273
    %1058 = vmatpush.msra.mxu0 %v272
    %1059 = vmatmul.f32.gmra.mxu0 %v971
    %v1060 = vpop.f32.mrf.mxu0
    %v1061 = vadd.f32 %v1032, %v1060
    %1062 = vmatmul.f32.gmra.mxu0 %v975
    %v1063 = vpop.f32.mrf.mxu0
    %v1064 = vadd.f32 %v1035, %v1063
    %1065 = vmatmul.f32.gmra.mxu0 %v979
    %v1066 = vpop.f32.mrf.mxu0
    %v1067 = vadd.f32 %v1038, %v1066
    %1068 = vmatmul.f32.gmra.mxu0 %v983
    %v1069 = vpop.f32.mrf.mxu0
    %v1070 = vadd.f32 %v1041, %v1069
    %1071 = vdwg.mxu0
    %1072 = vmatpush.msra.mxu0 %v303
    %1073 = vmatpush.msra.mxu0 %v302
    %1074 = vmatpush.msra.mxu0 %v301
    %1075 = vmatpush.msra.mxu0 %v300
    %1076 = vmatpush.msra.mxu0 %v299
    %1077 = vmatpush.msra.mxu0 %v298
    %1078 = vmatpush.msra.mxu0 %v297
    %1079 = vmatpush.msra.mxu0 %v296
    %1080 = vmatpush.msra.mxu0 %v295
    %1081 = vmatpush.msra.mxu0 %v294
    %1082 = vmatpush.msra.mxu0 %v293
    %1083 = vmatpush.msra.mxu0 %v292
    %1084 = vmatpush.msra.mxu0 %v291
    %1085 = vmatpush.msra.mxu0 %v290
    %1086 = vmatpush.msra.mxu0 %v289
    %1087 = vmatpush.msra.mxu0 %v288
    %1088 = vmatmul.f32.gmra.mxu0 %v972
    %v1089 = vpop.f32.mrf.mxu0
    %v1090 = vadd.f32 %v1061, %v1089
    %1091 = vmatmul.f32.gmra.mxu0 %v976
    %v1092 = vpop.f32.mrf.mxu0
    %v1093 = vadd.f32 %v1064, %v1092
    %1094 = vmatmul.f32.gmra.mxu0 %v980
    %v1095 = vpop.f32.mrf.mxu0
    %v1096 = vadd.f32 %v1067, %v1095
    %1097 = vmatmul.f32.gmra.mxu0 %v984
    %v1098 = vpop.f32.mrf.mxu0
    %v1099 = vadd.f32 %v1070, %v1098
    %1100 = vdwg.mxu0
    %v1101 = vsel %vm953, %v1090, 0.0
    %v1102 = vsel %vm953, %v1093, 0.0
    %v1103 = vadd.f32 %v1101, %v1102
    %v1104 = vsel %vm953, %v1096, 0.0
    %v1105 = vadd.f32 %v1103, %v1104
    %v1106 = vsel %vm959, %v1099, 0.0
    %v1107 = vadd.f32 %v1105, %v1106
    %v1108 = vrot.slane %v1107, 4
    %v1109 = vadd.f32 %v1107, %v1108
    %v1110 = vrot.slane %v1109, 2
    %v1111 = vadd.f32 %v1109, %v1110
    %v1112 = vrot.slane %v1111, 1
    %v1113 = vadd.f32 %v1111, %v1112
    %v1114 = vadd.f32 %v1113, 0.0
    %s1115 = scalar_lea.vmem %s0, 32
    %v1116 = vld [vmem:[%s1115] sm:$0xff]
    %v1117 = vld [vmem:[%s1115 + $0x8] sm:$0xff]
    %v1118 = vld [vmem:[%s1115 + $0x10] sm:$0xff]
    %v1119 = vld [vmem:[%s1115 + $0x18] sm:$0x3]
    %v1120 = vld [vmem:[%s1115 + $0x1] sm:$0xff]
    %v1121 = vld [vmem:[%s1115 + $0x9] sm:$0xff]
    %v1122 = vld [vmem:[%s1115 + $0x11] sm:$0xff]
    %v1123 = vld [vmem:[%s1115 + $0x19] sm:$0x3]
    %v1125 = vsel %vm198, %v1120, 0
    %v1128 = vsel %vm198, %v1121, 0
    %v1131 = vsel %vm198, %v1122, 0
    %v1134 = vsel %vm198, %v1123, 0
    %1136 = vmatpush.msra.mxu0 0.0
    %1137 = vmatpush.msra.mxu0 0.0
    %1138 = vmatpush.msra.mxu0 0.0
    %1139 = vmatpush.msra.mxu0 0.0
    %1140 = vmatpush.msra.mxu0 0.0
    %1141 = vmatpush.msra.mxu0 0.0
    %1142 = vmatpush.msra.mxu0 0.0
    %1143 = vmatpush.msra.mxu0 0.0
    %1144 = vmatpush.msra.mxu0 0.0
    %1145 = vmatpush.msra.mxu0 0.0
    %1146 = vmatpush.msra.mxu0 0.0
    %1147 = vmatpush.msra.mxu0 0.0
    %1148 = vmatpush.msra.mxu0 %v367
    %1149 = vmatpush.msra.mxu0 %v345
    %1150 = vmatpush.msra.mxu0 %v341
    %1151 = vmatpush.msra.mxu0 %v337
    %1152 = vmatmul.f32.gmra.mxu0 %v1125
    %v1153 = vpop.f32.mrf.mxu0
    %v1154 = vadd.f32 0.0, %v1153
    %1155 = vmatmul.f32.gmra.mxu0 %v1128
    %v1156 = vpop.f32.mrf.mxu0
    %v1157 = vadd.f32 0.0, %v1156
    %1158 = vmatmul.f32.gmra.mxu0 %v1131
    %v1159 = vpop.f32.mrf.mxu0
    %v1160 = vadd.f32 0.0, %v1159
    %1161 = vmatmul.f32.gmra.mxu0 %v1134
    %v1162 = vpop.f32.mrf.mxu0
    %v1163 = vadd.f32 0.0, %v1162
    %1164 = vdwg.mxu0
    %1165 = vmatpush.msra.mxu0 0.0
    %1166 = vmatpush.msra.mxu0 0.0
    %1167 = vmatpush.msra.mxu0 0.0
    %1168 = vmatpush.msra.mxu0 0.0
    %1169 = vmatpush.msra.mxu0 0.0
    %1170 = vmatpush.msra.mxu0 0.0
    %1171 = vmatpush.msra.mxu0 0.0
    %1172 = vmatpush.msra.mxu0 0.0
    %1173 = vmatpush.msra.mxu0 0.0
    %1174 = vmatpush.msra.mxu0 0.0
    %1175 = vmatpush.msra.mxu0 0.0
    %1176 = vmatpush.msra.mxu0 0.0
    %1177 = vmatpush.msra.mxu0 %v370
    %1178 = vmatpush.msra.mxu0 %v346
    %1179 = vmatpush.msra.mxu0 %v342
    %1180 = vmatpush.msra.mxu0 %v338
    %1181 = vmatmul.f32.gmra.mxu0 %v1125
    %v1182 = vpop.f32.mrf.mxu0
    %v1183 = vadd.f32 0.0, %v1182
    %1184 = vmatmul.f32.gmra.mxu0 %v1128
    %v1185 = vpop.f32.mrf.mxu0
    %v1186 = vadd.f32 0.0, %v1185
    %1187 = vmatmul.f32.gmra.mxu0 %v1131
    %v1188 = vpop.f32.mrf.mxu0
    %v1189 = vadd.f32 0.0, %v1188
    %1190 = vmatmul.f32.gmra.mxu0 %v1134
    %v1191 = vpop.f32.mrf.mxu0
    %v1192 = vadd.f32 0.0, %v1191
    %1193 = vdwg.mxu0
    %1194 = vmatpush.msra.mxu0 0.0
    %1195 = vmatpush.msra.mxu0 0.0
    %1196 = vmatpush.msra.mxu0 0.0
    %1197 = vmatpush.msra.mxu0 0.0
    %1198 = vmatpush.msra.mxu0 0.0
    %1199 = vmatpush.msra.mxu0 0.0
    %1200 = vmatpush.msra.mxu0 0.0
    %1201 = vmatpush.msra.mxu0 0.0
    %1202 = vmatpush.msra.mxu0 0.0
    %1203 = vmatpush.msra.mxu0 0.0
    %1204 = vmatpush.msra.mxu0 0.0
    %1205 = vmatpush.msra.mxu0 0.0
    %1206 = vmatpush.msra.mxu0 %v373
    %1207 = vmatpush.msra.mxu0 %v347
    %1208 = vmatpush.msra.mxu0 %v343
    %1209 = vmatpush.msra.mxu0 %v339
    %1210 = vmatmul.f32.gmra.mxu0 %v1125
    %v1211 = vpop.f32.mrf.mxu0
    %v1212 = vadd.f32 0.0, %v1211
    %1213 = vmatmul.f32.gmra.mxu0 %v1128
    %v1214 = vpop.f32.mrf.mxu0
    %v1215 = vadd.f32 0.0, %v1214
    %1216 = vmatmul.f32.gmra.mxu0 %v1131
    %v1217 = vpop.f32.mrf.mxu0
    %v1218 = vadd.f32 0.0, %v1217
    %1219 = vmatmul.f32.gmra.mxu0 %v1134
    %v1220 = vpop.f32.mrf.mxu0
    %v1221 = vadd.f32 0.0, %v1220
    %1222 = vdwg.mxu0
    %1223 = vmatpush.msra.mxu0 0.0
    %1224 = vmatpush.msra.mxu0 0.0
    %1225 = vmatpush.msra.mxu0 0.0
    %1226 = vmatpush.msra.mxu0 0.0
    %1227 = vmatpush.msra.mxu0 0.0
    %1228 = vmatpush.msra.mxu0 0.0
    %1229 = vmatpush.msra.mxu0 0.0
    %1230 = vmatpush.msra.mxu0 0.0
    %1231 = vmatpush.msra.mxu0 0.0
    %1232 = vmatpush.msra.mxu0 0.0
    %1233 = vmatpush.msra.mxu0 0.0
    %1234 = vmatpush.msra.mxu0 0.0
    %1235 = vmatpush.msra.mxu0 %v376
    %1236 = vmatpush.msra.mxu0 %v348
    %1237 = vmatpush.msra.mxu0 %v344
    %1238 = vmatpush.msra.mxu0 %v340
    %1239 = vmatmul.f32.gmra.mxu0 %v1125
    %v1240 = vpop.f32.mrf.mxu0
    %v1241 = vadd.f32 0.0, %v1240
    %1242 = vmatmul.f32.gmra.mxu0 %v1128
    %v1243 = vpop.f32.mrf.mxu0
    %v1244 = vadd.f32 0.0, %v1243
    %1245 = vmatmul.f32.gmra.mxu0 %v1131
    %v1246 = vpop.f32.mrf.mxu0
    %v1247 = vadd.f32 0.0, %v1246
    %1248 = vmatmul.f32.gmra.mxu0 %v1134
    %v1249 = vpop.f32.mrf.mxu0
    %v1250 = vadd.f32 0.0, %v1249
    %1251 = vdwg.mxu0
    %v1253 = vsel %vm198, %v1116, 0
    %v1256 = vsel %vm198, %v1117, 0
    %v1259 = vsel %vm198, %v1118, 0
    %v1262 = vsel %vm198, %v1119, 0
    %1264 = vmatpush.msra.mxu0 0.0
    %1265 = vmatpush.msra.mxu0 0.0
    %1266 = vmatpush.msra.mxu0 0.0
    %1267 = vmatpush.msra.mxu0 0.0
    %1268 = vmatpush.msra.mxu0 0.0
    %1269 = vmatpush.msra.mxu0 0.0
    %1270 = vmatpush.msra.mxu0 0.0
    %1271 = vmatpush.msra.mxu0 0.0
    %1272 = vmatpush.msra.mxu0 0.0
    %1273 = vmatpush.msra.mxu0 0.0
    %1274 = vmatpush.msra.mxu0 0.0
    %1275 = vmatpush.msra.mxu0 0.0
    %1276 = vmatpush.msra.mxu0 %v507
    %1277 = vmatpush.msra.mxu0 %v324
    %1278 = vmatpush.msra.mxu0 %v320
    %1279 = vmatpush.msra.mxu0 %v316
    %1280 = vmatmul.f32.gmra.mxu0 %v1253
    %v1281 = vpop.f32.mrf.mxu0
    %v1282 = vadd.f32 %v1154, %v1281
    %1283 = vmatmul.f32.gmra.mxu0 %v1256
    %v1284 = vpop.f32.mrf.mxu0
    %v1285 = vadd.f32 %v1157, %v1284
    %1286 = vmatmul.f32.gmra.mxu0 %v1259
    %v1287 = vpop.f32.mrf.mxu0
    %v1288 = vadd.f32 %v1160, %v1287
    %1289 = vmatmul.f32.gmra.mxu0 %v1262
    %v1290 = vpop.f32.mrf.mxu0
    %v1291 = vadd.f32 %v1163, %v1290
    %1292 = vdwg.mxu0
    %1293 = vmatpush.msra.mxu0 0.0
    %1294 = vmatpush.msra.mxu0 0.0
    %1295 = vmatpush.msra.mxu0 0.0
    %1296 = vmatpush.msra.mxu0 0.0
    %1297 = vmatpush.msra.mxu0 0.0
    %1298 = vmatpush.msra.mxu0 0.0
    %1299 = vmatpush.msra.mxu0 0.0
    %1300 = vmatpush.msra.mxu0 0.0
    %1301 = vmatpush.msra.mxu0 0.0
    %1302 = vmatpush.msra.mxu0 0.0
    %1303 = vmatpush.msra.mxu0 0.0
    %1304 = vmatpush.msra.mxu0 0.0
    %1305 = vmatpush.msra.mxu0 %v510
    %1306 = vmatpush.msra.mxu0 %v325
    %1307 = vmatpush.msra.mxu0 %v321
    %1308 = vmatpush.msra.mxu0 %v317
    %1309 = vmatmul.f32.gmra.mxu0 %v1253
    %v1310 = vpop.f32.mrf.mxu0
    %v1311 = vadd.f32 %v1183, %v1310
    %1312 = vmatmul.f32.gmra.mxu0 %v1256
    %v1313 = vpop.f32.mrf.mxu0
    %v1314 = vadd.f32 %v1186, %v1313
    %1315 = vmatmul.f32.gmra.mxu0 %v1259
    %v1316 = vpop.f32.mrf.mxu0
    %v1317 = vadd.f32 %v1189, %v1316
    %1318 = vmatmul.f32.gmra.mxu0 %v1262
    %v1319 = vpop.f32.mrf.mxu0
    %v1320 = vadd.f32 %v1192, %v1319
    %1321 = vdwg.mxu0
    %1322 = vmatpush.msra.mxu0 0.0
    %1323 = vmatpush.msra.mxu0 0.0
    %1324 = vmatpush.msra.mxu0 0.0
    %1325 = vmatpush.msra.mxu0 0.0
    %1326 = vmatpush.msra.mxu0 0.0
    %1327 = vmatpush.msra.mxu0 0.0
    %1328 = vmatpush.msra.mxu0 0.0
    %1329 = vmatpush.msra.mxu0 0.0
    %1330 = vmatpush.msra.mxu0 0.0
    %1331 = vmatpush.msra.mxu0 0.0
    %1332 = vmatpush.msra.mxu0 0.0
    %1333 = vmatpush.msra.mxu0 0.0
    %1334 = vmatpush.msra.mxu0 %v513
    %1335 = vmatpush.msra.mxu0 %v326
    %1336 = vmatpush.msra.mxu0 %v322
    %1337 = vmatpush.msra.mxu0 %v318
    %1338 = vmatmul.f32.gmra.mxu0 %v1253
    %v1339 = vpop.f32.mrf.mxu0
    %v1340 = vadd.f32 %v1212, %v1339
    %1341 = vmatmul.f32.gmra.mxu0 %v1256
    %v1342 = vpop.f32.mrf.mxu0
    %v1343 = vadd.f32 %v1215, %v1342
    %1344 = vmatmul.f32.gmra.mxu0 %v1259
    %v1345 = vpop.f32.mrf.mxu0
    %v1346 = vadd.f32 %v1218, %v1345
    %1347 = vmatmul.f32.gmra.mxu0 %v1262
    %v1348 = vpop.f32.mrf.mxu0
    %v1349 = vadd.f32 %v1221, %v1348
    %1350 = vdwg.mxu0
    %1351 = vmatpush.msra.mxu0 0.0
    %1352 = vmatpush.msra.mxu0 0.0
    %1353 = vmatpush.msra.mxu0 0.0
    %1354 = vmatpush.msra.mxu0 0.0
    %1355 = vmatpush.msra.mxu0 0.0
    %1356 = vmatpush.msra.mxu0 0.0
    %1357 = vmatpush.msra.mxu0 0.0
    %1358 = vmatpush.msra.mxu0 0.0
    %1359 = vmatpush.msra.mxu0 0.0
    %1360 = vmatpush.msra.mxu0 0.0
    %1361 = vmatpush.msra.mxu0 0.0
    %1362 = vmatpush.msra.mxu0 0.0
    %1363 = vmatpush.msra.mxu0 %v516
    %1364 = vmatpush.msra.mxu0 %v327
    %1365 = vmatpush.msra.mxu0 %v323
    %1366 = vmatpush.msra.mxu0 %v319
    %1367 = vmatmul.f32.gmra.mxu0 %v1253
    %v1368 = vpop.f32.mrf.mxu0
    %v1369 = vadd.f32 %v1241, %v1368
    %1370 = vmatmul.f32.gmra.mxu0 %v1256
    %v1371 = vpop.f32.mrf.mxu0
    %v1372 = vadd.f32 %v1244, %v1371
    %1373 = vmatmul.f32.gmra.mxu0 %v1259
    %v1374 = vpop.f32.mrf.mxu0
    %v1375 = vadd.f32 %v1247, %v1374
    %1376 = vmatmul.f32.gmra.mxu0 %v1262
    %v1377 = vpop.f32.mrf.mxu0
    %v1378 = vadd.f32 %v1250, %v1377
    %1379 = vdwg.mxu0
    %v1380 = vld [vmem:[%s1115 + $0x2] sm:$0xff]
    %v1381 = vld [vmem:[%s1115 + $0xa] sm:$0xff]
    %v1382 = vld [vmem:[%s1115 + $0x12] sm:$0xff]
    %v1383 = vld [vmem:[%s1115 + $0x1a] sm:$0x3]
    %v1385 = vsel %vm198, %v1380, 0
    %v1388 = vsel %vm198, %v1381, 0
    %v1391 = vsel %vm198, %v1382, 0
    %v1394 = vsel %vm198, %v1383, 0
    %1396 = vmatpush.msra.mxu0 0.0
    %1397 = vmatpush.msra.mxu0 0.0
    %1398 = vmatpush.msra.mxu0 0.0
    %1399 = vmatpush.msra.mxu0 0.0
    %1400 = vmatpush.msra.mxu0 0.0
    %1401 = vmatpush.msra.mxu0 0.0
    %1402 = vmatpush.msra.mxu0 0.0
    %1403 = vmatpush.msra.mxu0 0.0
    %1404 = vmatpush.msra.mxu0 0.0
    %1405 = vmatpush.msra.mxu0 0.0
    %1406 = vmatpush.msra.mxu0 0.0
    %1407 = vmatpush.msra.mxu0 0.0
    %1408 = vmatpush.msra.mxu0 %v668
    %1409 = vmatpush.msra.mxu0 %v647
    %1410 = vmatpush.msra.mxu0 %v643
    %1411 = vmatpush.msra.mxu0 %v639
    %1412 = vmatmul.f32.gmra.mxu0 %v1385
    %v1413 = vpop.f32.mrf.mxu0
    %v1414 = vadd.f32 0.0, %v1413
    %1415 = vmatmul.f32.gmra.mxu0 %v1388
    %v1416 = vpop.f32.mrf.mxu0
    %v1417 = vadd.f32 0.0, %v1416
    %1418 = vmatmul.f32.gmra.mxu0 %v1391
    %v1419 = vpop.f32.mrf.mxu0
    %v1420 = vadd.f32 0.0, %v1419
    %1421 = vmatmul.f32.gmra.mxu0 %v1394
    %v1422 = vpop.f32.mrf.mxu0
    %v1423 = vadd.f32 0.0, %v1422
    %1424 = vdwg.mxu0
    %1425 = vmatpush.msra.mxu0 0.0
    %1426 = vmatpush.msra.mxu0 0.0
    %1427 = vmatpush.msra.mxu0 0.0
    %1428 = vmatpush.msra.mxu0 0.0
    %1429 = vmatpush.msra.mxu0 0.0
    %1430 = vmatpush.msra.mxu0 0.0
    %1431 = vmatpush.msra.mxu0 0.0
    %1432 = vmatpush.msra.mxu0 0.0
    %1433 = vmatpush.msra.mxu0 0.0
    %1434 = vmatpush.msra.mxu0 0.0
    %1435 = vmatpush.msra.mxu0 0.0
    %1436 = vmatpush.msra.mxu0 0.0
    %1437 = vmatpush.msra.mxu0 %v671
    %1438 = vmatpush.msra.mxu0 %v648
    %1439 = vmatpush.msra.mxu0 %v644
    %1440 = vmatpush.msra.mxu0 %v640
    %1441 = vmatmul.f32.gmra.mxu0 %v1385
    %v1442 = vpop.f32.mrf.mxu0
    %v1443 = vadd.f32 0.0, %v1442
    %1444 = vmatmul.f32.gmra.mxu0 %v1388
    %v1445 = vpop.f32.mrf.mxu0
    %v1446 = vadd.f32 0.0, %v1445
    %1447 = vmatmul.f32.gmra.mxu0 %v1391
    %v1448 = vpop.f32.mrf.mxu0
    %v1449 = vadd.f32 0.0, %v1448
    %1450 = vmatmul.f32.gmra.mxu0 %v1394
    %v1451 = vpop.f32.mrf.mxu0
    %v1452 = vadd.f32 0.0, %v1451
    %1453 = vdwg.mxu0
    %1454 = vmatpush.msra.mxu0 0.0
    %1455 = vmatpush.msra.mxu0 0.0
    %1456 = vmatpush.msra.mxu0 0.0
    %1457 = vmatpush.msra.mxu0 0.0
    %1458 = vmatpush.msra.mxu0 0.0
    %1459 = vmatpush.msra.mxu0 0.0
    %1460 = vmatpush.msra.mxu0 0.0
    %1461 = vmatpush.msra.mxu0 0.0
    %1462 = vmatpush.msra.mxu0 0.0
    %1463 = vmatpush.msra.mxu0 0.0
    %1464 = vmatpush.msra.mxu0 0.0
    %1465 = vmatpush.msra.mxu0 0.0
    %1466 = vmatpush.msra.mxu0 %v674
    %1467 = vmatpush.msra.mxu0 %v649
    %1468 = vmatpush.msra.mxu0 %v645
    %1469 = vmatpush.msra.mxu0 %v641
    %1470 = vmatmul.f32.gmra.mxu0 %v1385
    %v1471 = vpop.f32.mrf.mxu0
    %v1472 = vadd.f32 0.0, %v1471
    %1473 = vmatmul.f32.gmra.mxu0 %v1388
    %v1474 = vpop.f32.mrf.mxu0
    %v1475 = vadd.f32 0.0, %v1474
    %1476 = vmatmul.f32.gmra.mxu0 %v1391
    %v1477 = vpop.f32.mrf.mxu0
    %v1478 = vadd.f32 0.0, %v1477
    %1479 = vmatmul.f32.gmra.mxu0 %v1394
    %v1480 = vpop.f32.mrf.mxu0
    %v1481 = vadd.f32 0.0, %v1480
    %1482 = vdwg.mxu0
    %1483 = vmatpush.msra.mxu0 0.0
    %1484 = vmatpush.msra.mxu0 0.0
    %1485 = vmatpush.msra.mxu0 0.0
    %1486 = vmatpush.msra.mxu0 0.0
    %1487 = vmatpush.msra.mxu0 0.0
    %1488 = vmatpush.msra.mxu0 0.0
    %1489 = vmatpush.msra.mxu0 0.0
    %1490 = vmatpush.msra.mxu0 0.0
    %1491 = vmatpush.msra.mxu0 0.0
    %1492 = vmatpush.msra.mxu0 0.0
    %1493 = vmatpush.msra.mxu0 0.0
    %1494 = vmatpush.msra.mxu0 0.0
    %1495 = vmatpush.msra.mxu0 %v677
    %1496 = vmatpush.msra.mxu0 %v650
    %1497 = vmatpush.msra.mxu0 %v646
    %1498 = vmatpush.msra.mxu0 %v642
    %1499 = vmatmul.f32.gmra.mxu0 %v1385
    %v1500 = vpop.f32.mrf.mxu0
    %v1501 = vadd.f32 0.0, %v1500
    %1502 = vmatmul.f32.gmra.mxu0 %v1388
    %v1503 = vpop.f32.mrf.mxu0
    %v1504 = vadd.f32 0.0, %v1503
    %1505 = vmatmul.f32.gmra.mxu0 %v1391
    %v1506 = vpop.f32.mrf.mxu0
    %v1507 = vadd.f32 0.0, %v1506
    %1508 = vmatmul.f32.gmra.mxu0 %v1394
    %v1509 = vpop.f32.mrf.mxu0
    %v1510 = vadd.f32 0.0, %v1509
    %1511 = vdwg.mxu0
    %v1512 = vadd.f32 %v1282, %v1414
    %v1513 = vadd.f32 %v1311, %v1443
    %v1514 = vadd.f32 %v1340, %v1472
    %v1515 = vadd.f32 %v1369, %v1501
    %v1516 = vadd.f32 %v1285, %v1417
    %v1517 = vadd.f32 %v1314, %v1446
    %v1518 = vadd.f32 %v1343, %v1475
    %v1519 = vadd.f32 %v1372, %v1504
    %v1520 = vadd.f32 %v1288, %v1420
    %v1521 = vadd.f32 %v1317, %v1449
    %v1522 = vadd.f32 %v1346, %v1478
    %v1523 = vadd.f32 %v1375, %v1507
    %v1524 = vadd.f32 %v1291, %v1423
    %v1525 = vadd.f32 %v1320, %v1452
    %v1526 = vadd.f32 %v1349, %v1481
    %v1527 = vadd.f32 %v1378, %v1510
    %v1528 = vadd.f32 %v1512, %v813
    %v1529 = vadd.f32 %v1513, %v814
    %v1530 = vadd.f32 %v1514, %v815
    %v1531 = vadd.f32 %v1515, %v816
    %v1532 = vadd.f32 %v1516, %v813
    %v1533 = vadd.f32 %v1517, %v814
    %v1534 = vadd.f32 %v1518, %v815
    %v1535 = vadd.f32 %v1519, %v816
    %v1536 = vadd.f32 %v1520, %v813
    %v1537 = vadd.f32 %v1521, %v814
    %v1538 = vadd.f32 %v1522, %v815
    %v1539 = vadd.f32 %v1523, %v816
    %v1540 = vadd.f32 %v1524, %v813
    %v1541 = vadd.f32 %v1525, %v814
    %v1542 = vadd.f32 %v1526, %v815
    %v1543 = vadd.f32 %v1527, %v816
    %1544 = vmatpush.msra.mxu0 %v255
    %1545 = vmatpush.msra.mxu0 %v254
    %1546 = vmatpush.msra.mxu0 %v253
    %1547 = vmatpush.msra.mxu0 %v252
    %1548 = vmatpush.msra.mxu0 %v251
    %1549 = vmatpush.msra.mxu0 %v250
    %1550 = vmatpush.msra.mxu0 %v249
    %1551 = vmatpush.msra.mxu0 %v248
    %1552 = vmatpush.msra.mxu0 %v247
    %1553 = vmatpush.msra.mxu0 %v246
    %1554 = vmatpush.msra.mxu0 %v245
    %1555 = vmatpush.msra.mxu0 %v244
    %1556 = vmatpush.msra.mxu0 %v243
    %1557 = vmatpush.msra.mxu0 %v242
    %1558 = vmatpush.msra.mxu0 %v241
    %1559 = vmatpush.msra.mxu0 %v240
    %1560 = vmatmul.f32.gmra.mxu0 %v1528
    %v1561 = vpop.f32.mrf.mxu0
    %v1562 = vadd.f32 0.0, %v1561
    %1563 = vmatmul.f32.gmra.mxu0 %v1532
    %v1564 = vpop.f32.mrf.mxu0
    %v1565 = vadd.f32 0.0, %v1564
    %1566 = vmatmul.f32.gmra.mxu0 %v1536
    %v1567 = vpop.f32.mrf.mxu0
    %v1568 = vadd.f32 0.0, %v1567
    %1569 = vmatmul.f32.gmra.mxu0 %v1540
    %v1570 = vpop.f32.mrf.mxu0
    %v1571 = vadd.f32 0.0, %v1570
    %1572 = vdwg.mxu0
    %1573 = vmatpush.msra.mxu0 %v271
    %1574 = vmatpush.msra.mxu0 %v270
    %1575 = vmatpush.msra.mxu0 %v269
    %1576 = vmatpush.msra.mxu0 %v268
    %1577 = vmatpush.msra.mxu0 %v267
    %1578 = vmatpush.msra.mxu0 %v266
    %1579 = vmatpush.msra.mxu0 %v265
    %1580 = vmatpush.msra.mxu0 %v264
    %1581 = vmatpush.msra.mxu0 %v263
    %1582 = vmatpush.msra.mxu0 %v262
    %1583 = vmatpush.msra.mxu0 %v261
    %1584 = vmatpush.msra.mxu0 %v260
    %1585 = vmatpush.msra.mxu0 %v259
    %1586 = vmatpush.msra.mxu0 %v258
    %1587 = vmatpush.msra.mxu0 %v257
    %1588 = vmatpush.msra.mxu0 %v256
    %1589 = vmatmul.f32.gmra.mxu0 %v1529
    %v1590 = vpop.f32.mrf.mxu0
    %v1591 = vadd.f32 %v1562, %v1590
    %1592 = vmatmul.f32.gmra.mxu0 %v1533
    %v1593 = vpop.f32.mrf.mxu0
    %v1594 = vadd.f32 %v1565, %v1593
    %1595 = vmatmul.f32.gmra.mxu0 %v1537
    %v1596 = vpop.f32.mrf.mxu0
    %v1597 = vadd.f32 %v1568, %v1596
    %1598 = vmatmul.f32.gmra.mxu0 %v1541
    %v1599 = vpop.f32.mrf.mxu0
    %v1600 = vadd.f32 %v1571, %v1599
    %1601 = vdwg.mxu0
    %1602 = vmatpush.msra.mxu0 %v287
    %1603 = vmatpush.msra.mxu0 %v286
    %1604 = vmatpush.msra.mxu0 %v285
    %1605 = vmatpush.msra.mxu0 %v284
    %1606 = vmatpush.msra.mxu0 %v283
    %1607 = vmatpush.msra.mxu0 %v282
    %1608 = vmatpush.msra.mxu0 %v281
    %1609 = vmatpush.msra.mxu0 %v280
    %1610 = vmatpush.msra.mxu0 %v279
    %1611 = vmatpush.msra.mxu0 %v278
    %1612 = vmatpush.msra.mxu0 %v277
    %1613 = vmatpush.msra.mxu0 %v276
    %1614 = vmatpush.msra.mxu0 %v275
    %1615 = vmatpush.msra.mxu0 %v274
    %1616 = vmatpush.msra.mxu0 %v273
    %1617 = vmatpush.msra.mxu0 %v272
    %1618 = vmatmul.f32.gmra.mxu0 %v1530
    %v1619 = vpop.f32.mrf.mxu0
    %v1620 = vadd.f32 %v1591, %v1619
    %1621 = vmatmul.f32.gmra.mxu0 %v1534
    %v1622 = vpop.f32.mrf.mxu0
    %v1623 = vadd.f32 %v1594, %v1622
    %1624 = vmatmul.f32.gmra.mxu0 %v1538
    %v1625 = vpop.f32.mrf.mxu0
    %v1626 = vadd.f32 %v1597, %v1625
    %1627 = vmatmul.f32.gmra.mxu0 %v1542
    %v1628 = vpop.f32.mrf.mxu0
    %v1629 = vadd.f32 %v1600, %v1628
    %1630 = vdwg.mxu0
    %1631 = vmatpush.msra.mxu0 %v303
    %1632 = vmatpush.msra.mxu0 %v302
    %1633 = vmatpush.msra.mxu0 %v301
    %1634 = vmatpush.msra.mxu0 %v300
    %1635 = vmatpush.msra.mxu0 %v299
    %1636 = vmatpush.msra.mxu0 %v298
    %1637 = vmatpush.msra.mxu0 %v297
    %1638 = vmatpush.msra.mxu0 %v296
    %1639 = vmatpush.msra.mxu0 %v295
    %1640 = vmatpush.msra.mxu0 %v294
    %1641 = vmatpush.msra.mxu0 %v293
    %1642 = vmatpush.msra.mxu0 %v292
    %1643 = vmatpush.msra.mxu0 %v291
    %1644 = vmatpush.msra.mxu0 %v290
    %1645 = vmatpush.msra.mxu0 %v289
    %1646 = vmatpush.msra.mxu0 %v288
    %1647 = vmatmul.f32.gmra.mxu0 %v1531
    %v1648 = vpop.f32.mrf.mxu0
    %v1649 = vadd.f32 %v1620, %v1648
    %1650 = vmatmul.f32.gmra.mxu0 %v1535
    %v1651 = vpop.f32.mrf.mxu0
    %v1652 = vadd.f32 %v1623, %v1651
    %1653 = vmatmul.f32.gmra.mxu0 %v1539
    %v1654 = vpop.f32.mrf.mxu0
    %v1655 = vadd.f32 %v1626, %v1654
    %1656 = vmatmul.f32.gmra.mxu0 %v1543
    %v1657 = vpop.f32.mrf.mxu0
    %v1658 = vadd.f32 %v1629, %v1657
    %1659 = vdwg.mxu0
    %v1660 = vsel %vm953, %v1649, 0.0
    %v1661 = vsel %vm953, %v1652, 0.0
    %v1662 = vadd.f32 %v1660, %v1661
    %v1663 = vsel %vm953, %v1655, 0.0
    %v1664 = vadd.f32 %v1662, %v1663
    %v1665 = vsel %vm959, %v1658, 0.0
    %v1666 = vadd.f32 %v1664, %v1665
    %v1667 = vrot.slane %v1666, 4
    %v1668 = vadd.f32 %v1666, %v1667
    %v1669 = vrot.slane %v1668, 2
    %v1670 = vadd.f32 %v1668, %v1669
    %v1671 = vrot.slane %v1670, 1
    %v1672 = vadd.f32 %v1670, %v1671
    %v1673 = vadd.f32 %v968, %v1672
    %v1674 = vmul.f32 %v1528, %v1528
    %v1675 = vmul.f32 %v1529, %v1529
    %v1676 = vmul.f32 %v1530, %v1530
    %v1677 = vmul.f32 %v1531, %v1531
    %v1678 = vmul.f32 %v1532, %v1532
    %v1679 = vmul.f32 %v1533, %v1533
    %v1680 = vmul.f32 %v1534, %v1534
    %v1681 = vmul.f32 %v1535, %v1535
    %v1682 = vmul.f32 %v1536, %v1536
    %v1683 = vmul.f32 %v1537, %v1537
    %v1684 = vmul.f32 %v1538, %v1538
    %v1685 = vmul.f32 %v1539, %v1539
    %v1686 = vmul.f32 %v1540, %v1540
    %v1687 = vmul.f32 %v1541, %v1541
    %v1688 = vmul.f32 %v1542, %v1542
    %v1689 = vmul.f32 %v1543, %v1543
    %1690 = vmatpush.msra.mxu0 %v255
    %1691 = vmatpush.msra.mxu0 %v254
    %1692 = vmatpush.msra.mxu0 %v253
    %1693 = vmatpush.msra.mxu0 %v252
    %1694 = vmatpush.msra.mxu0 %v251
    %1695 = vmatpush.msra.mxu0 %v250
    %1696 = vmatpush.msra.mxu0 %v249
    %1697 = vmatpush.msra.mxu0 %v248
    %1698 = vmatpush.msra.mxu0 %v247
    %1699 = vmatpush.msra.mxu0 %v246
    %1700 = vmatpush.msra.mxu0 %v245
    %1701 = vmatpush.msra.mxu0 %v244
    %1702 = vmatpush.msra.mxu0 %v243
    %1703 = vmatpush.msra.mxu0 %v242
    %1704 = vmatpush.msra.mxu0 %v241
    %1705 = vmatpush.msra.mxu0 %v240
    %1706 = vmatmul.f32.gmra.mxu0 %v1674
    %v1707 = vpop.f32.mrf.mxu0
    %v1708 = vadd.f32 0.0, %v1707
    %1709 = vmatmul.f32.gmra.mxu0 %v1678
    %v1710 = vpop.f32.mrf.mxu0
    %v1711 = vadd.f32 0.0, %v1710
    %1712 = vmatmul.f32.gmra.mxu0 %v1682
    %v1713 = vpop.f32.mrf.mxu0
    %v1714 = vadd.f32 0.0, %v1713
    %1715 = vmatmul.f32.gmra.mxu0 %v1686
    %v1716 = vpop.f32.mrf.mxu0
    %v1717 = vadd.f32 0.0, %v1716
    %1718 = vdwg.mxu0
    %1719 = vmatpush.msra.mxu0 %v271
    %1720 = vmatpush.msra.mxu0 %v270
    %1721 = vmatpush.msra.mxu0 %v269
    %1722 = vmatpush.msra.mxu0 %v268
    %1723 = vmatpush.msra.mxu0 %v267
    %1724 = vmatpush.msra.mxu0 %v266
    %1725 = vmatpush.msra.mxu0 %v265
    %1726 = vmatpush.msra.mxu0 %v264
    %1727 = vmatpush.msra.mxu0 %v263
    %1728 = vmatpush.msra.mxu0 %v262
    %1729 = vmatpush.msra.mxu0 %v261
    %1730 = vmatpush.msra.mxu0 %v260
    %1731 = vmatpush.msra.mxu0 %v259
    %1732 = vmatpush.msra.mxu0 %v258
    %1733 = vmatpush.msra.mxu0 %v257
    %1734 = vmatpush.msra.mxu0 %v256
    %1735 = vmatmul.f32.gmra.mxu0 %v1675
    %v1736 = vpop.f32.mrf.mxu0
    %v1737 = vadd.f32 %v1708, %v1736
    %1738 = vmatmul.f32.gmra.mxu0 %v1679
    %v1739 = vpop.f32.mrf.mxu0
    %v1740 = vadd.f32 %v1711, %v1739
    %1741 = vmatmul.f32.gmra.mxu0 %v1683
    %v1742 = vpop.f32.mrf.mxu0
    %v1743 = vadd.f32 %v1714, %v1742
    %1744 = vmatmul.f32.gmra.mxu0 %v1687
    %v1745 = vpop.f32.mrf.mxu0
    %v1746 = vadd.f32 %v1717, %v1745
    %1747 = vdwg.mxu0
    %1748 = vmatpush.msra.mxu0 %v287
    %1749 = vmatpush.msra.mxu0 %v286
    %1750 = vmatpush.msra.mxu0 %v285
    %1751 = vmatpush.msra.mxu0 %v284
    %1752 = vmatpush.msra.mxu0 %v283
    %1753 = vmatpush.msra.mxu0 %v282
    %1754 = vmatpush.msra.mxu0 %v281
    %1755 = vmatpush.msra.mxu0 %v280
    %1756 = vmatpush.msra.mxu0 %v279
    %1757 = vmatpush.msra.mxu0 %v278
    %1758 = vmatpush.msra.mxu0 %v277
    %1759 = vmatpush.msra.mxu0 %v276
    %1760 = vmatpush.msra.mxu0 %v275
    %1761 = vmatpush.msra.mxu0 %v274
    %1762 = vmatpush.msra.mxu0 %v273
    %1763 = vmatpush.msra.mxu0 %v272
    %1764 = vmatmul.f32.gmra.mxu0 %v1676
    %v1765 = vpop.f32.mrf.mxu0
    %v1766 = vadd.f32 %v1737, %v1765
    %1767 = vmatmul.f32.gmra.mxu0 %v1680
    %v1768 = vpop.f32.mrf.mxu0
    %v1769 = vadd.f32 %v1740, %v1768
    %1770 = vmatmul.f32.gmra.mxu0 %v1684
    %v1771 = vpop.f32.mrf.mxu0
    %v1772 = vadd.f32 %v1743, %v1771
    %1773 = vmatmul.f32.gmra.mxu0 %v1688
    %v1774 = vpop.f32.mrf.mxu0
    %v1775 = vadd.f32 %v1746, %v1774
    %1776 = vdwg.mxu0
    %1777 = vmatpush.msra.mxu0 %v303
    %1778 = vmatpush.msra.mxu0 %v302
    %1779 = vmatpush.msra.mxu0 %v301
    %1780 = vmatpush.msra.mxu0 %v300
    %1781 = vmatpush.msra.mxu0 %v299
    %1782 = vmatpush.msra.mxu0 %v298
    %1783 = vmatpush.msra.mxu0 %v297
    %1784 = vmatpush.msra.mxu0 %v296
    %1785 = vmatpush.msra.mxu0 %v295
    %1786 = vmatpush.msra.mxu0 %v294
    %1787 = vmatpush.msra.mxu0 %v293
    %1788 = vmatpush.msra.mxu0 %v292
    %1789 = vmatpush.msra.mxu0 %v291
    %1790 = vmatpush.msra.mxu0 %v290
    %1791 = vmatpush.msra.mxu0 %v289
    %1792 = vmatpush.msra.mxu0 %v288
    %1793 = vmatmul.f32.gmra.mxu0 %v1677
    %v1794 = vpop.f32.mrf.mxu0
    %v1795 = vadd.f32 %v1766, %v1794
    %1796 = vmatmul.f32.gmra.mxu0 %v1681
    %v1797 = vpop.f32.mrf.mxu0
    %v1798 = vadd.f32 %v1769, %v1797
    %1799 = vmatmul.f32.gmra.mxu0 %v1685
    %v1800 = vpop.f32.mrf.mxu0
    %v1801 = vadd.f32 %v1772, %v1800
    %1802 = vmatmul.f32.gmra.mxu0 %v1689
    %v1803 = vpop.f32.mrf.mxu0
    %v1804 = vadd.f32 %v1775, %v1803
    %1805 = vdwg.mxu0
    %v1806 = vsel %vm953, %v1795, 0.0
    %v1807 = vsel %vm953, %v1798, 0.0
    %v1808 = vadd.f32 %v1806, %v1807
    %v1809 = vsel %vm953, %v1801, 0.0
    %v1810 = vadd.f32 %v1808, %v1809
    %v1811 = vsel %vm959, %v1804, 0.0
    %v1812 = vadd.f32 %v1810, %v1811
    %v1813 = vrot.slane %v1812, 4
    %v1814 = vadd.f32 %v1812, %v1813
    %v1815 = vrot.slane %v1814, 2
    %v1816 = vadd.f32 %v1814, %v1815
    %v1817 = vrot.slane %v1816, 1
    %v1818 = vadd.f32 %v1816, %v1817
    %v1819 = vadd.f32 %v1114, %v1818
    %v1820 = vmul.f32 %v1673, 0.000739645
    %v1821 = vmul.f32 %v1819, 0.000739645
    %v1822 = vmul.f32 %v1820, %v1820
    %v1823 = vsub.f32 %v1821, %v1822
    %v1824 = vld [vmem:[%s3] sm:$0x1]
    %v1825 = vadd.f32 %v1823, 1e-05
    %v1826 = vrsqrt.pop %v1825
    %v1827 = vmul.f32 %v1826, %v1825
    %v1828 = vmul.f32 %v1827, %v1826
    %v1829 = vmul.f32 0.5, %v1828
    %v1830 = vsub.f32 1.5, %v1829
    %v1831 = vmul.f32 %v1826, %v1830
    %vm1832 = vweird.f32 %v1825
    %vm1833 = vweird.f32 %v1826
    %vm1834 = vmor %vm1832, %vm1833
    %v1835 = vsel %vm1834, %v1826, %v1831
    %v1836 = vmul.f32 %v1824, %v1835
    %v1837 = vld [vmem:[%s4] sm:$0x1]
    %v1838 = vmul.f32 %v1820, %v1836
    %v1839 = vsub.f32 %v1837, %v1838
    %v1841 = vperm.slane %v1836, 0
    %v1842 = vsel %vm953, %v1841, 0
    %1844 = vmatpush.msra.mxu0 0.0
    %1845 = vmatpush.msra.mxu0 0.0
    %1846 = vmatpush.msra.mxu0 0.0
    %1847 = vmatpush.msra.mxu0 0.0
    %1848 = vmatpush.msra.mxu0 0.0
    %1849 = vmatpush.msra.mxu0 0.0
    %1850 = vmatpush.msra.mxu0 0.0
    %1851 = vmatpush.msra.mxu0 0.0
    %1852 = vmatpush.msra.mxu0 0.0
    %1853 = vmatpush.msra.mxu0 0.0
    %1854 = vmatpush.msra.mxu0 0.0
    %1855 = vmatpush.msra.mxu0 0.0
    %1856 = vmatpush.msra.mxu0 0.0
    %1857 = vmatpush.msra.mxu0 0.0
    %1858 = vmatpush.msra.mxu0 %v308
    %1859 = vmatpush.msra.mxu0 %v304
    %1860 = vmatmul.f32.gmra.mxu0 %v1842
    %v1861 = vpop.f32.mrf.mxu0
    %v1862 = vadd.f32 0.0, %v1861
    %1863 = vmatmul.f32.gmra.mxu0 %v1842
    %v1864 = vpop.f32.mrf.mxu0
    %v1865 = vadd.f32 0.0, %v1864
    %1866 = vmatmul.f32.gmra.mxu0 %v1842
    %v1867 = vpop.f32.mrf.mxu0
    %v1868 = vadd.f32 0.0, %v1867
    %1869 = vmatmul.f32.gmra.mxu0 %v1842
    %v1870 = vpop.f32.mrf.mxu0
    %v1871 = vadd.f32 0.0, %v1870
    %1872 = vdwg.mxu0
    %1873 = vmatpush.msra.mxu0 0.0
    %1874 = vmatpush.msra.mxu0 0.0
    %1875 = vmatpush.msra.mxu0 0.0
    %1876 = vmatpush.msra.mxu0 0.0
    %1877 = vmatpush.msra.mxu0 0.0
    %1878 = vmatpush.msra.mxu0 0.0
    %1879 = vmatpush.msra.mxu0 0.0
    %1880 = vmatpush.msra.mxu0 0.0
    %1881 = vmatpush.msra.mxu0 0.0
    %1882 = vmatpush.msra.mxu0 0.0
    %1883 = vmatpush.msra.mxu0 0.0
    %1884 = vmatpush.msra.mxu0 0.0
    %1885 = vmatpush.msra.mxu0 0.0
    %1886 = vmatpush.msra.mxu0 0.0
    %1887 = vmatpush.msra.mxu0 %v309
    %1888 = vmatpush.msra.mxu0 %v305
    %1889 = vmatmul.f32.gmra.mxu0 %v1842
    %v1890 = vpop.f32.mrf.mxu0
    %v1891 = vadd.f32 0.0, %v1890
    %1892 = vmatmul.f32.gmra.mxu0 %v1842
    %v1893 = vpop.f32.mrf.mxu0
    %v1894 = vadd.f32 0.0, %v1893
    %1895 = vmatmul.f32.gmra.mxu0 %v1842
    %v1896 = vpop.f32.mrf.mxu0
    %v1897 = vadd.f32 0.0, %v1896
    %1898 = vmatmul.f32.gmra.mxu0 %v1842
    %v1899 = vpop.f32.mrf.mxu0
    %v1900 = vadd.f32 0.0, %v1899
    %1901 = vdwg.mxu0
    %1902 = vmatpush.msra.mxu0 0.0
    %1903 = vmatpush.msra.mxu0 0.0
    %1904 = vmatpush.msra.mxu0 0.0
    %1905 = vmatpush.msra.mxu0 0.0
    %1906 = vmatpush.msra.mxu0 0.0
    %1907 = vmatpush.msra.mxu0 0.0
    %1908 = vmatpush.msra.mxu0 0.0
    %1909 = vmatpush.msra.mxu0 0.0
    %1910 = vmatpush.msra.mxu0 0.0
    %1911 = vmatpush.msra.mxu0 0.0
    %1912 = vmatpush.msra.mxu0 0.0
    %1913 = vmatpush.msra.mxu0 0.0
    %1914 = vmatpush.msra.mxu0 0.0
    %1915 = vmatpush.msra.mxu0 0.0
    %1916 = vmatpush.msra.mxu0 %v310
    %1917 = vmatpush.msra.mxu0 %v306
    %1918 = vmatmul.f32.gmra.mxu0 %v1842
    %v1919 = vpop.f32.mrf.mxu0
    %v1920 = vadd.f32 0.0, %v1919
    %1921 = vmatmul.f32.gmra.mxu0 %v1842
    %v1922 = vpop.f32.mrf.mxu0
    %v1923 = vadd.f32 0.0, %v1922
    %1924 = vmatmul.f32.gmra.mxu0 %v1842
    %v1925 = vpop.f32.mrf.mxu0
    %v1926 = vadd.f32 0.0, %v1925
    %1927 = vmatmul.f32.gmra.mxu0 %v1842
    %v1928 = vpop.f32.mrf.mxu0
    %v1929 = vadd.f32 0.0, %v1928
    %1930 = vdwg.mxu0
    %1931 = vmatpush.msra.mxu0 0.0
    %1932 = vmatpush.msra.mxu0 0.0
    %1933 = vmatpush.msra.mxu0 0.0
    %1934 = vmatpush.msra.mxu0 0.0
    %1935 = vmatpush.msra.mxu0 0.0
    %1936 = vmatpush.msra.mxu0 0.0
    %1937 = vmatpush.msra.mxu0 0.0
    %1938 = vmatpush.msra.mxu0 0.0
    %1939 = vmatpush.msra.mxu0 0.0
    %1940 = vmatpush.msra.mxu0 0.0
    %1941 = vmatpush.msra.mxu0 0.0
    %1942 = vmatpush.msra.mxu0 0.0
    %1943 = vmatpush.msra.mxu0 0.0
    %1944 = vmatpush.msra.mxu0 0.0
    %1945 = vmatpush.msra.mxu0 %v311
    %1946 = vmatpush.msra.mxu0 %v307
    %1947 = vmatmul.f32.gmra.mxu0 %v1842
    %v1948 = vpop.f32.mrf.mxu0
    %v1949 = vadd.f32 0.0, %v1948
    %1950 = vmatmul.f32.gmra.mxu0 %v1842
    %v1951 = vpop.f32.mrf.mxu0
    %v1952 = vadd.f32 0.0, %v1951
    %1953 = vmatmul.f32.gmra.mxu0 %v1842
    %v1954 = vpop.f32.mrf.mxu0
    %v1955 = vadd.f32 0.0, %v1954
    %1956 = vmatmul.f32.gmra.mxu0 %v1842
    %v1957 = vpop.f32.mrf.mxu0
    %v1958 = vadd.f32 0.0, %v1957
    %1959 = vdwg.mxu0
    %v1961 = vperm.slane %v1839, 0
    %v1962 = vsel %vm953, %v1961, 0
    %1964 = vmatpush.msra.mxu0 0.0
    %1965 = vmatpush.msra.mxu0 0.0
    %1966 = vmatpush.msra.mxu0 0.0
    %1967 = vmatpush.msra.mxu0 0.0
    %1968 = vmatpush.msra.mxu0 0.0
    %1969 = vmatpush.msra.mxu0 0.0
    %1970 = vmatpush.msra.mxu0 0.0
    %1971 = vmatpush.msra.mxu0 0.0
    %1972 = vmatpush.msra.mxu0 0.0
    %1973 = vmatpush.msra.mxu0 0.0
    %1974 = vmatpush.msra.mxu0 0.0
    %1975 = vmatpush.msra.mxu0 0.0
    %1976 = vmatpush.msra.mxu0 0.0
    %1977 = vmatpush.msra.mxu0 0.0
    %1978 = vmatpush.msra.mxu0 %v308
    %1979 = vmatpush.msra.mxu0 %v304
    %1980 = vmatmul.f32.gmra.mxu0 %v1962
    %v1981 = vpop.f32.mrf.mxu0
    %v1982 = vadd.f32 0.0, %v1981
    %1983 = vmatmul.f32.gmra.mxu0 %v1962
    %v1984 = vpop.f32.mrf.mxu0
    %v1985 = vadd.f32 0.0, %v1984
    %1986 = vmatmul.f32.gmra.mxu0 %v1962
    %v1987 = vpop.f32.mrf.mxu0
    %v1988 = vadd.f32 0.0, %v1987
    %1989 = vmatmul.f32.gmra.mxu0 %v1962
    %v1990 = vpop.f32.mrf.mxu0
    %v1991 = vadd.f32 0.0, %v1990
    %1992 = vdwg.mxu0
    %1993 = vmatpush.msra.mxu0 0.0
    %1994 = vmatpush.msra.mxu0 0.0
    %1995 = vmatpush.msra.mxu0 0.0
    %1996 = vmatpush.msra.mxu0 0.0
    %1997 = vmatpush.msra.mxu0 0.0
    %1998 = vmatpush.msra.mxu0 0.0
    %1999 = vmatpush.msra.mxu0 0.0
    %2000 = vmatpush.msra.mxu0 0.0
    %2001 = vmatpush.msra.mxu0 0.0
    %2002 = vmatpush.msra.mxu0 0.0
    %2003 = vmatpush.msra.mxu0 0.0
    %2004 = vmatpush.msra.mxu0 0.0
    %2005 = vmatpush.msra.mxu0 0.0
    %2006 = vmatpush.msra.mxu0 0.0
    %2007 = vmatpush.msra.mxu0 %v309
    %2008 = vmatpush.msra.mxu0 %v305
    %2009 = vmatmul.f32.gmra.mxu0 %v1962
    %v2010 = vpop.f32.mrf.mxu0
    %v2011 = vadd.f32 0.0, %v2010
    %2012 = vmatmul.f32.gmra.mxu0 %v1962
    %v2013 = vpop.f32.mrf.mxu0
    %v2014 = vadd.f32 0.0, %v2013
    %2015 = vmatmul.f32.gmra.mxu0 %v1962
    %v2016 = vpop.f32.mrf.mxu0
    %v2017 = vadd.f32 0.0, %v2016
    %2018 = vmatmul.f32.gmra.mxu0 %v1962
    %v2019 = vpop.f32.mrf.mxu0
    %v2020 = vadd.f32 0.0, %v2019
    %2021 = vdwg.mxu0
    %2022 = vmatpush.msra.mxu0 0.0
    %2023 = vmatpush.msra.mxu0 0.0
    %2024 = vmatpush.msra.mxu0 0.0
    %2025 = vmatpush.msra.mxu0 0.0
    %2026 = vmatpush.msra.mxu0 0.0
    %2027 = vmatpush.msra.mxu0 0.0
    %2028 = vmatpush.msra.mxu0 0.0
    %2029 = vmatpush.msra.mxu0 0.0
    %2030 = vmatpush.msra.mxu0 0.0
    %2031 = vmatpush.msra.mxu0 0.0
    %2032 = vmatpush.msra.mxu0 0.0
    %2033 = vmatpush.msra.mxu0 0.0
    %2034 = vmatpush.msra.mxu0 0.0
    %2035 = vmatpush.msra.mxu0 0.0
    %2036 = vmatpush.msra.mxu0 %v310
    %2037 = vmatpush.msra.mxu0 %v306
    %2038 = vmatmul.f32.gmra.mxu0 %v1962
    %v2039 = vpop.f32.mrf.mxu0
    %v2040 = vadd.f32 0.0, %v2039
    %2041 = vmatmul.f32.gmra.mxu0 %v1962
    %v2042 = vpop.f32.mrf.mxu0
    %v2043 = vadd.f32 0.0, %v2042
    %2044 = vmatmul.f32.gmra.mxu0 %v1962
    %v2045 = vpop.f32.mrf.mxu0
    %v2046 = vadd.f32 0.0, %v2045
    %2047 = vmatmul.f32.gmra.mxu0 %v1962
    %v2048 = vpop.f32.mrf.mxu0
    %v2049 = vadd.f32 0.0, %v2048
    %2050 = vdwg.mxu0
    %2051 = vmatpush.msra.mxu0 0.0
    %2052 = vmatpush.msra.mxu0 0.0
    %2053 = vmatpush.msra.mxu0 0.0
    %2054 = vmatpush.msra.mxu0 0.0
    %2055 = vmatpush.msra.mxu0 0.0
    %2056 = vmatpush.msra.mxu0 0.0
    %2057 = vmatpush.msra.mxu0 0.0
    %2058 = vmatpush.msra.mxu0 0.0
    %2059 = vmatpush.msra.mxu0 0.0
    %2060 = vmatpush.msra.mxu0 0.0
    %2061 = vmatpush.msra.mxu0 0.0
    %2062 = vmatpush.msra.mxu0 0.0
    %2063 = vmatpush.msra.mxu0 0.0
    %2064 = vmatpush.msra.mxu0 0.0
    %2065 = vmatpush.msra.mxu0 %v311
    %2066 = vmatpush.msra.mxu0 %v307
    %2067 = vmatmul.f32.gmra.mxu0 %v1962
    %v2068 = vpop.f32.mrf.mxu0
    %v2069 = vadd.f32 0.0, %v2068
    %2070 = vmatmul.f32.gmra.mxu0 %v1962
    %v2071 = vpop.f32.mrf.mxu0
    %v2072 = vadd.f32 0.0, %v2071
    %2073 = vmatmul.f32.gmra.mxu0 %v1962
    %v2074 = vpop.f32.mrf.mxu0
    %v2075 = vadd.f32 0.0, %v2074
    %2076 = vmatmul.f32.gmra.mxu0 %v1962
    %v2077 = vpop.f32.mrf.mxu0
    %v2078 = vadd.f32 0.0, %v2077
    %2079 = vdwg.mxu0
    %v2080 = vmul.f32 %v821, %v1862
    %v2081 = vmul.f32 %v822, %v1891
    %v2082 = vmul.f32 %v823, %v1920
    %v2083 = vmul.f32 %v824, %v1949
    %v2084 = vmul.f32 %v825, %v1865
    %v2085 = vmul.f32 %v826, %v1894
    %v2086 = vmul.f32 %v827, %v1923
    %v2087 = vmul.f32 %v828, %v1952
    %v2088 = vmul.f32 %v829, %v1868
    %v2089 = vmul.f32 %v830, %v1897
    %v2090 = vmul.f32 %v831, %v1926
    %v2091 = vmul.f32 %v832, %v1955
    %v2092 = vmul.f32 %v833, %v1871
    %v2093 = vmul.f32 %v834, %v1900
    %v2094 = vmul.f32 %v835, %v1929
    %v2095 = vmul.f32 %v836, %v1958
    %v2096 = vadd.f32 %v2080, %v1982
    %v2097 = vadd.f32 %v2081, %v2011
    %v2098 = vadd.f32 %v2082, %v2040
    %v2099 = vadd.f32 %v2083, %v2069
    %v2100 = vadd.f32 %v2084, %v1985
    %v2101 = vadd.f32 %v2085, %v2014
    %v2102 = vadd.f32 %v2086, %v2043
    %v2103 = vadd.f32 %v2087, %v2072
    %v2104 = vadd.f32 %v2088, %v1988
    %v2105 = vadd.f32 %v2089, %v2017
    %v2106 = vadd.f32 %v2090, %v2046
    %v2107 = vadd.f32 %v2091, %v2075
    %v2108 = vadd.f32 %v2092, %v1991
    %v2109 = vadd.f32 %v2093, %v2020
    %v2110 = vadd.f32 %v2094, %v2049
    %v2111 = vadd.f32 %v2095, %v2078
    %2112 = vst [vmem:[#allocation2] sm:$0xff] %v2096
    %2113 = vst [vmem:[#allocation2 + $0x8] sm:$0xff] %v2097
    %2114 = vst [vmem:[#allocation2 + $0x10] sm:$0xff] %v2098
    %2115 = vst [vmem:[#allocation2 + $0x18] sm:$0xff] %v2099
    %2116 = vst [vmem:[#allocation2 + $0x20] sm:$0xff] %v2100
    %2117 = vst [vmem:[#allocation2 + $0x28] sm:$0xff] %v2101
    %2118 = vst [vmem:[#allocation2 + $0x30] sm:$0xff] %v2102
    %2119 = vst [vmem:[#allocation2 + $0x38] sm:$0xff] %v2103
    %2120 = vst [vmem:[#allocation2 + $0x40] sm:$0xff] %v2104
    %2121 = vst [vmem:[#allocation2 + $0x48] sm:$0xff] %v2105
    %2122 = vst [vmem:[#allocation2 + $0x50] sm:$0xff] %v2106
    %2123 = vst [vmem:[#allocation2 + $0x58] sm:$0xff] %v2107
    %2124 = vst [vmem:[#allocation2 + $0x60] sm:$0x3] %v2108
    %2125 = vst [vmem:[#allocation2 + $0x68] sm:$0x3] %v2109
    %2126 = vst [vmem:[#allocation2 + $0x70] sm:$0x3] %v2110
    %2127 = vst [vmem:[#allocation2 + $0x78] sm:$0x3] %v2111
    %v2128 = vmul.f32 %v1528, %v1862
    %v2129 = vmul.f32 %v1529, %v1891
    %v2130 = vmul.f32 %v1530, %v1920
    %v2131 = vmul.f32 %v1531, %v1949
    %v2132 = vmul.f32 %v1532, %v1865
    %v2133 = vmul.f32 %v1533, %v1894
    %v2134 = vmul.f32 %v1534, %v1923
    %v2135 = vmul.f32 %v1535, %v1952
    %v2136 = vmul.f32 %v1536, %v1868
    %v2137 = vmul.f32 %v1537, %v1897
    %v2138 = vmul.f32 %v1538, %v1926
    %v2139 = vmul.f32 %v1539, %v1955
    %v2140 = vmul.f32 %v1540, %v1871
    %v2141 = vmul.f32 %v1541, %v1900
    %v2142 = vmul.f32 %v1542, %v1929
    %v2143 = vmul.f32 %v1543, %v1958
    %v2144 = vadd.f32 %v2128, %v1982
    %v2145 = vadd.f32 %v2129, %v2011
    %v2146 = vadd.f32 %v2130, %v2040
    %v2147 = vadd.f32 %v2131, %v2069
    %v2148 = vadd.f32 %v2132, %v1985
    %v2149 = vadd.f32 %v2133, %v2014
    %v2150 = vadd.f32 %v2134, %v2043
    %v2151 = vadd.f32 %v2135, %v2072
    %v2152 = vadd.f32 %v2136, %v1988
    %v2153 = vadd.f32 %v2137, %v2017
    %v2154 = vadd.f32 %v2138, %v2046
    %v2155 = vadd.f32 %v2139, %v2075
    %v2156 = vadd.f32 %v2140, %v1991
    %v2157 = vadd.f32 %v2141, %v2020
    %v2158 = vadd.f32 %v2142, %v2049
    %v2159 = vadd.f32 %v2143, %v2078
    %s2160 = scalar_lea.vmem [#allocation2], 128
    %2161 = vst [vmem:[%s2160] sm:$0xff] %v2144
    %2162 = vst [vmem:[%s2160 + $0x8] sm:$0xff] %v2145
    %2163 = vst [vmem:[%s2160 + $0x10] sm:$0xff] %v2146
    %2164 = vst [vmem:[%s2160 + $0x18] sm:$0xff] %v2147
    %2165 = vst [vmem:[%s2160 + $0x20] sm:$0xff] %v2148
    %2166 = vst [vmem:[%s2160 + $0x28] sm:$0xff] %v2149
    %2167 = vst [vmem:[%s2160 + $0x30] sm:$0xff] %v2150
    %2168 = vst [vmem:[%s2160 + $0x38] sm:$0xff] %v2151
    %2169 = vst [vmem:[%s2160 + $0x40] sm:$0xff] %v2152
    %2170 = vst [vmem:[%s2160 + $0x48] sm:$0xff] %v2153
    %2171 = vst [vmem:[%s2160 + $0x50] sm:$0xff] %v2154
    %2172 = vst [vmem:[%s2160 + $0x58] sm:$0xff] %v2155
    %2173 = vst [vmem:[%s2160 + $0x60] sm:$0x3] %v2156
    %2174 = vst [vmem:[%s2160 + $0x68] sm:$0x3] %v2157
    %2175 = vst [vmem:[%s2160 + $0x70] sm:$0x3] %v2158
    %2176 = vst [vmem:[%s2160 + $0x78] sm:$0x3] %v2159
    %v2177 = vld [vmem:[#allocation2] sm:$0xff]
    %v2178 = vld [vmem:[#allocation2 + $0x8] sm:$0xff]
    %v2179 = vld [vmem:[#allocation2 + $0x10] sm:$0xff]
    %v2180 = vld [vmem:[#allocation2 + $0x18] sm:$0xff]
    %v2181 = vld [vmem:[#allocation2 + $0x20] sm:$0xff]
    %v2182 = vld [vmem:[#allocation2 + $0x28] sm:$0xff]
    %v2183 = vld [vmem:[#allocation2 + $0x30] sm:$0xff]
    %v2184 = vld [vmem:[#allocation2 + $0x38] sm:$0xff]
    %v2185 = vld [vmem:[#allocation2 + $0x40] sm:$0xff]
    %v2186 = vld [vmem:[#allocation2 + $0x48] sm:$0xff]
    %v2187 = vld [vmem:[#allocation2 + $0x50] sm:$0xff]
    %v2188 = vld [vmem:[#allocation2 + $0x58] sm:$0xff]
    %v2189 = vld [vmem:[#allocation14] sm:$0xff]
    %v2190 = vld [vmem:[#allocation14 + $0x8] sm:$0xff]
    %v2191 = vld [vmem:[#allocation14 + $0x10] sm:$0xff]
    %v2192 = vld [vmem:[#allocation14 + $0x18] sm:$0xff]
    %v2193 = vld [vmem:[#allocation14 + $0x20] sm:$0xff]
    %v2194 = vld [vmem:[#allocation14 + $0x28] sm:$0xff]
    %v2195 = vld [vmem:[#allocation14 + $0x30] sm:$0xff]
    %v2196 = vld [vmem:[#allocation14 + $0x38] sm:$0xff]
    %v2197 = vld [vmem:[#allocation14 + $0x40] sm:$0xff]
    %v2198 = vld [vmem:[#allocation14 + $0x48] sm:$0xff]
    %v2199 = vld [vmem:[#allocation14 + $0x50] sm:$0xff]
    %v2200 = vld [vmem:[#allocation14 + $0x58] sm:$0xff]
    %v2201 = vld [vmem:[#allocation2] sm:$0xfe]
    %v2202 = vld [vmem:[#allocation2 + $0x8] sm:$0xfe]
    %v2203 = vld [vmem:[#allocation2 + $0x10] sm:$0xfe]
    %v2204 = vld [vmem:[#allocation2 + $0x18] sm:$0xfe]
    %v2205 = vld [vmem:[#allocation2 + $0x60] sm:$0x1]
    %v2206 = vld [vmem:[#allocation2 + $0x68] sm:$0x1]
    %v2207 = vld [vmem:[#allocation2 + $0x70] sm:$0x1]
    %v2208 = vld [vmem:[#allocation2 + $0x78] sm:$0x1]
    %s2209 = scalar_lea.vmem [#allocation14], 96
    %v2210 = vld [vmem:[%s2209] sm:$0xff]
    %v2211 = vld [vmem:[%s2209 + $0x8] sm:$0xff]
    %v2212 = vld [vmem:[%s2209 + $0x10] sm:$0xff]
    %v2213 = vld [vmem:[%s2209 + $0x18] sm:$0xff]
    %v2214 = vld [vmem:[%s2209 + $0x20] sm:$0xff]
    %v2215 = vld [vmem:[%s2209 + $0x28] sm:$0xff]
    %v2216 = vld [vmem:[%s2209 + $0x30] sm:$0xff]
    %v2217 = vld [vmem:[%s2209 + $0x38] sm:$0xff]
    %v2218 = vld [vmem:[%s2209 + $0x40] sm:$0xff]
    %v2219 = vld [vmem:[%s2209 + $0x48] sm:$0xff]
    %v2220 = vld [vmem:[%s2209 + $0x50] sm:$0xff]
    %v2221 = vld [vmem:[%s2209 + $0x58] sm:$0xff]
    %vm2238 = vcmask 1046528
    %v2239 = vrot.slane %v2201, 1
    %v2240 = vrot.slane %v2181, 1
    %v2241 = vsel %vm2238, %v2239, %v2240
    %v2242 = vrot.slane %v2202, 1
    %v2243 = vrot.slane %v2182, 1
    %v2244 = vsel %vm2238, %v2242, %v2243
    %v2245 = vrot.slane %v2203, 1
    %v2246 = vrot.slane %v2183, 1
    %v2247 = vsel %vm2238, %v2245, %v2246
    %v2248 = vrot.slane %v2204, 1
    %v2249 = vrot.slane %v2184, 1
    %v2250 = vsel %vm2238, %v2248, %v2249
    %v2251 = vrot.slane %v2185, 1
    %v2252 = vsel %vm2238, %v2240, %v2251
    %v2253 = vrot.slane %v2186, 1
    %v2254 = vsel %vm2238, %v2243, %v2253
    %v2255 = vrot.slane %v2187, 1
    %v2256 = vsel %vm2238, %v2246, %v2255
    %v2257 = vrot.slane %v2188, 1
    %v2258 = vsel %vm2238, %v2249, %v2257
    %v2259 = vrot.slane %v2205, 1
    %v2260 = vsel %vm2238, %v2251, %v2259
    %v2261 = vrot.slane %v2206, 1
    %v2262 = vsel %vm2238, %v2253, %v2261
    %v2263 = vrot.slane %v2207, 1
    %v2264 = vsel %vm2238, %v2255, %v2263
    %v2265 = vrot.slane %v2208, 1
    %v2266 = vsel %vm2238, %v2257, %v2265
    %2279 = vmatpush.xpose.msra.mxu0 0.0
    %2280 = vmatpush.xpose.msra.mxu0 0.0
    %2281 = vmatpush.xpose.msra.mxu0 0.0
    %2282 = vmatpush.xpose.msra.mxu0 0.0
    %2283 = vmatpush.xpose.msra.mxu0 0.0
    %2284 = vmatpush.xpose.msra.mxu0 0.0
    %2285 = vmatpush.xpose.msra.mxu0 0.0
    %2286 = vmatpush.xpose.msra.mxu0 0.0
    %2287 = vmatpush.xpose.msra.mxu0 0.0
    %2288 = vmatpush.xpose.msra.mxu0 0.0
    %2289 = vmatpush.xpose.msra.mxu0 0.0
    %2290 = vmatpush.xpose.msra.mxu0 0.0
    %2291 = vmatpush.xpose.msra.mxu0 0.0
    %2292 = vmatpush.xpose.msra.mxu0 %v2218
    %2293 = vmatpush.xpose.msra.mxu0 %v2214
    %2294 = vmatpush.xpose.msra.mxu0 %v2210
    %2295 = vmatmul.f32.gmra.mxu0 %v2241
    %v2296 = vpop.f32.mrf.mxu0
    %v2297 = vadd.f32 0.0, %v2296
    %2298 = vmatmul.f32.gmra.mxu0 %v2252
    %v2299 = vpop.f32.mrf.mxu0
    %v2300 = vadd.f32 0.0, %v2299
    %2301 = vmatmul.f32.gmra.mxu0 %v2260
    %v2302 = vpop.f32.mrf.mxu0
    %v2303 = vadd.f32 0.0, %v2302
    %2304 = vdwg.mxu0
    %2305 = vmatpush.xpose.msra.mxu0 0.0
    %2306 = vmatpush.xpose.msra.mxu0 0.0
    %2307 = vmatpush.xpose.msra.mxu0 0.0
    %2308 = vmatpush.xpose.msra.mxu0 0.0
    %2309 = vmatpush.xpose.msra.mxu0 0.0
    %2310 = vmatpush.xpose.msra.mxu0 0.0
    %2311 = vmatpush.xpose.msra.mxu0 0.0
    %2312 = vmatpush.xpose.msra.mxu0 0.0
    %2313 = vmatpush.xpose.msra.mxu0 0.0
    %2314 = vmatpush.xpose.msra.mxu0 0.0
    %2315 = vmatpush.xpose.msra.mxu0 0.0
    %2316 = vmatpush.xpose.msra.mxu0 0.0
    %2317 = vmatpush.xpose.msra.mxu0 0.0
    %2318 = vmatpush.xpose.msra.mxu0 %v2219
    %2319 = vmatpush.xpose.msra.mxu0 %v2215
    %2320 = vmatpush.xpose.msra.mxu0 %v2211
    %2321 = vmatmul.f32.gmra.mxu0 %v2244
    %v2322 = vpop.f32.mrf.mxu0
    %v2323 = vadd.f32 %v2297, %v2322
    %2324 = vmatmul.f32.gmra.mxu0 %v2254
    %v2325 = vpop.f32.mrf.mxu0
    %v2326 = vadd.f32 %v2300, %v2325
    %2327 = vmatmul.f32.gmra.mxu0 %v2262
    %v2328 = vpop.f32.mrf.mxu0
    %v2329 = vadd.f32 %v2303, %v2328
    %2330 = vdwg.mxu0
    %2331 = vmatpush.xpose.msra.mxu0 0.0
    %2332 = vmatpush.xpose.msra.mxu0 0.0
    %2333 = vmatpush.xpose.msra.mxu0 0.0
    %2334 = vmatpush.xpose.msra.mxu0 0.0
    %2335 = vmatpush.xpose.msra.mxu0 0.0
    %2336 = vmatpush.xpose.msra.mxu0 0.0
    %2337 = vmatpush.xpose.msra.mxu0 0.0
    %2338 = vmatpush.xpose.msra.mxu0 0.0
    %2339 = vmatpush.xpose.msra.mxu0 0.0
    %2340 = vmatpush.xpose.msra.mxu0 0.0
    %2341 = vmatpush.xpose.msra.mxu0 0.0
    %2342 = vmatpush.xpose.msra.mxu0 0.0
    %2343 = vmatpush.xpose.msra.mxu0 0.0
    %2344 = vmatpush.xpose.msra.mxu0 %v2220
    %2345 = vmatpush.xpose.msra.mxu0 %v2216
    %2346 = vmatpush.xpose.msra.mxu0 %v2212
    %2347 = vmatmul.f32.gmra.mxu0 %v2247
    %v2348 = vpop.f32.mrf.mxu0
    %v2349 = vadd.f32 %v2323, %v2348
    %2350 = vmatmul.f32.gmra.mxu0 %v2256
    %v2351 = vpop.f32.mrf.mxu0
    %v2352 = vadd.f32 %v2326, %v2351
    %2353 = vmatmul.f32.gmra.mxu0 %v2264
    %v2354 = vpop.f32.mrf.mxu0
    %v2355 = vadd.f32 %v2329, %v2354
    %2356 = vdwg.mxu0
    %2357 = vmatpush.xpose.msra.mxu0 0.0
    %2358 = vmatpush.xpose.msra.mxu0 0.0
    %2359 = vmatpush.xpose.msra.mxu0 0.0
    %2360 = vmatpush.xpose.msra.mxu0 0.0
    %2361 = vmatpush.xpose.msra.mxu0 0.0
    %2362 = vmatpush.xpose.msra.mxu0 0.0
    %2363 = vmatpush.xpose.msra.mxu0 0.0
    %2364 = vmatpush.xpose.msra.mxu0 0.0
    %2365 = vmatpush.xpose.msra.mxu0 0.0
    %2366 = vmatpush.xpose.msra.mxu0 0.0
    %2367 = vmatpush.xpose.msra.mxu0 0.0
    %2368 = vmatpush.xpose.msra.mxu0 0.0
    %2369 = vmatpush.xpose.msra.mxu0 0.0
    %2370 = vmatpush.xpose.msra.mxu0 %v2221
    %2371 = vmatpush.xpose.msra.mxu0 %v2217
    %2372 = vmatpush.xpose.msra.mxu0 %v2213
    %2373 = vmatmul.f32.gmra.mxu0 %v2250
    %v2374 = vpop.f32.mrf.mxu0
    %v2375 = vadd.f32 %v2349, %v2374
    %2376 = vmatmul.f32.gmra.mxu0 %v2258
    %v2377 = vpop.f32.mrf.mxu0
    %v2378 = vadd.f32 %v2352, %v2377
    %2379 = vmatmul.f32.gmra.mxu0 %v2266
    %v2380 = vpop.f32.mrf.mxu0
    %v2381 = vadd.f32 %v2355, %v2380
    %2382 = vdwg.mxu0
    %2383 = vmatpush.xpose.msra.mxu0 0.0
    %2384 = vmatpush.xpose.msra.mxu0 0.0
    %2385 = vmatpush.xpose.msra.mxu0 0.0
    %2386 = vmatpush.xpose.msra.mxu0 0.0
    %2387 = vmatpush.xpose.msra.mxu0 0.0
    %2388 = vmatpush.xpose.msra.mxu0 0.0
    %2389 = vmatpush.xpose.msra.mxu0 0.0
    %2390 = vmatpush.xpose.msra.mxu0 0.0
    %2391 = vmatpush.xpose.msra.mxu0 0.0
    %2392 = vmatpush.xpose.msra.mxu0 0.0
    %2393 = vmatpush.xpose.msra.mxu0 0.0
    %2394 = vmatpush.xpose.msra.mxu0 0.0
    %2395 = vmatpush.xpose.msra.mxu0 0.0
    %2396 = vmatpush.xpose.msra.mxu0 %v2197
    %2397 = vmatpush.xpose.msra.mxu0 %v2193
    %2398 = vmatpush.xpose.msra.mxu0 %v2189
    %2399 = vmatmul.f32.gmra.mxu0 %v2177
    %v2400 = vpop.f32.mrf.mxu0
    %v2401 = vadd.f32 %v2375, %v2400
    %2402 = vmatmul.f32.gmra.mxu0 %v2181
    %v2403 = vpop.f32.mrf.mxu0
    %v2404 = vadd.f32 %v2378, %v2403
    %2405 = vmatmul.f32.gmra.mxu0 %v2185
    %v2406 = vpop.f32.mrf.mxu0
    %v2407 = vadd.f32 %v2381, %v2406
    %2408 = vdwg.mxu0
    %2409 = vmatpush.xpose.msra.mxu0 0.0
    %2410 = vmatpush.xpose.msra.mxu0 0.0
    %2411 = vmatpush.xpose.msra.mxu0 0.0
    %2412 = vmatpush.xpose.msra.mxu0 0.0
    %2413 = vmatpush.xpose.msra.mxu0 0.0
    %2414 = vmatpush.xpose.msra.mxu0 0.0
    %2415 = vmatpush.xpose.msra.mxu0 0.0
    %2416 = vmatpush.xpose.msra.mxu0 0.0
    %2417 = vmatpush.xpose.msra.mxu0 0.0
    %2418 = vmatpush.xpose.msra.mxu0 0.0
    %2419 = vmatpush.xpose.msra.mxu0 0.0
    %2420 = vmatpush.xpose.msra.mxu0 0.0
    %2421 = vmatpush.xpose.msra.mxu0 0.0
    %2422 = vmatpush.xpose.msra.mxu0 %v2198
    %2423 = vmatpush.xpose.msra.mxu0 %v2194
    %2424 = vmatpush.xpose.msra.mxu0 %v2190
    %2425 = vmatmul.f32.gmra.mxu0 %v2178
    %v2426 = vpop.f32.mrf.mxu0
    %v2427 = vadd.f32 %v2401, %v2426
    %2428 = vmatmul.f32.gmra.mxu0 %v2182
    %v2429 = vpop.f32.mrf.mxu0
    %v2430 = vadd.f32 %v2404, %v2429
    %2431 = vmatmul.f32.gmra.mxu0 %v2186
    %v2432 = vpop.f32.mrf.mxu0
    %v2433 = vadd.f32 %v2407, %v2432
    %2434 = vdwg.mxu0
    %2435 = vmatpush.xpose.msra.mxu0 0.0
    %2436 = vmatpush.xpose.msra.mxu0 0.0
    %2437 = vmatpush.xpose.msra.mxu0 0.0
    %2438 = vmatpush.xpose.msra.mxu0 0.0
    %2439 = vmatpush.xpose.msra.mxu0 0.0
    %2440 = vmatpush.xpose.msra.mxu0 0.0
    %2441 = vmatpush.xpose.msra.mxu0 0.0
    %2442 = vmatpush.xpose.msra.mxu0 0.0
    %2443 = vmatpush.xpose.msra.mxu0 0.0
    %2444 = vmatpush.xpose.msra.mxu0 0.0
    %2445 = vmatpush.xpose.msra.mxu0 0.0
    %2446 = vmatpush.xpose.msra.mxu0 0.0
    %2447 = vmatpush.xpose.msra.mxu0 0.0
    %2448 = vmatpush.xpose.msra.mxu0 %v2199
    %2449 = vmatpush.xpose.msra.mxu0 %v2195
    %2450 = vmatpush.xpose.msra.mxu0 %v2191
    %2451 = vmatmul.f32.gmra.mxu0 %v2179
    %v2452 = vpop.f32.mrf.mxu0
    %v2453 = vadd.f32 %v2427, %v2452
    %2454 = vmatmul.f32.gmra.mxu0 %v2183
    %v2455 = vpop.f32.mrf.mxu0
    %v2456 = vadd.f32 %v2430, %v2455
    %2457 = vmatmul.f32.gmra.mxu0 %v2187
    %v2458 = vpop.f32.mrf.mxu0
    %v2459 = vadd.f32 %v2433, %v2458
    %2460 = vdwg.mxu0
    %2461 = vmatpush.xpose.msra.mxu0 0.0
    %2462 = vmatpush.xpose.msra.mxu0 0.0
    %2463 = vmatpush.xpose.msra.mxu0 0.0
    %2464 = vmatpush.xpose.msra.mxu0 0.0
    %2465 = vmatpush.xpose.msra.mxu0 0.0
    %2466 = vmatpush.xpose.msra.mxu0 0.0
    %2467 = vmatpush.xpose.msra.mxu0 0.0
    %2468 = vmatpush.xpose.msra.mxu0 0.0
    %2469 = vmatpush.xpose.msra.mxu0 0.0
    %2470 = vmatpush.xpose.msra.mxu0 0.0
    %2471 = vmatpush.xpose.msra.mxu0 0.0
    %2472 = vmatpush.xpose.msra.mxu0 0.0
    %2473 = vmatpush.xpose.msra.mxu0 0.0
    %2474 = vmatpush.xpose.msra.mxu0 %v2200
    %2475 = vmatpush.xpose.msra.mxu0 %v2196
    %2476 = vmatpush.xpose.msra.mxu0 %v2192
    %2477 = vmatmul.f32.gmra.mxu0 %v2180
    %v2478 = vpop.f32.mrf.mxu0
    %v2479 = vadd.f32 %v2453, %v2478
    %2480 = vmatmul.f32.gmra.mxu0 %v2184
    %v2481 = vpop.f32.mrf.mxu0
    %v2482 = vadd.f32 %v2456, %v2481
    %2483 = vmatmul.f32.gmra.mxu0 %v2188
    %v2484 = vpop.f32.mrf.mxu0
    %v2485 = vadd.f32 %v2459, %v2484
    %2486 = vdwg.mxu0
    %v2487 = vld [vmem:[#allocation2] sm:$0xfc]
    %v2488 = vld [vmem:[#allocation2 + $0x8] sm:$0xfc]
    %v2489 = vld [vmem:[#allocation2 + $0x10] sm:$0xfc]
    %v2490 = vld [vmem:[#allocation2 + $0x18] sm:$0xfc]
    %v2491 = vld [vmem:[#allocation2 + $0x60] sm:$0x3]
    %v2492 = vld [vmem:[#allocation2 + $0x68] sm:$0x3]
    %v2493 = vld [vmem:[#allocation2 + $0x70] sm:$0x3]
    %v2494 = vld [vmem:[#allocation2 + $0x78] sm:$0x3]
    %s2495 = scalar_lea.vmem [#allocation14], 192
    %v2496 = vld [vmem:[%s2495] sm:$0xff]
    %v2497 = vld [vmem:[%s2495 + $0x8] sm:$0xff]
    %v2498 = vld [vmem:[%s2495 + $0x10] sm:$0xff]
    %v2499 = vld [vmem:[%s2495 + $0x18] sm:$0xff]
    %v2500 = vld [vmem:[%s2495 + $0x20] sm:$0xff]
    %v2501 = vld [vmem:[%s2495 + $0x28] sm:$0xff]
    %v2502 = vld [vmem:[%s2495 + $0x30] sm:$0xff]
    %v2503 = vld [vmem:[%s2495 + $0x38] sm:$0xff]
    %v2504 = vld [vmem:[%s2495 + $0x40] sm:$0xff]
    %v2505 = vld [vmem:[%s2495 + $0x48] sm:$0xff]
    %v2506 = vld [vmem:[%s2495 + $0x50] sm:$0xff]
    %v2507 = vld [vmem:[%s2495 + $0x58] sm:$0xff]
    %vm2516 = vcmask 1045504
    %v2517 = vrot.slane %v2487, 2
    %v2518 = vrot.slane %v2181, 2
    %v2519 = vsel %vm2516, %v2517, %v2518
    %v2520 = vrot.slane %v2488, 2
    %v2521 = vrot.slane %v2182, 2
    %v2522 = vsel %vm2516, %v2520, %v2521
    %v2523 = vrot.slane %v2489, 2
    %v2524 = vrot.slane %v2183, 2
    %v2525 = vsel %vm2516, %v2523, %v2524
    %v2526 = vrot.slane %v2490, 2
    %v2527 = vrot.slane %v2184, 2
    %v2528 = vsel %vm2516, %v2526, %v2527
    %v2529 = vrot.slane %v2185, 2
    %v2530 = vsel %vm2516, %v2518, %v2529
    %v2531 = vrot.slane %v2186, 2
    %v2532 = vsel %vm2516, %v2521, %v2531
    %v2533 = vrot.slane %v2187, 2
    %v2534 = vsel %vm2516, %v2524, %v2533
    %v2535 = vrot.slane %v2188, 2
    %v2536 = vsel %vm2516, %v2527, %v2535
    %v2537 = vrot.slane %v2491, 2
    %v2538 = vsel %vm2516, %v2529, %v2537
    %v2539 = vrot.slane %v2492, 2
    %v2540 = vsel %vm2516, %v2531, %v2539
    %v2541 = vrot.slane %v2493, 2
    %v2542 = vsel %vm2516, %v2533, %v2541
    %v2543 = vrot.slane %v2494, 2
    %v2544 = vsel %vm2516, %v2535, %v2543
    %2557 = vmatpush.xpose.msra.mxu0 0.0
    %2558 = vmatpush.xpose.msra.mxu0 0.0
    %2559 = vmatpush.xpose.msra.mxu0 0.0
    %2560 = vmatpush.xpose.msra.mxu0 0.0
    %2561 = vmatpush.xpose.msra.mxu0 0.0
    %2562 = vmatpush.xpose.msra.mxu0 0.0
    %2563 = vmatpush.xpose.msra.mxu0 0.0
    %2564 = vmatpush.xpose.msra.mxu0 0.0
    %2565 = vmatpush.xpose.msra.mxu0 0.0
    %2566 = vmatpush.xpose.msra.mxu0 0.0
    %2567 = vmatpush.xpose.msra.mxu0 0.0
    %2568 = vmatpush.xpose.msra.mxu0 0.0
    %2569 = vmatpush.xpose.msra.mxu0 0.0
    %2570 = vmatpush.xpose.msra.mxu0 %v2504
    %2571 = vmatpush.xpose.msra.mxu0 %v2500
    %2572 = vmatpush.xpose.msra.mxu0 %v2496
    %2573 = vmatmul.f32.gmra.mxu0 %v2519
    %v2574 = vpop.f32.mrf.mxu0
    %v2575 = vadd.f32 0.0, %v2574
    %2576 = vmatmul.f32.gmra.mxu0 %v2530
    %v2577 = vpop.f32.mrf.mxu0
    %v2578 = vadd.f32 0.0, %v2577
    %2579 = vmatmul.f32.gmra.mxu0 %v2538
    %v2580 = vpop.f32.mrf.mxu0
    %v2581 = vadd.f32 0.0, %v2580
    %2582 = vdwg.mxu0
    %2583 = vmatpush.xpose.msra.mxu0 0.0
    %2584 = vmatpush.xpose.msra.mxu0 0.0
    %2585 = vmatpush.xpose.msra.mxu0 0.0
    %2586 = vmatpush.xpose.msra.mxu0 0.0
    %2587 = vmatpush.xpose.msra.mxu0 0.0
    %2588 = vmatpush.xpose.msra.mxu0 0.0
    %2589 = vmatpush.xpose.msra.mxu0 0.0
    %2590 = vmatpush.xpose.msra.mxu0 0.0
    %2591 = vmatpush.xpose.msra.mxu0 0.0
    %2592 = vmatpush.xpose.msra.mxu0 0.0
    %2593 = vmatpush.xpose.msra.mxu0 0.0
    %2594 = vmatpush.xpose.msra.mxu0 0.0
    %2595 = vmatpush.xpose.msra.mxu0 0.0
    %2596 = vmatpush.xpose.msra.mxu0 %v2505
    %2597 = vmatpush.xpose.msra.mxu0 %v2501
    %2598 = vmatpush.xpose.msra.mxu0 %v2497
    %2599 = vmatmul.f32.gmra.mxu0 %v2522
    %v2600 = vpop.f32.mrf.mxu0
    %v2601 = vadd.f32 %v2575, %v2600
    %2602 = vmatmul.f32.gmra.mxu0 %v2532
    %v2603 = vpop.f32.mrf.mxu0
    %v2604 = vadd.f32 %v2578, %v2603
    %2605 = vmatmul.f32.gmra.mxu0 %v2540
    %v2606 = vpop.f32.mrf.mxu0
    %v2607 = vadd.f32 %v2581, %v2606
    %2608 = vdwg.mxu0
    %2609 = vmatpush.xpose.msra.mxu0 0.0
    %2610 = vmatpush.xpose.msra.mxu0 0.0
    %2611 = vmatpush.xpose.msra.mxu0 0.0
    %2612 = vmatpush.xpose.msra.mxu0 0.0
    %2613 = vmatpush.xpose.msra.mxu0 0.0
    %2614 = vmatpush.xpose.msra.mxu0 0.0
    %2615 = vmatpush.xpose.msra.mxu0 0.0
    %2616 = vmatpush.xpose.msra.mxu0 0.0
    %2617 = vmatpush.xpose.msra.mxu0 0.0
    %2618 = vmatpush.xpose.msra.mxu0 0.0
    %2619 = vmatpush.xpose.msra.mxu0 0.0
    %2620 = vmatpush.xpose.msra.mxu0 0.0
    %2621 = vmatpush.xpose.msra.mxu0 0.0
    %2622 = vmatpush.xpose.msra.mxu0 %v2506
    %2623 = vmatpush.xpose.msra.mxu0 %v2502
    %2624 = vmatpush.xpose.msra.mxu0 %v2498
    %2625 = vmatmul.f32.gmra.mxu0 %v2525
    %v2626 = vpop.f32.mrf.mxu0
    %v2627 = vadd.f32 %v2601, %v2626
    %2628 = vmatmul.f32.gmra.mxu0 %v2534
    %v2629 = vpop.f32.mrf.mxu0
    %v2630 = vadd.f32 %v2604, %v2629
    %2631 = vmatmul.f32.gmra.mxu0 %v2542
    %v2632 = vpop.f32.mrf.mxu0
    %v2633 = vadd.f32 %v2607, %v2632
    %2634 = vdwg.mxu0
    %2635 = vmatpush.xpose.msra.mxu0 0.0
    %2636 = vmatpush.xpose.msra.mxu0 0.0
    %2637 = vmatpush.xpose.msra.mxu0 0.0
    %2638 = vmatpush.xpose.msra.mxu0 0.0
    %2639 = vmatpush.xpose.msra.mxu0 0.0
    %2640 = vmatpush.xpose.msra.mxu0 0.0
    %2641 = vmatpush.xpose.msra.mxu0 0.0
    %2642 = vmatpush.xpose.msra.mxu0 0.0
    %2643 = vmatpush.xpose.msra.mxu0 0.0
    %2644 = vmatpush.xpose.msra.mxu0 0.0
    %2645 = vmatpush.xpose.msra.mxu0 0.0
    %2646 = vmatpush.xpose.msra.mxu0 0.0
    %2647 = vmatpush.xpose.msra.mxu0 0.0
    %2648 = vmatpush.xpose.msra.mxu0 %v2507
    %2649 = vmatpush.xpose.msra.mxu0 %v2503
    %2650 = vmatpush.xpose.msra.mxu0 %v2499
    %2651 = vmatmul.f32.gmra.mxu0 %v2528
    %v2652 = vpop.f32.mrf.mxu0
    %v2653 = vadd.f32 %v2627, %v2652
    %2654 = vmatmul.f32.gmra.mxu0 %v2536
    %v2655 = vpop.f32.mrf.mxu0
    %v2656 = vadd.f32 %v2630, %v2655
    %2657 = vmatmul.f32.gmra.mxu0 %v2544
    %v2658 = vpop.f32.mrf.mxu0
    %v2659 = vadd.f32 %v2633, %v2658
    %2660 = vdwg.mxu0
    %v2661 = vadd.f32 %v2479, %v2653
    %v2662 = vadd.f32 %v2482, %v2656
    %v2663 = vadd.f32 %v2485, %v2659
    %s2664 = sld [smem:[#allocation5]]
    %v2665 = vstv %s2664
    %v2666 = vadd.f32 %v2661, %v2665
    %v2667 = vadd.f32 %v2662, %v2665
    %v2668 = vadd.f32 %v2663, %v2665
    %vm2669 = vcmask 195584
    %v2670 = vsel %vm2669, %v2666, 0.0
    %2671 = vadd.xlane.f32.xlu0 %v2670
    %v2672 = vpop.xlane.xlu0 %2671
    %v2673 = vsel %vm2669, %v2667, 0.0
    %2674 = vadd.xlane.f32.xlu0 %v2673
    %v2675 = vpop.xlane.xlu0 %2674
    %v2676 = vsel %vm2669, %v2668, 0.0
    %2677 = vadd.xlane.f32.xlu0 %v2676
    %v2678 = vpop.xlane.xlu0 %2677
    %v2679 = vadd.f32 %v2672, %v2675
    %v2680 = vadd.f32 %v2679, %v2678
    %v2681 = vrot.slane %v2680, 4
    %v2682 = vadd.f32 %v2680, %v2681
    %v2683 = vrot.slane %v2682, 2
    %v2684 = vadd.f32 %v2682, %v2683
    %v2685 = vrot.slane %v2684, 1
    %v2686 = vadd.f32 %v2684, %v2685
    %v2687 = vadd.f32 %v2686, 0.0
    %v2688 = vmul.f32 %v2666, %v2666
    %v2689 = vmul.f32 %v2667, %v2667
    %v2690 = vmul.f32 %v2668, %v2668
    %v2691 = vsel %vm2669, %v2688, 0.0
    %2692 = vadd.xlane.f32.xlu0 %v2691
    %v2693 = vpop.xlane.xlu0 %2692
    %v2694 = vsel %vm2669, %v2689, 0.0
    %2695 = vadd.xlane.f32.xlu0 %v2694
    %v2696 = vpop.xlane.xlu0 %2695
    %v2697 = vsel %vm2669, %v2690, 0.0
    %2698 = vadd.xlane.f32.xlu0 %v2697
    %v2699 = vpop.xlane.xlu0 %2698
    %v2700 = vadd.f32 %v2693, %v2696
    %v2701 = vadd.f32 %v2700, %v2699
    %v2702 = vrot.slane %v2701, 4
    %v2703 = vadd.f32 %v2701, %v2702
    %v2704 = vrot.slane %v2703, 2
    %v2705 = vadd.f32 %v2703, %v2704
    %v2706 = vrot.slane %v2705, 1
    %v2707 = vadd.f32 %v2705, %v2706
    %v2708 = vadd.f32 %v2707, 0.0
    %v2709 = vld [vmem:[%s2160] sm:$0xff]
    %v2710 = vld [vmem:[%s2160 + $0x8] sm:$0xff]
    %v2711 = vld [vmem:[%s2160 + $0x10] sm:$0xff]
    %v2712 = vld [vmem:[%s2160 + $0x18] sm:$0xff]
    %v2713 = vld [vmem:[%s2160 + $0x20] sm:$0xff]
    %v2714 = vld [vmem:[%s2160 + $0x28] sm:$0xff]
    %v2715 = vld [vmem:[%s2160 + $0x30] sm:$0xff]
    %v2716 = vld [vmem:[%s2160 + $0x38] sm:$0xff]
    %v2717 = vld [vmem:[%s2160 + $0x40] sm:$0xff]
    %v2718 = vld [vmem:[%s2160 + $0x48] sm:$0xff]
    %v2719 = vld [vmem:[%s2160 + $0x50] sm:$0xff]
    %v2720 = vld [vmem:[%s2160 + $0x58] sm:$0xff]
    %v2721 = vld [vmem:[%s2160] sm:$0xfe]
    %v2722 = vld [vmem:[%s2160 + $0x8] sm:$0xfe]
    %v2723 = vld [vmem:[%s2160 + $0x10] sm:$0xfe]
    %v2724 = vld [vmem:[%s2160 + $0x18] sm:$0xfe]
    %v2725 = vld [vmem:[%s2160 + $0x60] sm:$0x1]
    %v2726 = vld [vmem:[%s2160 + $0x68] sm:$0x1]
    %v2727 = vld [vmem:[%s2160 + $0x70] sm:$0x1]
    %v2728 = vld [vmem:[%s2160 + $0x78] sm:$0x1]
    %v2745 = vrot.slane %v2721, 1
    %v2746 = vrot.slane %v2713, 1
    %v2747 = vsel %vm2238, %v2745, %v2746
    %v2748 = vrot.slane %v2722, 1
    %v2749 = vrot.slane %v2714, 1
    %v2750 = vsel %vm2238, %v2748, %v2749
    %v2751 = vrot.slane %v2723, 1
    %v2752 = vrot.slane %v2715, 1
    %v2753 = vsel %vm2238, %v2751, %v2752
    %v2754 = vrot.slane %v2724, 1
    %v2755 = vrot.slane %v2716, 1
    %v2756 = vsel %vm2238, %v2754, %v2755
    %v2757 = vrot.slane %v2717, 1
    %v2758 = vsel %vm2238, %v2746, %v2757
    %v2759 = vrot.slane %v2718, 1
    %v2760 = vsel %vm2238, %v2749, %v2759
    %v2761 = vrot.slane %v2719, 1
    %v2762 = vsel %vm2238, %v2752, %v2761
    %v2763 = vrot.slane %v2720, 1
    %v2764 = vsel %vm2238, %v2755, %v2763
    %v2765 = vrot.slane %v2725, 1
    %v2766 = vsel %vm2238, %v2757, %v2765
    %v2767 = vrot.slane %v2726, 1
    %v2768 = vsel %vm2238, %v2759, %v2767
    %v2769 = vrot.slane %v2727, 1
    %v2770 = vsel %vm2238, %v2761, %v2769
    %v2771 = vrot.slane %v2728, 1
    %v2772 = vsel %vm2238, %v2763, %v2771
    %2785 = vmatpush.xpose.msra.mxu0 0.0
    %2786 = vmatpush.xpose.msra.mxu0 0.0
    %2787 = vmatpush.xpose.msra.mxu0 0.0
    %2788 = vmatpush.xpose.msra.mxu0 0.0
    %2789 = vmatpush.xpose.msra.mxu0 0.0
    %2790 = vmatpush.xpose.msra.mxu0 0.0
    %2791 = vmatpush.xpose.msra.mxu0 0.0
    %2792 = vmatpush.xpose.msra.mxu0 0.0
    %2793 = vmatpush.xpose.msra.mxu0 0.0
    %2794 = vmatpush.xpose.msra.mxu0 0.0
    %2795 = vmatpush.xpose.msra.mxu0 0.0
    %2796 = vmatpush.xpose.msra.mxu0 0.0
    %2797 = vmatpush.xpose.msra.mxu0 0.0
    %2798 = vmatpush.xpose.msra.mxu0 %v2218
    %2799 = vmatpush.xpose.msra.mxu0 %v2214
    %2800 = vmatpush.xpose.msra.mxu0 %v2210
    %2801 = vmatmul.f32.gmra.mxu0 %v2747
    %v2802 = vpop.f32.mrf.mxu0
    %v2803 = vadd.f32 0.0, %v2802
    %2804 = vmatmul.f32.gmra.mxu0 %v2758
    %v2805 = vpop.f32.mrf.mxu0
    %v2806 = vadd.f32 0.0, %v2805
    %2807 = vmatmul.f32.gmra.mxu0 %v2766
    %v2808 = vpop.f32.mrf.mxu0
    %v2809 = vadd.f32 0.0, %v2808
    %2810 = vdwg.mxu0
    %2811 = vmatpush.xpose.msra.mxu0 0.0
    %2812 = vmatpush.xpose.msra.mxu0 0.0
    %2813 = vmatpush.xpose.msra.mxu0 0.0
    %2814 = vmatpush.xpose.msra.mxu0 0.0
    %2815 = vmatpush.xpose.msra.mxu0 0.0
    %2816 = vmatpush.xpose.msra.mxu0 0.0
    %2817 = vmatpush.xpose.msra.mxu0 0.0
    %2818 = vmatpush.xpose.msra.mxu0 0.0
    %2819 = vmatpush.xpose.msra.mxu0 0.0
    %2820 = vmatpush.xpose.msra.mxu0 0.0
    %2821 = vmatpush.xpose.msra.mxu0 0.0
    %2822 = vmatpush.xpose.msra.mxu0 0.0
    %2823 = vmatpush.xpose.msra.mxu0 0.0
    %2824 = vmatpush.xpose.msra.mxu0 %v2219
    %2825 = vmatpush.xpose.msra.mxu0 %v2215
    %2826 = vmatpush.xpose.msra.mxu0 %v2211
    %2827 = vmatmul.f32.gmra.mxu0 %v2750
    %v2828 = vpop.f32.mrf.mxu0
    %v2829 = vadd.f32 %v2803, %v2828
    %2830 = vmatmul.f32.gmra.mxu0 %v2760
    %v2831 = vpop.f32.mrf.mxu0
    %v2832 = vadd.f32 %v2806, %v2831
    %2833 = vmatmul.f32.gmra.mxu0 %v2768
    %v2834 = vpop.f32.mrf.mxu0
    %v2835 = vadd.f32 %v2809, %v2834
    %2836 = vdwg.mxu0
    %2837 = vmatpush.xpose.msra.mxu0 0.0
    %2838 = vmatpush.xpose.msra.mxu0 0.0
    %2839 = vmatpush.xpose.msra.mxu0 0.0
    %2840 = vmatpush.xpose.msra.mxu0 0.0
    %2841 = vmatpush.xpose.msra.mxu0 0.0
    %2842 = vmatpush.xpose.msra.mxu0 0.0
    %2843 = vmatpush.xpose.msra.mxu0 0.0
    %2844 = vmatpush.xpose.msra.mxu0 0.0
    %2845 = vmatpush.xpose.msra.mxu0 0.0
    %2846 = vmatpush.xpose.msra.mxu0 0.0
    %2847 = vmatpush.xpose.msra.mxu0 0.0
    %2848 = vmatpush.xpose.msra.mxu0 0.0
    %2849 = vmatpush.xpose.msra.mxu0 0.0
    %2850 = vmatpush.xpose.msra.mxu0 %v2220
    %2851 = vmatpush.xpose.msra.mxu0 %v2216
    %2852 = vmatpush.xpose.msra.mxu0 %v2212
    %2853 = vmatmul.f32.gmra.mxu0 %v2753
    %v2854 = vpop.f32.mrf.mxu0
    %v2855 = vadd.f32 %v2829, %v2854
    %2856 = vmatmul.f32.gmra.mxu0 %v2762
    %v2857 = vpop.f32.mrf.mxu0
    %v2858 = vadd.f32 %v2832, %v2857
    %2859 = vmatmul.f32.gmra.mxu0 %v2770
    %v2860 = vpop.f32.mrf.mxu0
    %v2861 = vadd.f32 %v2835, %v2860
    %2862 = vdwg.mxu0
    %2863 = vmatpush.xpose.msra.mxu0 0.0
    %2864 = vmatpush.xpose.msra.mxu0 0.0
    %2865 = vmatpush.xpose.msra.mxu0 0.0
    %2866 = vmatpush.xpose.msra.mxu0 0.0
    %2867 = vmatpush.xpose.msra.mxu0 0.0
    %2868 = vmatpush.xpose.msra.mxu0 0.0
    %2869 = vmatpush.xpose.msra.mxu0 0.0
    %2870 = vmatpush.xpose.msra.mxu0 0.0
    %2871 = vmatpush.xpose.msra.mxu0 0.0
    %2872 = vmatpush.xpose.msra.mxu0 0.0
    %2873 = vmatpush.xpose.msra.mxu0 0.0
    %2874 = vmatpush.xpose.msra.mxu0 0.0
    %2875 = vmatpush.xpose.msra.mxu0 0.0
    %2876 = vmatpush.xpose.msra.mxu0 %v2221
    %2877 = vmatpush.xpose.msra.mxu0 %v2217
    %2878 = vmatpush.xpose.msra.mxu0 %v2213
    %2879 = vmatmul.f32.gmra.mxu0 %v2756
    %v2880 = vpop.f32.mrf.mxu0
    %v2881 = vadd.f32 %v2855, %v2880
    %2882 = vmatmul.f32.gmra.mxu0 %v2764
    %v2883 = vpop.f32.mrf.mxu0
    %v2884 = vadd.f32 %v2858, %v2883
    %2885 = vmatmul.f32.gmra.mxu0 %v2772
    %v2886 = vpop.f32.mrf.mxu0
    %v2887 = vadd.f32 %v2861, %v2886
    %2888 = vdwg.mxu0
    %2889 = vmatpush.xpose.msra.mxu0 0.0
    %2890 = vmatpush.xpose.msra.mxu0 0.0
    %2891 = vmatpush.xpose.msra.mxu0 0.0
    %2892 = vmatpush.xpose.msra.mxu0 0.0
    %2893 = vmatpush.xpose.msra.mxu0 0.0
    %2894 = vmatpush.xpose.msra.mxu0 0.0
    %2895 = vmatpush.xpose.msra.mxu0 0.0
    %2896 = vmatpush.xpose.msra.mxu0 0.0
    %2897 = vmatpush.xpose.msra.mxu0 0.0
    %2898 = vmatpush.xpose.msra.mxu0 0.0
    %2899 = vmatpush.xpose.msra.mxu0 0.0
    %2900 = vmatpush.xpose.msra.mxu0 0.0
    %2901 = vmatpush.xpose.msra.mxu0 0.0
    %2902 = vmatpush.xpose.msra.mxu0 %v2197
    %2903 = vmatpush.xpose.msra.mxu0 %v2193
    %2904 = vmatpush.xpose.msra.mxu0 %v2189
    %2905 = vmatmul.f32.gmra.mxu0 %v2709
    %v2906 = vpop.f32.mrf.mxu0
    %v2907 = vadd.f32 %v2881, %v2906
    %2908 = vmatmul.f32.gmra.mxu0 %v2713
    %v2909 = vpop.f32.mrf.mxu0
    %v2910 = vadd.f32 %v2884, %v2909
    %2911 = vmatmul.f32.gmra.mxu0 %v2717
    %v2912 = vpop.f32.mrf.mxu0
    %v2913 = vadd.f32 %v2887, %v2912
    %2914 = vdwg.mxu0
    %2915 = vmatpush.xpose.msra.mxu0 0.0
    %2916 = vmatpush.xpose.msra.mxu0 0.0
    %2917 = vmatpush.xpose.msra.mxu0 0.0
    %2918 = vmatpush.xpose.msra.mxu0 0.0
    %2919 = vmatpush.xpose.msra.mxu0 0.0
    %2920 = vmatpush.xpose.msra.mxu0 0.0
    %2921 = vmatpush.xpose.msra.mxu0 0.0
    %2922 = vmatpush.xpose.msra.mxu0 0.0
    %2923 = vmatpush.xpose.msra.mxu0 0.0
    %2924 = vmatpush.xpose.msra.mxu0 0.0
    %2925 = vmatpush.xpose.msra.mxu0 0.0
    %2926 = vmatpush.xpose.msra.mxu0 0.0
    %2927 = vmatpush.xpose.msra.mxu0 0.0
    %2928 = vmatpush.xpose.msra.mxu0 %v2198
    %2929 = vmatpush.xpose.msra.mxu0 %v2194
    %2930 = vmatpush.xpose.msra.mxu0 %v2190
    %2931 = vmatmul.f32.gmra.mxu0 %v2710
    %v2932 = vpop.f32.mrf.mxu0
    %v2933 = vadd.f32 %v2907, %v2932
    %2934 = vmatmul.f32.gmra.mxu0 %v2714
    %v2935 = vpop.f32.mrf.mxu0
    %v2936 = vadd.f32 %v2910, %v2935
    %2937 = vmatmul.f32.gmra.mxu0 %v2718
    %v2938 = vpop.f32.mrf.mxu0
    %v2939 = vadd.f32 %v2913, %v2938
    %2940 = vdwg.mxu0
    %2941 = vmatpush.xpose.msra.mxu0 0.0
    %2942 = vmatpush.xpose.msra.mxu0 0.0
    %2943 = vmatpush.xpose.msra.mxu0 0.0
    %2944 = vmatpush.xpose.msra.mxu0 0.0
    %2945 = vmatpush.xpose.msra.mxu0 0.0
    %2946 = vmatpush.xpose.msra.mxu0 0.0
    %2947 = vmatpush.xpose.msra.mxu0 0.0
    %2948 = vmatpush.xpose.msra.mxu0 0.0
    %2949 = vmatpush.xpose.msra.mxu0 0.0
    %2950 = vmatpush.xpose.msra.mxu0 0.0
    %2951 = vmatpush.xpose.msra.mxu0 0.0
    %2952 = vmatpush.xpose.msra.mxu0 0.0
    %2953 = vmatpush.xpose.msra.mxu0 0.0
    %2954 = vmatpush.xpose.msra.mxu0 %v2199
    %2955 = vmatpush.xpose.msra.mxu0 %v2195
    %2956 = vmatpush.xpose.msra.mxu0 %v2191
    %2957 = vmatmul.f32.gmra.mxu0 %v2711
    %v2958 = vpop.f32.mrf.mxu0
    %v2959 = vadd.f32 %v2933, %v2958
    %2960 = vmatmul.f32.gmra.mxu0 %v2715
    %v2961 = vpop.f32.mrf.mxu0
    %v2962 = vadd.f32 %v2936, %v2961
    %2963 = vmatmul.f32.gmra.mxu0 %v2719
    %v2964 = vpop.f32.mrf.mxu0
    %v2965 = vadd.f32 %v2939, %v2964
    %2966 = vdwg.mxu0
    %2967 = vmatpush.xpose.msra.mxu0 0.0
    %2968 = vmatpush.xpose.msra.mxu0 0.0
    %2969 = vmatpush.xpose.msra.mxu0 0.0
    %2970 = vmatpush.xpose.msra.mxu0 0.0
    %2971 = vmatpush.xpose.msra.mxu0 0.0
    %2972 = vmatpush.xpose.msra.mxu0 0.0
    %2973 = vmatpush.xpose.msra.mxu0 0.0
    %2974 = vmatpush.xpose.msra.mxu0 0.0
    %2975 = vmatpush.xpose.msra.mxu0 0.0
    %2976 = vmatpush.xpose.msra.mxu0 0.0
    %2977 = vmatpush.xpose.msra.mxu0 0.0
    %2978 = vmatpush.xpose.msra.mxu0 0.0
    %2979 = vmatpush.xpose.msra.mxu0 0.0
    %2980 = vmatpush.xpose.msra.mxu0 %v2200
    %2981 = vmatpush.xpose.msra.mxu0 %v2196
    %2982 = vmatpush.xpose.msra.mxu0 %v2192
    %2983 = vmatmul.f32.gmra.mxu0 %v2712
    %v2984 = vpop.f32.mrf.mxu0
    %v2985 = vadd.f32 %v2959, %v2984
    %2986 = vmatmul.f32.gmra.mxu0 %v2716
    %v2987 = vpop.f32.mrf.mxu0
    %v2988 = vadd.f32 %v2962, %v2987
    %2989 = vmatmul.f32.gmra.mxu0 %v2720
    %v2990 = vpop.f32.mrf.mxu0
    %v2991 = vadd.f32 %v2965, %v2990
    %2992 = vdwg.mxu0
    %v2993 = vld [vmem:[%s2160] sm:$0xfc]
    %v2994 = vld [vmem:[%s2160 + $0x8] sm:$0xfc]
    %v2995 = vld [vmem:[%s2160 + $0x10] sm:$0xfc]
    %v2996 = vld [vmem:[%s2160 + $0x18] sm:$0xfc]
    %v2997 = vld [vmem:[%s2160 + $0x60] sm:$0x3]
    %v2998 = vld [vmem:[%s2160 + $0x68] sm:$0x3]
    %v2999 = vld [vmem:[%s2160 + $0x70] sm:$0x3]
    %v3000 = vld [vmem:[%s2160 + $0x78] sm:$0x3]
    %v3009 = vrot.slane %v2993, 2
    %v3010 = vrot.slane %v2713, 2
    %v3011 = vsel %vm2516, %v3009, %v3010
    %v3012 = vrot.slane %v2994, 2
    %v3013 = vrot.slane %v2714, 2
    %v3014 = vsel %vm2516, %v3012, %v3013
    %v3015 = vrot.slane %v2995, 2
    %v3016 = vrot.slane %v2715, 2
    %v3017 = vsel %vm2516, %v3015, %v3016
    %v3018 = vrot.slane %v2996, 2
    %v3019 = vrot.slane %v2716, 2
    %v3020 = vsel %vm2516, %v3018, %v3019
    %v3021 = vrot.slane %v2717, 2
    %v3022 = vsel %vm2516, %v3010, %v3021
    %v3023 = vrot.slane %v2718, 2
    %v3024 = vsel %vm2516, %v3013, %v3023
    %v3025 = vrot.slane %v2719, 2
    %v3026 = vsel %vm2516, %v3016, %v3025
    %v3027 = vrot.slane %v2720, 2
    %v3028 = vsel %vm2516, %v3019, %v3027
    %v3029 = vrot.slane %v2997, 2
    %v3030 = vsel %vm2516, %v3021, %v3029
    %v3031 = vrot.slane %v2998, 2
    %v3032 = vsel %vm2516, %v3023, %v3031
    %v3033 = vrot.slane %v2999, 2
    %v3034 = vsel %vm2516, %v3025, %v3033
    %v3035 = vrot.slane %v3000, 2
    %v3036 = vsel %vm2516, %v3027, %v3035
    %3049 = vmatpush.xpose.msra.mxu0 0.0
    %3050 = vmatpush.xpose.msra.mxu0 0.0
    %3051 = vmatpush.xpose.msra.mxu0 0.0
    %3052 = vmatpush.xpose.msra.mxu0 0.0
    %3053 = vmatpush.xpose.msra.mxu0 0.0
    %3054 = vmatpush.xpose.msra.mxu0 0.0
    %3055 = vmatpush.xpose.msra.mxu0 0.0
    %3056 = vmatpush.xpose.msra.mxu0 0.0
    %3057 = vmatpush.xpose.msra.mxu0 0.0
    %3058 = vmatpush.xpose.msra.mxu0 0.0
    %3059 = vmatpush.xpose.msra.mxu0 0.0
    %3060 = vmatpush.xpose.msra.mxu0 0.0
    %3061 = vmatpush.xpose.msra.mxu0 0.0
    %3062 = vmatpush.xpose.msra.mxu0 %v2504
    %3063 = vmatpush.xpose.msra.mxu0 %v2500
    %3064 = vmatpush.xpose.msra.mxu0 %v2496
    %3065 = vmatmul.f32.gmra.mxu0 %v3011
    %v3066 = vpop.f32.mrf.mxu0
    %v3067 = vadd.f32 0.0, %v3066
    %3068 = vmatmul.f32.gmra.mxu0 %v3022
    %v3069 = vpop.f32.mrf.mxu0
    %v3070 = vadd.f32 0.0, %v3069
    %3071 = vmatmul.f32.gmra.mxu0 %v3030
    %v3072 = vpop.f32.mrf.mxu0
    %v3073 = vadd.f32 0.0, %v3072
    %3074 = vdwg.mxu0
    %3075 = vmatpush.xpose.msra.mxu0 0.0
    %3076 = vmatpush.xpose.msra.mxu0 0.0
    %3077 = vmatpush.xpose.msra.mxu0 0.0
    %3078 = vmatpush.xpose.msra.mxu0 0.0
    %3079 = vmatpush.xpose.msra.mxu0 0.0
    %3080 = vmatpush.xpose.msra.mxu0 0.0
    %3081 = vmatpush.xpose.msra.mxu0 0.0
    %3082 = vmatpush.xpose.msra.mxu0 0.0
    %3083 = vmatpush.xpose.msra.mxu0 0.0
    %3084 = vmatpush.xpose.msra.mxu0 0.0
    %3085 = vmatpush.xpose.msra.mxu0 0.0
    %3086 = vmatpush.xpose.msra.mxu0 0.0
    %3087 = vmatpush.xpose.msra.mxu0 0.0
    %3088 = vmatpush.xpose.msra.mxu0 %v2505
    %3089 = vmatpush.xpose.msra.mxu0 %v2501
    %3090 = vmatpush.xpose.msra.mxu0 %v2497
    %3091 = vmatmul.f32.gmra.mxu0 %v3014
    %v3092 = vpop.f32.mrf.mxu0
    %v3093 = vadd.f32 %v3067, %v3092
    %3094 = vmatmul.f32.gmra.mxu0 %v3024
    %v3095 = vpop.f32.mrf.mxu0
    %v3096 = vadd.f32 %v3070, %v3095
    %3097 = vmatmul.f32.gmra.mxu0 %v3032
    %v3098 = vpop.f32.mrf.mxu0
    %v3099 = vadd.f32 %v3073, %v3098
    %3100 = vdwg.mxu0
    %3101 = vmatpush.xpose.msra.mxu0 0.0
    %3102 = vmatpush.xpose.msra.mxu0 0.0
    %3103 = vmatpush.xpose.msra.mxu0 0.0
    %3104 = vmatpush.xpose.msra.mxu0 0.0
    %3105 = vmatpush.xpose.msra.mxu0 0.0
    %3106 = vmatpush.xpose.msra.mxu0 0.0
    %3107 = vmatpush.xpose.msra.mxu0 0.0
    %3108 = vmatpush.xpose.msra.mxu0 0.0
    %3109 = vmatpush.xpose.msra.mxu0 0.0
    %3110 = vmatpush.xpose.msra.mxu0 0.0
    %3111 = vmatpush.xpose.msra.mxu0 0.0
    %3112 = vmatpush.xpose.msra.mxu0 0.0
    %3113 = vmatpush.xpose.msra.mxu0 0.0
    %3114 = vmatpush.xpose.msra.mxu0 %v2506
    %3115 = vmatpush.xpose.msra.mxu0 %v2502
    %3116 = vmatpush.xpose.msra.mxu0 %v2498
    %3117 = vmatmul.f32.gmra.mxu0 %v3017
    %v3118 = vpop.f32.mrf.mxu0
    %v3119 = vadd.f32 %v3093, %v3118
    %3120 = vmatmul.f32.gmra.mxu0 %v3026
    %v3121 = vpop.f32.mrf.mxu0
    %v3122 = vadd.f32 %v3096, %v3121
    %3123 = vmatmul.f32.gmra.mxu0 %v3034
    %v3124 = vpop.f32.mrf.mxu0
    %v3125 = vadd.f32 %v3099, %v3124
    %3126 = vdwg.mxu0
    %3127 = vmatpush.xpose.msra.mxu0 0.0
    %3128 = vmatpush.xpose.msra.mxu0 0.0
    %3129 = vmatpush.xpose.msra.mxu0 0.0
    %3130 = vmatpush.xpose.msra.mxu0 0.0
    %3131 = vmatpush.xpose.msra.mxu0 0.0
    %3132 = vmatpush.xpose.msra.mxu0 0.0
    %3133 = vmatpush.xpose.msra.mxu0 0.0
    %3134 = vmatpush.xpose.msra.mxu0 0.0
    %3135 = vmatpush.xpose.msra.mxu0 0.0
    %3136 = vmatpush.xpose.msra.mxu0 0.0
    %3137 = vmatpush.xpose.msra.mxu0 0.0
    %3138 = vmatpush.xpose.msra.mxu0 0.0
    %3139 = vmatpush.xpose.msra.mxu0 0.0
    %3140 = vmatpush.xpose.msra.mxu0 %v2507
    %3141 = vmatpush.xpose.msra.mxu0 %v2503
    %3142 = vmatpush.xpose.msra.mxu0 %v2499
    %3143 = vmatmul.f32.gmra.mxu0 %v3020
    %v3144 = vpop.f32.mrf.mxu0
    %v3145 = vadd.f32 %v3119, %v3144
    %3146 = vmatmul.f32.gmra.mxu0 %v3028
    %v3147 = vpop.f32.mrf.mxu0
    %v3148 = vadd.f32 %v3122, %v3147
    %3149 = vmatmul.f32.gmra.mxu0 %v3036
    %v3150 = vpop.f32.mrf.mxu0
    %v3151 = vadd.f32 %v3125, %v3150
    %3152 = vdwg.mxu0
    %v3153 = vadd.f32 %v2985, %v3145
    %v3154 = vadd.f32 %v2988, %v3148
    %v3155 = vadd.f32 %v2991, %v3151
    %v3156 = vadd.f32 %v3153, %v2665
    %v3157 = vadd.f32 %v3154, %v2665
    %v3158 = vadd.f32 %v3155, %v2665
    %v3159 = vsel %vm2669, %v3156, 0.0
    %3160 = vadd.xlane.f32.xlu0 %v3159
    %v3161 = vpop.xlane.xlu0 %3160
    %v3162 = vsel %vm2669, %v3157, 0.0
    %3163 = vadd.xlane.f32.xlu0 %v3162
    %v3164 = vpop.xlane.xlu0 %3163
    %v3165 = vsel %vm2669, %v3158, 0.0
    %3166 = vadd.xlane.f32.xlu0 %v3165
    %v3167 = vpop.xlane.xlu0 %3166
    %v3168 = vadd.f32 %v3161, %v3164
    %v3169 = vadd.f32 %v3168, %v3167
    %v3170 = vrot.slane %v3169, 4
    %v3171 = vadd.f32 %v3169, %v3170
    %v3172 = vrot.slane %v3171, 2
    %v3173 = vadd.f32 %v3171, %v3172
    %v3174 = vrot.slane %v3173, 1
    %v3175 = vadd.f32 %v3173, %v3174
    %v3176 = vadd.f32 %v2687, %v3175
    %v3177 = vmul.f32 %v3156, %v3156
    %v3178 = vmul.f32 %v3157, %v3157
    %v3179 = vmul.f32 %v3158, %v3158
    %v3180 = vsel %vm2669, %v3177, 0.0
    %3181 = vadd.xlane.f32.xlu0 %v3180
    %v3182 = vpop.xlane.xlu0 %3181
    %v3183 = vsel %vm2669, %v3178, 0.0
    %3184 = vadd.xlane.f32.xlu0 %v3183
    %v3185 = vpop.xlane.xlu0 %3184
    %v3186 = vsel %vm2669, %v3179, 0.0
    %3187 = vadd.xlane.f32.xlu0 %v3186
    %v3188 = vpop.xlane.xlu0 %3187
    %v3189 = vadd.f32 %v3182, %v3185
    %v3190 = vadd.f32 %v3189, %v3188
    %v3191 = vrot.slane %v3190, 4
    %v3192 = vadd.f32 %v3190, %v3191
    %v3193 = vrot.slane %v3192, 2
    %v3194 = vadd.f32 %v3192, %v3193
    %v3195 = vrot.slane %v3194, 1
    %v3196 = vadd.f32 %v3194, %v3195
    %v3197 = vadd.f32 %v2708, %v3196
    %v3198 = vmul.f32 %v3176, 0.00086805556
    %v3199 = vmul.f32 %v3197, 0.00086805556
    %v3200 = vmul.f32 %v3198, %v3198
    %v3201 = vsub.f32 %v3199, %v3200
    %s3202 = sld [smem:[#allocation6]]
    %v3203 = vadd.f32 %v3201, 1e-05
    %v3204 = vrsqrt.pop %v3203
    %v3205 = vmul.f32 %v3204, %v3203
    %v3206 = vmul.f32 %v3205, %v3204
    %v3207 = vmul.f32 0.5, %v3206
    %v3208 = vsub.f32 1.5, %v3207
    %v3209 = vmul.f32 %v3204, %v3208
    %vm3210 = vweird.f32 %v3203
    %vm3211 = vweird.f32 %v3204
    %vm3212 = vmor %vm3210, %vm3211
    %v3213 = vsel %vm3212, %v3204, %v3209
    %v3214 = vstv %s3202
    %v3215 = vmul.f32 %v3214, %v3213
    %s3216 = sld [smem:[#allocation7]]
    %v3217 = vmul.f32 %v3198, %v3215
    %v3218 = vstv %s3216
    %v3219 = vsub.f32 %v3218, %v3217
    %v3220 = vmul.f32 %v2666, %v3215
    %v3221 = vmul.f32 %v2667, %v3215
    %v3222 = vmul.f32 %v2668, %v3215
    %v3223 = vadd.f32 %v3220, %v3219
    %v3224 = vadd.f32 %v3221, %v3219
    %v3225 = vadd.f32 %v3222, %v3219
    %v3226 = vmul.f32 %v3156, %v3215
    %v3227 = vmul.f32 %v3157, %v3215
    %v3228 = vmul.f32 %v3158, %v3215
    %v3229 = vadd.f32 %v3226, %v3219
    %v3230 = vadd.f32 %v3227, %v3219
    %v3231 = vadd.f32 %v3228, %v3219
    %v3232 = vld [vmem:[%s9] sm:$0xff]
    %v3233 = vld [vmem:[%s9 + $0x8] sm:$0xff]
    %v3234 = vld [vmem:[%s9 + $0x10] sm:$0xff]
    %v3235 = vmul.f32 %v3232, %v3223
    %v3236 = vmul.f32 %v3233, %v3224
    %v3237 = vmul.f32 %v3234, %v3225
    %v3238 = vsel %vm2669, %v3235, 0.0
    %3239 = vadd.xlane.f32.xlu0 %v3238
    %v3240 = vpop.xlane.xlu0 %3239
    %v3241 = vsel %vm2669, %v3236, 0.0
    %3242 = vadd.xlane.f32.xlu0 %v3241
    %v3243 = vpop.xlane.xlu0 %3242
    %v3244 = vsel %vm2669, %v3237, 0.0
    %3245 = vadd.xlane.f32.xlu0 %v3244
    %v3246 = vpop.xlane.xlu0 %3245
    %v3247 = vadd.f32 %v3240, %v3243
    %v3248 = vadd.f32 %v3247, %v3246
    %v3249 = vrot.slane %v3248, 4
    %v3250 = vadd.f32 %v3248, %v3249
    %v3251 = vrot.slane %v3250, 2
    %v3252 = vadd.f32 %v3250, %v3251
    %v3253 = vrot.slane %v3252, 1
    %v3254 = vadd.f32 %v3252, %v3253
    %s3255 = sld [smem:[#allocation16]]
    %v3256 = vstv %s3255
    %v3257 = vadd.f32 %v3254, %v3256
    %vm3258 = vcmp.ge.f32.partialorder %v3257, 0.0
    %v3259 = vmul.f32 %v3257, 0.01
    %v3260 = vsel %vm3258, %v3257, %v3259
    %s3261 = scalar_lea.vmem %s9, 24
    %v3262 = vld [vmem:[%s3261] sm:$0xff]
    %v3263 = vld [vmem:[%s3261 + $0x8] sm:$0xff]
    %v3264 = vld [vmem:[%s3261 + $0x10] sm:$0xff]
    %v3265 = vmul.f32 %v3262, %v3223
    %v3266 = vmul.f32 %v3263, %v3224
    %v3267 = vmul.f32 %v3264, %v3225
    %v3268 = vsel %vm2669, %v3265, 0.0
    %3269 = vadd.xlane.f32.xlu0 %v3268
    %v3270 = vpop.xlane.xlu0 %3269
    %v3271 = vsel %vm2669, %v3266, 0.0
    %3272 = vadd.xlane.f32.xlu0 %v3271
    %v3273 = vpop.xlane.xlu0 %3272
    %v3274 = vsel %vm2669, %v3267, 0.0
    %3275 = vadd.xlane.f32.xlu0 %v3274
    %v3276 = vpop.xlane.xlu0 %3275
    %v3277 = vadd.f32 %v3270, %v3273
    %v3278 = vadd.f32 %v3277, %v3276
    %v3279 = vrot.slane %v3278, 4
    %v3280 = vadd.f32 %v3278, %v3279
    %v3281 = vrot.slane %v3280, 2
    %v3282 = vadd.f32 %v3280, %v3281
    %v3283 = vrot.slane %v3282, 1
    %v3284 = vadd.f32 %v3282, %v3283
    %s3285 = sld [smem:[#allocation16 + $0x1]]
    %v3286 = vstv %s3285
    %v3287 = vadd.f32 %v3284, %v3286
    %vm3288 = vcmp.ge.f32.partialorder %v3287, 0.0
    %v3289 = vmul.f32 %v3287, 0.01
    %v3290 = vsel %vm3288, %v3287, %v3289
    %s3291 = scalar_lea.vmem %s9, 48
    %v3292 = vld [vmem:[%s3291] sm:$0xff]
    %v3293 = vld [vmem:[%s3291 + $0x8] sm:$0xff]
    %v3294 = vld [vmem:[%s3291 + $0x10] sm:$0xff]
    %v3295 = vmul.f32 %v3292, %v3223
    %v3296 = vmul.f32 %v3293, %v3224
    %v3297 = vmul.f32 %v3294, %v3225
    %v3298 = vsel %vm2669, %v3295, 0.0
    %3299 = vadd.xlane.f32.xlu0 %v3298
    %v3300 = vpop.xlane.xlu0 %3299
    %v3301 = vsel %vm2669, %v3296, 0.0
    %3302 = vadd.xlane.f32.xlu0 %v3301
    %v3303 = vpop.xlane.xlu0 %3302
    %v3304 = vsel %vm2669, %v3297, 0.0
    %3305 = vadd.xlane.f32.xlu0 %v3304
    %v3306 = vpop.xlane.xlu0 %3305
    %v3307 = vadd.f32 %v3300, %v3303
    %v3308 = vadd.f32 %v3307, %v3306
    %v3309 = vrot.slane %v3308, 4
    %v3310 = vadd.f32 %v3308, %v3309
    %v3311 = vrot.slane %v3310, 2
    %v3312 = vadd.f32 %v3310, %v3311
    %v3313 = vrot.slane %v3312, 1
    %v3314 = vadd.f32 %v3312, %v3313
    %s3315 = sld [smem:[#allocation16 + $0x2]]
    %v3316 = vstv %s3315
    %v3317 = vadd.f32 %v3314, %v3316
    %vm3318 = vcmp.ge.f32.partialorder %v3317, 0.0
    %v3319 = vmul.f32 %v3317, 0.01
    %v3320 = vsel %vm3318, %v3317, %v3319
    %s3321 = scalar_lea.vmem %s9, 72
    %v3322 = vld [vmem:[%s3321] sm:$0xff]
    %v3323 = vld [vmem:[%s3321 + $0x8] sm:$0xff]
    %v3324 = vld [vmem:[%s3321 + $0x10] sm:$0xff]
    %v3325 = vmul.f32 %v3322, %v3223
    %v3326 = vmul.f32 %v3323, %v3224
    %v3327 = vmul.f32 %v3324, %v3225
    %v3328 = vsel %vm2669, %v3325, 0.0
    %3329 = vadd.xlane.f32.xlu0 %v3328
    %v3330 = vpop.xlane.xlu0 %3329
    %v3331 = vsel %vm2669, %v3326, 0.0
    %3332 = vadd.xlane.f32.xlu0 %v3331
    %v3333 = vpop.xlane.xlu0 %3332
    %v3334 = vsel %vm2669, %v3327, 0.0
    %3335 = vadd.xlane.f32.xlu0 %v3334
    %v3336 = vpop.xlane.xlu0 %3335
    %v3337 = vadd.f32 %v3330, %v3333
    %v3338 = vadd.f32 %v3337, %v3336
    %v3339 = vrot.slane %v3338, 4
    %v3340 = vadd.f32 %v3338, %v3339
    %v3341 = vrot.slane %v3340, 2
    %v3342 = vadd.f32 %v3340, %v3341
    %v3343 = vrot.slane %v3342, 1
    %v3344 = vadd.f32 %v3342, %v3343
    %s3345 = sld [smem:[#allocation16 + $0x3]]
    %v3346 = vstv %s3345
    %v3347 = vadd.f32 %v3344, %v3346
    %vm3348 = vcmp.ge.f32.partialorder %v3347, 0.0
    %v3349 = vmul.f32 %v3347, 0.01
    %v3350 = vsel %vm3348, %v3347, %v3349
    %s3351 = scalar_lea.vmem %s9, 96
    %v3352 = vld [vmem:[%s3351] sm:$0xff]
    %v3353 = vld [vmem:[%s3351 + $0x8] sm:$0xff]
    %v3354 = vld [vmem:[%s3351 + $0x10] sm:$0xff]
    %v3355 = vmul.f32 %v3352, %v3223
    %v3356 = vmul.f32 %v3353, %v3224
    %v3357 = vmul.f32 %v3354, %v3225
    %v3358 = vsel %vm2669, %v3355, 0.0
    %3359 = vadd.xlane.f32.xlu0 %v3358
    %v3360 = vpop.xlane.xlu0 %3359
    %v3361 = vsel %vm2669, %v3356, 0.0
    %3362 = vadd.xlane.f32.xlu0 %v3361
    %v3363 = vpop.xlane.xlu0 %3362
    %v3364 = vsel %vm2669, %v3357, 0.0
    %3365 = vadd.xlane.f32.xlu0 %v3364
    %v3366 = vpop.xlane.xlu0 %3365
    %v3367 = vadd.f32 %v3360, %v3363
    %v3368 = vadd.f32 %v3367, %v3366
    %v3369 = vrot.slane %v3368, 4
    %v3370 = vadd.f32 %v3368, %v3369
    %v3371 = vrot.slane %v3370, 2
    %v3372 = vadd.f32 %v3370, %v3371
    %v3373 = vrot.slane %v3372, 1
    %v3374 = vadd.f32 %v3372, %v3373
    %s3375 = sld [smem:[#allocation16 + $0x4]]
    %v3376 = vstv %s3375
    %v3377 = vadd.f32 %v3374, %v3376
    %vm3378 = vcmp.ge.f32.partialorder %v3377, 0.0
    %v3379 = vmul.f32 %v3377, 0.01
    %v3380 = vsel %vm3378, %v3377, %v3379
    %s3381 = scalar_lea.vmem %s9, 120
    %v3382 = vld [vmem:[%s3381] sm:$0xff]
    %v3383 = vld [vmem:[%s3381 + $0x8] sm:$0xff]
    %v3384 = vld [vmem:[%s3381 + $0x10] sm:$0xff]
    %v3385 = vmul.f32 %v3382, %v3223
    %v3386 = vmul.f32 %v3383, %v3224
    %v3387 = vmul.f32 %v3384, %v3225
    %v3388 = vsel %vm2669, %v3385, 0.0
    %3389 = vadd.xlane.f32.xlu0 %v3388
    %v3390 = vpop.xlane.xlu0 %3389
    %v3391 = vsel %vm2669, %v3386, 0.0
    %3392 = vadd.xlane.f32.xlu0 %v3391
    %v3393 = vpop.xlane.xlu0 %3392
    %v3394 = vsel %vm2669, %v3387, 0.0
    %3395 = vadd.xlane.f32.xlu0 %v3394
    %v3396 = vpop.xlane.xlu0 %3395
    %v3397 = vadd.f32 %v3390, %v3393
    %v3398 = vadd.f32 %v3397, %v3396
    %v3399 = vrot.slane %v3398, 4
    %v3400 = vadd.f32 %v3398, %v3399
    %v3401 = vrot.slane %v3400, 2
    %v3402 = vadd.f32 %v3400, %v3401
    %v3403 = vrot.slane %v3402, 1
    %v3404 = vadd.f32 %v3402, %v3403
    %s3405 = sld [smem:[#allocation16 + $0x5]]
    %v3406 = vstv %s3405
    %v3407 = vadd.f32 %v3404, %v3406
    %vm3408 = vcmp.ge.f32.partialorder %v3407, 0.0
    %v3409 = vmul.f32 %v3407, 0.01
    %v3410 = vsel %vm3408, %v3407, %v3409
    %s3411 = scalar_lea.vmem %s9, 144
    %v3412 = vld [vmem:[%s3411] sm:$0xff]
    %v3413 = vld [vmem:[%s3411 + $0x8] sm:$0xff]
    %v3414 = vld [vmem:[%s3411 + $0x10] sm:$0xff]
    %v3415 = vmul.f32 %v3412, %v3223
    %v3416 = vmul.f32 %v3413, %v3224
    %v3417 = vmul.f32 %v3414, %v3225
    %v3418 = vsel %vm2669, %v3415, 0.0
    %3419 = vadd.xlane.f32.xlu0 %v3418
    %v3420 = vpop.xlane.xlu0 %3419
    %v3421 = vsel %vm2669, %v3416, 0.0
    %3422 = vadd.xlane.f32.xlu0 %v3421
    %v3423 = vpop.xlane.xlu0 %3422
    %v3424 = vsel %vm2669, %v3417, 0.0
    %3425 = vadd.xlane.f32.xlu0 %v3424
    %v3426 = vpop.xlane.xlu0 %3425
    %v3427 = vadd.f32 %v3420, %v3423
    %v3428 = vadd.f32 %v3427, %v3426
    %v3429 = vrot.slane %v3428, 4
    %v3430 = vadd.f32 %v3428, %v3429
    %v3431 = vrot.slane %v3430, 2
    %v3432 = vadd.f32 %v3430, %v3431
    %v3433 = vrot.slane %v3432, 1
    %v3434 = vadd.f32 %v3432, %v3433
    %s3435 = sld [smem:[#allocation16 + $0x6]]
    %v3436 = vstv %s3435
    %v3437 = vadd.f32 %v3434, %v3436
    %vm3438 = vcmp.ge.f32.partialorder %v3437, 0.0
    %v3439 = vmul.f32 %v3437, 0.01
    %v3440 = vsel %vm3438, %v3437, %v3439
    %s3441 = scalar_lea.vmem %s9, 168
    %v3442 = vld [vmem:[%s3441] sm:$0xff]
    %v3443 = vld [vmem:[%s3441 + $0x8] sm:$0xff]
    %v3444 = vld [vmem:[%s3441 + $0x10] sm:$0xff]
    %v3445 = vmul.f32 %v3442, %v3223
    %v3446 = vmul.f32 %v3443, %v3224
    %v3447 = vmul.f32 %v3444, %v3225
    %v3448 = vsel %vm2669, %v3445, 0.0
    %3449 = vadd.xlane.f32.xlu0 %v3448
    %v3450 = vpop.xlane.xlu0 %3449
    %v3451 = vsel %vm2669, %v3446, 0.0
    %3452 = vadd.xlane.f32.xlu0 %v3451
    %v3453 = vpop.xlane.xlu0 %3452
    %v3454 = vsel %vm2669, %v3447, 0.0
    %3455 = vadd.xlane.f32.xlu0 %v3454
    %v3456 = vpop.xlane.xlu0 %3455
    %v3457 = vadd.f32 %v3450, %v3453
    %v3458 = vadd.f32 %v3457, %v3456
    %v3459 = vrot.slane %v3458, 4
    %v3460 = vadd.f32 %v3458, %v3459
    %v3461 = vrot.slane %v3460, 2
    %v3462 = vadd.f32 %v3460, %v3461
    %v3463 = vrot.slane %v3462, 1
    %v3464 = vadd.f32 %v3462, %v3463
    %s3465 = sld [smem:[#allocation16 + $0x7]]
    %v3466 = vstv %s3465
    %v3467 = vadd.f32 %v3464, %v3466
    %vm3468 = vcmp.ge.f32.partialorder %v3467, 0.0
    %v3469 = vmul.f32 %v3467, 0.01
    %v3470 = vsel %vm3468, %v3467, %v3469
    %v3471 = vld [vmem:[#allocation18] sm:$0xff]
    %v3472 = vld [vmem:[#allocation18 + $0x8] sm:$0xff]
    %v3473 = vld [vmem:[#allocation18 + $0x10] sm:$0xff]
    %v3474 = vld [vmem:[#allocation17] sm:$0xff]
    %v3475 = vld [vmem:[#allocation17 + $0x8] sm:$0xff]
    %v3476 = vld [vmem:[#allocation17 + $0x10] sm:$0xff]
    %v3477 = vmul.f32 %v3474, %v3260
    %v3478 = vmul.f32 %v3475, %v3260
    %v3479 = vmul.f32 %v3476, %v3260
    %v3480 = vadd.f32 %v3471, %v3477
    %v3481 = vadd.f32 %v3472, %v3478
    %v3482 = vadd.f32 %v3473, %v3479
    %s3483 = scalar_lea.vmem [#allocation17], 24
    %v3484 = vld [vmem:[%s3483] sm:$0xff]
    %v3485 = vld [vmem:[%s3483 + $0x8] sm:$0xff]
    %v3486 = vld [vmem:[%s3483 + $0x10] sm:$0xff]
    %v3487 = vmul.f32 %v3484, %v3290
    %v3488 = vmul.f32 %v3485, %v3290
    %v3489 = vmul.f32 %v3486, %v3290
    %v3490 = vadd.f32 %v3480, %v3487
    %v3491 = vadd.f32 %v3481, %v3488
    %v3492 = vadd.f32 %v3482, %v3489
    %s3493 = scalar_lea.vmem [#allocation17], 48
    %v3494 = vld [vmem:[%s3493] sm:$0xff]
    %v3495 = vld [vmem:[%s3493 + $0x8] sm:$0xff]
    %v3496 = vld [vmem:[%s3493 + $0x10] sm:$0xff]
    %v3497 = vmul.f32 %v3494, %v3320
    %v3498 = vmul.f32 %v3495, %v3320
    %v3499 = vmul.f32 %v3496, %v3320
    %v3500 = vadd.f32 %v3490, %v3497
    %v3501 = vadd.f32 %v3491, %v3498
    %v3502 = vadd.f32 %v3492, %v3499
    %s3503 = scalar_lea.vmem [#allocation17], 72
    %v3504 = vld [vmem:[%s3503] sm:$0xff]
    %v3505 = vld [vmem:[%s3503 + $0x8] sm:$0xff]
    %v3506 = vld [vmem:[%s3503 + $0x10] sm:$0xff]
    %v3507 = vmul.f32 %v3504, %v3350
    %v3508 = vmul.f32 %v3505, %v3350
    %v3509 = vmul.f32 %v3506, %v3350
    %v3510 = vadd.f32 %v3500, %v3507
    %v3511 = vadd.f32 %v3501, %v3508
    %v3512 = vadd.f32 %v3502, %v3509
    %s3513 = scalar_lea.vmem [#allocation17], 96
    %v3514 = vld [vmem:[%s3513] sm:$0xff]
    %v3515 = vld [vmem:[%s3513 + $0x8] sm:$0xff]
    %v3516 = vld [vmem:[%s3513 + $0x10] sm:$0xff]
    %v3517 = vmul.f32 %v3514, %v3380
    %v3518 = vmul.f32 %v3515, %v3380
    %v3519 = vmul.f32 %v3516, %v3380
    %v3520 = vadd.f32 %v3510, %v3517
    %v3521 = vadd.f32 %v3511, %v3518
    %v3522 = vadd.f32 %v3512, %v3519
    %s3523 = scalar_lea.vmem [#allocation17], 120
    %v3524 = vld [vmem:[%s3523] sm:$0xff]
    %v3525 = vld [vmem:[%s3523 + $0x8] sm:$0xff]
    %v3526 = vld [vmem:[%s3523 + $0x10] sm:$0xff]
    %v3527 = vmul.f32 %v3524, %v3410
    %v3528 = vmul.f32 %v3525, %v3410
    %v3529 = vmul.f32 %v3526, %v3410
    %v3530 = vadd.f32 %v3520, %v3527
    %v3531 = vadd.f32 %v3521, %v3528
    %v3532 = vadd.f32 %v3522, %v3529
    %s3533 = scalar_lea.vmem [#allocation17], 144
    %v3534 = vld [vmem:[%s3533] sm:$0xff]
    %v3535 = vld [vmem:[%s3533 + $0x8] sm:$0xff]
    %v3536 = vld [vmem:[%s3533 + $0x10] sm:$0xff]
    %v3537 = vmul.f32 %v3534, %v3440
    %v3538 = vmul.f32 %v3535, %v3440
    %v3539 = vmul.f32 %v3536, %v3440
    %v3540 = vadd.f32 %v3530, %v3537
    %v3541 = vadd.f32 %v3531, %v3538
    %v3542 = vadd.f32 %v3532, %v3539
    %s3543 = scalar_lea.vmem [#allocation17], 168
    %v3544 = vld [vmem:[%s3543] sm:$0xff]
    %v3545 = vld [vmem:[%s3543 + $0x8] sm:$0xff]
    %v3546 = vld [vmem:[%s3543 + $0x10] sm:$0xff]
    %v3547 = vmul.f32 %v3544, %v3470
    %v3548 = vmul.f32 %v3545, %v3470
    %v3549 = vmul.f32 %v3546, %v3470
    %v3550 = vadd.f32 %v3540, %v3547
    %v3551 = vadd.f32 %v3541, %v3548
    %v3552 = vadd.f32 %v3542, %v3549
    %vm3553 = vcmp.ge.f32.partialorder %v3550, 0.0
    %vm3554 = vcmp.ge.f32.partialorder %v3551, 0.0
    %vm3555 = vcmp.ge.f32.partialorder %v3552, 0.0
    %v3556 = vmul.f32 %v3550, 0.01
    %v3557 = vmul.f32 %v3551, 0.01
    %v3558 = vmul.f32 %v3552, 0.01
    %v3559 = vsel %vm3553, %v3550, %v3556
    %v3560 = vsel %vm3554, %v3551, %v3557
    %v3561 = vsel %vm3555, %v3552, %v3558
    %3565 = vrot.lane.b32.xlu0 %v3559, 2
    %v3566 = vpop.permute.xlu0 %3565
    %3567 = vrot.lane.b32.xlu0 %v3560, 2
    %v3568 = vpop.permute.xlu0 %3567
    %3569 = vrot.lane.b32.xlu0 %v3561, 2
    %v3570 = vpop.permute.xlu0 %3569
    %vm3574 = vcmask 211984
    %3575 = vst.msk [vmem:[#allocation3 + $0x2] sm:$0xff] %vm3574, %v3566
    %3576 = vst.msk [vmem:[#allocation3 + $0xa] sm:$0xff] %vm3574, %v3568
    %3577 = vst.msk [vmem:[#allocation3 + $0x12] sm:$0xff] %vm3574, %v3570
    %v3578 = vld [vmem:[%s9] sm:$0xff]
    %v3579 = vld [vmem:[%s9 + $0x8] sm:$0xff]
    %v3580 = vld [vmem:[%s9 + $0x10] sm:$0xff]
    %v3581 = vmul.f32 %v3578, %v3229
    %v3582 = vmul.f32 %v3579, %v3230
    %v3583 = vmul.f32 %v3580, %v3231
    %v3584 = vsel %vm2669, %v3581, 0.0
    %3585 = vadd.xlane.f32.xlu0 %v3584
    %v3586 = vpop.xlane.xlu0 %3585
    %v3587 = vsel %vm2669, %v3582, 0.0
    %3588 = vadd.xlane.f32.xlu0 %v3587
    %v3589 = vpop.xlane.xlu0 %3588
    %v3590 = vsel %vm2669, %v3583, 0.0
    %3591 = vadd.xlane.f32.xlu0 %v3590
    %v3592 = vpop.xlane.xlu0 %3591
    %v3593 = vadd.f32 %v3586, %v3589
    %v3594 = vadd.f32 %v3593, %v3592
    %v3595 = vrot.slane %v3594, 4
    %v3596 = vadd.f32 %v3594, %v3595
    %v3597 = vrot.slane %v3596, 2
    %v3598 = vadd.f32 %v3596, %v3597
    %v3599 = vrot.slane %v3598, 1
    %v3600 = vadd.f32 %v3598, %v3599
    %s3601 = sld [smem:[#allocation16]]
    %v3602 = vstv %s3601
    %v3603 = vadd.f32 %v3600, %v3602
    %vm3604 = vcmp.ge.f32.partialorder %v3603, 0.0
    %v3605 = vmul.f32 %v3603, 0.01
    %v3606 = vsel %vm3604, %v3603, %v3605
    %v3607 = vld [vmem:[%s3261] sm:$0xff]
    %v3608 = vld [vmem:[%s3261 + $0x8] sm:$0xff]
    %v3609 = vld [vmem:[%s3261 + $0x10] sm:$0xff]
    %v3610 = vmul.f32 %v3607, %v3229
    %v3611 = vmul.f32 %v3608, %v3230
    %v3612 = vmul.f32 %v3609, %v3231
    %v3613 = vsel %vm2669, %v3610, 0.0
    %3614 = vadd.xlane.f32.xlu0 %v3613
    %v3615 = vpop.xlane.xlu0 %3614
    %v3616 = vsel %vm2669, %v3611, 0.0
    %3617 = vadd.xlane.f32.xlu0 %v3616
    %v3618 = vpop.xlane.xlu0 %3617
    %v3619 = vsel %vm2669, %v3612, 0.0
    %3620 = vadd.xlane.f32.xlu0 %v3619
    %v3621 = vpop.xlane.xlu0 %3620
    %v3622 = vadd.f32 %v3615, %v3618
    %v3623 = vadd.f32 %v3622, %v3621
    %v3624 = vrot.slane %v3623, 4
    %v3625 = vadd.f32 %v3623, %v3624
    %v3626 = vrot.slane %v3625, 2
    %v3627 = vadd.f32 %v3625, %v3626
    %v3628 = vrot.slane %v3627, 1
    %v3629 = vadd.f32 %v3627, %v3628
    %s3630 = sld [smem:[#allocation16 + $0x1]]
    %v3631 = vstv %s3630
    %v3632 = vadd.f32 %v3629, %v3631
    %vm3633 = vcmp.ge.f32.partialorder %v3632, 0.0
    %v3634 = vmul.f32 %v3632, 0.01
    %v3635 = vsel %vm3633, %v3632, %v3634
    %v3636 = vld [vmem:[%s3291] sm:$0xff]
    %v3637 = vld [vmem:[%s3291 + $0x8] sm:$0xff]
    %v3638 = vld [vmem:[%s3291 + $0x10] sm:$0xff]
    %v3639 = vmul.f32 %v3636, %v3229
    %v3640 = vmul.f32 %v3637, %v3230
    %v3641 = vmul.f32 %v3638, %v3231
    %v3642 = vsel %vm2669, %v3639, 0.0
    %3643 = vadd.xlane.f32.xlu0 %v3642
    %v3644 = vpop.xlane.xlu0 %3643
    %v3645 = vsel %vm2669, %v3640, 0.0
    %3646 = vadd.xlane.f32.xlu0 %v3645
    %v3647 = vpop.xlane.xlu0 %3646
    %v3648 = vsel %vm2669, %v3641, 0.0
    %3649 = vadd.xlane.f32.xlu0 %v3648
    %v3650 = vpop.xlane.xlu0 %3649
    %v3651 = vadd.f32 %v3644, %v3647
    %v3652 = vadd.f32 %v3651, %v3650
    %v3653 = vrot.slane %v3652, 4
    %v3654 = vadd.f32 %v3652, %v3653
    %v3655 = vrot.slane %v3654, 2
    %v3656 = vadd.f32 %v3654, %v3655
    %v3657 = vrot.slane %v3656, 1
    %v3658 = vadd.f32 %v3656, %v3657
    %s3659 = sld [smem:[#allocation16 + $0x2]]
    %v3660 = vstv %s3659
    %v3661 = vadd.f32 %v3658, %v3660
    %vm3662 = vcmp.ge.f32.partialorder %v3661, 0.0
    %v3663 = vmul.f32 %v3661, 0.01
    %v3664 = vsel %vm3662, %v3661, %v3663
    %v3665 = vld [vmem:[%s3321] sm:$0xff]
    %v3666 = vld [vmem:[%s3321 + $0x8] sm:$0xff]
    %v3667 = vld [vmem:[%s3321 + $0x10] sm:$0xff]
    %v3668 = vmul.f32 %v3665, %v3229
    %v3669 = vmul.f32 %v3666, %v3230
    %v3670 = vmul.f32 %v3667, %v3231
    %v3671 = vsel %vm2669, %v3668, 0.0
    %3672 = vadd.xlane.f32.xlu0 %v3671
    %v3673 = vpop.xlane.xlu0 %3672
    %v3674 = vsel %vm2669, %v3669, 0.0
    %3675 = vadd.xlane.f32.xlu0 %v3674
    %v3676 = vpop.xlane.xlu0 %3675
    %v3677 = vsel %vm2669, %v3670, 0.0
    %3678 = vadd.xlane.f32.xlu0 %v3677
    %v3679 = vpop.xlane.xlu0 %3678
    %v3680 = vadd.f32 %v3673, %v3676
    %v3681 = vadd.f32 %v3680, %v3679
    %v3682 = vrot.slane %v3681, 4
    %v3683 = vadd.f32 %v3681, %v3682
    %v3684 = vrot.slane %v3683, 2
    %v3685 = vadd.f32 %v3683, %v3684
    %v3686 = vrot.slane %v3685, 1
    %v3687 = vadd.f32 %v3685, %v3686
    %s3688 = sld [smem:[#allocation16 + $0x3]]
    %v3689 = vstv %s3688
    %v3690 = vadd.f32 %v3687, %v3689
    %vm3691 = vcmp.ge.f32.partialorder %v3690, 0.0
    %v3692 = vmul.f32 %v3690, 0.01
    %v3693 = vsel %vm3691, %v3690, %v3692
    %v3694 = vld [vmem:[%s3351] sm:$0xff]
    %v3695 = vld [vmem:[%s3351 + $0x8] sm:$0xff]
    %v3696 = vld [vmem:[%s3351 + $0x10] sm:$0xff]
    %v3697 = vmul.f32 %v3694, %v3229
    %v3698 = vmul.f32 %v3695, %v3230
    %v3699 = vmul.f32 %v3696, %v3231
    %v3700 = vsel %vm2669, %v3697, 0.0
    %3701 = vadd.xlane.f32.xlu0 %v3700
    %v3702 = vpop.xlane.xlu0 %3701
    %v3703 = vsel %vm2669, %v3698, 0.0
    %3704 = vadd.xlane.f32.xlu0 %v3703
    %v3705 = vpop.xlane.xlu0 %3704
    %v3706 = vsel %vm2669, %v3699, 0.0
    %3707 = vadd.xlane.f32.xlu0 %v3706
    %v3708 = vpop.xlane.xlu0 %3707
    %v3709 = vadd.f32 %v3702, %v3705
    %v3710 = vadd.f32 %v3709, %v3708
    %v3711 = vrot.slane %v3710, 4
    %v3712 = vadd.f32 %v3710, %v3711
    %v3713 = vrot.slane %v3712, 2
    %v3714 = vadd.f32 %v3712, %v3713
    %v3715 = vrot.slane %v3714, 1
    %v3716 = vadd.f32 %v3714, %v3715
    %s3717 = sld [smem:[#allocation16 + $0x4]]
    %v3718 = vstv %s3717
    %v3719 = vadd.f32 %v3716, %v3718
    %vm3720 = vcmp.ge.f32.partialorder %v3719, 0.0
    %v3721 = vmul.f32 %v3719, 0.01
    %v3722 = vsel %vm3720, %v3719, %v3721
    %v3723 = vld [vmem:[%s3381] sm:$0xff]
    %v3724 = vld [vmem:[%s3381 + $0x8] sm:$0xff]
    %v3725 = vld [vmem:[%s3381 + $0x10] sm:$0xff]
    %v3726 = vmul.f32 %v3723, %v3229
    %v3727 = vmul.f32 %v3724, %v3230
    %v3728 = vmul.f32 %v3725, %v3231
    %v3729 = vsel %vm2669, %v3726, 0.0
    %3730 = vadd.xlane.f32.xlu0 %v3729
    %v3731 = vpop.xlane.xlu0 %3730
    %v3732 = vsel %vm2669, %v3727, 0.0
    %3733 = vadd.xlane.f32.xlu0 %v3732
    %v3734 = vpop.xlane.xlu0 %3733
    %v3735 = vsel %vm2669, %v3728, 0.0
    %3736 = vadd.xlane.f32.xlu0 %v3735
    %v3737 = vpop.xlane.xlu0 %3736
    %v3738 = vadd.f32 %v3731, %v3734
    %v3739 = vadd.f32 %v3738, %v3737
    %v3740 = vrot.slane %v3739, 4
    %v3741 = vadd.f32 %v3739, %v3740
    %v3742 = vrot.slane %v3741, 2
    %v3743 = vadd.f32 %v3741, %v3742
    %v3744 = vrot.slane %v3743, 1
    %v3745 = vadd.f32 %v3743, %v3744
    %s3746 = sld [smem:[#allocation16 + $0x5]]
    %v3747 = vstv %s3746
    %v3748 = vadd.f32 %v3745, %v3747
    %vm3749 = vcmp.ge.f32.partialorder %v3748, 0.0
    %v3750 = vmul.f32 %v3748, 0.01
    %v3751 = vsel %vm3749, %v3748, %v3750
    %v3752 = vld [vmem:[%s3411] sm:$0xff]
    %v3753 = vld [vmem:[%s3411 + $0x8] sm:$0xff]
    %v3754 = vld [vmem:[%s3411 + $0x10] sm:$0xff]
    %v3755 = vmul.f32 %v3752, %v3229
    %v3756 = vmul.f32 %v3753, %v3230
    %v3757 = vmul.f32 %v3754, %v3231
    %v3758 = vsel %vm2669, %v3755, 0.0
    %3759 = vadd.xlane.f32.xlu0 %v3758
    %v3760 = vpop.xlane.xlu0 %3759
    %v3761 = vsel %vm2669, %v3756, 0.0
    %3762 = vadd.xlane.f32.xlu0 %v3761
    %v3763 = vpop.xlane.xlu0 %3762
    %v3764 = vsel %vm2669, %v3757, 0.0
    %3765 = vadd.xlane.f32.xlu0 %v3764
    %v3766 = vpop.xlane.xlu0 %3765
    %v3767 = vadd.f32 %v3760, %v3763
    %v3768 = vadd.f32 %v3767, %v3766
    %v3769 = vrot.slane %v3768, 4
    %v3770 = vadd.f32 %v3768, %v3769
    %v3771 = vrot.slane %v3770, 2
    %v3772 = vadd.f32 %v3770, %v3771
    %v3773 = vrot.slane %v3772, 1
    %v3774 = vadd.f32 %v3772, %v3773
    %s3775 = sld [smem:[#allocation16 + $0x6]]
    %v3776 = vstv %s3775
    %v3777 = vadd.f32 %v3774, %v3776
    %vm3778 = vcmp.ge.f32.partialorder %v3777, 0.0
    %v3779 = vmul.f32 %v3777, 0.01
    %v3780 = vsel %vm3778, %v3777, %v3779
    %v3781 = vld [vmem:[%s3441] sm:$0xff]
    %v3782 = vld [vmem:[%s3441 + $0x8] sm:$0xff]
    %v3783 = vld [vmem:[%s3441 + $0x10] sm:$0xff]
    %v3784 = vmul.f32 %v3781, %v3229
    %v3785 = vmul.f32 %v3782, %v3230
    %v3786 = vmul.f32 %v3783, %v3231
    %v3787 = vsel %vm2669, %v3784, 0.0
    %3788 = vadd.xlane.f32.xlu0 %v3787
    %v3789 = vpop.xlane.xlu0 %3788
    %v3790 = vsel %vm2669, %v3785, 0.0
    %3791 = vadd.xlane.f32.xlu0 %v3790
    %v3792 = vpop.xlane.xlu0 %3791
    %v3793 = vsel %vm2669, %v3786, 0.0
    %3794 = vadd.xlane.f32.xlu0 %v3793
    %v3795 = vpop.xlane.xlu0 %3794
    %v3796 = vadd.f32 %v3789, %v3792
    %v3797 = vadd.f32 %v3796, %v3795
    %v3798 = vrot.slane %v3797, 4
    %v3799 = vadd.f32 %v3797, %v3798
    %v3800 = vrot.slane %v3799, 2
    %v3801 = vadd.f32 %v3799, %v3800
    %v3802 = vrot.slane %v3801, 1
    %v3803 = vadd.f32 %v3801, %v3802
    %s3804 = sld [smem:[#allocation16 + $0x7]]
    %v3805 = vstv %s3804
    %v3806 = vadd.f32 %v3803, %v3805
    %vm3807 = vcmp.ge.f32.partialorder %v3806, 0.0
    %v3808 = vmul.f32 %v3806, 0.01
    %v3809 = vsel %vm3807, %v3806, %v3808
    %v3810 = vld [vmem:[#allocation18] sm:$0xff]
    %v3811 = vld [vmem:[#allocation18 + $0x8] sm:$0xff]
    %v3812 = vld [vmem:[#allocation18 + $0x10] sm:$0xff]
    %v3813 = vld [vmem:[#allocation17] sm:$0xff]
    %v3814 = vld [vmem:[#allocation17 + $0x8] sm:$0xff]
    %v3815 = vld [vmem:[#allocation17 + $0x10] sm:$0xff]
    %v3816 = vmul.f32 %v3813, %v3606
    %v3817 = vmul.f32 %v3814, %v3606
    %v3818 = vmul.f32 %v3815, %v3606
    %v3819 = vadd.f32 %v3810, %v3816
    %v3820 = vadd.f32 %v3811, %v3817
    %v3821 = vadd.f32 %v3812, %v3818
    %v3822 = vld [vmem:[%s3483] sm:$0xff]
    %v3823 = vld [vmem:[%s3483 + $0x8] sm:$0xff]
    %v3824 = vld [vmem:[%s3483 + $0x10] sm:$0xff]
    %v3825 = vmul.f32 %v3822, %v3635
    %v3826 = vmul.f32 %v3823, %v3635
    %v3827 = vmul.f32 %v3824, %v3635
    %v3828 = vadd.f32 %v3819, %v3825
    %v3829 = vadd.f32 %v3820, %v3826
    %v3830 = vadd.f32 %v3821, %v3827
    %v3831 = vld [vmem:[%s3493] sm:$0xff]
    %v3832 = vld [vmem:[%s3493 + $0x8] sm:$0xff]
    %v3833 = vld [vmem:[%s3493 + $0x10] sm:$0xff]
    %v3834 = vmul.f32 %v3831, %v3664
    %v3835 = vmul.f32 %v3832, %v3664
    %v3836 = vmul.f32 %v3833, %v3664
    %v3837 = vadd.f32 %v3828, %v3834
    %v3838 = vadd.f32 %v3829, %v3835
    %v3839 = vadd.f32 %v3830, %v3836
    %v3840 = vld [vmem:[%s3503] sm:$0xff]
    %v3841 = vld [vmem:[%s3503 + $0x8] sm:$0xff]
    %v3842 = vld [vmem:[%s3503 + $0x10] sm:$0xff]
    %v3843 = vmul.f32 %v3840, %v3693
    %v3844 = vmul.f32 %v3841, %v3693
    %v3845 = vmul.f32 %v3842, %v3693
    %v3846 = vadd.f32 %v3837, %v3843
    %v3847 = vadd.f32 %v3838, %v3844
    %v3848 = vadd.f32 %v3839, %v3845
    %v3849 = vld [vmem:[%s3513] sm:$0xff]
    %v3850 = vld [vmem:[%s3513 + $0x8] sm:$0xff]
    %v3851 = vld [vmem:[%s3513 + $0x10] sm:$0xff]
    %v3852 = vmul.f32 %v3849, %v3722
    %v3853 = vmul.f32 %v3850, %v3722
    %v3854 = vmul.f32 %v3851, %v3722
    %v3855 = vadd.f32 %v3846, %v3852
    %v3856 = vadd.f32 %v3847, %v3853
    %v3857 = vadd.f32 %v3848, %v3854
    %v3858 = vld [vmem:[%s3523] sm:$0xff]
    %v3859 = vld [vmem:[%s3523 + $0x8] sm:$0xff]
    %v3860 = vld [vmem:[%s3523 + $0x10] sm:$0xff]
    %v3861 = vmul.f32 %v3858, %v3751
    %v3862 = vmul.f32 %v3859, %v3751
    %v3863 = vmul.f32 %v3860, %v3751
    %v3864 = vadd.f32 %v3855, %v3861
    %v3865 = vadd.f32 %v3856, %v3862
    %v3866 = vadd.f32 %v3857, %v3863
    %v3867 = vld [vmem:[%s3533] sm:$0xff]
    %v3868 = vld [vmem:[%s3533 + $0x8] sm:$0xff]
    %v3869 = vld [vmem:[%s3533 + $0x10] sm:$0xff]
    %v3870 = vmul.f32 %v3867, %v3780
    %v3871 = vmul.f32 %v3868, %v3780
    %v3872 = vmul.f32 %v3869, %v3780
    %v3873 = vadd.f32 %v3864, %v3870
    %v3874 = vadd.f32 %v3865, %v3871
    %v3875 = vadd.f32 %v3866, %v3872
    %v3876 = vld [vmem:[%s3543] sm:$0xff]
    %v3877 = vld [vmem:[%s3543 + $0x8] sm:$0xff]
    %v3878 = vld [vmem:[%s3543 + $0x10] sm:$0xff]
    %v3879 = vmul.f32 %v3876, %v3809
    %v3880 = vmul.f32 %v3877, %v3809
    %v3881 = vmul.f32 %v3878, %v3809
    %v3882 = vadd.f32 %v3873, %v3879
    %v3883 = vadd.f32 %v3874, %v3880
    %v3884 = vadd.f32 %v3875, %v3881
    %vm3885 = vcmp.ge.f32.partialorder %v3882, 0.0
    %vm3886 = vcmp.ge.f32.partialorder %v3883, 0.0
    %vm3887 = vcmp.ge.f32.partialorder %v3884, 0.0
    %v3888 = vmul.f32 %v3882, 0.01
    %v3889 = vmul.f32 %v3883, 0.01
    %v3890 = vmul.f32 %v3884, 0.01
    %v3891 = vsel %vm3885, %v3882, %v3888
    %v3892 = vsel %vm3886, %v3883, %v3889
    %v3893 = vsel %vm3887, %v3884, %v3890
    %3897 = vrot.lane.b32.xlu0 %v3891, 2
    %v3898 = vpop.permute.xlu0 %3897
    %3899 = vrot.lane.b32.xlu0 %v3892, 2
    %v3900 = vpop.permute.xlu0 %3899
    %3901 = vrot.lane.b32.xlu0 %v3893, 2
    %v3902 = vpop.permute.xlu0 %3901
    %s3906 = scalar_lea.vmem [#allocation3], 32
    %3907 = vst.msk [vmem:[%s3906 + $0x2] sm:$0xff] %vm3574, %v3898
    %3908 = vst.msk [vmem:[%s3906 + $0xa] sm:$0xff] %vm3574, %v3900
    %3909 = vst.msk [vmem:[%s3906 + $0x12] sm:$0xff] %vm3574, %v3902
    %v3910 = vld [vmem:[#allocation3] sm:$0xff]
    %v3911 = vld [vmem:[#allocation3 + $0x8] sm:$0xff]
    %v3912 = vld [vmem:[#allocation3 + $0x10] sm:$0xff]
    %v3913 = vld [vmem:[#allocation3 + $0x18] sm:$0x3]
    %v3914 = vld [vmem:[#allocation20] sm:$0xff]
    %v3915 = vld [vmem:[#allocation20 + $0x8] sm:$0xff]
    %v3916 = vld [vmem:[#allocation20 + $0x10] sm:$0xff]
    %v3917 = vld [vmem:[#allocation20 + $0x18] sm:$0xff]
    %v3918 = vld [vmem:[#allocation20 + $0x20] sm:$0xff]
    %v3919 = vld [vmem:[#allocation20 + $0x28] sm:$0xff]
    %v3920 = vld [vmem:[#allocation20 + $0x30] sm:$0xff]
    %v3921 = vld [vmem:[#allocation20 + $0x38] sm:$0xff]
    %v3922 = vld [vmem:[#allocation20 + $0x40] sm:$0xff]
    %v3923 = vld [vmem:[#allocation20 + $0x48] sm:$0xff]
    %v3924 = vld [vmem:[#allocation20 + $0x50] sm:$0xff]
    %v3925 = vld [vmem:[#allocation20 + $0x58] sm:$0xff]
    %v3926 = vld [vmem:[#allocation20 + $0x60] sm:$0xf]
    %v3927 = vld [vmem:[#allocation20 + $0x68] sm:$0xf]
    %v3928 = vld [vmem:[#allocation20 + $0x70] sm:$0xf]
    %v3929 = vld [vmem:[#allocation20 + $0x78] sm:$0xf]
    %v3930 = vld [vmem:[#allocation3 + $0x1] sm:$0xff]
    %v3931 = vld [vmem:[#allocation3 + $0x9] sm:$0xff]
    %v3932 = vld [vmem:[#allocation3 + $0x11] sm:$0xff]
    %v3933 = vld [vmem:[#allocation3 + $0x19] sm:$0x3]
    %s3934 = scalar_lea.vmem [#allocation20], 128
    %v3935 = vld [vmem:[%s3934] sm:$0xff]
    %v3936 = vld [vmem:[%s3934 + $0x8] sm:$0xff]
    %v3937 = vld [vmem:[%s3934 + $0x10] sm:$0xff]
    %v3938 = vld [vmem:[%s3934 + $0x18] sm:$0xff]
    %v3939 = vld [vmem:[%s3934 + $0x20] sm:$0xff]
    %v3940 = vld [vmem:[%s3934 + $0x28] sm:$0xff]
    %v3941 = vld [vmem:[%s3934 + $0x30] sm:$0xff]
    %v3942 = vld [vmem:[%s3934 + $0x38] sm:$0xff]
    %v3943 = vld [vmem:[%s3934 + $0x40] sm:$0xff]
    %v3944 = vld [vmem:[%s3934 + $0x48] sm:$0xff]
    %v3945 = vld [vmem:[%s3934 + $0x50] sm:$0xff]
    %v3946 = vld [vmem:[%s3934 + $0x58] sm:$0xff]
    %v3947 = vld [vmem:[%s3934 + $0x60] sm:$0xf]
    %v3948 = vld [vmem:[%s3934 + $0x68] sm:$0xf]
    %v3949 = vld [vmem:[%s3934 + $0x70] sm:$0xf]
    %v3950 = vld [vmem:[%s3934 + $0x78] sm:$0xf]
    %v3952 = vsel %vm198, %v3930, 0
    %v3955 = vsel %vm198, %v3931, 0
    %v3958 = vsel %vm198, %v3932, 0
    %v3961 = vsel %vm198, %v3933, 0
    %v3964 = vsel %vm365, %v3947, 0
    %v3967 = vsel %vm365, %v3948, 0
    %v3970 = vsel %vm365, %v3949, 0
    %v3973 = vsel %vm365, %v3950, 0
    %3975 = vmatpush.msra.mxu0 0.0
    %3976 = vmatpush.msra.mxu0 0.0
    %3977 = vmatpush.msra.mxu0 0.0
    %3978 = vmatpush.msra.mxu0 0.0
    %3979 = vmatpush.msra.mxu0 0.0
    %3980 = vmatpush.msra.mxu0 0.0
    %3981 = vmatpush.msra.mxu0 0.0
    %3982 = vmatpush.msra.mxu0 0.0
    %3983 = vmatpush.msra.mxu0 0.0
    %3984 = vmatpush.msra.mxu0 0.0
    %3985 = vmatpush.msra.mxu0 0.0
    %3986 = vmatpush.msra.mxu0 0.0
    %3987 = vmatpush.msra.mxu0 %v3964
    %3988 = vmatpush.msra.mxu0 %v3943
    %3989 = vmatpush.msra.mxu0 %v3939
    %3990 = vmatpush.msra.mxu0 %v3935
    %3991 = vmatmul.f32.gmra.mxu0 %v3952
    %v3992 = vpop.f32.mrf.mxu0
    %v3993 = vadd.f32 0.0, %v3992
    %3994 = vmatmul.f32.gmra.mxu0 %v3955
    %v3995 = vpop.f32.mrf.mxu0
    %v3996 = vadd.f32 0.0, %v3995
    %3997 = vmatmul.f32.gmra.mxu0 %v3958
    %v3998 = vpop.f32.mrf.mxu0
    %v3999 = vadd.f32 0.0, %v3998
    %4000 = vmatmul.f32.gmra.mxu0 %v3961
    %v4001 = vpop.f32.mrf.mxu0
    %v4002 = vadd.f32 0.0, %v4001
    %4003 = vdwg.mxu0
    %4004 = vmatpush.msra.mxu0 0.0
    %4005 = vmatpush.msra.mxu0 0.0
    %4006 = vmatpush.msra.mxu0 0.0
    %4007 = vmatpush.msra.mxu0 0.0
    %4008 = vmatpush.msra.mxu0 0.0
    %4009 = vmatpush.msra.mxu0 0.0
    %4010 = vmatpush.msra.mxu0 0.0
    %4011 = vmatpush.msra.mxu0 0.0
    %4012 = vmatpush.msra.mxu0 0.0
    %4013 = vmatpush.msra.mxu0 0.0
    %4014 = vmatpush.msra.mxu0 0.0
    %4015 = vmatpush.msra.mxu0 0.0
    %4016 = vmatpush.msra.mxu0 %v3967
    %4017 = vmatpush.msra.mxu0 %v3944
    %4018 = vmatpush.msra.mxu0 %v3940
    %4019 = vmatpush.msra.mxu0 %v3936
    %4020 = vmatmul.f32.gmra.mxu0 %v3952
    %v4021 = vpop.f32.mrf.mxu0
    %v4022 = vadd.f32 0.0, %v4021
    %4023 = vmatmul.f32.gmra.mxu0 %v3955
    %v4024 = vpop.f32.mrf.mxu0
    %v4025 = vadd.f32 0.0, %v4024
    %4026 = vmatmul.f32.gmra.mxu0 %v3958
    %v4027 = vpop.f32.mrf.mxu0
    %v4028 = vadd.f32 0.0, %v4027
    %4029 = vmatmul.f32.gmra.mxu0 %v3961
    %v4030 = vpop.f32.mrf.mxu0
    %v4031 = vadd.f32 0.0, %v4030
    %4032 = vdwg.mxu0
    %4033 = vmatpush.msra.mxu0 0.0
    %4034 = vmatpush.msra.mxu0 0.0
    %4035 = vmatpush.msra.mxu0 0.0
    %4036 = vmatpush.msra.mxu0 0.0
    %4037 = vmatpush.msra.mxu0 0.0
    %4038 = vmatpush.msra.mxu0 0.0
    %4039 = vmatpush.msra.mxu0 0.0
    %4040 = vmatpush.msra.mxu0 0.0
    %4041 = vmatpush.msra.mxu0 0.0
    %4042 = vmatpush.msra.mxu0 0.0
    %4043 = vmatpush.msra.mxu0 0.0
    %4044 = vmatpush.msra.mxu0 0.0
    %4045 = vmatpush.msra.mxu0 %v3970
    %4046 = vmatpush.msra.mxu0 %v3945
    %4047 = vmatpush.msra.mxu0 %v3941
    %4048 = vmatpush.msra.mxu0 %v3937
    %4049 = vmatmul.f32.gmra.mxu0 %v3952
    %v4050 = vpop.f32.mrf.mxu0
    %v4051 = vadd.f32 0.0, %v4050
    %4052 = vmatmul.f32.gmra.mxu0 %v3955
    %v4053 = vpop.f32.mrf.mxu0
    %v4054 = vadd.f32 0.0, %v4053
    %4055 = vmatmul.f32.gmra.mxu0 %v3958
    %v4056 = vpop.f32.mrf.mxu0
    %v4057 = vadd.f32 0.0, %v4056
    %4058 = vmatmul.f32.gmra.mxu0 %v3961
    %v4059 = vpop.f32.mrf.mxu0
    %v4060 = vadd.f32 0.0, %v4059
    %4061 = vdwg.mxu0
    %4062 = vmatpush.msra.mxu0 0.0
    %4063 = vmatpush.msra.mxu0 0.0
    %4064 = vmatpush.msra.mxu0 0.0
    %4065 = vmatpush.msra.mxu0 0.0
    %4066 = vmatpush.msra.mxu0 0.0
    %4067 = vmatpush.msra.mxu0 0.0
    %4068 = vmatpush.msra.mxu0 0.0
    %4069 = vmatpush.msra.mxu0 0.0
    %4070 = vmatpush.msra.mxu0 0.0
    %4071 = vmatpush.msra.mxu0 0.0
    %4072 = vmatpush.msra.mxu0 0.0
    %4073 = vmatpush.msra.mxu0 0.0
    %4074 = vmatpush.msra.mxu0 %v3973
    %4075 = vmatpush.msra.mxu0 %v3946
    %4076 = vmatpush.msra.mxu0 %v3942
    %4077 = vmatpush.msra.mxu0 %v3938
    %4078 = vmatmul.f32.gmra.mxu0 %v3952
    %v4079 = vpop.f32.mrf.mxu0
    %v4080 = vadd.f32 0.0, %v4079
    %4081 = vmatmul.f32.gmra.mxu0 %v3955
    %v4082 = vpop.f32.mrf.mxu0
    %v4083 = vadd.f32 0.0, %v4082
    %4084 = vmatmul.f32.gmra.mxu0 %v3958
    %v4085 = vpop.f32.mrf.mxu0
    %v4086 = vadd.f32 0.0, %v4085
    %4087 = vmatmul.f32.gmra.mxu0 %v3961
    %v4088 = vpop.f32.mrf.mxu0
    %v4089 = vadd.f32 0.0, %v4088
    %4090 = vdwg.mxu0
    %v4092 = vsel %vm198, %v3910, 0
    %v4095 = vsel %vm198, %v3911, 0
    %v4098 = vsel %vm198, %v3912, 0
    %v4101 = vsel %vm198, %v3913, 0
    %v4104 = vsel %vm365, %v3926, 0
    %v4107 = vsel %vm365, %v3927, 0
    %v4110 = vsel %vm365, %v3928, 0
    %v4113 = vsel %vm365, %v3929, 0
    %4115 = vmatpush.msra.mxu0 0.0
    %4116 = vmatpush.msra.mxu0 0.0
    %4117 = vmatpush.msra.mxu0 0.0
    %4118 = vmatpush.msra.mxu0 0.0
    %4119 = vmatpush.msra.mxu0 0.0
    %4120 = vmatpush.msra.mxu0 0.0
    %4121 = vmatpush.msra.mxu0 0.0
    %4122 = vmatpush.msra.mxu0 0.0
    %4123 = vmatpush.msra.mxu0 0.0
    %4124 = vmatpush.msra.mxu0 0.0
    %4125 = vmatpush.msra.mxu0 0.0
    %4126 = vmatpush.msra.mxu0 0.0
    %4127 = vmatpush.msra.mxu0 %v4104
    %4128 = vmatpush.msra.mxu0 %v3922
    %4129 = vmatpush.msra.mxu0 %v3918
    %4130 = vmatpush.msra.mxu0 %v3914
    %4131 = vmatmul.f32.gmra.mxu0 %v4092
    %v4132 = vpop.f32.mrf.mxu0
    %v4133 = vadd.f32 %v3993, %v4132
    %4134 = vmatmul.f32.gmra.mxu0 %v4095
    %v4135 = vpop.f32.mrf.mxu0
    %v4136 = vadd.f32 %v3996, %v4135
    %4137 = vmatmul.f32.gmra.mxu0 %v4098
    %v4138 = vpop.f32.mrf.mxu0
    %v4139 = vadd.f32 %v3999, %v4138
    %4140 = vmatmul.f32.gmra.mxu0 %v4101
    %v4141 = vpop.f32.mrf.mxu0
    %v4142 = vadd.f32 %v4002, %v4141
    %4143 = vdwg.mxu0
    %4144 = vmatpush.msra.mxu0 0.0
    %4145 = vmatpush.msra.mxu0 0.0
    %4146 = vmatpush.msra.mxu0 0.0
    %4147 = vmatpush.msra.mxu0 0.0
    %4148 = vmatpush.msra.mxu0 0.0
    %4149 = vmatpush.msra.mxu0 0.0
    %4150 = vmatpush.msra.mxu0 0.0
    %4151 = vmatpush.msra.mxu0 0.0
    %4152 = vmatpush.msra.mxu0 0.0
    %4153 = vmatpush.msra.mxu0 0.0
    %4154 = vmatpush.msra.mxu0 0.0
    %4155 = vmatpush.msra.mxu0 0.0
    %4156 = vmatpush.msra.mxu0 %v4107
    %4157 = vmatpush.msra.mxu0 %v3923
    %4158 = vmatpush.msra.mxu0 %v3919
    %4159 = vmatpush.msra.mxu0 %v3915
    %4160 = vmatmul.f32.gmra.mxu0 %v4092
    %v4161 = vpop.f32.mrf.mxu0
    %v4162 = vadd.f32 %v4022, %v4161
    %4163 = vmatmul.f32.gmra.mxu0 %v4095
    %v4164 = vpop.f32.mrf.mxu0
    %v4165 = vadd.f32 %v4025, %v4164
    %4166 = vmatmul.f32.gmra.mxu0 %v4098
    %v4167 = vpop.f32.mrf.mxu0
    %v4168 = vadd.f32 %v4028, %v4167
    %4169 = vmatmul.f32.gmra.mxu0 %v4101
    %v4170 = vpop.f32.mrf.mxu0
    %v4171 = vadd.f32 %v4031, %v4170
    %4172 = vdwg.mxu0
    %4173 = vmatpush.msra.mxu0 0.0
    %4174 = vmatpush.msra.mxu0 0.0
    %4175 = vmatpush.msra.mxu0 0.0
    %4176 = vmatpush.msra.mxu0 0.0
    %4177 = vmatpush.msra.mxu0 0.0
    %4178 = vmatpush.msra.mxu0 0.0
    %4179 = vmatpush.msra.mxu0 0.0
    %4180 = vmatpush.msra.mxu0 0.0
    %4181 = vmatpush.msra.mxu0 0.0
    %4182 = vmatpush.msra.mxu0 0.0
    %4183 = vmatpush.msra.mxu0 0.0
    %4184 = vmatpush.msra.mxu0 0.0
    %4185 = vmatpush.msra.mxu0 %v4110
    %4186 = vmatpush.msra.mxu0 %v3924
    %4187 = vmatpush.msra.mxu0 %v3920
    %4188 = vmatpush.msra.mxu0 %v3916
    %4189 = vmatmul.f32.gmra.mxu0 %v4092
    %v4190 = vpop.f32.mrf.mxu0
    %v4191 = vadd.f32 %v4051, %v4190
    %4192 = vmatmul.f32.gmra.mxu0 %v4095
    %v4193 = vpop.f32.mrf.mxu0
    %v4194 = vadd.f32 %v4054, %v4193
    %4195 = vmatmul.f32.gmra.mxu0 %v4098
    %v4196 = vpop.f32.mrf.mxu0
    %v4197 = vadd.f32 %v4057, %v4196
    %4198 = vmatmul.f32.gmra.mxu0 %v4101
    %v4199 = vpop.f32.mrf.mxu0
    %v4200 = vadd.f32 %v4060, %v4199
    %4201 = vdwg.mxu0
    %4202 = vmatpush.msra.mxu0 0.0
    %4203 = vmatpush.msra.mxu0 0.0
    %4204 = vmatpush.msra.mxu0 0.0
    %4205 = vmatpush.msra.mxu0 0.0
    %4206 = vmatpush.msra.mxu0 0.0
    %4207 = vmatpush.msra.mxu0 0.0
    %4208 = vmatpush.msra.mxu0 0.0
    %4209 = vmatpush.msra.mxu0 0.0
    %4210 = vmatpush.msra.mxu0 0.0
    %4211 = vmatpush.msra.mxu0 0.0
    %4212 = vmatpush.msra.mxu0 0.0
    %4213 = vmatpush.msra.mxu0 0.0
    %4214 = vmatpush.msra.mxu0 %v4113
    %4215 = vmatpush.msra.mxu0 %v3925
    %4216 = vmatpush.msra.mxu0 %v3921
    %4217 = vmatpush.msra.mxu0 %v3917
    %4218 = vmatmul.f32.gmra.mxu0 %v4092
    %v4219 = vpop.f32.mrf.mxu0
    %v4220 = vadd.f32 %v4080, %v4219
    %4221 = vmatmul.f32.gmra.mxu0 %v4095
    %v4222 = vpop.f32.mrf.mxu0
    %v4223 = vadd.f32 %v4083, %v4222
    %4224 = vmatmul.f32.gmra.mxu0 %v4098
    %v4225 = vpop.f32.mrf.mxu0
    %v4226 = vadd.f32 %v4086, %v4225
    %4227 = vmatmul.f32.gmra.mxu0 %v4101
    %v4228 = vpop.f32.mrf.mxu0
    %v4229 = vadd.f32 %v4089, %v4228
    %4230 = vdwg.mxu0
    %v4231 = vld [vmem:[#allocation3 + $0x2] sm:$0xff]
    %v4232 = vld [vmem:[#allocation3 + $0xa] sm:$0xff]
    %v4233 = vld [vmem:[#allocation3 + $0x12] sm:$0xff]
    %v4234 = vld [vmem:[#allocation3 + $0x1a] sm:$0x3]
    %s4235 = scalar_lea.vmem [#allocation20], 256
    %v4236 = vld [vmem:[%s4235] sm:$0xff]
    %v4237 = vld [vmem:[%s4235 + $0x8] sm:$0xff]
    %v4238 = vld [vmem:[%s4235 + $0x10] sm:$0xff]
    %v4239 = vld [vmem:[%s4235 + $0x18] sm:$0xff]
    %v4240 = vld [vmem:[%s4235 + $0x20] sm:$0xff]
    %v4241 = vld [vmem:[%s4235 + $0x28] sm:$0xff]
    %v4242 = vld [vmem:[%s4235 + $0x30] sm:$0xff]
    %v4243 = vld [vmem:[%s4235 + $0x38] sm:$0xff]
    %v4244 = vld [vmem:[%s4235 + $0x40] sm:$0xff]
    %v4245 = vld [vmem:[%s4235 + $0x48] sm:$0xff]
    %v4246 = vld [vmem:[%s4235 + $0x50] sm:$0xff]
    %v4247 = vld [vmem:[%s4235 + $0x58] sm:$0xff]
    %v4248 = vld [vmem:[%s4235 + $0x60] sm:$0xf]
    %v4249 = vld [vmem:[%s4235 + $0x68] sm:$0xf]
    %v4250 = vld [vmem:[%s4235 + $0x70] sm:$0xf]
    %v4251 = vld [vmem:[%s4235 + $0x78] sm:$0xf]
    %v4253 = vsel %vm198, %v4231, 0
    %v4256 = vsel %vm198, %v4232, 0
    %v4259 = vsel %vm198, %v4233, 0
    %v4262 = vsel %vm198, %v4234, 0
    %v4265 = vsel %vm365, %v4248, 0
    %v4268 = vsel %vm365, %v4249, 0
    %v4271 = vsel %vm365, %v4250, 0
    %v4274 = vsel %vm365, %v4251, 0
    %4276 = vmatpush.msra.mxu0 0.0
    %4277 = vmatpush.msra.mxu0 0.0
    %4278 = vmatpush.msra.mxu0 0.0
    %4279 = vmatpush.msra.mxu0 0.0
    %4280 = vmatpush.msra.mxu0 0.0
    %4281 = vmatpush.msra.mxu0 0.0
    %4282 = vmatpush.msra.mxu0 0.0
    %4283 = vmatpush.msra.mxu0 0.0
    %4284 = vmatpush.msra.mxu0 0.0
    %4285 = vmatpush.msra.mxu0 0.0
    %4286 = vmatpush.msra.mxu0 0.0
    %4287 = vmatpush.msra.mxu0 0.0
    %4288 = vmatpush.msra.mxu0 %v4265
    %4289 = vmatpush.msra.mxu0 %v4244
    %4290 = vmatpush.msra.mxu0 %v4240
    %4291 = vmatpush.msra.mxu0 %v4236
    %4292 = vmatmul.f32.gmra.mxu0 %v4253
    %v4293 = vpop.f32.mrf.mxu0
    %v4294 = vadd.f32 0.0, %v4293
    %4295 = vmatmul.f32.gmra.mxu0 %v4256
    %v4296 = vpop.f32.mrf.mxu0
    %v4297 = vadd.f32 0.0, %v4296
    %4298 = vmatmul.f32.gmra.mxu0 %v4259
    %v4299 = vpop.f32.mrf.mxu0
    %v4300 = vadd.f32 0.0, %v4299
    %4301 = vmatmul.f32.gmra.mxu0 %v4262
    %v4302 = vpop.f32.mrf.mxu0
    %v4303 = vadd.f32 0.0, %v4302
    %4304 = vdwg.mxu0
    %4305 = vmatpush.msra.mxu0 0.0
    %4306 = vmatpush.msra.mxu0 0.0
    %4307 = vmatpush.msra.mxu0 0.0
    %4308 = vmatpush.msra.mxu0 0.0
    %4309 = vmatpush.msra.mxu0 0.0
    %4310 = vmatpush.msra.mxu0 0.0
    %4311 = vmatpush.msra.mxu0 0.0
    %4312 = vmatpush.msra.mxu0 0.0
    %4313 = vmatpush.msra.mxu0 0.0
    %4314 = vmatpush.msra.mxu0 0.0
    %4315 = vmatpush.msra.mxu0 0.0
    %4316 = vmatpush.msra.mxu0 0.0
    %4317 = vmatpush.msra.mxu0 %v4268
    %4318 = vmatpush.msra.mxu0 %v4245
    %4319 = vmatpush.msra.mxu0 %v4241
    %4320 = vmatpush.msra.mxu0 %v4237
    %4321 = vmatmul.f32.gmra.mxu0 %v4253
    %v4322 = vpop.f32.mrf.mxu0
    %v4323 = vadd.f32 0.0, %v4322
    %4324 = vmatmul.f32.gmra.mxu0 %v4256
    %v4325 = vpop.f32.mrf.mxu0
    %v4326 = vadd.f32 0.0, %v4325
    %4327 = vmatmul.f32.gmra.mxu0 %v4259
    %v4328 = vpop.f32.mrf.mxu0
    %v4329 = vadd.f32 0.0, %v4328
    %4330 = vmatmul.f32.gmra.mxu0 %v4262
    %v4331 = vpop.f32.mrf.mxu0
    %v4332 = vadd.f32 0.0, %v4331
    %4333 = vdwg.mxu0
    %4334 = vmatpush.msra.mxu0 0.0
    %4335 = vmatpush.msra.mxu0 0.0
    %4336 = vmatpush.msra.mxu0 0.0
    %4337 = vmatpush.msra.mxu0 0.0
    %4338 = vmatpush.msra.mxu0 0.0
    %4339 = vmatpush.msra.mxu0 0.0
    %4340 = vmatpush.msra.mxu0 0.0
    %4341 = vmatpush.msra.mxu0 0.0
    %4342 = vmatpush.msra.mxu0 0.0
    %4343 = vmatpush.msra.mxu0 0.0
    %4344 = vmatpush.msra.mxu0 0.0
    %4345 = vmatpush.msra.mxu0 0.0
    %4346 = vmatpush.msra.mxu0 %v4271
    %4347 = vmatpush.msra.mxu0 %v4246
    %4348 = vmatpush.msra.mxu0 %v4242
    %4349 = vmatpush.msra.mxu0 %v4238
    %4350 = vmatmul.f32.gmra.mxu0 %v4253
    %v4351 = vpop.f32.mrf.mxu0
    %v4352 = vadd.f32 0.0, %v4351
    %4353 = vmatmul.f32.gmra.mxu0 %v4256
    %v4354 = vpop.f32.mrf.mxu0
    %v4355 = vadd.f32 0.0, %v4354
    %4356 = vmatmul.f32.gmra.mxu0 %v4259
    %v4357 = vpop.f32.mrf.mxu0
    %v4358 = vadd.f32 0.0, %v4357
    %4359 = vmatmul.f32.gmra.mxu0 %v4262
    %v4360 = vpop.f32.mrf.mxu0
    %v4361 = vadd.f32 0.0, %v4360
    %4362 = vdwg.mxu0
    %4363 = vmatpush.msra.mxu0 0.0
    %4364 = vmatpush.msra.mxu0 0.0
    %4365 = vmatpush.msra.mxu0 0.0
    %4366 = vmatpush.msra.mxu0 0.0
    %4367 = vmatpush.msra.mxu0 0.0
    %4368 = vmatpush.msra.mxu0 0.0
    %4369 = vmatpush.msra.mxu0 0.0
    %4370 = vmatpush.msra.mxu0 0.0
    %4371 = vmatpush.msra.mxu0 0.0
    %4372 = vmatpush.msra.mxu0 0.0
    %4373 = vmatpush.msra.mxu0 0.0
    %4374 = vmatpush.msra.mxu0 0.0
    %4375 = vmatpush.msra.mxu0 %v4274
    %4376 = vmatpush.msra.mxu0 %v4247
    %4377 = vmatpush.msra.mxu0 %v4243
    %4378 = vmatpush.msra.mxu0 %v4239
    %4379 = vmatmul.f32.gmra.mxu0 %v4253
    %v4380 = vpop.f32.mrf.mxu0
    %v4381 = vadd.f32 0.0, %v4380
    %4382 = vmatmul.f32.gmra.mxu0 %v4256
    %v4383 = vpop.f32.mrf.mxu0
    %v4384 = vadd.f32 0.0, %v4383
    %4385 = vmatmul.f32.gmra.mxu0 %v4259
    %v4386 = vpop.f32.mrf.mxu0
    %v4387 = vadd.f32 0.0, %v4386
    %4388 = vmatmul.f32.gmra.mxu0 %v4262
    %v4389 = vpop.f32.mrf.mxu0
    %v4390 = vadd.f32 0.0, %v4389
    %4391 = vdwg.mxu0
    %v4392 = vadd.f32 %v4133, %v4294
    %v4393 = vadd.f32 %v4162, %v4323
    %v4394 = vadd.f32 %v4191, %v4352
    %v4395 = vadd.f32 %v4220, %v4381
    %v4396 = vadd.f32 %v4136, %v4297
    %v4397 = vadd.f32 %v4165, %v4326
    %v4398 = vadd.f32 %v4194, %v4355
    %v4399 = vadd.f32 %v4223, %v4384
    %v4400 = vadd.f32 %v4139, %v4300
    %v4401 = vadd.f32 %v4168, %v4329
    %v4402 = vadd.f32 %v4197, %v4358
    %v4403 = vadd.f32 %v4226, %v4387
    %v4404 = vadd.f32 %v4142, %v4303
    %v4405 = vadd.f32 %v4171, %v4332
    %v4406 = vadd.f32 %v4200, %v4361
    %v4407 = vadd.f32 %v4229, %v4390
    %v4408 = vld [vmem:[#allocation21] sm:$0xf]
    %v4410 = vperm.slane %v4408, 0
    %v4411 = vperm.slane %v4408, 1
    %v4412 = vperm.slane %v4408, 2
    %v4413 = vperm.slane %v4408, 3
    %v4418 = vadd.f32 %v4392, %v4410
    %v4419 = vadd.f32 %v4393, %v4411
    %v4420 = vadd.f32 %v4394, %v4412
    %v4421 = vadd.f32 %v4395, %v4413
    %v4422 = vadd.f32 %v4396, %v4410
    %v4423 = vadd.f32 %v4397, %v4411
    %v4424 = vadd.f32 %v4398, %v4412
    %v4425 = vadd.f32 %v4399, %v4413
    %v4426 = vadd.f32 %v4400, %v4410
    %v4427 = vadd.f32 %v4401, %v4411
    %v4428 = vadd.f32 %v4402, %v4412
    %v4429 = vadd.f32 %v4403, %v4413
    %v4430 = vadd.f32 %v4404, %v4410
    %v4431 = vadd.f32 %v4405, %v4411
    %v4432 = vadd.f32 %v4406, %v4412
    %v4433 = vadd.f32 %v4407, %v4413
    %4434 = vmatpush.msra.mxu0 %v255
    %4435 = vmatpush.msra.mxu0 %v254
    %4436 = vmatpush.msra.mxu0 %v253
    %4437 = vmatpush.msra.mxu0 %v252
    %4438 = vmatpush.msra.mxu0 %v251
    %4439 = vmatpush.msra.mxu0 %v250
    %4440 = vmatpush.msra.mxu0 %v249
    %4441 = vmatpush.msra.mxu0 %v248
    %4442 = vmatpush.msra.mxu0 %v247
    %4443 = vmatpush.msra.mxu0 %v246
    %4444 = vmatpush.msra.mxu0 %v245
    %4445 = vmatpush.msra.mxu0 %v244
    %4446 = vmatpush.msra.mxu0 %v243
    %4447 = vmatpush.msra.mxu0 %v242
    %4448 = vmatpush.msra.mxu0 %v241
    %4449 = vmatpush.msra.mxu0 %v240
    %4450 = vmatmul.f32.gmra.mxu0 %v4418
    %v4451 = vpop.f32.mrf.mxu0
    %v4452 = vadd.f32 0.0, %v4451
    %4453 = vmatmul.f32.gmra.mxu0 %v4422
    %v4454 = vpop.f32.mrf.mxu0
    %v4455 = vadd.f32 0.0, %v4454
    %4456 = vmatmul.f32.gmra.mxu0 %v4426
    %v4457 = vpop.f32.mrf.mxu0
    %v4458 = vadd.f32 0.0, %v4457
    %4459 = vmatmul.f32.gmra.mxu0 %v4430
    %v4460 = vpop.f32.mrf.mxu0
    %v4461 = vadd.f32 0.0, %v4460
    %4462 = vdwg.mxu0
    %4463 = vmatpush.msra.mxu0 %v271
    %4464 = vmatpush.msra.mxu0 %v270
    %4465 = vmatpush.msra.mxu0 %v269
    %4466 = vmatpush.msra.mxu0 %v268
    %4467 = vmatpush.msra.mxu0 %v267
    %4468 = vmatpush.msra.mxu0 %v266
    %4469 = vmatpush.msra.mxu0 %v265
    %4470 = vmatpush.msra.mxu0 %v264
    %4471 = vmatpush.msra.mxu0 %v263
    %4472 = vmatpush.msra.mxu0 %v262
    %4473 = vmatpush.msra.mxu0 %v261
    %4474 = vmatpush.msra.mxu0 %v260
    %4475 = vmatpush.msra.mxu0 %v259
    %4476 = vmatpush.msra.mxu0 %v258
    %4477 = vmatpush.msra.mxu0 %v257
    %4478 = vmatpush.msra.mxu0 %v256
    %4479 = vmatmul.f32.gmra.mxu0 %v4419
    %v4480 = vpop.f32.mrf.mxu0
    %v4481 = vadd.f32 %v4452, %v4480
    %4482 = vmatmul.f32.gmra.mxu0 %v4423
    %v4483 = vpop.f32.mrf.mxu0
    %v4484 = vadd.f32 %v4455, %v4483
    %4485 = vmatmul.f32.gmra.mxu0 %v4427
    %v4486 = vpop.f32.mrf.mxu0
    %v4487 = vadd.f32 %v4458, %v4486
    %4488 = vmatmul.f32.gmra.mxu0 %v4431
    %v4489 = vpop.f32.mrf.mxu0
    %v4490 = vadd.f32 %v4461, %v4489
    %4491 = vdwg.mxu0
    %4492 = vmatpush.msra.mxu0 %v287
    %4493 = vmatpush.msra.mxu0 %v286
    %4494 = vmatpush.msra.mxu0 %v285
    %4495 = vmatpush.msra.mxu0 %v284
    %4496 = vmatpush.msra.mxu0 %v283
    %4497 = vmatpush.msra.mxu0 %v282
    %4498 = vmatpush.msra.mxu0 %v281
    %4499 = vmatpush.msra.mxu0 %v280
    %4500 = vmatpush.msra.mxu0 %v279
    %4501 = vmatpush.msra.mxu0 %v278
    %4502 = vmatpush.msra.mxu0 %v277
    %4503 = vmatpush.msra.mxu0 %v276
    %4504 = vmatpush.msra.mxu0 %v275
    %4505 = vmatpush.msra.mxu0 %v274
    %4506 = vmatpush.msra.mxu0 %v273
    %4507 = vmatpush.msra.mxu0 %v272
    %4508 = vmatmul.f32.gmra.mxu0 %v4420
    %v4509 = vpop.f32.mrf.mxu0
    %v4510 = vadd.f32 %v4481, %v4509
    %4511 = vmatmul.f32.gmra.mxu0 %v4424
    %v4512 = vpop.f32.mrf.mxu0
    %v4513 = vadd.f32 %v4484, %v4512
    %4514 = vmatmul.f32.gmra.mxu0 %v4428
    %v4515 = vpop.f32.mrf.mxu0
    %v4516 = vadd.f32 %v4487, %v4515
    %4517 = vmatmul.f32.gmra.mxu0 %v4432
    %v4518 = vpop.f32.mrf.mxu0
    %v4519 = vadd.f32 %v4490, %v4518
    %4520 = vdwg.mxu0
    %4521 = vmatpush.msra.mxu0 %v303
    %4522 = vmatpush.msra.mxu0 %v302
    %4523 = vmatpush.msra.mxu0 %v301
    %4524 = vmatpush.msra.mxu0 %v300
    %4525 = vmatpush.msra.mxu0 %v299
    %4526 = vmatpush.msra.mxu0 %v298
    %4527 = vmatpush.msra.mxu0 %v297
    %4528 = vmatpush.msra.mxu0 %v296
    %4529 = vmatpush.msra.mxu0 %v295
    %4530 = vmatpush.msra.mxu0 %v294
    %4531 = vmatpush.msra.mxu0 %v293
    %4532 = vmatpush.msra.mxu0 %v292
    %4533 = vmatpush.msra.mxu0 %v291
    %4534 = vmatpush.msra.mxu0 %v290
    %4535 = vmatpush.msra.mxu0 %v289
    %4536 = vmatpush.msra.mxu0 %v288
    %4537 = vmatmul.f32.gmra.mxu0 %v4421
    %v4538 = vpop.f32.mrf.mxu0
    %v4539 = vadd.f32 %v4510, %v4538
    %4540 = vmatmul.f32.gmra.mxu0 %v4425
    %v4541 = vpop.f32.mrf.mxu0
    %v4542 = vadd.f32 %v4513, %v4541
    %4543 = vmatmul.f32.gmra.mxu0 %v4429
    %v4544 = vpop.f32.mrf.mxu0
    %v4545 = vadd.f32 %v4516, %v4544
    %4546 = vmatmul.f32.gmra.mxu0 %v4433
    %v4547 = vpop.f32.mrf.mxu0
    %v4548 = vadd.f32 %v4519, %v4547
    %4549 = vdwg.mxu0
    %v4550 = vsel %vm953, %v4539, 0.0
    %v4551 = vsel %vm953, %v4542, 0.0
    %v4552 = vadd.f32 %v4550, %v4551
    %v4553 = vsel %vm953, %v4545, 0.0
    %v4554 = vadd.f32 %v4552, %v4553
    %v4555 = vsel %vm959, %v4548, 0.0
    %v4556 = vadd.f32 %v4554, %v4555
    %v4557 = vrot.slane %v4556, 4
    %v4558 = vadd.f32 %v4556, %v4557
    %v4559 = vrot.slane %v4558, 2
    %v4560 = vadd.f32 %v4558, %v4559
    %v4561 = vrot.slane %v4560, 1
    %v4562 = vadd.f32 %v4560, %v4561
    %v4563 = vadd.f32 %v4562, 0.0
    %v4564 = vmul.f32 %v4418, %v4418
    %v4565 = vmul.f32 %v4419, %v4419
    %v4566 = vmul.f32 %v4420, %v4420
    %v4567 = vmul.f32 %v4421, %v4421
    %v4568 = vmul.f32 %v4422, %v4422
    %v4569 = vmul.f32 %v4423, %v4423
    %v4570 = vmul.f32 %v4424, %v4424
    %v4571 = vmul.f32 %v4425, %v4425
    %v4572 = vmul.f32 %v4426, %v4426
    %v4573 = vmul.f32 %v4427, %v4427
    %v4574 = vmul.f32 %v4428, %v4428
    %v4575 = vmul.f32 %v4429, %v4429
    %v4576 = vmul.f32 %v4430, %v4430
    %v4577 = vmul.f32 %v4431, %v4431
    %v4578 = vmul.f32 %v4432, %v4432
    %v4579 = vmul.f32 %v4433, %v4433
    %4580 = vmatpush.msra.mxu0 %v255
    %4581 = vmatpush.msra.mxu0 %v254
    %4582 = vmatpush.msra.mxu0 %v253
    %4583 = vmatpush.msra.mxu0 %v252
    %4584 = vmatpush.msra.mxu0 %v251
    %4585 = vmatpush.msra.mxu0 %v250
    %4586 = vmatpush.msra.mxu0 %v249
    %4587 = vmatpush.msra.mxu0 %v248
    %4588 = vmatpush.msra.mxu0 %v247
    %4589 = vmatpush.msra.mxu0 %v246
    %4590 = vmatpush.msra.mxu0 %v245
    %4591 = vmatpush.msra.mxu0 %v244
    %4592 = vmatpush.msra.mxu0 %v243
    %4593 = vmatpush.msra.mxu0 %v242
    %4594 = vmatpush.msra.mxu0 %v241
    %4595 = vmatpush.msra.mxu0 %v240
    %4596 = vmatmul.f32.gmra.mxu0 %v4564
    %v4597 = vpop.f32.mrf.mxu0
    %v4598 = vadd.f32 0.0, %v4597
    %4599 = vmatmul.f32.gmra.mxu0 %v4568
    %v4600 = vpop.f32.mrf.mxu0
    %v4601 = vadd.f32 0.0, %v4600
    %4602 = vmatmul.f32.gmra.mxu0 %v4572
    %v4603 = vpop.f32.mrf.mxu0
    %v4604 = vadd.f32 0.0, %v4603
    %4605 = vmatmul.f32.gmra.mxu0 %v4576
    %v4606 = vpop.f32.mrf.mxu0
    %v4607 = vadd.f32 0.0, %v4606
    %4608 = vdwg.mxu0
    %4609 = vmatpush.msra.mxu0 %v271
    %4610 = vmatpush.msra.mxu0 %v270
    %4611 = vmatpush.msra.mxu0 %v269
    %4612 = vmatpush.msra.mxu0 %v268
    %4613 = vmatpush.msra.mxu0 %v267
    %4614 = vmatpush.msra.mxu0 %v266
    %4615 = vmatpush.msra.mxu0 %v265
    %4616 = vmatpush.msra.mxu0 %v264
    %4617 = vmatpush.msra.mxu0 %v263
    %4618 = vmatpush.msra.mxu0 %v262
    %4619 = vmatpush.msra.mxu0 %v261
    %4620 = vmatpush.msra.mxu0 %v260
    %4621 = vmatpush.msra.mxu0 %v259
    %4622 = vmatpush.msra.mxu0 %v258
    %4623 = vmatpush.msra.mxu0 %v257
    %4624 = vmatpush.msra.mxu0 %v256
    %4625 = vmatmul.f32.gmra.mxu0 %v4565
    %v4626 = vpop.f32.mrf.mxu0
    %v4627 = vadd.f32 %v4598, %v4626
    %4628 = vmatmul.f32.gmra.mxu0 %v4569
    %v4629 = vpop.f32.mrf.mxu0
    %v4630 = vadd.f32 %v4601, %v4629
    %4631 = vmatmul.f32.gmra.mxu0 %v4573
    %v4632 = vpop.f32.mrf.mxu0
    %v4633 = vadd.f32 %v4604, %v4632
    %4634 = vmatmul.f32.gmra.mxu0 %v4577
    %v4635 = vpop.f32.mrf.mxu0
    %v4636 = vadd.f32 %v4607, %v4635
    %4637 = vdwg.mxu0
    %4638 = vmatpush.msra.mxu0 %v287
    %4639 = vmatpush.msra.mxu0 %v286
    %4640 = vmatpush.msra.mxu0 %v285
    %4641 = vmatpush.msra.mxu0 %v284
    %4642 = vmatpush.msra.mxu0 %v283
    %4643 = vmatpush.msra.mxu0 %v282
    %4644 = vmatpush.msra.mxu0 %v281
    %4645 = vmatpush.msra.mxu0 %v280
    %4646 = vmatpush.msra.mxu0 %v279
    %4647 = vmatpush.msra.mxu0 %v278
    %4648 = vmatpush.msra.mxu0 %v277
    %4649 = vmatpush.msra.mxu0 %v276
    %4650 = vmatpush.msra.mxu0 %v275
    %4651 = vmatpush.msra.mxu0 %v274
    %4652 = vmatpush.msra.mxu0 %v273
    %4653 = vmatpush.msra.mxu0 %v272
    %4654 = vmatmul.f32.gmra.mxu0 %v4566
    %v4655 = vpop.f32.mrf.mxu0
    %v4656 = vadd.f32 %v4627, %v4655
    %4657 = vmatmul.f32.gmra.mxu0 %v4570
    %v4658 = vpop.f32.mrf.mxu0
    %v4659 = vadd.f32 %v4630, %v4658
    %4660 = vmatmul.f32.gmra.mxu0 %v4574
    %v4661 = vpop.f32.mrf.mxu0
    %v4662 = vadd.f32 %v4633, %v4661
    %4663 = vmatmul.f32.gmra.mxu0 %v4578
    %v4664 = vpop.f32.mrf.mxu0
    %v4665 = vadd.f32 %v4636, %v4664
    %4666 = vdwg.mxu0
    %4667 = vmatpush.msra.mxu0 %v303
    %4668 = vmatpush.msra.mxu0 %v302
    %4669 = vmatpush.msra.mxu0 %v301
    %4670 = vmatpush.msra.mxu0 %v300
    %4671 = vmatpush.msra.mxu0 %v299
    %4672 = vmatpush.msra.mxu0 %v298
    %4673 = vmatpush.msra.mxu0 %v297
    %4674 = vmatpush.msra.mxu0 %v296
    %4675 = vmatpush.msra.mxu0 %v295
    %4676 = vmatpush.msra.mxu0 %v294
    %4677 = vmatpush.msra.mxu0 %v293
    %4678 = vmatpush.msra.mxu0 %v292
    %4679 = vmatpush.msra.mxu0 %v291
    %4680 = vmatpush.msra.mxu0 %v290
    %4681 = vmatpush.msra.mxu0 %v289
    %4682 = vmatpush.msra.mxu0 %v288
    %4683 = vmatmul.f32.gmra.mxu0 %v4567
    %v4684 = vpop.f32.mrf.mxu0
    %v4685 = vadd.f32 %v4656, %v4684
    %4686 = vmatmul.f32.gmra.mxu0 %v4571
    %v4687 = vpop.f32.mrf.mxu0
    %v4688 = vadd.f32 %v4659, %v4687
    %4689 = vmatmul.f32.gmra.mxu0 %v4575
    %v4690 = vpop.f32.mrf.mxu0
    %v4691 = vadd.f32 %v4662, %v4690
    %4692 = vmatmul.f32.gmra.mxu0 %v4579
    %v4693 = vpop.f32.mrf.mxu0
    %v4694 = vadd.f32 %v4665, %v4693
    %4695 = vdwg.mxu0
    %v4696 = vsel %vm953, %v4685, 0.0
    %v4697 = vsel %vm953, %v4688, 0.0
    %v4698 = vadd.f32 %v4696, %v4697
    %v4699 = vsel %vm953, %v4691, 0.0
    %v4700 = vadd.f32 %v4698, %v4699
    %v4701 = vsel %vm959, %v4694, 0.0
    %v4702 = vadd.f32 %v4700, %v4701
    %v4703 = vrot.slane %v4702, 4
    %v4704 = vadd.f32 %v4702, %v4703
    %v4705 = vrot.slane %v4704, 2
    %v4706 = vadd.f32 %v4704, %v4705
    %v4707 = vrot.slane %v4706, 1
    %v4708 = vadd.f32 %v4706, %v4707
    %v4709 = vadd.f32 %v4708, 0.0
    %v4710 = vld [vmem:[%s3906] sm:$0xff]
    %v4711 = vld [vmem:[%s3906 + $0x8] sm:$0xff]
    %v4712 = vld [vmem:[%s3906 + $0x10] sm:$0xff]
    %v4713 = vld [vmem:[%s3906 + $0x18] sm:$0x3]
    %v4714 = vld [vmem:[%s3906 + $0x1] sm:$0xff]
    %v4715 = vld [vmem:[%s3906 + $0x9] sm:$0xff]
    %v4716 = vld [vmem:[%s3906 + $0x11] sm:$0xff]
    %v4717 = vld [vmem:[%s3906 + $0x19] sm:$0x3]
    %v4719 = vsel %vm198, %v4714, 0
    %v4722 = vsel %vm198, %v4715, 0
    %v4725 = vsel %vm198, %v4716, 0
    %v4728 = vsel %vm198, %v4717, 0
    %4730 = vmatpush.msra.mxu0 0.0
    %4731 = vmatpush.msra.mxu0 0.0
    %4732 = vmatpush.msra.mxu0 0.0
    %4733 = vmatpush.msra.mxu0 0.0
    %4734 = vmatpush.msra.mxu0 0.0
    %4735 = vmatpush.msra.mxu0 0.0
    %4736 = vmatpush.msra.mxu0 0.0
    %4737 = vmatpush.msra.mxu0 0.0
    %4738 = vmatpush.msra.mxu0 0.0
    %4739 = vmatpush.msra.mxu0 0.0
    %4740 = vmatpush.msra.mxu0 0.0
    %4741 = vmatpush.msra.mxu0 0.0
    %4742 = vmatpush.msra.mxu0 %v3964
    %4743 = vmatpush.msra.mxu0 %v3943
    %4744 = vmatpush.msra.mxu0 %v3939
    %4745 = vmatpush.msra.mxu0 %v3935
    %4746 = vmatmul.f32.gmra.mxu0 %v4719
    %v4747 = vpop.f32.mrf.mxu0
    %v4748 = vadd.f32 0.0, %v4747
    %4749 = vmatmul.f32.gmra.mxu0 %v4722
    %v4750 = vpop.f32.mrf.mxu0
    %v4751 = vadd.f32 0.0, %v4750
    %4752 = vmatmul.f32.gmra.mxu0 %v4725
    %v4753 = vpop.f32.mrf.mxu0
    %v4754 = vadd.f32 0.0, %v4753
    %4755 = vmatmul.f32.gmra.mxu0 %v4728
    %v4756 = vpop.f32.mrf.mxu0
    %v4757 = vadd.f32 0.0, %v4756
    %4758 = vdwg.mxu0
    %4759 = vmatpush.msra.mxu0 0.0
    %4760 = vmatpush.msra.mxu0 0.0
    %4761 = vmatpush.msra.mxu0 0.0
    %4762 = vmatpush.msra.mxu0 0.0
    %4763 = vmatpush.msra.mxu0 0.0
    %4764 = vmatpush.msra.mxu0 0.0
    %4765 = vmatpush.msra.mxu0 0.0
    %4766 = vmatpush.msra.mxu0 0.0
    %4767 = vmatpush.msra.mxu0 0.0
    %4768 = vmatpush.msra.mxu0 0.0
    %4769 = vmatpush.msra.mxu0 0.0
    %4770 = vmatpush.msra.mxu0 0.0
    %4771 = vmatpush.msra.mxu0 %v3967
    %4772 = vmatpush.msra.mxu0 %v3944
    %4773 = vmatpush.msra.mxu0 %v3940
    %4774 = vmatpush.msra.mxu0 %v3936
    %4775 = vmatmul.f32.gmra.mxu0 %v4719
    %v4776 = vpop.f32.mrf.mxu0
    %v4777 = vadd.f32 0.0, %v4776
    %4778 = vmatmul.f32.gmra.mxu0 %v4722
    %v4779 = vpop.f32.mrf.mxu0
    %v4780 = vadd.f32 0.0, %v4779
    %4781 = vmatmul.f32.gmra.mxu0 %v4725
    %v4782 = vpop.f32.mrf.mxu0
    %v4783 = vadd.f32 0.0, %v4782
    %4784 = vmatmul.f32.gmra.mxu0 %v4728
    %v4785 = vpop.f32.mrf.mxu0
    %v4786 = vadd.f32 0.0, %v4785
    %4787 = vdwg.mxu0
    %4788 = vmatpush.msra.mxu0 0.0
    %4789 = vmatpush.msra.mxu0 0.0
    %4790 = vmatpush.msra.mxu0 0.0
    %4791 = vmatpush.msra.mxu0 0.0
    %4792 = vmatpush.msra.mxu0 0.0
    %4793 = vmatpush.msra.mxu0 0.0
    %4794 = vmatpush.msra.mxu0 0.0
    %4795 = vmatpush.msra.mxu0 0.0
    %4796 = vmatpush.msra.mxu0 0.0
    %4797 = vmatpush.msra.mxu0 0.0
    %4798 = vmatpush.msra.mxu0 0.0
    %4799 = vmatpush.msra.mxu0 0.0
    %4800 = vmatpush.msra.mxu0 %v3970
    %4801 = vmatpush.msra.mxu0 %v3945
    %4802 = vmatpush.msra.mxu0 %v3941
    %4803 = vmatpush.msra.mxu0 %v3937
    %4804 = vmatmul.f32.gmra.mxu0 %v4719
    %v4805 = vpop.f32.mrf.mxu0
    %v4806 = vadd.f32 0.0, %v4805
    %4807 = vmatmul.f32.gmra.mxu0 %v4722
    %v4808 = vpop.f32.mrf.mxu0
    %v4809 = vadd.f32 0.0, %v4808
    %4810 = vmatmul.f32.gmra.mxu0 %v4725
    %v4811 = vpop.f32.mrf.mxu0
    %v4812 = vadd.f32 0.0, %v4811
    %4813 = vmatmul.f32.gmra.mxu0 %v4728
    %v4814 = vpop.f32.mrf.mxu0
    %v4815 = vadd.f32 0.0, %v4814
    %4816 = vdwg.mxu0
    %4817 = vmatpush.msra.mxu0 0.0
    %4818 = vmatpush.msra.mxu0 0.0
    %4819 = vmatpush.msra.mxu0 0.0
    %4820 = vmatpush.msra.mxu0 0.0
    %4821 = vmatpush.msra.mxu0 0.0
    %4822 = vmatpush.msra.mxu0 0.0
    %4823 = vmatpush.msra.mxu0 0.0
    %4824 = vmatpush.msra.mxu0 0.0
    %4825 = vmatpush.msra.mxu0 0.0
    %4826 = vmatpush.msra.mxu0 0.0
    %4827 = vmatpush.msra.mxu0 0.0
    %4828 = vmatpush.msra.mxu0 0.0
    %4829 = vmatpush.msra.mxu0 %v3973
    %4830 = vmatpush.msra.mxu0 %v3946
    %4831 = vmatpush.msra.mxu0 %v3942
    %4832 = vmatpush.msra.mxu0 %v3938
    %4833 = vmatmul.f32.gmra.mxu0 %v4719
    %v4834 = vpop.f32.mrf.mxu0
    %v4835 = vadd.f32 0.0, %v4834
    %4836 = vmatmul.f32.gmra.mxu0 %v4722
    %v4837 = vpop.f32.mrf.mxu0
    %v4838 = vadd.f32 0.0, %v4837
    %4839 = vmatmul.f32.gmra.mxu0 %v4725
    %v4840 = vpop.f32.mrf.mxu0
    %v4841 = vadd.f32 0.0, %v4840
    %4842 = vmatmul.f32.gmra.mxu0 %v4728
    %v4843 = vpop.f32.mrf.mxu0
    %v4844 = vadd.f32 0.0, %v4843
    %4845 = vdwg.mxu0
    %v4847 = vsel %vm198, %v4710, 0
    %v4850 = vsel %vm198, %v4711, 0
    %v4853 = vsel %vm198, %v4712, 0
    %v4856 = vsel %vm198, %v4713, 0
    %4858 = vmatpush.msra.mxu0 0.0
    %4859 = vmatpush.msra.mxu0 0.0
    %4860 = vmatpush.msra.mxu0 0.0
    %4861 = vmatpush.msra.mxu0 0.0
    %4862 = vmatpush.msra.mxu0 0.0
    %4863 = vmatpush.msra.mxu0 0.0
    %4864 = vmatpush.msra.mxu0 0.0
    %4865 = vmatpush.msra.mxu0 0.0
    %4866 = vmatpush.msra.mxu0 0.0
    %4867 = vmatpush.msra.mxu0 0.0
    %4868 = vmatpush.msra.mxu0 0.0
    %4869 = vmatpush.msra.mxu0 0.0
    %4870 = vmatpush.msra.mxu0 %v4104
    %4871 = vmatpush.msra.mxu0 %v3922
    %4872 = vmatpush.msra.mxu0 %v3918
    %4873 = vmatpush.msra.mxu0 %v3914
    %4874 = vmatmul.f32.gmra.mxu0 %v4847
    %v4875 = vpop.f32.mrf.mxu0
    %v4876 = vadd.f32 %v4748, %v4875
    %4877 = vmatmul.f32.gmra.mxu0 %v4850
    %v4878 = vpop.f32.mrf.mxu0
    %v4879 = vadd.f32 %v4751, %v4878
    %4880 = vmatmul.f32.gmra.mxu0 %v4853
    %v4881 = vpop.f32.mrf.mxu0
    %v4882 = vadd.f32 %v4754, %v4881
    %4883 = vmatmul.f32.gmra.mxu0 %v4856
    %v4884 = vpop.f32.mrf.mxu0
    %v4885 = vadd.f32 %v4757, %v4884
    %4886 = vdwg.mxu0
    %4887 = vmatpush.msra.mxu0 0.0
    %4888 = vmatpush.msra.mxu0 0.0
    %4889 = vmatpush.msra.mxu0 0.0
    %4890 = vmatpush.msra.mxu0 0.0
    %4891 = vmatpush.msra.mxu0 0.0
    %4892 = vmatpush.msra.mxu0 0.0
    %4893 = vmatpush.msra.mxu0 0.0
    %4894 = vmatpush.msra.mxu0 0.0
    %4895 = vmatpush.msra.mxu0 0.0
    %4896 = vmatpush.msra.mxu0 0.0
    %4897 = vmatpush.msra.mxu0 0.0
    %4898 = vmatpush.msra.mxu0 0.0
    %4899 = vmatpush.msra.mxu0 %v4107
    %4900 = vmatpush.msra.mxu0 %v3923
    %4901 = vmatpush.msra.mxu0 %v3919
    %4902 = vmatpush.msra.mxu0 %v3915
    %4903 = vmatmul.f32.gmra.mxu0 %v4847
    %v4904 = vpop.f32.mrf.mxu0
    %v4905 = vadd.f32 %v4777, %v4904
    %4906 = vmatmul.f32.gmra.mxu0 %v4850
    %v4907 = vpop.f32.mrf.mxu0
    %v4908 = vadd.f32 %v4780, %v4907
    %4909 = vmatmul.f32.gmra.mxu0 %v4853
    %v4910 = vpop.f32.mrf.mxu0
    %v4911 = vadd.f32 %v4783, %v4910
    %4912 = vmatmul.f32.gmra.mxu0 %v4856
    %v4913 = vpop.f32.mrf.mxu0
    %v4914 = vadd.f32 %v4786, %v4913
    %4915 = vdwg.mxu0
    %4916 = vmatpush.msra.mxu0 0.0
    %4917 = vmatpush.msra.mxu0 0.0
    %4918 = vmatpush.msra.mxu0 0.0
    %4919 = vmatpush.msra.mxu0 0.0
    %4920 = vmatpush.msra.mxu0 0.0
    %4921 = vmatpush.msra.mxu0 0.0
    %4922 = vmatpush.msra.mxu0 0.0
    %4923 = vmatpush.msra.mxu0 0.0
    %4924 = vmatpush.msra.mxu0 0.0
    %4925 = vmatpush.msra.mxu0 0.0
    %4926 = vmatpush.msra.mxu0 0.0
    %4927 = vmatpush.msra.mxu0 0.0
    %4928 = vmatpush.msra.mxu0 %v4110
    %4929 = vmatpush.msra.mxu0 %v3924
    %4930 = vmatpush.msra.mxu0 %v3920
    %4931 = vmatpush.msra.mxu0 %v3916
    %4932 = vmatmul.f32.gmra.mxu0 %v4847
    %v4933 = vpop.f32.mrf.mxu0
    %v4934 = vadd.f32 %v4806, %v4933
    %4935 = vmatmul.f32.gmra.mxu0 %v4850
    %v4936 = vpop.f32.mrf.mxu0
    %v4937 = vadd.f32 %v4809, %v4936
    %4938 = vmatmul.f32.gmra.mxu0 %v4853
    %v4939 = vpop.f32.mrf.mxu0
    %v4940 = vadd.f32 %v4812, %v4939
    %4941 = vmatmul.f32.gmra.mxu0 %v4856
    %v4942 = vpop.f32.mrf.mxu0
    %v4943 = vadd.f32 %v4815, %v4942
    %4944 = vdwg.mxu0
    %4945 = vmatpush.msra.mxu0 0.0
    %4946 = vmatpush.msra.mxu0 0.0
    %4947 = vmatpush.msra.mxu0 0.0
    %4948 = vmatpush.msra.mxu0 0.0
    %4949 = vmatpush.msra.mxu0 0.0
    %4950 = vmatpush.msra.mxu0 0.0
    %4951 = vmatpush.msra.mxu0 0.0
    %4952 = vmatpush.msra.mxu0 0.0
    %4953 = vmatpush.msra.mxu0 0.0
    %4954 = vmatpush.msra.mxu0 0.0
    %4955 = vmatpush.msra.mxu0 0.0
    %4956 = vmatpush.msra.mxu0 0.0
    %4957 = vmatpush.msra.mxu0 %v4113
    %4958 = vmatpush.msra.mxu0 %v3925
    %4959 = vmatpush.msra.mxu0 %v3921
    %4960 = vmatpush.msra.mxu0 %v3917
    %4961 = vmatmul.f32.gmra.mxu0 %v4847
    %v4962 = vpop.f32.mrf.mxu0
    %v4963 = vadd.f32 %v4835, %v4962
    %4964 = vmatmul.f32.gmra.mxu0 %v4850
    %v4965 = vpop.f32.mrf.mxu0
    %v4966 = vadd.f32 %v4838, %v4965
    %4967 = vmatmul.f32.gmra.mxu0 %v4853
    %v4968 = vpop.f32.mrf.mxu0
    %v4969 = vadd.f32 %v4841, %v4968
    %4970 = vmatmul.f32.gmra.mxu0 %v4856
    %v4971 = vpop.f32.mrf.mxu0
    %v4972 = vadd.f32 %v4844, %v4971
    %4973 = vdwg.mxu0
    %v4974 = vld [vmem:[%s3906 + $0x2] sm:$0xff]
    %v4975 = vld [vmem:[%s3906 + $0xa] sm:$0xff]
    %v4976 = vld [vmem:[%s3906 + $0x12] sm:$0xff]
    %v4977 = vld [vmem:[%s3906 + $0x1a] sm:$0x3]
    %v4979 = vsel %vm198, %v4974, 0
    %v4982 = vsel %vm198, %v4975, 0
    %v4985 = vsel %vm198, %v4976, 0
    %v4988 = vsel %vm198, %v4977, 0
    %4990 = vmatpush.msra.mxu0 0.0
    %4991 = vmatpush.msra.mxu0 0.0
    %4992 = vmatpush.msra.mxu0 0.0
    %4993 = vmatpush.msra.mxu0 0.0
    %4994 = vmatpush.msra.mxu0 0.0
    %4995 = vmatpush.msra.mxu0 0.0
    %4996 = vmatpush.msra.mxu0 0.0
    %4997 = vmatpush.msra.mxu0 0.0
    %4998 = vmatpush.msra.mxu0 0.0
    %4999 = vmatpush.msra.mxu0 0.0
    %5000 = vmatpush.msra.mxu0 0.0
    %5001 = vmatpush.msra.mxu0 0.0
    %5002 = vmatpush.msra.mxu0 %v4265
    %5003 = vmatpush.msra.mxu0 %v4244
    %5004 = vmatpush.msra.mxu0 %v4240
    %5005 = vmatpush.msra.mxu0 %v4236
    %5006 = vmatmul.f32.gmra.mxu0 %v4979
    %v5007 = vpop.f32.mrf.mxu0
    %v5008 = vadd.f32 0.0, %v5007
    %5009 = vmatmul.f32.gmra.mxu0 %v4982
    %v5010 = vpop.f32.mrf.mxu0
    %v5011 = vadd.f32 0.0, %v5010
    %5012 = vmatmul.f32.gmra.mxu0 %v4985
    %v5013 = vpop.f32.mrf.mxu0
    %v5014 = vadd.f32 0.0, %v5013
    %5015 = vmatmul.f32.gmra.mxu0 %v4988
    %v5016 = vpop.f32.mrf.mxu0
    %v5017 = vadd.f32 0.0, %v5016
    %5018 = vdwg.mxu0
    %5019 = vmatpush.msra.mxu0 0.0
    %5020 = vmatpush.msra.mxu0 0.0
    %5021 = vmatpush.msra.mxu0 0.0
    %5022 = vmatpush.msra.mxu0 0.0
    %5023 = vmatpush.msra.mxu0 0.0
    %5024 = vmatpush.msra.mxu0 0.0
    %5025 = vmatpush.msra.mxu0 0.0
    %5026 = vmatpush.msra.mxu0 0.0
    %5027 = vmatpush.msra.mxu0 0.0
    %5028 = vmatpush.msra.mxu0 0.0
    %5029 = vmatpush.msra.mxu0 0.0
    %5030 = vmatpush.msra.mxu0 0.0
    %5031 = vmatpush.msra.mxu0 %v4268
    %5032 = vmatpush.msra.mxu0 %v4245
    %5033 = vmatpush.msra.mxu0 %v4241
    %5034 = vmatpush.msra.mxu0 %v4237
    %5035 = vmatmul.f32.gmra.mxu0 %v4979
    %v5036 = vpop.f32.mrf.mxu0
    %v5037 = vadd.f32 0.0, %v5036
    %5038 = vmatmul.f32.gmra.mxu0 %v4982
    %v5039 = vpop.f32.mrf.mxu0
    %v5040 = vadd.f32 0.0, %v5039
    %5041 = vmatmul.f32.gmra.mxu0 %v4985
    %v5042 = vpop.f32.mrf.mxu0
    %v5043 = vadd.f32 0.0, %v5042
    %5044 = vmatmul.f32.gmra.mxu0 %v4988
    %v5045 = vpop.f32.mrf.mxu0
    %v5046 = vadd.f32 0.0, %v5045
    %5047 = vdwg.mxu0
    %5048 = vmatpush.msra.mxu0 0.0
    %5049 = vmatpush.msra.mxu0 0.0
    %5050 = vmatpush.msra.mxu0 0.0
    %5051 = vmatpush.msra.mxu0 0.0
    %5052 = vmatpush.msra.mxu0 0.0
    %5053 = vmatpush.msra.mxu0 0.0
    %5054 = vmatpush.msra.mxu0 0.0
    %5055 = vmatpush.msra.mxu0 0.0
    %5056 = vmatpush.msra.mxu0 0.0
    %5057 = vmatpush.msra.mxu0 0.0
    %5058 = vmatpush.msra.mxu0 0.0
    %5059 = vmatpush.msra.mxu0 0.0
    %5060 = vmatpush.msra.mxu0 %v4271
    %5061 = vmatpush.msra.mxu0 %v4246
    %5062 = vmatpush.msra.mxu0 %v4242
    %5063 = vmatpush.msra.mxu0 %v4238
    %5064 = vmatmul.f32.gmra.mxu0 %v4979
    %v5065 = vpop.f32.mrf.mxu0
    %v5066 = vadd.f32 0.0, %v5065
    %5067 = vmatmul.f32.gmra.mxu0 %v4982
    %v5068 = vpop.f32.mrf.mxu0
    %v5069 = vadd.f32 0.0, %v5068
    %5070 = vmatmul.f32.gmra.mxu0 %v4985
    %v5071 = vpop.f32.mrf.mxu0
    %v5072 = vadd.f32 0.0, %v5071
    %5073 = vmatmul.f32.gmra.mxu0 %v4988
    %v5074 = vpop.f32.mrf.mxu0
    %v5075 = vadd.f32 0.0, %v5074
    %5076 = vdwg.mxu0
    %5077 = vmatpush.msra.mxu0 0.0
    %5078 = vmatpush.msra.mxu0 0.0
    %5079 = vmatpush.msra.mxu0 0.0
    %5080 = vmatpush.msra.mxu0 0.0
    %5081 = vmatpush.msra.mxu0 0.0
    %5082 = vmatpush.msra.mxu0 0.0
    %5083 = vmatpush.msra.mxu0 0.0
    %5084 = vmatpush.msra.mxu0 0.0
    %5085 = vmatpush.msra.mxu0 0.0
    %5086 = vmatpush.msra.mxu0 0.0
    %5087 = vmatpush.msra.mxu0 0.0
    %5088 = vmatpush.msra.mxu0 0.0
    %5089 = vmatpush.msra.mxu0 %v4274
    %5090 = vmatpush.msra.mxu0 %v4247
    %5091 = vmatpush.msra.mxu0 %v4243
    %5092 = vmatpush.msra.mxu0 %v4239
    %5093 = vmatmul.f32.gmra.mxu0 %v4979
    %v5094 = vpop.f32.mrf.mxu0
    %v5095 = vadd.f32 0.0, %v5094
    %5096 = vmatmul.f32.gmra.mxu0 %v4982
    %v5097 = vpop.f32.mrf.mxu0
    %v5098 = vadd.f32 0.0, %v5097
    %5099 = vmatmul.f32.gmra.mxu0 %v4985
    %v5100 = vpop.f32.mrf.mxu0
    %v5101 = vadd.f32 0.0, %v5100
    %5102 = vmatmul.f32.gmra.mxu0 %v4988
    %v5103 = vpop.f32.mrf.mxu0
    %v5104 = vadd.f32 0.0, %v5103
    %5105 = vdwg.mxu0
    %v5106 = vadd.f32 %v4876, %v5008
    %v5107 = vadd.f32 %v4905, %v5037
    %v5108 = vadd.f32 %v4934, %v5066
    %v5109 = vadd.f32 %v4963, %v5095
    %v5110 = vadd.f32 %v4879, %v5011
    %v5111 = vadd.f32 %v4908, %v5040
    %v5112 = vadd.f32 %v4937, %v5069
    %v5113 = vadd.f32 %v4966, %v5098
    %v5114 = vadd.f32 %v4882, %v5014
    %v5115 = vadd.f32 %v4911, %v5043
    %v5116 = vadd.f32 %v4940, %v5072
    %v5117 = vadd.f32 %v4969, %v5101
    %v5118 = vadd.f32 %v4885, %v5017
    %v5119 = vadd.f32 %v4914, %v5046
    %v5120 = vadd.f32 %v4943, %v5075
    %v5121 = vadd.f32 %v4972, %v5104
    %v5122 = vadd.f32 %v5106, %v4410
    %v5123 = vadd.f32 %v5107, %v4411
    %v5124 = vadd.f32 %v5108, %v4412
    %v5125 = vadd.f32 %v5109, %v4413
    %v5126 = vadd.f32 %v5110, %v4410
    %v5127 = vadd.f32 %v5111, %v4411
    %v5128 = vadd.f32 %v5112, %v4412
    %v5129 = vadd.f32 %v5113, %v4413
    %v5130 = vadd.f32 %v5114, %v4410
    %v5131 = vadd.f32 %v5115, %v4411
    %v5132 = vadd.f32 %v5116, %v4412
    %v5133 = vadd.f32 %v5117, %v4413
    %v5134 = vadd.f32 %v5118, %v4410
    %v5135 = vadd.f32 %v5119, %v4411
    %v5136 = vadd.f32 %v5120, %v4412
    %v5137 = vadd.f32 %v5121, %v4413
    %5138 = vmatpush.msra.mxu0 %v255
    %5139 = vmatpush.msra.mxu0 %v254
    %5140 = vmatpush.msra.mxu0 %v253
    %5141 = vmatpush.msra.mxu0 %v252
    %5142 = vmatpush.msra.mxu0 %v251
    %5143 = vmatpush.msra.mxu0 %v250
    %5144 = vmatpush.msra.mxu0 %v249
    %5145 = vmatpush.msra.mxu0 %v248
    %5146 = vmatpush.msra.mxu0 %v247
    %5147 = vmatpush.msra.mxu0 %v246
    %5148 = vmatpush.msra.mxu0 %v245
    %5149 = vmatpush.msra.mxu0 %v244
    %5150 = vmatpush.msra.mxu0 %v243
    %5151 = vmatpush.msra.mxu0 %v242
    %5152 = vmatpush.msra.mxu0 %v241
    %5153 = vmatpush.msra.mxu0 %v240
    %5154 = vmatmul.f32.gmra.mxu0 %v5122
    %v5155 = vpop.f32.mrf.mxu0
    %v5156 = vadd.f32 0.0, %v5155
    %5157 = vmatmul.f32.gmra.mxu0 %v5126
    %v5158 = vpop.f32.mrf.mxu0
    %v5159 = vadd.f32 0.0, %v5158
    %5160 = vmatmul.f32.gmra.mxu0 %v5130
    %v5161 = vpop.f32.mrf.mxu0
    %v5162 = vadd.f32 0.0, %v5161
    %5163 = vmatmul.f32.gmra.mxu0 %v5134
    %v5164 = vpop.f32.mrf.mxu0
    %v5165 = vadd.f32 0.0, %v5164
    %5166 = vdwg.mxu0
    %5167 = vmatpush.msra.mxu0 %v271
    %5168 = vmatpush.msra.mxu0 %v270
    %5169 = vmatpush.msra.mxu0 %v269
    %5170 = vmatpush.msra.mxu0 %v268
    %5171 = vmatpush.msra.mxu0 %v267
    %5172 = vmatpush.msra.mxu0 %v266
    %5173 = vmatpush.msra.mxu0 %v265
    %5174 = vmatpush.msra.mxu0 %v264
    %5175 = vmatpush.msra.mxu0 %v263
    %5176 = vmatpush.msra.mxu0 %v262
    %5177 = vmatpush.msra.mxu0 %v261
    %5178 = vmatpush.msra.mxu0 %v260
    %5179 = vmatpush.msra.mxu0 %v259
    %5180 = vmatpush.msra.mxu0 %v258
    %5181 = vmatpush.msra.mxu0 %v257
    %5182 = vmatpush.msra.mxu0 %v256
    %5183 = vmatmul.f32.gmra.mxu0 %v5123
    %v5184 = vpop.f32.mrf.mxu0
    %v5185 = vadd.f32 %v5156, %v5184
    %5186 = vmatmul.f32.gmra.mxu0 %v5127
    %v5187 = vpop.f32.mrf.mxu0
    %v5188 = vadd.f32 %v5159, %v5187
    %5189 = vmatmul.f32.gmra.mxu0 %v5131
    %v5190 = vpop.f32.mrf.mxu0
    %v5191 = vadd.f32 %v5162, %v5190
    %5192 = vmatmul.f32.gmra.mxu0 %v5135
    %v5193 = vpop.f32.mrf.mxu0
    %v5194 = vadd.f32 %v5165, %v5193
    %5195 = vdwg.mxu0
    %5196 = vmatpush.msra.mxu0 %v287
    %5197 = vmatpush.msra.mxu0 %v286
    %5198 = vmatpush.msra.mxu0 %v285
    %5199 = vmatpush.msra.mxu0 %v284
    %5200 = vmatpush.msra.mxu0 %v283
    %5201 = vmatpush.msra.mxu0 %v282
    %5202 = vmatpush.msra.mxu0 %v281
    %5203 = vmatpush.msra.mxu0 %v280
    %5204 = vmatpush.msra.mxu0 %v279
    %5205 = vmatpush.msra.mxu0 %v278
    %5206 = vmatpush.msra.mxu0 %v277
    %5207 = vmatpush.msra.mxu0 %v276
    %5208 = vmatpush.msra.mxu0 %v275
    %5209 = vmatpush.msra.mxu0 %v274
    %5210 = vmatpush.msra.mxu0 %v273
    %5211 = vmatpush.msra.mxu0 %v272
    %5212 = vmatmul.f32.gmra.mxu0 %v5124
    %v5213 = vpop.f32.mrf.mxu0
    %v5214 = vadd.f32 %v5185, %v5213
    %5215 = vmatmul.f32.gmra.mxu0 %v5128
    %v5216 = vpop.f32.mrf.mxu0
    %v5217 = vadd.f32 %v5188, %v5216
    %5218 = vmatmul.f32.gmra.mxu0 %v5132
    %v5219 = vpop.f32.mrf.mxu0
    %v5220 = vadd.f32 %v5191, %v5219
    %5221 = vmatmul.f32.gmra.mxu0 %v5136
    %v5222 = vpop.f32.mrf.mxu0
    %v5223 = vadd.f32 %v5194, %v5222
    %5224 = vdwg.mxu0
    %5225 = vmatpush.msra.mxu0 %v303
    %5226 = vmatpush.msra.mxu0 %v302
    %5227 = vmatpush.msra.mxu0 %v301
    %5228 = vmatpush.msra.mxu0 %v300
    %5229 = vmatpush.msra.mxu0 %v299
    %5230 = vmatpush.msra.mxu0 %v298
    %5231 = vmatpush.msra.mxu0 %v297
    %5232 = vmatpush.msra.mxu0 %v296
    %5233 = vmatpush.msra.mxu0 %v295
    %5234 = vmatpush.msra.mxu0 %v294
    %5235 = vmatpush.msra.mxu0 %v293
    %5236 = vmatpush.msra.mxu0 %v292
    %5237 = vmatpush.msra.mxu0 %v291
    %5238 = vmatpush.msra.mxu0 %v290
    %5239 = vmatpush.msra.mxu0 %v289
    %5240 = vmatpush.msra.mxu0 %v288
    %5241 = vmatmul.f32.gmra.mxu0 %v5125
    %v5242 = vpop.f32.mrf.mxu0
    %v5243 = vadd.f32 %v5214, %v5242
    %5244 = vmatmul.f32.gmra.mxu0 %v5129
    %v5245 = vpop.f32.mrf.mxu0
    %v5246 = vadd.f32 %v5217, %v5245
    %5247 = vmatmul.f32.gmra.mxu0 %v5133
    %v5248 = vpop.f32.mrf.mxu0
    %v5249 = vadd.f32 %v5220, %v5248
    %5250 = vmatmul.f32.gmra.mxu0 %v5137
    %v5251 = vpop.f32.mrf.mxu0
    %v5252 = vadd.f32 %v5223, %v5251
    %5253 = vdwg.mxu0
    %v5254 = vsel %vm953, %v5243, 0.0
    %v5255 = vsel %vm953, %v5246, 0.0
    %v5256 = vadd.f32 %v5254, %v5255
    %v5257 = vsel %vm953, %v5249, 0.0
    %v5258 = vadd.f32 %v5256, %v5257
    %v5259 = vsel %vm959, %v5252, 0.0
    %v5260 = vadd.f32 %v5258, %v5259
    %v5261 = vrot.slane %v5260, 4
    %v5262 = vadd.f32 %v5260, %v5261
    %v5263 = vrot.slane %v5262, 2
    %v5264 = vadd.f32 %v5262, %v5263
    %v5265 = vrot.slane %v5264, 1
    %v5266 = vadd.f32 %v5264, %v5265
    %v5267 = vadd.f32 %v4563, %v5266
    %v5268 = vmul.f32 %v5122, %v5122
    %v5269 = vmul.f32 %v5123, %v5123
    %v5270 = vmul.f32 %v5124, %v5124
    %v5271 = vmul.f32 %v5125, %v5125
    %v5272 = vmul.f32 %v5126, %v5126
    %v5273 = vmul.f32 %v5127, %v5127
    %v5274 = vmul.f32 %v5128, %v5128
    %v5275 = vmul.f32 %v5129, %v5129
    %v5276 = vmul.f32 %v5130, %v5130
    %v5277 = vmul.f32 %v5131, %v5131
    %v5278 = vmul.f32 %v5132, %v5132
    %v5279 = vmul.f32 %v5133, %v5133
    %v5280 = vmul.f32 %v5134, %v5134
    %v5281 = vmul.f32 %v5135, %v5135
    %v5282 = vmul.f32 %v5136, %v5136
    %v5283 = vmul.f32 %v5137, %v5137
    %5284 = vmatpush.msra.mxu0 %v255
    %5285 = vmatpush.msra.mxu0 %v254
    %5286 = vmatpush.msra.mxu0 %v253
    %5287 = vmatpush.msra.mxu0 %v252
    %5288 = vmatpush.msra.mxu0 %v251
    %5289 = vmatpush.msra.mxu0 %v250
    %5290 = vmatpush.msra.mxu0 %v249
    %5291 = vmatpush.msra.mxu0 %v248
    %5292 = vmatpush.msra.mxu0 %v247
    %5293 = vmatpush.msra.mxu0 %v246
    %5294 = vmatpush.msra.mxu0 %v245
    %5295 = vmatpush.msra.mxu0 %v244
    %5296 = vmatpush.msra.mxu0 %v243
    %5297 = vmatpush.msra.mxu0 %v242
    %5298 = vmatpush.msra.mxu0 %v241
    %5299 = vmatpush.msra.mxu0 %v240
    %5300 = vmatmul.f32.gmra.mxu0 %v5268
    %v5301 = vpop.f32.mrf.mxu0
    %v5302 = vadd.f32 0.0, %v5301
    %5303 = vmatmul.f32.gmra.mxu0 %v5272
    %v5304 = vpop.f32.mrf.mxu0
    %v5305 = vadd.f32 0.0, %v5304
    %5306 = vmatmul.f32.gmra.mxu0 %v5276
    %v5307 = vpop.f32.mrf.mxu0
    %v5308 = vadd.f32 0.0, %v5307
    %5309 = vmatmul.f32.gmra.mxu0 %v5280
    %v5310 = vpop.f32.mrf.mxu0
    %v5311 = vadd.f32 0.0, %v5310
    %5312 = vdwg.mxu0
    %5313 = vmatpush.msra.mxu0 %v271
    %5314 = vmatpush.msra.mxu0 %v270
    %5315 = vmatpush.msra.mxu0 %v269
    %5316 = vmatpush.msra.mxu0 %v268
    %5317 = vmatpush.msra.mxu0 %v267
    %5318 = vmatpush.msra.mxu0 %v266
    %5319 = vmatpush.msra.mxu0 %v265
    %5320 = vmatpush.msra.mxu0 %v264
    %5321 = vmatpush.msra.mxu0 %v263
    %5322 = vmatpush.msra.mxu0 %v262
    %5323 = vmatpush.msra.mxu0 %v261
    %5324 = vmatpush.msra.mxu0 %v260
    %5325 = vmatpush.msra.mxu0 %v259
    %5326 = vmatpush.msra.mxu0 %v258
    %5327 = vmatpush.msra.mxu0 %v257
    %5328 = vmatpush.msra.mxu0 %v256
    %5329 = vmatmul.f32.gmra.mxu0 %v5269
    %v5330 = vpop.f32.mrf.mxu0
    %v5331 = vadd.f32 %v5302, %v5330
    %5332 = vmatmul.f32.gmra.mxu0 %v5273
    %v5333 = vpop.f32.mrf.mxu0
    %v5334 = vadd.f32 %v5305, %v5333
    %5335 = vmatmul.f32.gmra.mxu0 %v5277
    %v5336 = vpop.f32.mrf.mxu0
    %v5337 = vadd.f32 %v5308, %v5336
    %5338 = vmatmul.f32.gmra.mxu0 %v5281
    %v5339 = vpop.f32.mrf.mxu0
    %v5340 = vadd.f32 %v5311, %v5339
    %5341 = vdwg.mxu0
    %5342 = vmatpush.msra.mxu0 %v287
    %5343 = vmatpush.msra.mxu0 %v286
    %5344 = vmatpush.msra.mxu0 %v285
    %5345 = vmatpush.msra.mxu0 %v284
    %5346 = vmatpush.msra.mxu0 %v283
    %5347 = vmatpush.msra.mxu0 %v282
    %5348 = vmatpush.msra.mxu0 %v281
    %5349 = vmatpush.msra.mxu0 %v280
    %5350 = vmatpush.msra.mxu0 %v279
    %5351 = vmatpush.msra.mxu0 %v278
    %5352 = vmatpush.msra.mxu0 %v277
    %5353 = vmatpush.msra.mxu0 %v276
    %5354 = vmatpush.msra.mxu0 %v275
    %5355 = vmatpush.msra.mxu0 %v274
    %5356 = vmatpush.msra.mxu0 %v273
    %5357 = vmatpush.msra.mxu0 %v272
    %5358 = vmatmul.f32.gmra.mxu0 %v5270
    %v5359 = vpop.f32.mrf.mxu0
    %v5360 = vadd.f32 %v5331, %v5359
    %5361 = vmatmul.f32.gmra.mxu0 %v5274
    %v5362 = vpop.f32.mrf.mxu0
    %v5363 = vadd.f32 %v5334, %v5362
    %5364 = vmatmul.f32.gmra.mxu0 %v5278
    %v5365 = vpop.f32.mrf.mxu0
    %v5366 = vadd.f32 %v5337, %v5365
    %5367 = vmatmul.f32.gmra.mxu0 %v5282
    %v5368 = vpop.f32.mrf.mxu0
    %v5369 = vadd.f32 %v5340, %v5368
    %5370 = vdwg.mxu0
    %5371 = vmatpush.msra.mxu0 %v303
    %5372 = vmatpush.msra.mxu0 %v302
    %5373 = vmatpush.msra.mxu0 %v301
    %5374 = vmatpush.msra.mxu0 %v300
    %5375 = vmatpush.msra.mxu0 %v299
    %5376 = vmatpush.msra.mxu0 %v298
    %5377 = vmatpush.msra.mxu0 %v297
    %5378 = vmatpush.msra.mxu0 %v296
    %5379 = vmatpush.msra.mxu0 %v295
    %5380 = vmatpush.msra.mxu0 %v294
    %5381 = vmatpush.msra.mxu0 %v293
    %5382 = vmatpush.msra.mxu0 %v292
    %5383 = vmatpush.msra.mxu0 %v291
    %5384 = vmatpush.msra.mxu0 %v290
    %5385 = vmatpush.msra.mxu0 %v289
    %5386 = vmatpush.msra.mxu0 %v288
    %5387 = vmatmul.f32.gmra.mxu0 %v5271
    %v5388 = vpop.f32.mrf.mxu0
    %v5389 = vadd.f32 %v5360, %v5388
    %5390 = vmatmul.f32.gmra.mxu0 %v5275
    %v5391 = vpop.f32.mrf.mxu0
    %v5392 = vadd.f32 %v5363, %v5391
    %5393 = vmatmul.f32.gmra.mxu0 %v5279
    %v5394 = vpop.f32.mrf.mxu0
    %v5395 = vadd.f32 %v5366, %v5394
    %5396 = vmatmul.f32.gmra.mxu0 %v5283
    %v5397 = vpop.f32.mrf.mxu0
    %v5398 = vadd.f32 %v5369, %v5397
    %5399 = vdwg.mxu0
    %v5400 = vsel %vm953, %v5389, 0.0
    %v5401 = vsel %vm953, %v5392, 0.0
    %v5402 = vadd.f32 %v5400, %v5401
    %v5403 = vsel %vm953, %v5395, 0.0
    %v5404 = vadd.f32 %v5402, %v5403
    %v5405 = vsel %vm959, %v5398, 0.0
    %v5406 = vadd.f32 %v5404, %v5405
    %v5407 = vrot.slane %v5406, 4
    %v5408 = vadd.f32 %v5406, %v5407
    %v5409 = vrot.slane %v5408, 2
    %v5410 = vadd.f32 %v5408, %v5409
    %v5411 = vrot.slane %v5410, 1
    %v5412 = vadd.f32 %v5410, %v5411
    %v5413 = vadd.f32 %v4709, %v5412
    %v5414 = vmul.f32 %v5267, 0.000739645
    %v5415 = vmul.f32 %v5413, 0.000739645
    %v5416 = vmul.f32 %v5414, %v5414
    %v5417 = vsub.f32 %v5415, %v5416
    %v5418 = vld [vmem:[%s15] sm:$0x1]
    %v5419 = vadd.f32 %v5417, 1e-05
    %v5420 = vrsqrt.pop %v5419
    %v5421 = vmul.f32 %v5420, %v5419
    %v5422 = vmul.f32 %v5421, %v5420
    %v5423 = vmul.f32 0.5, %v5422
    %v5424 = vsub.f32 1.5, %v5423
    %v5425 = vmul.f32 %v5420, %v5424
    %vm5426 = vweird.f32 %v5419
    %vm5427 = vweird.f32 %v5420
    %vm5428 = vmor %vm5426, %vm5427
    %v5429 = vsel %vm5428, %v5420, %v5425
    %v5430 = vmul.f32 %v5418, %v5429
    %v5431 = vld [vmem:[%s16] sm:$0x1]
    %v5432 = vmul.f32 %v5414, %v5430
    %v5433 = vsub.f32 %v5431, %v5432
    %v5435 = vperm.slane %v5430, 0
    %v5436 = vsel %vm953, %v5435, 0
    %5438 = vmatpush.msra.mxu0 0.0
    %5439 = vmatpush.msra.mxu0 0.0
    %5440 = vmatpush.msra.mxu0 0.0
    %5441 = vmatpush.msra.mxu0 0.0
    %5442 = vmatpush.msra.mxu0 0.0
    %5443 = vmatpush.msra.mxu0 0.0
    %5444 = vmatpush.msra.mxu0 0.0
    %5445 = vmatpush.msra.mxu0 0.0
    %5446 = vmatpush.msra.mxu0 0.0
    %5447 = vmatpush.msra.mxu0 0.0
    %5448 = vmatpush.msra.mxu0 0.0
    %5449 = vmatpush.msra.mxu0 0.0
    %5450 = vmatpush.msra.mxu0 0.0
    %5451 = vmatpush.msra.mxu0 0.0
    %5452 = vmatpush.msra.mxu0 %v308
    %5453 = vmatpush.msra.mxu0 %v304
    %5454 = vmatmul.f32.gmra.mxu0 %v5436
    %v5455 = vpop.f32.mrf.mxu0
    %v5456 = vadd.f32 0.0, %v5455
    %5457 = vmatmul.f32.gmra.mxu0 %v5436
    %v5458 = vpop.f32.mrf.mxu0
    %v5459 = vadd.f32 0.0, %v5458
    %5460 = vmatmul.f32.gmra.mxu0 %v5436
    %v5461 = vpop.f32.mrf.mxu0
    %v5462 = vadd.f32 0.0, %v5461
    %5463 = vmatmul.f32.gmra.mxu0 %v5436
    %v5464 = vpop.f32.mrf.mxu0
    %v5465 = vadd.f32 0.0, %v5464
    %5466 = vdwg.mxu0
    %5467 = vmatpush.msra.mxu0 0.0
    %5468 = vmatpush.msra.mxu0 0.0
    %5469 = vmatpush.msra.mxu0 0.0
    %5470 = vmatpush.msra.mxu0 0.0
    %5471 = vmatpush.msra.mxu0 0.0
    %5472 = vmatpush.msra.mxu0 0.0
    %5473 = vmatpush.msra.mxu0 0.0
    %5474 = vmatpush.msra.mxu0 0.0
    %5475 = vmatpush.msra.mxu0 0.0
    %5476 = vmatpush.msra.mxu0 0.0
    %5477 = vmatpush.msra.mxu0 0.0
    %5478 = vmatpush.msra.mxu0 0.0
    %5479 = vmatpush.msra.mxu0 0.0
    %5480 = vmatpush.msra.mxu0 0.0
    %5481 = vmatpush.msra.mxu0 %v309
    %5482 = vmatpush.msra.mxu0 %v305
    %5483 = vmatmul.f32.gmra.mxu0 %v5436
    %v5484 = vpop.f32.mrf.mxu0
    %v5485 = vadd.f32 0.0, %v5484
    %5486 = vmatmul.f32.gmra.mxu0 %v5436
    %v5487 = vpop.f32.mrf.mxu0
    %v5488 = vadd.f32 0.0, %v5487
    %5489 = vmatmul.f32.gmra.mxu0 %v5436
    %v5490 = vpop.f32.mrf.mxu0
    %v5491 = vadd.f32 0.0, %v5490
    %5492 = vmatmul.f32.gmra.mxu0 %v5436
    %v5493 = vpop.f32.mrf.mxu0
    %v5494 = vadd.f32 0.0, %v5493
    %5495 = vdwg.mxu0
    %5496 = vmatpush.msra.mxu0 0.0
    %5497 = vmatpush.msra.mxu0 0.0
    %5498 = vmatpush.msra.mxu0 0.0
    %5499 = vmatpush.msra.mxu0 0.0
    %5500 = vmatpush.msra.mxu0 0.0
    %5501 = vmatpush.msra.mxu0 0.0
    %5502 = vmatpush.msra.mxu0 0.0
    %5503 = vmatpush.msra.mxu0 0.0
    %5504 = vmatpush.msra.mxu0 0.0
    %5505 = vmatpush.msra.mxu0 0.0
    %5506 = vmatpush.msra.mxu0 0.0
    %5507 = vmatpush.msra.mxu0 0.0
    %5508 = vmatpush.msra.mxu0 0.0
    %5509 = vmatpush.msra.mxu0 0.0
    %5510 = vmatpush.msra.mxu0 %v310
    %5511 = vmatpush.msra.mxu0 %v306
    %5512 = vmatmul.f32.gmra.mxu0 %v5436
    %v5513 = vpop.f32.mrf.mxu0
    %v5514 = vadd.f32 0.0, %v5513
    %5515 = vmatmul.f32.gmra.mxu0 %v5436
    %v5516 = vpop.f32.mrf.mxu0
    %v5517 = vadd.f32 0.0, %v5516
    %5518 = vmatmul.f32.gmra.mxu0 %v5436
    %v5519 = vpop.f32.mrf.mxu0
    %v5520 = vadd.f32 0.0, %v5519
    %5521 = vmatmul.f32.gmra.mxu0 %v5436
    %v5522 = vpop.f32.mrf.mxu0
    %v5523 = vadd.f32 0.0, %v5522
    %5524 = vdwg.mxu0
    %5525 = vmatpush.msra.mxu0 0.0
    %5526 = vmatpush.msra.mxu0 0.0
    %5527 = vmatpush.msra.mxu0 0.0
    %5528 = vmatpush.msra.mxu0 0.0
    %5529 = vmatpush.msra.mxu0 0.0
    %5530 = vmatpush.msra.mxu0 0.0
    %5531 = vmatpush.msra.mxu0 0.0
    %5532 = vmatpush.msra.mxu0 0.0
    %5533 = vmatpush.msra.mxu0 0.0
    %5534 = vmatpush.msra.mxu0 0.0
    %5535 = vmatpush.msra.mxu0 0.0
    %5536 = vmatpush.msra.mxu0 0.0
    %5537 = vmatpush.msra.mxu0 0.0
    %5538 = vmatpush.msra.mxu0 0.0
    %5539 = vmatpush.msra.mxu0 %v311
    %5540 = vmatpush.msra.mxu0 %v307
    %5541 = vmatmul.f32.gmra.mxu0 %v5436
    %v5542 = vpop.f32.mrf.mxu0
    %v5543 = vadd.f32 0.0, %v5542
    %5544 = vmatmul.f32.gmra.mxu0 %v5436
    %v5545 = vpop.f32.mrf.mxu0
    %v5546 = vadd.f32 0.0, %v5545
    %5547 = vmatmul.f32.gmra.mxu0 %v5436
    %v5548 = vpop.f32.mrf.mxu0
    %v5549 = vadd.f32 0.0, %v5548
    %5550 = vmatmul.f32.gmra.mxu0 %v5436
    %v5551 = vpop.f32.mrf.mxu0
    %v5552 = vadd.f32 0.0, %v5551
    %5553 = vdwg.mxu0
    %v5555 = vperm.slane %v5433, 0
    %v5556 = vsel %vm953, %v5555, 0
    %5558 = vmatpush.msra.mxu0 0.0
    %5559 = vmatpush.msra.mxu0 0.0
    %5560 = vmatpush.msra.mxu0 0.0
    %5561 = vmatpush.msra.mxu0 0.0
    %5562 = vmatpush.msra.mxu0 0.0
    %5563 = vmatpush.msra.mxu0 0.0
    %5564 = vmatpush.msra.mxu0 0.0
    %5565 = vmatpush.msra.mxu0 0.0
    %5566 = vmatpush.msra.mxu0 0.0
    %5567 = vmatpush.msra.mxu0 0.0
    %5568 = vmatpush.msra.mxu0 0.0
    %5569 = vmatpush.msra.mxu0 0.0
    %5570 = vmatpush.msra.mxu0 0.0
    %5571 = vmatpush.msra.mxu0 0.0
    %5572 = vmatpush.msra.mxu0 %v308
    %5573 = vmatpush.msra.mxu0 %v304
    %5574 = vmatmul.f32.gmra.mxu0 %v5556
    %v5575 = vpop.f32.mrf.mxu0
    %v5576 = vadd.f32 0.0, %v5575
    %5577 = vmatmul.f32.gmra.mxu0 %v5556
    %v5578 = vpop.f32.mrf.mxu0
    %v5579 = vadd.f32 0.0, %v5578
    %5580 = vmatmul.f32.gmra.mxu0 %v5556
    %v5581 = vpop.f32.mrf.mxu0
    %v5582 = vadd.f32 0.0, %v5581
    %5583 = vmatmul.f32.gmra.mxu0 %v5556
    %v5584 = vpop.f32.mrf.mxu0
    %v5585 = vadd.f32 0.0, %v5584
    %5586 = vdwg.mxu0
    %5587 = vmatpush.msra.mxu0 0.0
    %5588 = vmatpush.msra.mxu0 0.0
    %5589 = vmatpush.msra.mxu0 0.0
    %5590 = vmatpush.msra.mxu0 0.0
    %5591 = vmatpush.msra.mxu0 0.0
    %5592 = vmatpush.msra.mxu0 0.0
    %5593 = vmatpush.msra.mxu0 0.0
    %5594 = vmatpush.msra.mxu0 0.0
    %5595 = vmatpush.msra.mxu0 0.0
    %5596 = vmatpush.msra.mxu0 0.0
    %5597 = vmatpush.msra.mxu0 0.0
    %5598 = vmatpush.msra.mxu0 0.0
    %5599 = vmatpush.msra.mxu0 0.0
    %5600 = vmatpush.msra.mxu0 0.0
    %5601 = vmatpush.msra.mxu0 %v309
    %5602 = vmatpush.msra.mxu0 %v305
    %5603 = vmatmul.f32.gmra.mxu0 %v5556
    %v5604 = vpop.f32.mrf.mxu0
    %v5605 = vadd.f32 0.0, %v5604
    %5606 = vmatmul.f32.gmra.mxu0 %v5556
    %v5607 = vpop.f32.mrf.mxu0
    %v5608 = vadd.f32 0.0, %v5607
    %5609 = vmatmul.f32.gmra.mxu0 %v5556
    %v5610 = vpop.f32.mrf.mxu0
    %v5611 = vadd.f32 0.0, %v5610
    %5612 = vmatmul.f32.gmra.mxu0 %v5556
    %v5613 = vpop.f32.mrf.mxu0
    %v5614 = vadd.f32 0.0, %v5613
    %5615 = vdwg.mxu0
    %5616 = vmatpush.msra.mxu0 0.0
    %5617 = vmatpush.msra.mxu0 0.0
    %5618 = vmatpush.msra.mxu0 0.0
    %5619 = vmatpush.msra.mxu0 0.0
    %5620 = vmatpush.msra.mxu0 0.0
    %5621 = vmatpush.msra.mxu0 0.0
    %5622 = vmatpush.msra.mxu0 0.0
    %5623 = vmatpush.msra.mxu0 0.0
    %5624 = vmatpush.msra.mxu0 0.0
    %5625 = vmatpush.msra.mxu0 0.0
    %5626 = vmatpush.msra.mxu0 0.0
    %5627 = vmatpush.msra.mxu0 0.0
    %5628 = vmatpush.msra.mxu0 0.0
    %5629 = vmatpush.msra.mxu0 0.0
    %5630 = vmatpush.msra.mxu0 %v310
    %5631 = vmatpush.msra.mxu0 %v306
    %5632 = vmatmul.f32.gmra.mxu0 %v5556
    %v5633 = vpop.f32.mrf.mxu0
    %v5634 = vadd.f32 0.0, %v5633
    %5635 = vmatmul.f32.gmra.mxu0 %v5556
    %v5636 = vpop.f32.mrf.mxu0
    %v5637 = vadd.f32 0.0, %v5636
    %5638 = vmatmul.f32.gmra.mxu0 %v5556
    %v5639 = vpop.f32.mrf.mxu0
    %v5640 = vadd.f32 0.0, %v5639
    %5641 = vmatmul.f32.gmra.mxu0 %v5556
    %v5642 = vpop.f32.mrf.mxu0
    %v5643 = vadd.f32 0.0, %v5642
    %5644 = vdwg.mxu0
    %5645 = vmatpush.msra.mxu0 0.0
    %5646 = vmatpush.msra.mxu0 0.0
    %5647 = vmatpush.msra.mxu0 0.0
    %5648 = vmatpush.msra.mxu0 0.0
    %5649 = vmatpush.msra.mxu0 0.0
    %5650 = vmatpush.msra.mxu0 0.0
    %5651 = vmatpush.msra.mxu0 0.0
    %5652 = vmatpush.msra.mxu0 0.0
    %5653 = vmatpush.msra.mxu0 0.0
    %5654 = vmatpush.msra.mxu0 0.0
    %5655 = vmatpush.msra.mxu0 0.0
    %5656 = vmatpush.msra.mxu0 0.0
    %5657 = vmatpush.msra.mxu0 0.0
    %5658 = vmatpush.msra.mxu0 0.0
    %5659 = vmatpush.msra.mxu0 %v311
    %5660 = vmatpush.msra.mxu0 %v307
    %5661 = vmatmul.f32.gmra.mxu0 %v5556
    %v5662 = vpop.f32.mrf.mxu0
    %v5663 = vadd.f32 0.0, %v5662
    %5664 = vmatmul.f32.gmra.mxu0 %v5556
    %v5665 = vpop.f32.mrf.mxu0
    %v5666 = vadd.f32 0.0, %v5665
    %5667 = vmatmul.f32.gmra.mxu0 %v5556
    %v5668 = vpop.f32.mrf.mxu0
    %v5669 = vadd.f32 0.0, %v5668
    %5670 = vmatmul.f32.gmra.mxu0 %v5556
    %v5671 = vpop.f32.mrf.mxu0
    %v5672 = vadd.f32 0.0, %v5671
    %5673 = vdwg.mxu0
    %v5674 = vmul.f32 %v4418, %v5456
    %v5675 = vmul.f32 %v4419, %v5485
    %v5676 = vmul.f32 %v4420, %v5514
    %v5677 = vmul.f32 %v4421, %v5543
    %v5678 = vmul.f32 %v4422, %v5459
    %v5679 = vmul.f32 %v4423, %v5488
    %v5680 = vmul.f32 %v4424, %v5517
    %v5681 = vmul.f32 %v4425, %v5546
    %v5682 = vmul.f32 %v4426, %v5462
    %v5683 = vmul.f32 %v4427, %v5491
    %v5684 = vmul.f32 %v4428, %v5520
    %v5685 = vmul.f32 %v4429, %v5549
    %v5686 = vmul.f32 %v4430, %v5465
    %v5687 = vmul.f32 %v4431, %v5494
    %v5688 = vmul.f32 %v4432, %v5523
    %v5689 = vmul.f32 %v4433, %v5552
    %v5690 = vadd.f32 %v5674, %v5576
    %v5691 = vadd.f32 %v5675, %v5605
    %v5692 = vadd.f32 %v5676, %v5634
    %v5693 = vadd.f32 %v5677, %v5663
    %v5694 = vadd.f32 %v5678, %v5579
    %v5695 = vadd.f32 %v5679, %v5608
    %v5696 = vadd.f32 %v5680, %v5637
    %v5697 = vadd.f32 %v5681, %v5666
    %v5698 = vadd.f32 %v5682, %v5582
    %v5699 = vadd.f32 %v5683, %v5611
    %v5700 = vadd.f32 %v5684, %v5640
    %v5701 = vadd.f32 %v5685, %v5669
    %v5702 = vadd.f32 %v5686, %v5585
    %v5703 = vadd.f32 %v5687, %v5614
    %v5704 = vadd.f32 %v5688, %v5643
    %v5705 = vadd.f32 %v5689, %v5672
    %vm5722 = vcmask 1041408
    %v5723 = vrot.slane %v5690, 6
    %v5724 = vrot.slane %v5691, 6
    %v5725 = vrot.slane %v5692, 6
    %v5726 = vrot.slane %v5693, 6
    %v5727 = vrot.slane %v5694, 6
    %v5728 = vsel %vm5722, %v5723, %v5727
    %v5729 = vrot.slane %v5695, 6
    %v5730 = vsel %vm5722, %v5724, %v5729
    %v5731 = vrot.slane %v5696, 6
    %v5732 = vsel %vm5722, %v5725, %v5731
    %v5733 = vrot.slane %v5697, 6
    %v5734 = vsel %vm5722, %v5726, %v5733
    %v5735 = vrot.slane %v5698, 6
    %v5736 = vsel %vm5722, %v5727, %v5735
    %v5737 = vrot.slane %v5699, 6
    %v5738 = vsel %vm5722, %v5729, %v5737
    %v5739 = vrot.slane %v5700, 6
    %v5740 = vsel %vm5722, %v5731, %v5739
    %v5741 = vrot.slane %v5701, 6
    %v5742 = vsel %vm5722, %v5733, %v5741
    %v5743 = vrot.slane %v5702, 6
    %v5744 = vsel %vm5722, %v5735, %v5743
    %v5745 = vrot.slane %v5703, 6
    %v5746 = vsel %vm5722, %v5737, %v5745
    %v5747 = vrot.slane %v5704, 6
    %v5748 = vsel %vm5722, %v5739, %v5747
    %v5749 = vrot.slane %v5705, 6
    %v5750 = vsel %vm5722, %v5741, %v5749
    %5767 = vst [vmem:[#allocation4] sm:$0xfc] %v5723
    %5768 = vst [vmem:[#allocation4 + $0x8] sm:$0xfc] %v5724
    %5769 = vst [vmem:[#allocation4 + $0x10] sm:$0xfc] %v5725
    %5770 = vst [vmem:[#allocation4 + $0x18] sm:$0xfc] %v5726
    %5771 = vst [vmem:[#allocation4 + $0x20] sm:$0xff] %v5728
    %5772 = vst [vmem:[#allocation4 + $0x28] sm:$0xff] %v5730
    %5773 = vst [vmem:[#allocation4 + $0x30] sm:$0xff] %v5732
    %5774 = vst [vmem:[#allocation4 + $0x38] sm:$0xff] %v5734
    %5775 = vst [vmem:[#allocation4 + $0x40] sm:$0xff] %v5736
    %5776 = vst [vmem:[#allocation4 + $0x48] sm:$0xff] %v5738
    %5777 = vst [vmem:[#allocation4 + $0x50] sm:$0xff] %v5740
    %5778 = vst [vmem:[#allocation4 + $0x58] sm:$0xff] %v5742
    %5779 = vst [vmem:[#allocation4 + $0x60] sm:$0xf] %v5744
    %5780 = vst [vmem:[#allocation4 + $0x68] sm:$0xf] %v5746
    %5781 = vst [vmem:[#allocation4 + $0x70] sm:$0xf] %v5748
    %5782 = vst [vmem:[#allocation4 + $0x78] sm:$0xf] %v5750
    %v5783 = vmul.f32 %v5122, %v5456
    %v5784 = vmul.f32 %v5123, %v5485
    %v5785 = vmul.f32 %v5124, %v5514
    %v5786 = vmul.f32 %v5125, %v5543
    %v5787 = vmul.f32 %v5126, %v5459
    %v5788 = vmul.f32 %v5127, %v5488
    %v5789 = vmul.f32 %v5128, %v5517
    %v5790 = vmul.f32 %v5129, %v5546
    %v5791 = vmul.f32 %v5130, %v5462
    %v5792 = vmul.f32 %v5131, %v5491
    %v5793 = vmul.f32 %v5132, %v5520
    %v5794 = vmul.f32 %v5133, %v5549
    %v5795 = vmul.f32 %v5134, %v5465
    %v5796 = vmul.f32 %v5135, %v5494
    %v5797 = vmul.f32 %v5136, %v5523
    %v5798 = vmul.f32 %v5137, %v5552
    %v5799 = vadd.f32 %v5783, %v5576
    %v5800 = vadd.f32 %v5784, %v5605
    %v5801 = vadd.f32 %v5785, %v5634
    %v5802 = vadd.f32 %v5786, %v5663
    %v5803 = vadd.f32 %v5787, %v5579
    %v5804 = vadd.f32 %v5788, %v5608
    %v5805 = vadd.f32 %v5789, %v5637
    %v5806 = vadd.f32 %v5790, %v5666
    %v5807 = vadd.f32 %v5791, %v5582
    %v5808 = vadd.f32 %v5792, %v5611
    %v5809 = vadd.f32 %v5793, %v5640
    %v5810 = vadd.f32 %v5794, %v5669
    %v5811 = vadd.f32 %v5795, %v5585
    %v5812 = vadd.f32 %v5796, %v5614
    %v5813 = vadd.f32 %v5797, %v5643
    %v5814 = vadd.f32 %v5798, %v5672
    %v5831 = vrot.slane %v5799, 6
    %v5832 = vrot.slane %v5800, 6
    %v5833 = vrot.slane %v5801, 6
    %v5834 = vrot.slane %v5802, 6
    %v5835 = vrot.slane %v5803, 6
    %v5836 = vsel %vm5722, %v5831, %v5835
    %v5837 = vrot.slane %v5804, 6
    %v5838 = vsel %vm5722, %v5832, %v5837
    %v5839 = vrot.slane %v5805, 6
    %v5840 = vsel %vm5722, %v5833, %v5839
    %v5841 = vrot.slane %v5806, 6
    %v5842 = vsel %vm5722, %v5834, %v5841
    %v5843 = vrot.slane %v5807, 6
    %v5844 = vsel %vm5722, %v5835, %v5843
    %v5845 = vrot.slane %v5808, 6
    %v5846 = vsel %vm5722, %v5837, %v5845
    %v5847 = vrot.slane %v5809, 6
    %v5848 = vsel %vm5722, %v5839, %v5847
    %v5849 = vrot.slane %v5810, 6
    %v5850 = vsel %vm5722, %v5841, %v5849
    %v5851 = vrot.slane %v5811, 6
    %v5852 = vsel %vm5722, %v5843, %v5851
    %v5853 = vrot.slane %v5812, 6
    %v5854 = vsel %vm5722, %v5845, %v5853
    %v5855 = vrot.slane %v5813, 6
    %v5856 = vsel %vm5722, %v5847, %v5855
    %v5857 = vrot.slane %v5814, 6
    %v5858 = vsel %vm5722, %v5849, %v5857
    %s5875 = scalar_lea.vmem [#allocation4], 128
    %5876 = vst [vmem:[%s5875] sm:$0xfc] %v5831
    %5877 = vst [vmem:[%s5875 + $0x8] sm:$0xfc] %v5832
    %5878 = vst [vmem:[%s5875 + $0x10] sm:$0xfc] %v5833
    %5879 = vst [vmem:[%s5875 + $0x18] sm:$0xfc] %v5834
    %5880 = vst [vmem:[%s5875 + $0x20] sm:$0xff] %v5836
    %5881 = vst [vmem:[%s5875 + $0x28] sm:$0xff] %v5838
    %5882 = vst [vmem:[%s5875 + $0x30] sm:$0xff] %v5840
    %5883 = vst [vmem:[%s5875 + $0x38] sm:$0xff] %v5842
    %5884 = vst [vmem:[%s5875 + $0x40] sm:$0xff] %v5844
    %5885 = vst [vmem:[%s5875 + $0x48] sm:$0xff] %v5846
    %5886 = vst [vmem:[%s5875 + $0x50] sm:$0xff] %v5848
    %5887 = vst [vmem:[%s5875 + $0x58] sm:$0xff] %v5850
    %5888 = vst [vmem:[%s5875 + $0x60] sm:$0xf] %v5852
    %5889 = vst [vmem:[%s5875 + $0x68] sm:$0xf] %v5854
    %5890 = vst [vmem:[%s5875 + $0x70] sm:$0xf] %v5856
    %5891 = vst [vmem:[%s5875 + $0x78] sm:$0xf] %v5858
    %v5892 = vld [vmem:[#allocation4] sm:$0xff]
    %v5893 = vld [vmem:[#allocation4 + $0x8] sm:$0xff]
    %v5894 = vld [vmem:[#allocation4 + $0x10] sm:$0xff]
    %v5895 = vld [vmem:[#allocation4 + $0x18] sm:$0xff]
    %v5896 = vld [vmem:[#allocation4 + $0x20] sm:$0xff]
    %v5897 = vld [vmem:[#allocation4 + $0x28] sm:$0xff]
    %v5898 = vld [vmem:[#allocation4 + $0x30] sm:$0xff]
    %v5899 = vld [vmem:[#allocation4 + $0x38] sm:$0xff]
    %v5900 = vld [vmem:[#allocation4 + $0x40] sm:$0xff]
    %v5901 = vld [vmem:[#allocation4 + $0x48] sm:$0xff]
    %v5902 = vld [vmem:[#allocation4 + $0x50] sm:$0xff]
    %v5903 = vld [vmem:[#allocation4 + $0x58] sm:$0xff]
    %v5904 = vld [vmem:[#allocation4 + $0x60] sm:$0xf]
    %v5905 = vld [vmem:[#allocation4 + $0x68] sm:$0xf]
    %v5906 = vld [vmem:[#allocation4 + $0x70] sm:$0xf]
    %v5907 = vld [vmem:[#allocation4 + $0x78] sm:$0xf]
    %v5908 = vld [vmem:[#allocation23] sm:$0xff]
    %v5909 = vld [vmem:[#allocation23 + $0x8] sm:$0xff]
    %v5910 = vld [vmem:[#allocation23 + $0x10] sm:$0xff]
    %v5911 = vld [vmem:[#allocation23 + $0x18] sm:$0xff]
    %v5912 = vld [vmem:[#allocation23 + $0x20] sm:$0xff]
    %v5913 = vld [vmem:[#allocation23 + $0x28] sm:$0xff]
    %v5914 = vld [vmem:[#allocation23 + $0x30] sm:$0xff]
    %v5915 = vld [vmem:[#allocation23 + $0x38] sm:$0xff]
    %v5916 = vld [vmem:[#allocation23 + $0x40] sm:$0xff]
    %v5917 = vld [vmem:[#allocation23 + $0x48] sm:$0xff]
    %v5918 = vld [vmem:[#allocation23 + $0x50] sm:$0xff]
    %v5919 = vld [vmem:[#allocation23 + $0x58] sm:$0xff]
    %v5920 = vld [vmem:[#allocation23 + $0x60] sm:$0xf]
    %v5921 = vld [vmem:[#allocation23 + $0x68] sm:$0xf]
    %v5922 = vld [vmem:[#allocation23 + $0x70] sm:$0xf]
    %v5923 = vld [vmem:[#allocation23 + $0x78] sm:$0xf]
    %v5924 = vld [vmem:[#allocation4] sm:$0xfe]
    %v5925 = vld [vmem:[#allocation4 + $0x8] sm:$0xfe]
    %v5926 = vld [vmem:[#allocation4 + $0x10] sm:$0xfe]
    %v5927 = vld [vmem:[#allocation4 + $0x18] sm:$0xfe]
    %v5928 = vld [vmem:[#allocation4 + $0x60] sm:$0x1f]
    %v5929 = vld [vmem:[#allocation4 + $0x68] sm:$0x1f]
    %v5930 = vld [vmem:[#allocation4 + $0x70] sm:$0x1f]
    %v5931 = vld [vmem:[#allocation4 + $0x78] sm:$0x1f]
    %s5932 = scalar_lea.vmem [#allocation23], 128
    %v5933 = vld [vmem:[%s5932] sm:$0xff]
    %v5934 = vld [vmem:[%s5932 + $0x8] sm:$0xff]
    %v5935 = vld [vmem:[%s5932 + $0x10] sm:$0xff]
    %v5936 = vld [vmem:[%s5932 + $0x18] sm:$0xff]
    %v5937 = vld [vmem:[%s5932 + $0x20] sm:$0xff]
    %v5938 = vld [vmem:[%s5932 + $0x28] sm:$0xff]
    %v5939 = vld [vmem:[%s5932 + $0x30] sm:$0xff]
    %v5940 = vld [vmem:[%s5932 + $0x38] sm:$0xff]
    %v5941 = vld [vmem:[%s5932 + $0x40] sm:$0xff]
    %v5942 = vld [vmem:[%s5932 + $0x48] sm:$0xff]
    %v5943 = vld [vmem:[%s5932 + $0x50] sm:$0xff]
    %v5944 = vld [vmem:[%s5932 + $0x58] sm:$0xff]
    %v5945 = vld [vmem:[%s5932 + $0x60] sm:$0xf]
    %v5946 = vld [vmem:[%s5932 + $0x68] sm:$0xf]
    %v5947 = vld [vmem:[%s5932 + $0x70] sm:$0xf]
    %v5948 = vld [vmem:[%s5932 + $0x78] sm:$0xf]
    %v5965 = vrot.slane %v5924, 1
    %v5966 = vrot.slane %v5896, 1
    %v5967 = vsel %vm2238, %v5965, %v5966
    %v5968 = vrot.slane %v5925, 1
    %v5969 = vrot.slane %v5897, 1
    %v5970 = vsel %vm2238, %v5968, %v5969
    %v5971 = vrot.slane %v5926, 1
    %v5972 = vrot.slane %v5898, 1
    %v5973 = vsel %vm2238, %v5971, %v5972
    %v5974 = vrot.slane %v5927, 1
    %v5975 = vrot.slane %v5899, 1
    %v5976 = vsel %vm2238, %v5974, %v5975
    %v5977 = vrot.slane %v5900, 1
    %v5978 = vsel %vm2238, %v5966, %v5977
    %v5979 = vrot.slane %v5901, 1
    %v5980 = vsel %vm2238, %v5969, %v5979
    %v5981 = vrot.slane %v5902, 1
    %v5982 = vsel %vm2238, %v5972, %v5981
    %v5983 = vrot.slane %v5903, 1
    %v5984 = vsel %vm2238, %v5975, %v5983
    %v5985 = vrot.slane %v5928, 1
    %v5986 = vsel %vm2238, %v5977, %v5985
    %v5987 = vrot.slane %v5929, 1
    %v5988 = vsel %vm2238, %v5979, %v5987
    %v5989 = vrot.slane %v5930, 1
    %v5990 = vsel %vm2238, %v5981, %v5989
    %v5991 = vrot.slane %v5931, 1
    %v5992 = vsel %vm2238, %v5983, %v5991
    %6009 = vmatpush.xpose.msra.mxu0 0.0
    %6010 = vmatpush.xpose.msra.mxu0 0.0
    %6011 = vmatpush.xpose.msra.mxu0 0.0
    %6012 = vmatpush.xpose.msra.mxu0 0.0
    %6013 = vmatpush.xpose.msra.mxu0 0.0
    %6014 = vmatpush.xpose.msra.mxu0 0.0
    %6015 = vmatpush.xpose.msra.mxu0 0.0
    %6016 = vmatpush.xpose.msra.mxu0 0.0
    %6017 = vmatpush.xpose.msra.mxu0 0.0
    %6018 = vmatpush.xpose.msra.mxu0 0.0
    %6019 = vmatpush.xpose.msra.mxu0 0.0
    %6020 = vmatpush.xpose.msra.mxu0 0.0
    %6021 = vmatpush.xpose.msra.mxu0 %v5945
    %6022 = vmatpush.xpose.msra.mxu0 %v5941
    %6023 = vmatpush.xpose.msra.mxu0 %v5937
    %6024 = vmatpush.xpose.msra.mxu0 %v5933
    %6025 = vmatmul.f32.gmra.mxu0 %v5967
    %v6026 = vpop.f32.mrf.mxu0
    %v6027 = vadd.f32 0.0, %v6026
    %6028 = vmatmul.f32.gmra.mxu0 %v5978
    %v6029 = vpop.f32.mrf.mxu0
    %v6030 = vadd.f32 0.0, %v6029
    %6031 = vmatmul.f32.gmra.mxu0 %v5986
    %v6032 = vpop.f32.mrf.mxu0
    %v6033 = vadd.f32 0.0, %v6032
    %6034 = vmatmul.f32.gmra.mxu0 %v5985
    %v6035 = vpop.f32.mrf.mxu0
    %v6036 = vadd.f32 0.0, %v6035
    %6037 = vdwg.mxu0
    %6038 = vmatpush.xpose.msra.mxu0 0.0
    %6039 = vmatpush.xpose.msra.mxu0 0.0
    %6040 = vmatpush.xpose.msra.mxu0 0.0
    %6041 = vmatpush.xpose.msra.mxu0 0.0
    %6042 = vmatpush.xpose.msra.mxu0 0.0
    %6043 = vmatpush.xpose.msra.mxu0 0.0
    %6044 = vmatpush.xpose.msra.mxu0 0.0
    %6045 = vmatpush.xpose.msra.mxu0 0.0
    %6046 = vmatpush.xpose.msra.mxu0 0.0
    %6047 = vmatpush.xpose.msra.mxu0 0.0
    %6048 = vmatpush.xpose.msra.mxu0 0.0
    %6049 = vmatpush.xpose.msra.mxu0 0.0
    %6050 = vmatpush.xpose.msra.mxu0 %v5946
    %6051 = vmatpush.xpose.msra.mxu0 %v5942
    %6052 = vmatpush.xpose.msra.mxu0 %v5938
    %6053 = vmatpush.xpose.msra.mxu0 %v5934
    %6054 = vmatmul.f32.gmra.mxu0 %v5970
    %v6055 = vpop.f32.mrf.mxu0
    %v6056 = vadd.f32 %v6027, %v6055
    %6057 = vmatmul.f32.gmra.mxu0 %v5980
    %v6058 = vpop.f32.mrf.mxu0
    %v6059 = vadd.f32 %v6030, %v6058
    %6060 = vmatmul.f32.gmra.mxu0 %v5988
    %v6061 = vpop.f32.mrf.mxu0
    %v6062 = vadd.f32 %v6033, %v6061
    %6063 = vmatmul.f32.gmra.mxu0 %v5987
    %v6064 = vpop.f32.mrf.mxu0
    %v6065 = vadd.f32 %v6036, %v6064
    %6066 = vdwg.mxu0
    %6067 = vmatpush.xpose.msra.mxu0 0.0
    %6068 = vmatpush.xpose.msra.mxu0 0.0
    %6069 = vmatpush.xpose.msra.mxu0 0.0
    %6070 = vmatpush.xpose.msra.mxu0 0.0
    %6071 = vmatpush.xpose.msra.mxu0 0.0
    %6072 = vmatpush.xpose.msra.mxu0 0.0
    %6073 = vmatpush.xpose.msra.mxu0 0.0
    %6074 = vmatpush.xpose.msra.mxu0 0.0
    %6075 = vmatpush.xpose.msra.mxu0 0.0
    %6076 = vmatpush.xpose.msra.mxu0 0.0
    %6077 = vmatpush.xpose.msra.mxu0 0.0
    %6078 = vmatpush.xpose.msra.mxu0 0.0
    %6079 = vmatpush.xpose.msra.mxu0 %v5947
    %6080 = vmatpush.xpose.msra.mxu0 %v5943
    %6081 = vmatpush.xpose.msra.mxu0 %v5939
    %6082 = vmatpush.xpose.msra.mxu0 %v5935
    %6083 = vmatmul.f32.gmra.mxu0 %v5973
    %v6084 = vpop.f32.mrf.mxu0
    %v6085 = vadd.f32 %v6056, %v6084
    %6086 = vmatmul.f32.gmra.mxu0 %v5982
    %v6087 = vpop.f32.mrf.mxu0
    %v6088 = vadd.f32 %v6059, %v6087
    %6089 = vmatmul.f32.gmra.mxu0 %v5990
    %v6090 = vpop.f32.mrf.mxu0
    %v6091 = vadd.f32 %v6062, %v6090
    %6092 = vmatmul.f32.gmra.mxu0 %v5989
    %v6093 = vpop.f32.mrf.mxu0
    %v6094 = vadd.f32 %v6065, %v6093
    %6095 = vdwg.mxu0
    %6096 = vmatpush.xpose.msra.mxu0 0.0
    %6097 = vmatpush.xpose.msra.mxu0 0.0
    %6098 = vmatpush.xpose.msra.mxu0 0.0
    %6099 = vmatpush.xpose.msra.mxu0 0.0
    %6100 = vmatpush.xpose.msra.mxu0 0.0
    %6101 = vmatpush.xpose.msra.mxu0 0.0
    %6102 = vmatpush.xpose.msra.mxu0 0.0
    %6103 = vmatpush.xpose.msra.mxu0 0.0
    %6104 = vmatpush.xpose.msra.mxu0 0.0
    %6105 = vmatpush.xpose.msra.mxu0 0.0
    %6106 = vmatpush.xpose.msra.mxu0 0.0
    %6107 = vmatpush.xpose.msra.mxu0 0.0
    %6108 = vmatpush.xpose.msra.mxu0 %v5948
    %6109 = vmatpush.xpose.msra.mxu0 %v5944
    %6110 = vmatpush.xpose.msra.mxu0 %v5940
    %6111 = vmatpush.xpose.msra.mxu0 %v5936
    %6112 = vmatmul.f32.gmra.mxu0 %v5976
    %v6113 = vpop.f32.mrf.mxu0
    %v6114 = vadd.f32 %v6085, %v6113
    %6115 = vmatmul.f32.gmra.mxu0 %v5984
    %v6116 = vpop.f32.mrf.mxu0
    %v6117 = vadd.f32 %v6088, %v6116
    %6118 = vmatmul.f32.gmra.mxu0 %v5992
    %v6119 = vpop.f32.mrf.mxu0
    %v6120 = vadd.f32 %v6091, %v6119
    %6121 = vmatmul.f32.gmra.mxu0 %v5991
    %v6122 = vpop.f32.mrf.mxu0
    %v6123 = vadd.f32 %v6094, %v6122
    %6124 = vdwg.mxu0
    %6125 = vmatpush.xpose.msra.mxu0 0.0
    %6126 = vmatpush.xpose.msra.mxu0 0.0
    %6127 = vmatpush.xpose.msra.mxu0 0.0
    %6128 = vmatpush.xpose.msra.mxu0 0.0
    %6129 = vmatpush.xpose.msra.mxu0 0.0
    %6130 = vmatpush.xpose.msra.mxu0 0.0
    %6131 = vmatpush.xpose.msra.mxu0 0.0
    %6132 = vmatpush.xpose.msra.mxu0 0.0
    %6133 = vmatpush.xpose.msra.mxu0 0.0
    %6134 = vmatpush.xpose.msra.mxu0 0.0
    %6135 = vmatpush.xpose.msra.mxu0 0.0
    %6136 = vmatpush.xpose.msra.mxu0 0.0
    %6137 = vmatpush.xpose.msra.mxu0 %v5920
    %6138 = vmatpush.xpose.msra.mxu0 %v5916
    %6139 = vmatpush.xpose.msra.mxu0 %v5912
    %6140 = vmatpush.xpose.msra.mxu0 %v5908
    %6141 = vmatmul.f32.gmra.mxu0 %v5892
    %v6142 = vpop.f32.mrf.mxu0
    %v6143 = vadd.f32 %v6114, %v6142
    %6144 = vmatmul.f32.gmra.mxu0 %v5896
    %v6145 = vpop.f32.mrf.mxu0
    %v6146 = vadd.f32 %v6117, %v6145
    %6147 = vmatmul.f32.gmra.mxu0 %v5900
    %v6148 = vpop.f32.mrf.mxu0
    %v6149 = vadd.f32 %v6120, %v6148
    %6150 = vmatmul.f32.gmra.mxu0 %v5904
    %v6151 = vpop.f32.mrf.mxu0
    %v6152 = vadd.f32 %v6123, %v6151
    %6153 = vdwg.mxu0
    %6154 = vmatpush.xpose.msra.mxu0 0.0
    %6155 = vmatpush.xpose.msra.mxu0 0.0
    %6156 = vmatpush.xpose.msra.mxu0 0.0
    %6157 = vmatpush.xpose.msra.mxu0 0.0
    %6158 = vmatpush.xpose.msra.mxu0 0.0
    %6159 = vmatpush.xpose.msra.mxu0 0.0
    %6160 = vmatpush.xpose.msra.mxu0 0.0
    %6161 = vmatpush.xpose.msra.mxu0 0.0
    %6162 = vmatpush.xpose.msra.mxu0 0.0
    %6163 = vmatpush.xpose.msra.mxu0 0.0
    %6164 = vmatpush.xpose.msra.mxu0 0.0
    %6165 = vmatpush.xpose.msra.mxu0 0.0
    %6166 = vmatpush.xpose.msra.mxu0 %v5921
    %6167 = vmatpush.xpose.msra.mxu0 %v5917
    %6168 = vmatpush.xpose.msra.mxu0 %v5913
    %6169 = vmatpush.xpose.msra.mxu0 %v5909
    %6170 = vmatmul.f32.gmra.mxu0 %v5893
    %v6171 = vpop.f32.mrf.mxu0
    %v6172 = vadd.f32 %v6143, %v6171
    %6173 = vmatmul.f32.gmra.mxu0 %v5897
    %v6174 = vpop.f32.mrf.mxu0
    %v6175 = vadd.f32 %v6146, %v6174
    %6176 = vmatmul.f32.gmra.mxu0 %v5901
    %v6177 = vpop.f32.mrf.mxu0
    %v6178 = vadd.f32 %v6149, %v6177
    %6179 = vmatmul.f32.gmra.mxu0 %v5905
    %v6180 = vpop.f32.mrf.mxu0
    %v6181 = vadd.f32 %v6152, %v6180
    %6182 = vdwg.mxu0
    %6183 = vmatpush.xpose.msra.mxu0 0.0
    %6184 = vmatpush.xpose.msra.mxu0 0.0
    %6185 = vmatpush.xpose.msra.mxu0 0.0
    %6186 = vmatpush.xpose.msra.mxu0 0.0
    %6187 = vmatpush.xpose.msra.mxu0 0.0
    %6188 = vmatpush.xpose.msra.mxu0 0.0
    %6189 = vmatpush.xpose.msra.mxu0 0.0
    %6190 = vmatpush.xpose.msra.mxu0 0.0
    %6191 = vmatpush.xpose.msra.mxu0 0.0
    %6192 = vmatpush.xpose.msra.mxu0 0.0
    %6193 = vmatpush.xpose.msra.mxu0 0.0
    %6194 = vmatpush.xpose.msra.mxu0 0.0
    %6195 = vmatpush.xpose.msra.mxu0 %v5922
    %6196 = vmatpush.xpose.msra.mxu0 %v5918
    %6197 = vmatpush.xpose.msra.mxu0 %v5914
    %6198 = vmatpush.xpose.msra.mxu0 %v5910
    %6199 = vmatmul.f32.gmra.mxu0 %v5894
    %v6200 = vpop.f32.mrf.mxu0
    %v6201 = vadd.f32 %v6172, %v6200
    %6202 = vmatmul.f32.gmra.mxu0 %v5898
    %v6203 = vpop.f32.mrf.mxu0
    %v6204 = vadd.f32 %v6175, %v6203
    %6205 = vmatmul.f32.gmra.mxu0 %v5902
    %v6206 = vpop.f32.mrf.mxu0
    %v6207 = vadd.f32 %v6178, %v6206
    %6208 = vmatmul.f32.gmra.mxu0 %v5906
    %v6209 = vpop.f32.mrf.mxu0
    %v6210 = vadd.f32 %v6181, %v6209
    %6211 = vdwg.mxu0
    %6212 = vmatpush.xpose.msra.mxu0 0.0
    %6213 = vmatpush.xpose.msra.mxu0 0.0
    %6214 = vmatpush.xpose.msra.mxu0 0.0
    %6215 = vmatpush.xpose.msra.mxu0 0.0
    %6216 = vmatpush.xpose.msra.mxu0 0.0
    %6217 = vmatpush.xpose.msra.mxu0 0.0
    %6218 = vmatpush.xpose.msra.mxu0 0.0
    %6219 = vmatpush.xpose.msra.mxu0 0.0
    %6220 = vmatpush.xpose.msra.mxu0 0.0
    %6221 = vmatpush.xpose.msra.mxu0 0.0
    %6222 = vmatpush.xpose.msra.mxu0 0.0
    %6223 = vmatpush.xpose.msra.mxu0 0.0
    %6224 = vmatpush.xpose.msra.mxu0 %v5923
    %6225 = vmatpush.xpose.msra.mxu0 %v5919
    %6226 = vmatpush.xpose.msra.mxu0 %v5915
    %6227 = vmatpush.xpose.msra.mxu0 %v5911
    %6228 = vmatmul.f32.gmra.mxu0 %v5895
    %v6229 = vpop.f32.mrf.mxu0
    %v6230 = vadd.f32 %v6201, %v6229
    %6231 = vmatmul.f32.gmra.mxu0 %v5899
    %v6232 = vpop.f32.mrf.mxu0
    %v6233 = vadd.f32 %v6204, %v6232
    %6234 = vmatmul.f32.gmra.mxu0 %v5903
    %v6235 = vpop.f32.mrf.mxu0
    %v6236 = vadd.f32 %v6207, %v6235
    %6237 = vmatmul.f32.gmra.mxu0 %v5907
    %v6238 = vpop.f32.mrf.mxu0
    %v6239 = vadd.f32 %v6210, %v6238
    %6240 = vdwg.mxu0
    %v6241 = vld [vmem:[#allocation4] sm:$0xfc]
    %v6242 = vld [vmem:[#allocation4 + $0x8] sm:$0xfc]
    %v6243 = vld [vmem:[#allocation4 + $0x10] sm:$0xfc]
    %v6244 = vld [vmem:[#allocation4 + $0x18] sm:$0xfc]
    %v6245 = vld [vmem:[#allocation4 + $0x60] sm:$0x3f]
    %v6246 = vld [vmem:[#allocation4 + $0x68] sm:$0x3f]
    %v6247 = vld [vmem:[#allocation4 + $0x70] sm:$0x3f]
    %v6248 = vld [vmem:[#allocation4 + $0x78] sm:$0x3f]
    %s6249 = scalar_lea.vmem [#allocation23], 256
    %v6250 = vld [vmem:[%s6249] sm:$0xff]
    %v6251 = vld [vmem:[%s6249 + $0x8] sm:$0xff]
    %v6252 = vld [vmem:[%s6249 + $0x10] sm:$0xff]
    %v6253 = vld [vmem:[%s6249 + $0x18] sm:$0xff]
    %v6254 = vld [vmem:[%s6249 + $0x20] sm:$0xff]
    %v6255 = vld [vmem:[%s6249 + $0x28] sm:$0xff]
    %v6256 = vld [vmem:[%s6249 + $0x30] sm:$0xff]
    %v6257 = vld [vmem:[%s6249 + $0x38] sm:$0xff]
    %v6258 = vld [vmem:[%s6249 + $0x40] sm:$0xff]
    %v6259 = vld [vmem:[%s6249 + $0x48] sm:$0xff]
    %v6260 = vld [vmem:[%s6249 + $0x50] sm:$0xff]
    %v6261 = vld [vmem:[%s6249 + $0x58] sm:$0xff]
    %v6262 = vld [vmem:[%s6249 + $0x60] sm:$0xf]
    %v6263 = vld [vmem:[%s6249 + $0x68] sm:$0xf]
    %v6264 = vld [vmem:[%s6249 + $0x70] sm:$0xf]
    %v6265 = vld [vmem:[%s6249 + $0x78] sm:$0xf]
    %v6274 = vrot.slane %v6241, 2
    %v6275 = vrot.slane %v5896, 2
    %v6276 = vsel %vm2516, %v6274, %v6275
    %v6277 = vrot.slane %v6242, 2
    %v6278 = vrot.slane %v5897, 2
    %v6279 = vsel %vm2516, %v6277, %v6278
    %v6280 = vrot.slane %v6243, 2
    %v6281 = vrot.slane %v5898, 2
    %v6282 = vsel %vm2516, %v6280, %v6281
    %v6283 = vrot.slane %v6244, 2
    %v6284 = vrot.slane %v5899, 2
    %v6285 = vsel %vm2516, %v6283, %v6284
    %v6286 = vrot.slane %v5900, 2
    %v6287 = vsel %vm2516, %v6275, %v6286
    %v6288 = vrot.slane %v5901, 2
    %v6289 = vsel %vm2516, %v6278, %v6288
    %v6290 = vrot.slane %v5902, 2
    %v6291 = vsel %vm2516, %v6281, %v6290
    %v6292 = vrot.slane %v5903, 2
    %v6293 = vsel %vm2516, %v6284, %v6292
    %v6294 = vrot.slane %v6245, 2
    %v6295 = vsel %vm2516, %v6286, %v6294
    %v6296 = vrot.slane %v6246, 2
    %v6297 = vsel %vm2516, %v6288, %v6296
    %v6298 = vrot.slane %v6247, 2
    %v6299 = vsel %vm2516, %v6290, %v6298
    %v6300 = vrot.slane %v6248, 2
    %v6301 = vsel %vm2516, %v6292, %v6300
    %6318 = vmatpush.xpose.msra.mxu0 0.0
    %6319 = vmatpush.xpose.msra.mxu0 0.0
    %6320 = vmatpush.xpose.msra.mxu0 0.0
    %6321 = vmatpush.xpose.msra.mxu0 0.0
    %6322 = vmatpush.xpose.msra.mxu0 0.0
    %6323 = vmatpush.xpose.msra.mxu0 0.0
    %6324 = vmatpush.xpose.msra.mxu0 0.0
    %6325 = vmatpush.xpose.msra.mxu0 0.0
    %6326 = vmatpush.xpose.msra.mxu0 0.0
    %6327 = vmatpush.xpose.msra.mxu0 0.0
    %6328 = vmatpush.xpose.msra.mxu0 0.0
    %6329 = vmatpush.xpose.msra.mxu0 0.0
    %6330 = vmatpush.xpose.msra.mxu0 %v6262
    %6331 = vmatpush.xpose.msra.mxu0 %v6258
    %6332 = vmatpush.xpose.msra.mxu0 %v6254
    %6333 = vmatpush.xpose.msra.mxu0 %v6250
    %6334 = vmatmul.f32.gmra.mxu0 %v6276
    %v6335 = vpop.f32.mrf.mxu0
    %v6336 = vadd.f32 0.0, %v6335
    %6337 = vmatmul.f32.gmra.mxu0 %v6287
    %v6338 = vpop.f32.mrf.mxu0
    %v6339 = vadd.f32 0.0, %v6338
    %6340 = vmatmul.f32.gmra.mxu0 %v6295
    %v6341 = vpop.f32.mrf.mxu0
    %v6342 = vadd.f32 0.0, %v6341
    %6343 = vmatmul.f32.gmra.mxu0 %v6294
    %v6344 = vpop.f32.mrf.mxu0
    %v6345 = vadd.f32 0.0, %v6344
    %6346 = vdwg.mxu0
    %6347 = vmatpush.xpose.msra.mxu0 0.0
    %6348 = vmatpush.xpose.msra.mxu0 0.0
    %6349 = vmatpush.xpose.msra.mxu0 0.0
    %6350 = vmatpush.xpose.msra.mxu0 0.0
    %6351 = vmatpush.xpose.msra.mxu0 0.0
    %6352 = vmatpush.xpose.msra.mxu0 0.0
    %6353 = vmatpush.xpose.msra.mxu0 0.0
    %6354 = vmatpush.xpose.msra.mxu0 0.0
    %6355 = vmatpush.xpose.msra.mxu0 0.0
    %6356 = vmatpush.xpose.msra.mxu0 0.0
    %6357 = vmatpush.xpose.msra.mxu0 0.0
    %6358 = vmatpush.xpose.msra.mxu0 0.0
    %6359 = vmatpush.xpose.msra.mxu0 %v6263
    %6360 = vmatpush.xpose.msra.mxu0 %v6259
    %6361 = vmatpush.xpose.msra.mxu0 %v6255
    %6362 = vmatpush.xpose.msra.mxu0 %v6251
    %6363 = vmatmul.f32.gmra.mxu0 %v6279
    %v6364 = vpop.f32.mrf.mxu0
    %v6365 = vadd.f32 %v6336, %v6364
    %6366 = vmatmul.f32.gmra.mxu0 %v6289
    %v6367 = vpop.f32.mrf.mxu0
    %v6368 = vadd.f32 %v6339, %v6367
    %6369 = vmatmul.f32.gmra.mxu0 %v6297
    %v6370 = vpop.f32.mrf.mxu0
    %v6371 = vadd.f32 %v6342, %v6370
    %6372 = vmatmul.f32.gmra.mxu0 %v6296
    %v6373 = vpop.f32.mrf.mxu0
    %v6374 = vadd.f32 %v6345, %v6373
    %6375 = vdwg.mxu0
    %6376 = vmatpush.xpose.msra.mxu0 0.0
    %6377 = vmatpush.xpose.msra.mxu0 0.0
    %6378 = vmatpush.xpose.msra.mxu0 0.0
    %6379 = vmatpush.xpose.msra.mxu0 0.0
    %6380 = vmatpush.xpose.msra.mxu0 0.0
    %6381 = vmatpush.xpose.msra.mxu0 0.0
    %6382 = vmatpush.xpose.msra.mxu0 0.0
    %6383 = vmatpush.xpose.msra.mxu0 0.0
    %6384 = vmatpush.xpose.msra.mxu0 0.0
    %6385 = vmatpush.xpose.msra.mxu0 0.0
    %6386 = vmatpush.xpose.msra.mxu0 0.0
    %6387 = vmatpush.xpose.msra.mxu0 0.0
    %6388 = vmatpush.xpose.msra.mxu0 %v6264
    %6389 = vmatpush.xpose.msra.mxu0 %v6260
    %6390 = vmatpush.xpose.msra.mxu0 %v6256
    %6391 = vmatpush.xpose.msra.mxu0 %v6252
    %6392 = vmatmul.f32.gmra.mxu0 %v6282
    %v6393 = vpop.f32.mrf.mxu0
    %v6394 = vadd.f32 %v6365, %v6393
    %6395 = vmatmul.f32.gmra.mxu0 %v6291
    %v6396 = vpop.f32.mrf.mxu0
    %v6397 = vadd.f32 %v6368, %v6396
    %6398 = vmatmul.f32.gmra.mxu0 %v6299
    %v6399 = vpop.f32.mrf.mxu0
    %v6400 = vadd.f32 %v6371, %v6399
    %6401 = vmatmul.f32.gmra.mxu0 %v6298
    %v6402 = vpop.f32.mrf.mxu0
    %v6403 = vadd.f32 %v6374, %v6402
    %6404 = vdwg.mxu0
    %6405 = vmatpush.xpose.msra.mxu0 0.0
    %6406 = vmatpush.xpose.msra.mxu0 0.0
    %6407 = vmatpush.xpose.msra.mxu0 0.0
    %6408 = vmatpush.xpose.msra.mxu0 0.0
    %6409 = vmatpush.xpose.msra.mxu0 0.0
    %6410 = vmatpush.xpose.msra.mxu0 0.0
    %6411 = vmatpush.xpose.msra.mxu0 0.0
    %6412 = vmatpush.xpose.msra.mxu0 0.0
    %6413 = vmatpush.xpose.msra.mxu0 0.0
    %6414 = vmatpush.xpose.msra.mxu0 0.0
    %6415 = vmatpush.xpose.msra.mxu0 0.0
    %6416 = vmatpush.xpose.msra.mxu0 0.0
    %6417 = vmatpush.xpose.msra.mxu0 %v6265
    %6418 = vmatpush.xpose.msra.mxu0 %v6261
    %6419 = vmatpush.xpose.msra.mxu0 %v6257
    %6420 = vmatpush.xpose.msra.mxu0 %v6253
    %6421 = vmatmul.f32.gmra.mxu0 %v6285
    %v6422 = vpop.f32.mrf.mxu0
    %v6423 = vadd.f32 %v6394, %v6422
    %6424 = vmatmul.f32.gmra.mxu0 %v6293
    %v6425 = vpop.f32.mrf.mxu0
    %v6426 = vadd.f32 %v6397, %v6425
    %6427 = vmatmul.f32.gmra.mxu0 %v6301
    %v6428 = vpop.f32.mrf.mxu0
    %v6429 = vadd.f32 %v6400, %v6428
    %6430 = vmatmul.f32.gmra.mxu0 %v6300
    %v6431 = vpop.f32.mrf.mxu0
    %v6432 = vadd.f32 %v6403, %v6431
    %6433 = vdwg.mxu0
    %v6434 = vadd.f32 %v6230, %v6423
    %v6435 = vadd.f32 %v6233, %v6426
    %v6436 = vadd.f32 %v6236, %v6429
    %v6437 = vadd.f32 %v6239, %v6432
    %s6438 = sld [smem:[#allocation8]]
    %v6439 = vstv %s6438
    %v6440 = vadd.f32 %v6434, %v6439
    %v6441 = vadd.f32 %v6435, %v6439
    %v6442 = vadd.f32 %v6436, %v6439
    %v6443 = vadd.f32 %v6437, %v6439
    %v6444 = vsel %vm198, %v6440, 0.0
    %6445 = vadd.xlane.f32.xlu0 %v6444
    %v6446 = vpop.xlane.xlu0 %6445
    %v6447 = vsel %vm198, %v6441, 0.0
    %6448 = vadd.xlane.f32.xlu0 %v6447
    %v6449 = vpop.xlane.xlu0 %6448
    %v6450 = vsel %vm198, %v6442, 0.0
    %6451 = vadd.xlane.f32.xlu0 %v6450
    %v6452 = vpop.xlane.xlu0 %6451
    %v6453 = vsel %vm202, %v6443, 0.0
    %6454 = vadd.xlane.f32.xlu0 %v6453
    %v6455 = vpop.xlane.xlu0 %6454
    %v6456 = vadd.f32 %v6446, %v6449
    %v6457 = vadd.f32 %v6456, %v6452
    %v6458 = vsel %vm365, %v6455, 0.0
    %v6459 = vadd.f32 %v6457, %v6458
    %v6460 = vrot.slane %v6459, 4
    %v6461 = vadd.f32 %v6459, %v6460
    %v6462 = vrot.slane %v6461, 2
    %v6463 = vadd.f32 %v6461, %v6462
    %v6464 = vrot.slane %v6463, 1
    %v6465 = vadd.f32 %v6463, %v6464
    %v6466 = vadd.f32 %v6465, 0.0
    %v6467 = vmul.f32 %v6440, %v6440
    %v6468 = vmul.f32 %v6441, %v6441
    %v6469 = vmul.f32 %v6442, %v6442
    %v6470 = vmul.f32 %v6443, %v6443
    %v6471 = vsel %vm198, %v6467, 0.0
    %6472 = vadd.xlane.f32.xlu0 %v6471
    %v6473 = vpop.xlane.xlu0 %6472
    %v6474 = vsel %vm198, %v6468, 0.0
    %6475 = vadd.xlane.f32.xlu0 %v6474
    %v6476 = vpop.xlane.xlu0 %6475
    %v6477 = vsel %vm198, %v6469, 0.0
    %6478 = vadd.xlane.f32.xlu0 %v6477
    %v6479 = vpop.xlane.xlu0 %6478
    %v6480 = vsel %vm202, %v6470, 0.0
    %6481 = vadd.xlane.f32.xlu0 %v6480
    %v6482 = vpop.xlane.xlu0 %6481
    %v6483 = vadd.f32 %v6473, %v6476
    %v6484 = vadd.f32 %v6483, %v6479
    %v6485 = vsel %vm365, %v6482, 0.0
    %v6486 = vadd.f32 %v6484, %v6485
    %v6487 = vrot.slane %v6486, 4
    %v6488 = vadd.f32 %v6486, %v6487
    %v6489 = vrot.slane %v6488, 2
    %v6490 = vadd.f32 %v6488, %v6489
    %v6491 = vrot.slane %v6490, 1
    %v6492 = vadd.f32 %v6490, %v6491
    %v6493 = vadd.f32 %v6492, 0.0
    %v6494 = vld [vmem:[%s5875] sm:$0xff]
    %v6495 = vld [vmem:[%s5875 + $0x8] sm:$0xff]
    %v6496 = vld [vmem:[%s5875 + $0x10] sm:$0xff]
    %v6497 = vld [vmem:[%s5875 + $0x18] sm:$0xff]
    %v6498 = vld [vmem:[%s5875 + $0x20] sm:$0xff]
    %v6499 = vld [vmem:[%s5875 + $0x28] sm:$0xff]
    %v6500 = vld [vmem:[%s5875 + $0x30] sm:$0xff]
    %v6501 = vld [vmem:[%s5875 + $0x38] sm:$0xff]
    %v6502 = vld [vmem:[%s5875 + $0x40] sm:$0xff]
    %v6503 = vld [vmem:[%s5875 + $0x48] sm:$0xff]
    %v6504 = vld [vmem:[%s5875 + $0x50] sm:$0xff]
    %v6505 = vld [vmem:[%s5875 + $0x58] sm:$0xff]
    %v6506 = vld [vmem:[%s5875 + $0x60] sm:$0xf]
    %v6507 = vld [vmem:[%s5875 + $0x68] sm:$0xf]
    %v6508 = vld [vmem:[%s5875 + $0x70] sm:$0xf]
    %v6509 = vld [vmem:[%s5875 + $0x78] sm:$0xf]
    %v6510 = vld [vmem:[%s5875] sm:$0xfe]
    %v6511 = vld [vmem:[%s5875 + $0x8] sm:$0xfe]
    %v6512 = vld [vmem:[%s5875 + $0x10] sm:$0xfe]
    %v6513 = vld [vmem:[%s5875 + $0x18] sm:$0xfe]
    %v6514 = vld [vmem:[%s5875 + $0x60] sm:$0x1f]
    %v6515 = vld [vmem:[%s5875 + $0x68] sm:$0x1f]
    %v6516 = vld [vmem:[%s5875 + $0x70] sm:$0x1f]
    %v6517 = vld [vmem:[%s5875 + $0x78] sm:$0x1f]
    %v6534 = vrot.slane %v6510, 1
    %v6535 = vrot.slane %v6498, 1
    %v6536 = vsel %vm2238, %v6534, %v6535
    %v6537 = vrot.slane %v6511, 1
    %v6538 = vrot.slane %v6499, 1
    %v6539 = vsel %vm2238, %v6537, %v6538
    %v6540 = vrot.slane %v6512, 1
    %v6541 = vrot.slane %v6500, 1
    %v6542 = vsel %vm2238, %v6540, %v6541
    %v6543 = vrot.slane %v6513, 1
    %v6544 = vrot.slane %v6501, 1
    %v6545 = vsel %vm2238, %v6543, %v6544
    %v6546 = vrot.slane %v6502, 1
    %v6547 = vsel %vm2238, %v6535, %v6546
    %v6548 = vrot.slane %v6503, 1
    %v6549 = vsel %vm2238, %v6538, %v6548
    %v6550 = vrot.slane %v6504, 1
    %v6551 = vsel %vm2238, %v6541, %v6550
    %v6552 = vrot.slane %v6505, 1
    %v6553 = vsel %vm2238, %v6544, %v6552
    %v6554 = vrot.slane %v6514, 1
    %v6555 = vsel %vm2238, %v6546, %v6554
    %v6556 = vrot.slane %v6515, 1
    %v6557 = vsel %vm2238, %v6548, %v6556
    %v6558 = vrot.slane %v6516, 1
    %v6559 = vsel %vm2238, %v6550, %v6558
    %v6560 = vrot.slane %v6517, 1
    %v6561 = vsel %vm2238, %v6552, %v6560
    %6578 = vmatpush.xpose.msra.mxu0 0.0
    %6579 = vmatpush.xpose.msra.mxu0 0.0
    %6580 = vmatpush.xpose.msra.mxu0 0.0
    %6581 = vmatpush.xpose.msra.mxu0 0.0
    %6582 = vmatpush.xpose.msra.mxu0 0.0
    %6583 = vmatpush.xpose.msra.mxu0 0.0
    %6584 = vmatpush.xpose.msra.mxu0 0.0
    %6585 = vmatpush.xpose.msra.mxu0 0.0
    %6586 = vmatpush.xpose.msra.mxu0 0.0
    %6587 = vmatpush.xpose.msra.mxu0 0.0
    %6588 = vmatpush.xpose.msra.mxu0 0.0
    %6589 = vmatpush.xpose.msra.mxu0 0.0
    %6590 = vmatpush.xpose.msra.mxu0 %v5945
    %6591 = vmatpush.xpose.msra.mxu0 %v5941
    %6592 = vmatpush.xpose.msra.mxu0 %v5937
    %6593 = vmatpush.xpose.msra.mxu0 %v5933
    %6594 = vmatmul.f32.gmra.mxu0 %v6536
    %v6595 = vpop.f32.mrf.mxu0
    %v6596 = vadd.f32 0.0, %v6595
    %6597 = vmatmul.f32.gmra.mxu0 %v6547
    %v6598 = vpop.f32.mrf.mxu0
    %v6599 = vadd.f32 0.0, %v6598
    %6600 = vmatmul.f32.gmra.mxu0 %v6555
    %v6601 = vpop.f32.mrf.mxu0
    %v6602 = vadd.f32 0.0, %v6601
    %6603 = vmatmul.f32.gmra.mxu0 %v6554
    %v6604 = vpop.f32.mrf.mxu0
    %v6605 = vadd.f32 0.0, %v6604
    %6606 = vdwg.mxu0
    %6607 = vmatpush.xpose.msra.mxu0 0.0
    %6608 = vmatpush.xpose.msra.mxu0 0.0
    %6609 = vmatpush.xpose.msra.mxu0 0.0
    %6610 = vmatpush.xpose.msra.mxu0 0.0
    %6611 = vmatpush.xpose.msra.mxu0 0.0
    %6612 = vmatpush.xpose.msra.mxu0 0.0
    %6613 = vmatpush.xpose.msra.mxu0 0.0
    %6614 = vmatpush.xpose.msra.mxu0 0.0
    %6615 = vmatpush.xpose.msra.mxu0 0.0
    %6616 = vmatpush.xpose.msra.mxu0 0.0
    %6617 = vmatpush.xpose.msra.mxu0 0.0
    %6618 = vmatpush.xpose.msra.mxu0 0.0
    %6619 = vmatpush.xpose.msra.mxu0 %v5946
    %6620 = vmatpush.xpose.msra.mxu0 %v5942
    %6621 = vmatpush.xpose.msra.mxu0 %v5938
    %6622 = vmatpush.xpose.msra.mxu0 %v5934
    %6623 = vmatmul.f32.gmra.mxu0 %v6539
    %v6624 = vpop.f32.mrf.mxu0
    %v6625 = vadd.f32 %v6596, %v6624
    %6626 = vmatmul.f32.gmra.mxu0 %v6549
    %v6627 = vpop.f32.mrf.mxu0
    %v6628 = vadd.f32 %v6599, %v6627
    %6629 = vmatmul.f32.gmra.mxu0 %v6557
    %v6630 = vpop.f32.mrf.mxu0
    %v6631 = vadd.f32 %v6602, %v6630
    %6632 = vmatmul.f32.gmra.mxu0 %v6556
    %v6633 = vpop.f32.mrf.mxu0
    %v6634 = vadd.f32 %v6605, %v6633
    %6635 = vdwg.mxu0
    %6636 = vmatpush.xpose.msra.mxu0 0.0
    %6637 = vmatpush.xpose.msra.mxu0 0.0
    %6638 = vmatpush.xpose.msra.mxu0 0.0
    %6639 = vmatpush.xpose.msra.mxu0 0.0
    %6640 = vmatpush.xpose.msra.mxu0 0.0
    %6641 = vmatpush.xpose.msra.mxu0 0.0
    %6642 = vmatpush.xpose.msra.mxu0 0.0
    %6643 = vmatpush.xpose.msra.mxu0 0.0
    %6644 = vmatpush.xpose.msra.mxu0 0.0
    %6645 = vmatpush.xpose.msra.mxu0 0.0
    %6646 = vmatpush.xpose.msra.mxu0 0.0
    %6647 = vmatpush.xpose.msra.mxu0 0.0
    %6648 = vmatpush.xpose.msra.mxu0 %v5947
    %6649 = vmatpush.xpose.msra.mxu0 %v5943
    %6650 = vmatpush.xpose.msra.mxu0 %v5939
    %6651 = vmatpush.xpose.msra.mxu0 %v5935
    %6652 = vmatmul.f32.gmra.mxu0 %v6542
    %v6653 = vpop.f32.mrf.mxu0
    %v6654 = vadd.f32 %v6625, %v6653
    %6655 = vmatmul.f32.gmra.mxu0 %v6551
    %v6656 = vpop.f32.mrf.mxu0
    %v6657 = vadd.f32 %v6628, %v6656
    %6658 = vmatmul.f32.gmra.mxu0 %v6559
    %v6659 = vpop.f32.mrf.mxu0
    %v6660 = vadd.f32 %v6631, %v6659
    %6661 = vmatmul.f32.gmra.mxu0 %v6558
    %v6662 = vpop.f32.mrf.mxu0
    %v6663 = vadd.f32 %v6634, %v6662
    %6664 = vdwg.mxu0
    %6665 = vmatpush.xpose.msra.mxu0 0.0
    %6666 = vmatpush.xpose.msra.mxu0 0.0
    %6667 = vmatpush.xpose.msra.mxu0 0.0
    %6668 = vmatpush.xpose.msra.mxu0 0.0
    %6669 = vmatpush.xpose.msra.mxu0 0.0
    %6670 = vmatpush.xpose.msra.mxu0 0.0
    %6671 = vmatpush.xpose.msra.mxu0 0.0
    %6672 = vmatpush.xpose.msra.mxu0 0.0
    %6673 = vmatpush.xpose.msra.mxu0 0.0
    %6674 = vmatpush.xpose.msra.mxu0 0.0
    %6675 = vmatpush.xpose.msra.mxu0 0.0
    %6676 = vmatpush.xpose.msra.mxu0 0.0
    %6677 = vmatpush.xpose.msra.mxu0 %v5948
    %6678 = vmatpush.xpose.msra.mxu0 %v5944
    %6679 = vmatpush.xpose.msra.mxu0 %v5940
    %6680 = vmatpush.xpose.msra.mxu0 %v5936
    %6681 = vmatmul.f32.gmra.mxu0 %v6545
    %v6682 = vpop.f32.mrf.mxu0
    %v6683 = vadd.f32 %v6654, %v6682
    %6684 = vmatmul.f32.gmra.mxu0 %v6553
    %v6685 = vpop.f32.mrf.mxu0
    %v6686 = vadd.f32 %v6657, %v6685
    %6687 = vmatmul.f32.gmra.mxu0 %v6561
    %v6688 = vpop.f32.mrf.mxu0
    %v6689 = vadd.f32 %v6660, %v6688
    %6690 = vmatmul.f32.gmra.mxu0 %v6560
    %v6691 = vpop.f32.mrf.mxu0
    %v6692 = vadd.f32 %v6663, %v6691
    %6693 = vdwg.mxu0
    %6694 = vmatpush.xpose.msra.mxu0 0.0
    %6695 = vmatpush.xpose.msra.mxu0 0.0
    %6696 = vmatpush.xpose.msra.mxu0 0.0
    %6697 = vmatpush.xpose.msra.mxu0 0.0
    %6698 = vmatpush.xpose.msra.mxu0 0.0
    %6699 = vmatpush.xpose.msra.mxu0 0.0
    %6700 = vmatpush.xpose.msra.mxu0 0.0
    %6701 = vmatpush.xpose.msra.mxu0 0.0
    %6702 = vmatpush.xpose.msra.mxu0 0.0
    %6703 = vmatpush.xpose.msra.mxu0 0.0
    %6704 = vmatpush.xpose.msra.mxu0 0.0
    %6705 = vmatpush.xpose.msra.mxu0 0.0
    %6706 = vmatpush.xpose.msra.mxu0 %v5920
    %6707 = vmatpush.xpose.msra.mxu0 %v5916
    %6708 = vmatpush.xpose.msra.mxu0 %v5912
    %6709 = vmatpush.xpose.msra.mxu0 %v5908
    %6710 = vmatmul.f32.gmra.mxu0 %v6494
    %v6711 = vpop.f32.mrf.mxu0
    %v6712 = vadd.f32 %v6683, %v6711
    %6713 = vmatmul.f32.gmra.mxu0 %v6498
    %v6714 = vpop.f32.mrf.mxu0
    %v6715 = vadd.f32 %v6686, %v6714
    %6716 = vmatmul.f32.gmra.mxu0 %v6502
    %v6717 = vpop.f32.mrf.mxu0
    %v6718 = vadd.f32 %v6689, %v6717
    %6719 = vmatmul.f32.gmra.mxu0 %v6506
    %v6720 = vpop.f32.mrf.mxu0
    %v6721 = vadd.f32 %v6692, %v6720
    %6722 = vdwg.mxu0
    %6723 = vmatpush.xpose.msra.mxu0 0.0
    %6724 = vmatpush.xpose.msra.mxu0 0.0
    %6725 = vmatpush.xpose.msra.mxu0 0.0
    %6726 = vmatpush.xpose.msra.mxu0 0.0
    %6727 = vmatpush.xpose.msra.mxu0 0.0
    %6728 = vmatpush.xpose.msra.mxu0 0.0
    %6729 = vmatpush.xpose.msra.mxu0 0.0
    %6730 = vmatpush.xpose.msra.mxu0 0.0
    %6731 = vmatpush.xpose.msra.mxu0 0.0
    %6732 = vmatpush.xpose.msra.mxu0 0.0
    %6733 = vmatpush.xpose.msra.mxu0 0.0
    %6734 = vmatpush.xpose.msra.mxu0 0.0
    %6735 = vmatpush.xpose.msra.mxu0 %v5921
    %6736 = vmatpush.xpose.msra.mxu0 %v5917
    %6737 = vmatpush.xpose.msra.mxu0 %v5913
    %6738 = vmatpush.xpose.msra.mxu0 %v5909
    %6739 = vmatmul.f32.gmra.mxu0 %v6495
    %v6740 = vpop.f32.mrf.mxu0
    %v6741 = vadd.f32 %v6712, %v6740
    %6742 = vmatmul.f32.gmra.mxu0 %v6499
    %v6743 = vpop.f32.mrf.mxu0
    %v6744 = vadd.f32 %v6715, %v6743
    %6745 = vmatmul.f32.gmra.mxu0 %v6503
    %v6746 = vpop.f32.mrf.mxu0
    %v6747 = vadd.f32 %v6718, %v6746
    %6748 = vmatmul.f32.gmra.mxu0 %v6507
    %v6749 = vpop.f32.mrf.mxu0
    %v6750 = vadd.f32 %v6721, %v6749
    %6751 = vdwg.mxu0
    %6752 = vmatpush.xpose.msra.mxu0 0.0
    %6753 = vmatpush.xpose.msra.mxu0 0.0
    %6754 = vmatpush.xpose.msra.mxu0 0.0
    %6755 = vmatpush.xpose.msra.mxu0 0.0
    %6756 = vmatpush.xpose.msra.mxu0 0.0
    %6757 = vmatpush.xpose.msra.mxu0 0.0
    %6758 = vmatpush.xpose.msra.mxu0 0.0
    %6759 = vmatpush.xpose.msra.mxu0 0.0
    %6760 = vmatpush.xpose.msra.mxu0 0.0
    %6761 = vmatpush.xpose.msra.mxu0 0.0
    %6762 = vmatpush.xpose.msra.mxu0 0.0
    %6763 = vmatpush.xpose.msra.mxu0 0.0
    %6764 = vmatpush.xpose.msra.mxu0 %v5922
    %6765 = vmatpush.xpose.msra.mxu0 %v5918
    %6766 = vmatpush.xpose.msra.mxu0 %v5914
    %6767 = vmatpush.xpose.msra.mxu0 %v5910
    %6768 = vmatmul.f32.gmra.mxu0 %v6496
    %v6769 = vpop.f32.mrf.mxu0
    %v6770 = vadd.f32 %v6741, %v6769
    %6771 = vmatmul.f32.gmra.mxu0 %v6500
    %v6772 = vpop.f32.mrf.mxu0
    %v6773 = vadd.f32 %v6744, %v6772
    %6774 = vmatmul.f32.gmra.mxu0 %v6504
    %v6775 = vpop.f32.mrf.mxu0
    %v6776 = vadd.f32 %v6747, %v6775
    %6777 = vmatmul.f32.gmra.mxu0 %v6508
    %v6778 = vpop.f32.mrf.mxu0
    %v6779 = vadd.f32 %v6750, %v6778
    %6780 = vdwg.mxu0
    %6781 = vmatpush.xpose.msra.mxu0 0.0
    %6782 = vmatpush.xpose.msra.mxu0 0.0
    %6783 = vmatpush.xpose.msra.mxu0 0.0
    %6784 = vmatpush.xpose.msra.mxu0 0.0
    %6785 = vmatpush.xpose.msra.mxu0 0.0
    %6786 = vmatpush.xpose.msra.mxu0 0.0
    %6787 = vmatpush.xpose.msra.mxu0 0.0
    %6788 = vmatpush.xpose.msra.mxu0 0.0
    %6789 = vmatpush.xpose.msra.mxu0 0.0
    %6790 = vmatpush.xpose.msra.mxu0 0.0
    %6791 = vmatpush.xpose.msra.mxu0 0.0
    %6792 = vmatpush.xpose.msra.mxu0 0.0
    %6793 = vmatpush.xpose.msra.mxu0 %v5923
    %6794 = vmatpush.xpose.msra.mxu0 %v5919
    %6795 = vmatpush.xpose.msra.mxu0 %v5915
    %6796 = vmatpush.xpose.msra.mxu0 %v5911
    %6797 = vmatmul.f32.gmra.mxu0 %v6497
    %v6798 = vpop.f32.mrf.mxu0
    %v6799 = vadd.f32 %v6770, %v6798
    %6800 = vmatmul.f32.gmra.mxu0 %v6501
    %v6801 = vpop.f32.mrf.mxu0
    %v6802 = vadd.f32 %v6773, %v6801
    %6803 = vmatmul.f32.gmra.mxu0 %v6505
    %v6804 = vpop.f32.mrf.mxu0
    %v6805 = vadd.f32 %v6776, %v6804
    %6806 = vmatmul.f32.gmra.mxu0 %v6509
    %v6807 = vpop.f32.mrf.mxu0
    %v6808 = vadd.f32 %v6779, %v6807
    %6809 = vdwg.mxu0
    %v6810 = vld [vmem:[%s5875] sm:$0xfc]
    %v6811 = vld [vmem:[%s5875 + $0x8] sm:$0xfc]
    %v6812 = vld [vmem:[%s5875 + $0x10] sm:$0xfc]
    %v6813 = vld [vmem:[%s5875 + $0x18] sm:$0xfc]
    %v6814 = vld [vmem:[%s5875 + $0x60] sm:$0x3f]
    %v6815 = vld [vmem:[%s5875 + $0x68] sm:$0x3f]
    %v6816 = vld [vmem:[%s5875 + $0x70] sm:$0x3f]
    %v6817 = vld [vmem:[%s5875 + $0x78] sm:$0x3f]
    %v6826 = vrot.slane %v6810, 2
    %v6827 = vrot.slane %v6498, 2
    %v6828 = vsel %vm2516, %v6826, %v6827
    %v6829 = vrot.slane %v6811, 2
    %v6830 = vrot.slane %v6499, 2
    %v6831 = vsel %vm2516, %v6829, %v6830
    %v6832 = vrot.slane %v6812, 2
    %v6833 = vrot.slane %v6500, 2
    %v6834 = vsel %vm2516, %v6832, %v6833
    %v6835 = vrot.slane %v6813, 2
    %v6836 = vrot.slane %v6501, 2
    %v6837 = vsel %vm2516, %v6835, %v6836
    %v6838 = vrot.slane %v6502, 2
    %v6839 = vsel %vm2516, %v6827, %v6838
    %v6840 = vrot.slane %v6503, 2
    %v6841 = vsel %vm2516, %v6830, %v6840
    %v6842 = vrot.slane %v6504, 2
    %v6843 = vsel %vm2516, %v6833, %v6842
    %v6844 = vrot.slane %v6505, 2
    %v6845 = vsel %vm2516, %v6836, %v6844
    %v6846 = vrot.slane %v6814, 2
    %v6847 = vsel %vm2516, %v6838, %v6846
    %v6848 = vrot.slane %v6815, 2
    %v6849 = vsel %vm2516, %v6840, %v6848
    %v6850 = vrot.slane %v6816, 2
    %v6851 = vsel %vm2516, %v6842, %v6850
    %v6852 = vrot.slane %v6817, 2
    %v6853 = vsel %vm2516, %v6844, %v6852
    %6870 = vmatpush.xpose.msra.mxu0 0.0
    %6871 = vmatpush.xpose.msra.mxu0 0.0
    %6872 = vmatpush.xpose.msra.mxu0 0.0
    %6873 = vmatpush.xpose.msra.mxu0 0.0
    %6874 = vmatpush.xpose.msra.mxu0 0.0
    %6875 = vmatpush.xpose.msra.mxu0 0.0
    %6876 = vmatpush.xpose.msra.mxu0 0.0
    %6877 = vmatpush.xpose.msra.mxu0 0.0
    %6878 = vmatpush.xpose.msra.mxu0 0.0
    %6879 = vmatpush.xpose.msra.mxu0 0.0
    %6880 = vmatpush.xpose.msra.mxu0 0.0
    %6881 = vmatpush.xpose.msra.mxu0 0.0
    %6882 = vmatpush.xpose.msra.mxu0 %v6262
    %6883 = vmatpush.xpose.msra.mxu0 %v6258
    %6884 = vmatpush.xpose.msra.mxu0 %v6254
    %6885 = vmatpush.xpose.msra.mxu0 %v6250
    %6886 = vmatmul.f32.gmra.mxu0 %v6828
    %v6887 = vpop.f32.mrf.mxu0
    %v6888 = vadd.f32 0.0, %v6887
    %6889 = vmatmul.f32.gmra.mxu0 %v6839
    %v6890 = vpop.f32.mrf.mxu0
    %v6891 = vadd.f32 0.0, %v6890
    %6892 = vmatmul.f32.gmra.mxu0 %v6847
    %v6893 = vpop.f32.mrf.mxu0
    %v6894 = vadd.f32 0.0, %v6893
    %6895 = vmatmul.f32.gmra.mxu0 %v6846
    %v6896 = vpop.f32.mrf.mxu0
    %v6897 = vadd.f32 0.0, %v6896
    %6898 = vdwg.mxu0
    %6899 = vmatpush.xpose.msra.mxu0 0.0
    %6900 = vmatpush.xpose.msra.mxu0 0.0
    %6901 = vmatpush.xpose.msra.mxu0 0.0
    %6902 = vmatpush.xpose.msra.mxu0 0.0
    %6903 = vmatpush.xpose.msra.mxu0 0.0
    %6904 = vmatpush.xpose.msra.mxu0 0.0
    %6905 = vmatpush.xpose.msra.mxu0 0.0
    %6906 = vmatpush.xpose.msra.mxu0 0.0
    %6907 = vmatpush.xpose.msra.mxu0 0.0
    %6908 = vmatpush.xpose.msra.mxu0 0.0
    %6909 = vmatpush.xpose.msra.mxu0 0.0
    %6910 = vmatpush.xpose.msra.mxu0 0.0
    %6911 = vmatpush.xpose.msra.mxu0 %v6263
    %6912 = vmatpush.xpose.msra.mxu0 %v6259
    %6913 = vmatpush.xpose.msra.mxu0 %v6255
    %6914 = vmatpush.xpose.msra.mxu0 %v6251
    %6915 = vmatmul.f32.gmra.mxu0 %v6831
    %v6916 = vpop.f32.mrf.mxu0
    %v6917 = vadd.f32 %v6888, %v6916
    %6918 = vmatmul.f32.gmra.mxu0 %v6841
    %v6919 = vpop.f32.mrf.mxu0
    %v6920 = vadd.f32 %v6891, %v6919
    %6921 = vmatmul.f32.gmra.mxu0 %v6849
    %v6922 = vpop.f32.mrf.mxu0
    %v6923 = vadd.f32 %v6894, %v6922
    %6924 = vmatmul.f32.gmra.mxu0 %v6848
    %v6925 = vpop.f32.mrf.mxu0
    %v6926 = vadd.f32 %v6897, %v6925
    %6927 = vdwg.mxu0
    %6928 = vmatpush.xpose.msra.mxu0 0.0
    %6929 = vmatpush.xpose.msra.mxu0 0.0
    %6930 = vmatpush.xpose.msra.mxu0 0.0
    %6931 = vmatpush.xpose.msra.mxu0 0.0
    %6932 = vmatpush.xpose.msra.mxu0 0.0
    %6933 = vmatpush.xpose.msra.mxu0 0.0
    %6934 = vmatpush.xpose.msra.mxu0 0.0
    %6935 = vmatpush.xpose.msra.mxu0 0.0
    %6936 = vmatpush.xpose.msra.mxu0 0.0
    %6937 = vmatpush.xpose.msra.mxu0 0.0
    %6938 = vmatpush.xpose.msra.mxu0 0.0
    %6939 = vmatpush.xpose.msra.mxu0 0.0
    %6940 = vmatpush.xpose.msra.mxu0 %v6264
    %6941 = vmatpush.xpose.msra.mxu0 %v6260
    %6942 = vmatpush.xpose.msra.mxu0 %v6256
    %6943 = vmatpush.xpose.msra.mxu0 %v6252
    %6944 = vmatmul.f32.gmra.mxu0 %v6834
    %v6945 = vpop.f32.mrf.mxu0
    %v6946 = vadd.f32 %v6917, %v6945
    %6947 = vmatmul.f32.gmra.mxu0 %v6843
    %v6948 = vpop.f32.mrf.mxu0
    %v6949 = vadd.f32 %v6920, %v6948
    %6950 = vmatmul.f32.gmra.mxu0 %v6851
    %v6951 = vpop.f32.mrf.mxu0
    %v6952 = vadd.f32 %v6923, %v6951
    %6953 = vmatmul.f32.gmra.mxu0 %v6850
    %v6954 = vpop.f32.mrf.mxu0
    %v6955 = vadd.f32 %v6926, %v6954
    %6956 = vdwg.mxu0
    %6957 = vmatpush.xpose.msra.mxu0 0.0
    %6958 = vmatpush.xpose.msra.mxu0 0.0
    %6959 = vmatpush.xpose.msra.mxu0 0.0
    %6960 = vmatpush.xpose.msra.mxu0 0.0
    %6961 = vmatpush.xpose.msra.mxu0 0.0
    %6962 = vmatpush.xpose.msra.mxu0 0.0
    %6963 = vmatpush.xpose.msra.mxu0 0.0
    %6964 = vmatpush.xpose.msra.mxu0 0.0
    %6965 = vmatpush.xpose.msra.mxu0 0.0
    %6966 = vmatpush.xpose.msra.mxu0 0.0
    %6967 = vmatpush.xpose.msra.mxu0 0.0
    %6968 = vmatpush.xpose.msra.mxu0 0.0
    %6969 = vmatpush.xpose.msra.mxu0 %v6265
    %6970 = vmatpush.xpose.msra.mxu0 %v6261
    %6971 = vmatpush.xpose.msra.mxu0 %v6257
    %6972 = vmatpush.xpose.msra.mxu0 %v6253
    %6973 = vmatmul.f32.gmra.mxu0 %v6837
    %v6974 = vpop.f32.mrf.mxu0
    %v6975 = vadd.f32 %v6946, %v6974
    %6976 = vmatmul.f32.gmra.mxu0 %v6845
    %v6977 = vpop.f32.mrf.mxu0
    %v6978 = vadd.f32 %v6949, %v6977
    %6979 = vmatmul.f32.gmra.mxu0 %v6853
    %v6980 = vpop.f32.mrf.mxu0
    %v6981 = vadd.f32 %v6952, %v6980
    %6982 = vmatmul.f32.gmra.mxu0 %v6852
    %v6983 = vpop.f32.mrf.mxu0
    %v6984 = vadd.f32 %v6955, %v6983
    %6985 = vdwg.mxu0
    %v6986 = vadd.f32 %v6799, %v6975
    %v6987 = vadd.f32 %v6802, %v6978
    %v6988 = vadd.f32 %v6805, %v6981
    %v6989 = vadd.f32 %v6808, %v6984
    %v6990 = vadd.f32 %v6986, %v6439
    %v6991 = vadd.f32 %v6987, %v6439
    %v6992 = vadd.f32 %v6988, %v6439
    %v6993 = vadd.f32 %v6989, %v6439
    %v6994 = vsel %vm198, %v6990, 0.0
    %6995 = vadd.xlane.f32.xlu0 %v6994
    %v6996 = vpop.xlane.xlu0 %6995
    %v6997 = vsel %vm198, %v6991, 0.0
    %6998 = vadd.xlane.f32.xlu0 %v6997
    %v6999 = vpop.xlane.xlu0 %6998
    %v7000 = vsel %vm198, %v6992, 0.0
    %7001 = vadd.xlane.f32.xlu0 %v7000
    %v7002 = vpop.xlane.xlu0 %7001
    %v7003 = vsel %vm202, %v6993, 0.0
    %7004 = vadd.xlane.f32.xlu0 %v7003
    %v7005 = vpop.xlane.xlu0 %7004
    %v7006 = vadd.f32 %v6996, %v6999
    %v7007 = vadd.f32 %v7006, %v7002
    %v7008 = vsel %vm365, %v7005, 0.0
    %v7009 = vadd.f32 %v7007, %v7008
    %v7010 = vrot.slane %v7009, 4
    %v7011 = vadd.f32 %v7009, %v7010
    %v7012 = vrot.slane %v7011, 2
    %v7013 = vadd.f32 %v7011, %v7012
    %v7014 = vrot.slane %v7013, 1
    %v7015 = vadd.f32 %v7013, %v7014
    %v7016 = vadd.f32 %v6466, %v7015
    %v7017 = vmul.f32 %v6990, %v6990
    %v7018 = vmul.f32 %v6991, %v6991
    %v7019 = vmul.f32 %v6992, %v6992
    %v7020 = vmul.f32 %v6993, %v6993
    %v7021 = vsel %vm198, %v7017, 0.0
    %7022 = vadd.xlane.f32.xlu0 %v7021
    %v7023 = vpop.xlane.xlu0 %7022
    %v7024 = vsel %vm198, %v7018, 0.0
    %7025 = vadd.xlane.f32.xlu0 %v7024
    %v7026 = vpop.xlane.xlu0 %7025
    %v7027 = vsel %vm198, %v7019, 0.0
    %7028 = vadd.xlane.f32.xlu0 %v7027
    %v7029 = vpop.xlane.xlu0 %7028
    %v7030 = vsel %vm202, %v7020, 0.0
    %7031 = vadd.xlane.f32.xlu0 %v7030
    %v7032 = vpop.xlane.xlu0 %7031
    %v7033 = vadd.f32 %v7023, %v7026
    %v7034 = vadd.f32 %v7033, %v7029
    %v7035 = vsel %vm365, %v7032, 0.0
    %v7036 = vadd.f32 %v7034, %v7035
    %v7037 = vrot.slane %v7036, 4
    %v7038 = vadd.f32 %v7036, %v7037
    %v7039 = vrot.slane %v7038, 2
    %v7040 = vadd.f32 %v7038, %v7039
    %v7041 = vrot.slane %v7040, 1
    %v7042 = vadd.f32 %v7040, %v7041
    %v7043 = vadd.f32 %v6493, %v7042
    %v7044 = vmul.f32 %v7016, 0.0006377551
    %v7045 = vmul.f32 %v7043, 0.0006377551
    %v7046 = vmul.f32 %v7044, %v7044
    %v7047 = vsub.f32 %v7045, %v7046
    %s7048 = sld [smem:[#allocation9]]
    %v7049 = vadd.f32 %v7047, 1e-05
    %v7050 = vrsqrt.pop %v7049
    %v7051 = vmul.f32 %v7050, %v7049
    %v7052 = vmul.f32 %v7051, %v7050
    %v7053 = vmul.f32 0.5, %v7052
    %v7054 = vsub.f32 1.5, %v7053
    %v7055 = vmul.f32 %v7050, %v7054
    %vm7056 = vweird.f32 %v7049
    %vm7057 = vweird.f32 %v7050
    %vm7058 = vmor %vm7056, %vm7057
    %v7059 = vsel %vm7058, %v7050, %v7055
    %v7060 = vstv %s7048
    %v7061 = vmul.f32 %v7060, %v7059
    %s7062 = sld [smem:[#allocation10]]
    %v7063 = vmul.f32 %v7044, %v7061
    %v7064 = vstv %s7062
    %v7065 = vsub.f32 %v7064, %v7063
    %v7066 = vmul.f32 %v6440, %v7061
    %v7067 = vmul.f32 %v6441, %v7061
    %v7068 = vmul.f32 %v6442, %v7061
    %v7069 = vmul.f32 %v6443, %v7061
    %v7070 = vadd.f32 %v7066, %v7065
    %v7071 = vadd.f32 %v7067, %v7065
    %v7072 = vadd.f32 %v7068, %v7065
    %v7073 = vadd.f32 %v7069, %v7065
    %v7074 = vand.u32 2147483647, %v7070
    %v7075 = vand.u32 2147483647, %v7071
    %v7076 = vand.u32 2147483647, %v7072
    %v7077 = vand.u32 2147483647, %v7073
    %v7078 = vsub.f32 0.0, %v7074
    %v7079 = vsub.f32 0.0, %v7075
    %v7080 = vsub.f32 0.0, %v7076
    %v7081 = vsub.f32 0.0, %v7077
    %v7082 = vmul.f32 %v7078, 1.442695
    %v7083 = vpow.pop %v7082
    %v7084 = vmul.f32 %v7079, 1.442695
    %v7085 = vpow.pop %v7084
    %v7086 = vmul.f32 %v7080, 1.442695
    %v7087 = vpow.pop %v7086
    %v7088 = vmul.f32 %v7081, 1.442695
    %v7089 = vpow.pop %v7088
    %v7090 = vadd.f32 %v7083, 1.0
    %v7091 = vadd.f32 %v7085, 1.0
    %v7092 = vadd.f32 %v7087, 1.0
    %v7093 = vadd.f32 %v7089, 1.0
    %v7094 = vrcp.pop %v7090
    %v7095 = vmul.f32 %v7090, %v7094
    %v7096 = vsub.f32 1.0, %v7095
    %v7097 = vmul.f32 %v7094, %v7096
    %v7098 = vadd.f32 %v7094, %v7097
    %vm7099 = vweird.f32 %v7090
    %vm7100 = vweird.f32 %v7094
    %vm7101 = vmor %vm7099, %vm7100
    %v7102 = vsel %vm7101, %v7094, %v7098
    %v7103 = vand.u32 2147483647, %v7090
    %vm7104 = vcmp.eq.f32.partialorder %v7103, 8.507059e+37
    %v7105 = vand.u32 %v7090, 2147483648
    %v7106 = vor.u32 1.1754944e-38, %v7105
    %v7107 = vsel %vm7104, %v7106, %v7102
    %v7108 = vmul.f32 1.0, %v7107
    %v7109 = vrcp.pop %v7091
    %v7110 = vmul.f32 %v7091, %v7109
    %v7111 = vsub.f32 1.0, %v7110
    %v7112 = vmul.f32 %v7109, %v7111
    %v7113 = vadd.f32 %v7109, %v7112
    %vm7114 = vweird.f32 %v7091
    %vm7115 = vweird.f32 %v7109
    %vm7116 = vmor %vm7114, %vm7115
    %v7117 = vsel %vm7116, %v7109, %v7113
    %v7118 = vand.u32 2147483647, %v7091
    %vm7119 = vcmp.eq.f32.partialorder %v7118, 8.507059e+37
    %v7120 = vand.u32 %v7091, 2147483648
    %v7121 = vor.u32 1.1754944e-38, %v7120
    %v7122 = vsel %vm7119, %v7121, %v7117
    %v7123 = vmul.f32 1.0, %v7122
    %v7124 = vrcp.pop %v7092
    %v7125 = vmul.f32 %v7092, %v7124
    %v7126 = vsub.f32 1.0, %v7125
    %v7127 = vmul.f32 %v7124, %v7126
    %v7128 = vadd.f32 %v7124, %v7127
    %vm7129 = vweird.f32 %v7092
    %vm7130 = vweird.f32 %v7124
    %vm7131 = vmor %vm7129, %vm7130
    %v7132 = vsel %vm7131, %v7124, %v7128
    %v7133 = vand.u32 2147483647, %v7092
    %vm7134 = vcmp.eq.f32.partialorder %v7133, 8.507059e+37
    %v7135 = vand.u32 %v7092, 2147483648
    %v7136 = vor.u32 1.1754944e-38, %v7135
    %v7137 = vsel %vm7134, %v7136, %v7132
    %v7138 = vmul.f32 1.0, %v7137
    %v7139 = vrcp.pop %v7093
    %v7140 = vmul.f32 %v7093, %v7139
    %v7141 = vsub.f32 1.0, %v7140
    %v7142 = vmul.f32 %v7139, %v7141
    %v7143 = vadd.f32 %v7139, %v7142
    %vm7144 = vweird.f32 %v7093
    %vm7145 = vweird.f32 %v7139
    %vm7146 = vmor %vm7144, %vm7145
    %v7147 = vsel %vm7146, %v7139, %v7143
    %v7148 = vand.u32 2147483647, %v7093
    %vm7149 = vcmp.eq.f32.partialorder %v7148, 8.507059e+37
    %v7150 = vand.u32 %v7093, 2147483648
    %v7151 = vor.u32 1.1754944e-38, %v7150
    %v7152 = vsel %vm7149, %v7151, %v7147
    %v7153 = vmul.f32 1.0, %v7152
    %vm7154 = vcmp.ge.f32.partialorder %v7070, 0.0
    %vm7155 = vcmp.ge.f32.partialorder %v7071, 0.0
    %vm7156 = vcmp.ge.f32.partialorder %v7072, 0.0
    %vm7157 = vcmp.ge.f32.partialorder %v7073, 0.0
    %v7158 = vmul.f32 %v7083, %v7108
    %v7159 = vmul.f32 %v7085, %v7123
    %v7160 = vmul.f32 %v7087, %v7138
    %v7161 = vmul.f32 %v7089, %v7153
    %v7162 = vsel %vm7154, %v7108, %v7158
    %v7163 = vsel %vm7155, %v7123, %v7159
    %v7164 = vsel %vm7156, %v7138, %v7160
    %v7165 = vsel %vm7157, %v7153, %v7161
    %7166 = vst.msk [vmem:[%s23] sm:$0xff] %vm198, %v7162
    %7167 = vst.msk [vmem:[%s23 + $0x8] sm:$0xff] %vm198, %v7163
    %7168 = vst.msk [vmem:[%s23 + $0x10] sm:$0xff] %vm198, %v7164
    %7169 = vst.msk [vmem:[%s23 + $0x18] sm:$0xf] %vm202, %v7165
    %v7170 = vmul.f32 %v6990, %v7061
    %v7171 = vmul.f32 %v6991, %v7061
    %v7172 = vmul.f32 %v6992, %v7061
    %v7173 = vmul.f32 %v6993, %v7061
    %v7174 = vadd.f32 %v7170, %v7065
    %v7175 = vadd.f32 %v7171, %v7065
    %v7176 = vadd.f32 %v7172, %v7065
    %v7177 = vadd.f32 %v7173, %v7065
    %v7178 = vand.u32 2147483647, %v7174
    %v7179 = vand.u32 2147483647, %v7175
    %v7180 = vand.u32 2147483647, %v7176
    %v7181 = vand.u32 2147483647, %v7177
    %v7182 = vsub.f32 0.0, %v7178
    %v7183 = vsub.f32 0.0, %v7179
    %v7184 = vsub.f32 0.0, %v7180
    %v7185 = vsub.f32 0.0, %v7181
    %v7186 = vmul.f32 %v7182, 1.442695
    %v7187 = vpow.pop %v7186
    %v7188 = vmul.f32 %v7183, 1.442695
    %v7189 = vpow.pop %v7188
    %v7190 = vmul.f32 %v7184, 1.442695
    %v7191 = vpow.pop %v7190
    %v7192 = vmul.f32 %v7185, 1.442695
    %v7193 = vpow.pop %v7192
    %v7194 = vadd.f32 %v7187, 1.0
    %v7195 = vadd.f32 %v7189, 1.0
    %v7196 = vadd.f32 %v7191, 1.0
    %v7197 = vadd.f32 %v7193, 1.0
    %v7198 = vrcp.pop %v7194
    %v7199 = vmul.f32 %v7194, %v7198
    %v7200 = vsub.f32 1.0, %v7199
    %v7201 = vmul.f32 %v7198, %v7200
    %v7202 = vadd.f32 %v7198, %v7201
    %vm7203 = vweird.f32 %v7194
    %vm7204 = vweird.f32 %v7198
    %vm7205 = vmor %vm7203, %vm7204
    %v7206 = vsel %vm7205, %v7198, %v7202
    %v7207 = vand.u32 2147483647, %v7194
    %vm7208 = vcmp.eq.f32.partialorder %v7207, 8.507059e+37
    %v7209 = vand.u32 %v7194, 2147483648
    %v7210 = vor.u32 1.1754944e-38, %v7209
    %v7211 = vsel %vm7208, %v7210, %v7206
    %v7212 = vmul.f32 1.0, %v7211
    %v7213 = vrcp.pop %v7195
    %v7214 = vmul.f32 %v7195, %v7213
    %v7215 = vsub.f32 1.0, %v7214
    %v7216 = vmul.f32 %v7213, %v7215
    %v7217 = vadd.f32 %v7213, %v7216
    %vm7218 = vweird.f32 %v7195
    %vm7219 = vweird.f32 %v7213
    %vm7220 = vmor %vm7218, %vm7219
    %v7221 = vsel %vm7220, %v7213, %v7217
    %v7222 = vand.u32 2147483647, %v7195
    %vm7223 = vcmp.eq.f32.partialorder %v7222, 8.507059e+37
    %v7224 = vand.u32 %v7195, 2147483648
    %v7225 = vor.u32 1.1754944e-38, %v7224
    %v7226 = vsel %vm7223, %v7225, %v7221
    %v7227 = vmul.f32 1.0, %v7226
    %v7228 = vrcp.pop %v7196
    %v7229 = vmul.f32 %v7196, %v7228
    %v7230 = vsub.f32 1.0, %v7229
    %v7231 = vmul.f32 %v7228, %v7230
    %v7232 = vadd.f32 %v7228, %v7231
    %vm7233 = vweird.f32 %v7196
    %vm7234 = vweird.f32 %v7228
    %vm7235 = vmor %vm7233, %vm7234
    %v7236 = vsel %vm7235, %v7228, %v7232
    %v7237 = vand.u32 2147483647, %v7196
    %vm7238 = vcmp.eq.f32.partialorder %v7237, 8.507059e+37
    %v7239 = vand.u32 %v7196, 2147483648
    %v7240 = vor.u32 1.1754944e-38, %v7239
    %v7241 = vsel %vm7238, %v7240, %v7236
    %v7242 = vmul.f32 1.0, %v7241
    %v7243 = vrcp.pop %v7197
    %v7244 = vmul.f32 %v7197, %v7243
    %v7245 = vsub.f32 1.0, %v7244
    %v7246 = vmul.f32 %v7243, %v7245
    %v7247 = vadd.f32 %v7243, %v7246
    %vm7248 = vweird.f32 %v7197
    %vm7249 = vweird.f32 %v7243
    %vm7250 = vmor %vm7248, %vm7249
    %v7251 = vsel %vm7250, %v7243, %v7247
    %v7252 = vand.u32 2147483647, %v7197
    %vm7253 = vcmp.eq.f32.partialorder %v7252, 8.507059e+37
    %v7254 = vand.u32 %v7197, 2147483648
    %v7255 = vor.u32 1.1754944e-38, %v7254
    %v7256 = vsel %vm7253, %v7255, %v7251
    %v7257 = vmul.f32 1.0, %v7256
    %vm7258 = vcmp.ge.f32.partialorder %v7174, 0.0
    %vm7259 = vcmp.ge.f32.partialorder %v7175, 0.0
    %vm7260 = vcmp.ge.f32.partialorder %v7176, 0.0
    %vm7261 = vcmp.ge.f32.partialorder %v7177, 0.0
    %v7262 = vmul.f32 %v7187, %v7212
    %v7263 = vmul.f32 %v7189, %v7227
    %v7264 = vmul.f32 %v7191, %v7242
    %v7265 = vmul.f32 %v7193, %v7257
    %v7266 = vsel %vm7258, %v7212, %v7262
    %v7267 = vsel %vm7259, %v7227, %v7263
    %v7268 = vsel %vm7260, %v7242, %v7264
    %v7269 = vsel %vm7261, %v7257, %v7265
    %s7270 = scalar_lea.vmem %s23, 32
    %7271 = vst.msk [vmem:[%s7270] sm:$0xff] %vm198, %v7266
    %7272 = vst.msk [vmem:[%s7270 + $0x8] sm:$0xff] %vm198, %v7267
    %7273 = vst.msk [vmem:[%s7270 + $0x10] sm:$0xff] %vm198, %v7268
    %7274 = vst.msk [vmem:[%s7270 + $0x18] sm:$0xf] %vm202, %v7269
    // Predicated region
    $region126: #{autoencoder_forward.1} parent=1 // pred_check
      _
    $region127: #{autoencoder_forward.1} parent=1 // pred_check_branch
      %7276 = sbr.rel (0) target = $region129
    $region128: #{autoencoder_forward.1} parent=1 // pred_region
      _
    $region129: #{autoencoder_forward.1} parent=1 // pred_fallthru
      _
    // Predicated region
    $region130: #{autoencoder_forward.1} parent=1 // pred_check
      _
    $region131: #{autoencoder_forward.1} parent=1 // pred_check_branch
      %7278 = sbr.rel (0) target = $region133
    $region132: #{autoencoder_forward.1} parent=1 // pred_region
      _
    $region133: #{autoencoder_forward.1} parent=1 // pred_fallthru
      _
    %7279 = vsyncpa [#allocation12], 1
    %7280 = vsyncpa [#allocation15], 1
    %7281 = vsyncpa [#allocation19], 1
    %7282 = vsyncpa [#allocation22], 1
    %7283 = vsyncpa [#allocation13], 1

</llo_original>
